<compile_context>
chip_gen: v6e
topology: v6e:2x2x1
jax: 0.10.0
libtpu: 0.0.40
codegen_flags: <defaults>
</compile_context>

<pallas_src>
import jax
import jax.numpy as jnp
from jax import lax
from jax.experimental import pallas as pl
from jax.experimental.pallas import tpu as pltpu


_GRU_UNROLL_T = 12  # fully unroll the recurrence up to this many timesteps


# ----------------------------------------------------------------------------
# Small helpers
# ----------------------------------------------------------------------------
def _round_up(n, m):
    return ((n + m - 1) // m) * m


def _pick_tile(n, candidates):
    """Largest tile from `candidates` that still yields a >=2-step grid."""
    for t in candidates:
        if (n + t - 1) // t >= 2:
            return t
    return candidates[-1]


def _vmem_limit_bytes():
    """Generation-aware scoped-VMEM limit with double-buffer headroom."""
    cap = 128 * 1024 * 1024
    try:
        info_cap = pltpu.get_tpu_info().vmem_capacity_bytes
        if info_cap:
            cap = int(info_cap)
    except Exception:
        pass
    # ~48 MiB on v7x (64 MiB physical), 96 MiB on v5e/v6e (128 MiB physical).
    return int(min(cap * 3 // 4, 100 * 1024 * 1024))


# ----------------------------------------------------------------------------
# Pallas kernels
# ----------------------------------------------------------------------------
def gru2_kernel(x_ref, wi1_ref, wh1_ref, bi1_ref, bhn1_ref, w2_ref, b2_ref,
                out_ref, gi1_ref):
    """Fused 2-layer GRU over one batch tile of `tn` nodes.

    x_ref:    (T*tn, F)  tile-major input (row t*tn+r == node r of this tile at time t)
    wi1_ref:  (F, 3H)    layer-1 fused input weights [r|z|n]
    wh1_ref:  (H, 3H)    layer-1 fused hidden weights
    bi1_ref:  (1, 3H)    layer-1 bias [b_ir+b_hr | b_iz+b_hz | b_in]
    bhn1_ref: (1, H)     layer-1 n-gate hidden bias b_hn
    w2_ref:   (2H, 4H)   layer-2 fused weights: cols [r | z | n_in | n_h],
                         rows [input (=h1) | hidden (=h2)]
    b2_ref:   (1, 4H)    layer-2 bias [b_ir+b_hr | b_iz+b_hz | b_in | b_hn]
    out_ref:  (tn, Hp)   final top-layer hidden, zero-padded to Hp lanes
    gi1_ref:  (T*tn, 3H) scratch: hoisted layer-1 input projection
    """
    tn, Hp = out_ref.shape
    H = wh1_ref.shape[0]
    T = gi1_ref.shape[0] // tn

    # Hoisted layer-1 input projection: one wide MXU pass outside the serial
    # recurrence (biases for r/z/n already folded in).
    gi1_ref[...] = (jnp.dot(x_ref[...], wi1_ref[...],
                            preferred_element_type=jnp.float32)
                    + bi1_ref[...])

    wh1 = wh1_ref[...]
    w2 = w2_ref[...]
    # Hoist bias broadcasts out of the loop (JAX does not CSE broadcast_in_dim).
    bhn1 = jnp.broadcast_to(bhn1_ref[...], (tn, H))
    b2 = jnp.broadcast_to(b2_ref[...], (tn, 4 * H))

    def step(gi1, h1, h2):
        # ---- layer 1 cell (r/z hidden biases pre-folded; bhn only in n-gate)
        gh1 = jnp.dot(h1, wh1, preferred_element_type=jnp.float32)
        r1 = jax.nn.sigmoid(gi1[:, :H] + gh1[:, :H])
        z1 = jax.nn.sigmoid(gi1[:, H:2 * H] + gh1[:, H:2 * H])
        n1 = jnp.tanh(gi1[:, 2 * H:] + r1 * (gh1[:, 2 * H:] + bhn1))
        h1n = (1.0 - z1) * n1 + z1 * h1
        # ---- layer 2 cell: single fused (tn,2H)@(2H,4H) matmul
        g2 = jnp.dot(jnp.concatenate([h1n, h2], axis=1), w2,
                     preferred_element_type=jnp.float32) + b2
        r2 = jax.nn.sigmoid(g2[:, :H])
        z2 = jax.nn.sigmoid(g2[:, H:2 * H])
        n2 = jnp.tanh(g2[:, 2 * H:3 * H] + r2 * g2[:, 3 * H:])
        h2n = (1.0 - z2) * n2 + z2 * h2
        return h1n, h2n

    h1 = jnp.zeros((tn, H), jnp.float32)
    h2 = jnp.zeros((tn, H), jnp.float32)

    if T <= _GRU_UNROLL_T:
        # Small T: straight-line code for scheduler visibility.
        for t in range(T):
            h1, h2 = step(gi1_ref[t * tn:(t + 1) * tn, :], h1, h2)
    else:
        # Large T: bounded live ranges via fori_loop, dynamic aligned slices.
        def body(t, carry):
            h1_c, h2_c = carry
            base = pl.multiple_of(t * tn, tn)
            return step(gi1_ref[pl.ds(base, tn), :], h1_c, h2_c)
        h1, h2 = lax.fori_loop(0, T, body, (h1, h2), unroll=2)

    if Hp > H:
        out_ref[...] = jnp.concatenate(
            [h2, jnp.zeros((tn, Hp - H), jnp.float32)], axis=1)
    else:
        out_ref[...] = h2


def gcn_layer_kernel(adj_ref, rsr_ref, rsc_ref, hs_ref, w_ref, b_ref, out_ref):
    """GCN layer 1 on a row tile, emitting the column-scaled result for layer 2.

    adj_ref: (tm, Np) raw adj row tile (bf16); rsr_ref/rsc_ref: (tm, 1) rsqrt
    row/col sums for these rows; hs_ref: (Np, Hp) column-scaled hidden (bf16,
    resident); w_ref: (Hp, Hp); b_ref: (1, Hp); out_ref: (tm, Hp) bf16.
    """
    ah = jnp.dot(adj_ref[...], hs_ref[...],
                 preferred_element_type=jnp.float32) * rsr_ref[...]
    h = jnp.maximum(
        jnp.dot(ah, w_ref[...], preferred_element_type=jnp.float32)
        + b_ref[...], 0.0)
    # Pre-scale by this row's column factor so pass 2 consumes it directly.
    out_ref[...] = (h * rsc_ref[...]).astype(out_ref.dtype)


def gcn_out_kernel(adj_ref, rsr_ref, h1s_ref, w_ref, b_ref, wo_ref, bo_ref,
                   out_ref):
    """GCN layer 2 + fused fc_out; lane-dense (1, tm) output block.

    h1s_ref: (Np, Hp) column-scaled layer-1 output (bf16, resident);
    wo_ref: (1, Hp) fc_out weight as a row; bo_ref: (1, 1); out_ref: (1, tm).
    """
    ah = jnp.dot(adj_ref[...], h1s_ref[...],
                 preferred_element_type=jnp.float32) * rsr_ref[...]
    h2 = jnp.maximum(
        jnp.dot(ah, w_ref[...], preferred_element_type=jnp.float32)
        + b_ref[...], 0.0)
    pred = lax.dot_general(wo_ref[...], h2,
                           dimension_numbers=(((1,), (1,)), ((), ())),
                           preferred_element_type=jnp.float32)
    out_ref[...] = pred + bo_ref[...]


# ----------------------------------------------------------------------------
# Parameter packing
# ----------------------------------------------------------------------------
def pack_gru_layer1(p):
    wir, wiz, win, whr, whz, whn, bir, biz, bin_, bhr, bhz, bhn = p
    wi = jnp.concatenate([wir, wiz, win], axis=1)                    # (F, 3H)
    wh = jnp.concatenate([whr, whz, whn], axis=1)                    # (H, 3H)
    bi = jnp.concatenate([bir + bhr, biz + bhz, bin_], axis=1)       # (1, 3H)
    return wi, wh, bi, bhn                                           # bhn (1,H)


def pack_gru_layer2(p):
    """Fused layer-2 weights: cols [r | z | n_in | n_h], rows [h1 | h2]."""
    wir, wiz, win, whr, whz, whn, bir, biz, bin_, bhr, bhz, bhn = p
    zi = jnp.zeros_like(win)
    zh = jnp.zeros_like(whn)
    top = jnp.concatenate([wir, wiz, win, zi], axis=1)               # (H, 4H)
    bot = jnp.concatenate([whr, whz, zh, whn], axis=1)               # (H, 4H)
    w2 = jnp.concatenate([top, bot], axis=0)                         # (2H, 4H)
    b2 = jnp.concatenate([bir + bhr, biz + bhz, bin_, bhn], axis=1)  # (1, 4H)
    return w2, b2


def _pad_linear(w, b, hp):
    h_in, h_out = w.shape
    wp = jnp.zeros((hp, hp), jnp.float32).at[:h_in, :h_out].set(w)
    bp = jnp.zeros((1, hp), jnp.float32).at[:, :h_out].set(b)
    return wp, bp


# ----------------------------------------------------------------------------
# pallas_call wrappers
# ----------------------------------------------------------------------------
def run_gru2(x_tiles, T, tn, n_pad, hp, g0, g1):
    wi1, wh1, bi1, bhn1 = g0
    w2, b2 = g1
    F = x_tiles.shape[1]
    H = wh1.shape[0]
    nt = n_pad // tn

    return pl.pallas_call(
        gru2_kernel,
        out_shape=jax.ShapeDtypeStruct((n_pad, hp), jnp.float32),
        grid=(nt,),
        in_specs=[
            pl.BlockSpec((T * tn, F), lambda i: (i, 0)),          # x tile
            pl.BlockSpec((F, 3 * H), lambda i: (0, 0)),           # wi1
            pl.BlockSpec((H, 3 * H), lambda i: (0, 0)),           # wh1
            pl.BlockSpec((1, 3 * H), lambda i: (0, 0)),           # bi1
            pl.BlockSpec((1, H), lambda i: (0, 0)),               # bhn1
            pl.BlockSpec((2 * H, 4 * H), lambda i: (0, 0)),       # w2 fused
            pl.BlockSpec((1, 4 * H), lambda i: (0, 0)),           # b2 fused
        ],
        out_specs=pl.BlockSpec((tn, hp), lambda i: (i, 0)),
        scratch_shapes=[pltpu.VMEM((T * tn, 3 * H), jnp.float32)],
        compiler_params=pltpu.CompilerParams(
            dimension_semantics=("parallel",),
            vmem_limit_bytes=_vmem_limit_bytes(),
        ),
    )(x_tiles, wi1, wh1, bi1, bhn1, w2, b2)


def run_gcn_pass1(adj_p, rs_row_p, rs_col_p, hs, w1p, b1p, tm):
    n_pad = adj_p.shape[0]
    hp = hs.shape[1]
    return pl.pallas_call(
        gcn_layer_kernel,
        out_shape=jax.ShapeDtypeStruct((n_pad, hp), jnp.bfloat16),
        grid=(n_pad // tm,),
        in_specs=[
            pl.BlockSpec((tm, n_pad), lambda i: (i, 0)),   # raw adj row tile
            pl.BlockSpec((tm, 1), lambda i: (i, 0)),       # rsqrt(row_sum)
            pl.BlockSpec((tm, 1), lambda i: (i, 0)),       # rsqrt(col_sum)
            pl.BlockSpec((n_pad, hp), lambda i: (0, 0)),   # scaled hidden (resident)
            pl.BlockSpec((hp, hp), lambda i: (0, 0)),      # W1 (padded)
            pl.BlockSpec((1, hp), lambda i: (0, 0)),       # b1 (padded)
        ],
        out_specs=pl.BlockSpec((tm, hp), lambda i: (i, 0)),
        compiler_params=pltpu.CompilerParams(
            dimension_semantics=("parallel",),
            vmem_limit_bytes=_vmem_limit_bytes(),
        ),
    )(adj_p, rs_row_p, rs_col_p, hs, w1p, b1p)


def run_gcn_pass2(adj_p, rs_row_p, h1s, w2p, b2p, wo_row, bo, tm):
    n_pad = adj_p.shape[0]
    hp = h1s.shape[1]
    return pl.pallas_call(
        gcn_out_kernel,
        out_shape=jax.ShapeDtypeStruct((1, n_pad), jnp.float32),
        grid=(n_pad // tm,),
        in_specs=[
            pl.BlockSpec((tm, n_pad), lambda i: (i, 0)),   # raw adj row tile
            pl.BlockSpec((tm, 1), lambda i: (i, 0)),       # rsqrt(row_sum)
            pl.BlockSpec((n_pad, hp), lambda i: (0, 0)),   # scaled h1 (resident)
            pl.BlockSpec((hp, hp), lambda i: (0, 0)),      # W2 (padded)
            pl.BlockSpec((1, hp), lambda i: (0, 0)),       # b2 (padded)
            pl.BlockSpec((1, hp), lambda i: (0, 0)),       # fc_out weight row
            pl.BlockSpec((1, 1), lambda i: (0, 0)),        # fc_out bias
        ],
        out_specs=pl.BlockSpec((1, tm), lambda i: (0, i)),
        compiler_params=pltpu.CompilerParams(
            dimension_semantics=("parallel",),
            vmem_limit_bytes=_vmem_limit_bytes(),
        ),
    )(adj_p, rs_row_p, h1s, w2p, b2p, wo_row, bo)


# ----------------------------------------------------------------------------
# Full forward pass
# ----------------------------------------------------------------------------
def gcn_model_forward(x, adj, params, d_feat):
    N = x.shape[0]
    F = d_feat
    xs = x.reshape(N, F, -1)                       # (N, F, T)
    T = xs.shape[-1]
    H = params["gcn1_w"].shape[0]

    # Tile / padding choices: >=2 grid steps whenever N allows it.
    tn = _pick_tile(N, (256, 128))                 # GRU batch tile
    tm = _pick_tile(N, (512, 256, 128))            # GCN adj row tile
    n_pad = _round_up(N, max(tn, tm))
    hp = _round_up(H, 128)                         # lane-dense GCN hidden dim

    # ---- GRU input: (N,F,T) -> (T,N,F) -> pad N -> tile-major (nt*T*tn, F)
    x_tnf = jnp.transpose(xs, (2, 0, 1))                         # (T, N, F)
    x_tnf = jnp.pad(x_tnf, ((0, 0), (0, n_pad - N), (0, 0)))
    nt = n_pad // tn
    x_tiles = (x_tnf.reshape(T, nt, tn, F)
               .transpose(1, 0, 2, 3)
               .reshape(nt * T * tn, F))

    hidden_pad = run_gru2(x_tiles, T, tn, n_pad, hp,
                          pack_gru_layer1(params["gru0"]),
                          pack_gru_layer2(params["gru1"]))       # (n_pad, hp)

    # ---- Symmetric adj normalization factors (padding rows/cols zeroed so
    #      they contribute nothing and padded outputs are sliced off).
    rs_row = lax.rsqrt(jnp.sum(adj, axis=1, keepdims=True))       # (N, 1)
    rs_col = lax.rsqrt(jnp.sum(adj, axis=0, keepdims=True)).reshape(N, 1)
    rs_row_p = jnp.pad(rs_row, ((0, n_pad - N), (0, 0)))
    rs_col_p = jnp.pad(rs_col, ((0, n_pad - N), (0, 0)))
    adj_p = jnp.pad(adj, ((0, n_pad - N), (0, n_pad - N))).astype(jnp.bfloat16)

    # Column-scaled hidden (bf16 on the MXU / HBM path, f32 accumulation).
    hs = (hidden_pad * rs_col_p).astype(jnp.bfloat16)

    w1p, b1p = _pad_linear(params["gcn1_w"], params["gcn1_b"], hp)
    w2p, b2p = _pad_linear(params["gcn2_w"], params["gcn2_b"], hp)
    wo_row = jnp.zeros((1, hp), jnp.float32).at[:, :H].set(params["fc_w"].T)
    bo = params["fc_b"]

    h1s = run_gcn_pass1(adj_p, rs_row_p, rs_col_p, hs, w1p, b1p, tm)
    pred = run_gcn_pass2(adj_p, rs_row_p, h1s, w2p, b2p, wo_row, bo, tm)

    # Matches torch .squeeze() for N > 1 (N == 1 would give shape (1,)).
    return pred[0, :N]


# ----------------------------------------------------------------------------
# Deterministic parameter init (synthetic, PyTorch-like uniform bounds)
# ----------------------------------------------------------------------------
def init_params(key, d_feat, hidden):
    def uni(k, shape, bound):
        return jax.random.uniform(k, shape, jnp.float32, -bound, bound)

    keys = iter(jax.random.split(key, 40))
    kH = 1.0 / jnp.sqrt(hidden)

    def gru_layer_params(in_dim):
        # pre-transposed: (in, H) / (H, H); biases (1, H)
        return (
            uni(next(keys), (in_dim, hidden), kH),   # W_ir^T
            uni(next(keys), (in_dim, hidden), kH),   # W_iz^T
            uni(next(keys), (in_dim, hidden), kH),   # W_in^T
            uni(next(keys), (hidden, hidden), kH),   # W_hr^T
            uni(next(keys), (hidden, hidden), kH),   # W_hz^T
            uni(next(keys), (hidden, hidden), kH),   # W_hn^T
            uni(next(keys), (1, hidden), kH),        # b_ir
            uni(next(keys), (1, hidden), kH),        # b_iz
            uni(next(keys), (1, hidden), kH),        # b_in
            uni(next(keys), (1, hidden), kH),        # b_hr
            uni(next(keys), (1, hidden), kH),        # b_hz
            uni(next(keys), (1, hidden), kH),        # b_hn
        )

    return {
        "gru0": gru_layer_params(d_feat),
        "gru1": gru_layer_params(hidden),
        "gcn1_w": uni(next(keys), (hidden, hidden), kH),
        "gcn1_b": uni(next(keys), (1, hidden), kH),
        "gcn2_w": uni(next(keys), (hidden, hidden), kH),
        "gcn2_b": uni(next(keys), (1, hidden), kH),
        "fc_w": uni(next(keys), (hidden, 1), kH),
        "fc_b": uni(next(keys), (1, 1), kH),
    }


# ----------------------------------------------------------------------------
# Pure-JAX reference (for correctness check)
# ----------------------------------------------------------------------------
def ref_forward(x, adj, params, d_feat):
    N = x.shape[0]
    xs = x.reshape(N, d_feat, -1).transpose(0, 2, 1)   # (N, T, F)
    T = xs.shape[1]

    def gru_layer(seq, p):
        wir, wiz, win, whr, whz, whn, bir, biz, bin_, bhr, bhz, bhn = p
        H = whr.shape[1]
        h = jnp.zeros((seq.shape[0], H), jnp.float32)
        outs = []
        for t in range(T):
            x_t = seq[:, t, :]
            r = jax.nn.sigmoid(x_t @ wir + bir + h @ whr + bhr)
            z = jax.nn.sigmoid(x_t @ wiz + biz + h @ whz + bhz)
            n = jnp.tanh(x_t @ win + bin_ + r * (h @ whn + bhn))
            h = (1.0 - z) * n + z * h
            outs.append(h)
        return jnp.stack(outs, axis=1)                  # (N, T, H)

    out1 = gru_layer(xs, params["gru0"])
    out2 = gru_layer(out1, params["gru1"])
    hidden = out2[:, -1, :]

    adj_n = (adj / jnp.sqrt(adj.sum(axis=1, keepdims=True))
             / jnp.sqrt(adj.sum(axis=0, keepdims=True)))
    h = jnp.maximum(adj_n @ hidden @ params["gcn1_w"] + params["gcn1_b"], 0.0)
    h = jnp.maximum(adj_n @ h @ params["gcn2_w"] + params["gcn2_b"], 0.0)
    return (h @ params["fc_w"] + params["fc_b"]).squeeze(-1)


# ----------------------------------------------------------------------------
if __name__ == "__main__":
    configs = [
        # unrolled-GRU path, non-multiple-of-128 N exercises the padding logic
        dict(d_feat=6, hidden=64, T=8, N=250),
        # fori_loop-GRU path (T > _GRU_UNROLL_T), smaller hidden, padded N
        dict(d_feat=6, hidden=32, T=20, N=130),
    ]

    key = jax.random.PRNGKey(0)
    for cfg in configs:
        key, k_x, k_adj, k_p = jax.random.split(key, 4)
        d_feat, hidden, T, N = cfg["d_feat"], cfg["hidden"], cfg["T"], cfg["N"]

        x = jax.random.normal(k_x, (N, d_feat * T), jnp.float32)
        # positive adjacency so the sqrt-normalization is well defined
        adj = jax.random.uniform(k_adj, (N, N), jnp.float32, 0.1, 1.0)
        params = init_params(k_p, d_feat, hidden)

        out = jax.block_until_ready(gcn_model_forward(x, adj, params, d_feat))
        ref = ref_forward(x, adj, params, d_feat)

        assert out.shape == (N,)
        # bf16 adj / hidden streams on the MXU path (f32 accumulation) ->
        # slightly looser tolerance than a pure-f32 comparison.
        assert jnp.allclose(out, ref, rtol=2e-2, atol=2e-2), (cfg, out, ref)

    print("KERNEL_OK")
</pallas_src>

<mosaic_0001>
module attributes {stable_mosaic.version = 11 : i64} {
  func.func @gru2_kernel(%arg0: i32, %arg1: memref<1024x6xf32, #tpu.memory_space<vmem>>, %arg2: memref<6x192xf32, #tpu.memory_space<vmem>>, %arg3: memref<64x192xf32, #tpu.memory_space<vmem>>, %arg4: memref<1x192xf32, #tpu.memory_space<vmem>>, %arg5: memref<1x64xf32, #tpu.memory_space<vmem>>, %arg6: memref<128x256xf32, #tpu.memory_space<vmem>>, %arg7: memref<1x256xf32, #tpu.memory_space<vmem>>, %arg8: memref<128x128xf32, #tpu.memory_space<vmem>>, %arg9: memref<1024x192xf32, #tpu.memory_space<vmem>>) attributes {dimension_semantics = [#tpu.dimension_semantics<parallel>], iteration_bounds = array<i64: 2>, scalar_prefetch = 0 : i64, scratch_operands = 1 : i64, tpu.core_type = #tpu.core_type<tc>, window_params = [{transform_indices = @transform_0, window_bounds = array<i64: 1024, 6>}, {pipeline_mode = #tpu.pipeline_mode<synchronous>, transform_indices = @transform_1, window_bounds = array<i64: 6, 192>}, {pipeline_mode = #tpu.pipeline_mode<synchronous>, transform_indices = @transform_2, window_bounds = array<i64: 64, 192>}, {pipeline_mode = #tpu.pipeline_mode<synchronous>, transform_indices = @transform_3, window_bounds = array<i64: 1, 192>}, {pipeline_mode = #tpu.pipeline_mode<synchronous>, transform_indices = @transform_4, window_bounds = array<i64: 1, 64>}, {pipeline_mode = #tpu.pipeline_mode<synchronous>, transform_indices = @transform_5, window_bounds = array<i64: 128, 256>}, {pipeline_mode = #tpu.pipeline_mode<synchronous>, transform_indices = @transform_6, window_bounds = array<i64: 1, 256>}, {transform_indices = @transform_7, window_bounds = array<i64: 128, 128>}]} {
    %c0 = arith.constant 0 : index
    %c0_0 = arith.constant 0 : index
    %0 = vector.load %arg1[%c0, %c0_0] : memref<1024x6xf32, #tpu.memory_space<vmem>>, vector<1024x6xf32>
    %c0_1 = arith.constant 0 : index
    %c0_2 = arith.constant 0 : index
    %1 = vector.load %arg2[%c0_1, %c0_2] : memref<6x192xf32, #tpu.memory_space<vmem>>, vector<6x192xf32>
    %cst = arith.constant dense<0.000000e+00> : vector<1024x192xf32>
    %2 = tpu.matmul %0, %1, %cst {dimension_numbers = #tpu.dot_dimension_numbers<[1], [0], [0], [1], [0, 0, 1, 1], [], []>} : vector<1024x6xf32>, vector<6x192xf32>, vector<1024x192xf32> -> vector<1024x192xf32>
    %c0_3 = arith.constant 0 : index
    %c0_4 = arith.constant 0 : index
    %3 = vector.load %arg4[%c0_3, %c0_4] : memref<1x192xf32, #tpu.memory_space<vmem>>, vector<1x192xf32>
    %4 = vector.broadcast %3 : vector<1x192xf32> to vector<1024x192xf32>
    %5 = arith.addf %2, %4 : vector<1024x192xf32>
    %c0_5 = arith.constant 0 : index
    %c0_6 = arith.constant 0 : index
    %6 = vector.load %arg9[%c0_5, %c0_6] : memref<1024x192xf32, #tpu.memory_space<vmem>>, vector<1024x192xf32>
    tpu.vector_store %arg9[%c0_5, %c0_6], %5 {strides = array<i32>} : memref<1024x192xf32, #tpu.memory_space<vmem>>, vector<1024x192xf32>,
    %c0_7 = arith.constant 0 : index
    %c0_8 = arith.constant 0 : index
    %7 = vector.load %arg3[%c0_7, %c0_8] : memref<64x192xf32, #tpu.memory_space<vmem>>, vector<64x192xf32>
    %c0_9 = arith.constant 0 : index
    %c0_10 = arith.constant 0 : index
    %8 = vector.load %arg6[%c0_9, %c0_10] : memref<128x256xf32, #tpu.memory_space<vmem>>, vector<128x256xf32>
    %c0_11 = arith.constant 0 : index
    %c0_12 = arith.constant 0 : index
    %9 = vector.load %arg5[%c0_11, %c0_12] : memref<1x64xf32, #tpu.memory_space<vmem>>, vector<1x64xf32>
    %10 = vector.shape_cast %9 : vector<1x64xf32> to vector<1x64xf32>
    %11 = vector.broadcast %10 : vector<1x64xf32> to vector<128x64xf32>
    %c0_13 = arith.constant 0 : index
    %c0_14 = arith.constant 0 : index
    %12 = vector.load %arg7[%c0_13, %c0_14] : memref<1x256xf32, #tpu.memory_space<vmem>>, vector<1x256xf32>
    %13 = vector.shape_cast %12 : vector<1x256xf32> to vector<1x256xf32>
    %14 = vector.broadcast %13 : vector<1x256xf32> to vector<128x256xf32>
    %cst_15 = arith.constant 0.000000e+00 : f32
    %15 = vector.broadcast %cst_15 : f32 to vector<128x64xf32>
    %cst_16 = arith.constant 0.000000e+00 : f32
    %16 = vector.broadcast %cst_16 : f32 to vector<128x64xf32>
    %c0_17 = arith.constant 0 : index
    %c0_18 = arith.constant 0 : index
    %17 = vector.load %arg9[%c0_17, %c0_18] : memref<1024x192xf32, #tpu.memory_space<vmem>>, vector<128x192xf32>
    %cst_19 = arith.constant dense<0.000000e+00> : vector<128x192xf32>
    %18 = tpu.matmul %15, %7, %cst_19 {dimension_numbers = #tpu.dot_dimension_numbers<[1], [0], [0], [1], [0, 0, 1, 1], [], []>} : vector<128x64xf32>, vector<64x192xf32>, vector<128x192xf32> -> vector<128x192xf32>
    %19 = vector.extract_strided_slice %17 {offsets = [0, 0], sizes = [128, 64], strides = [1, 1]} : vector<128x192xf32> to vector<128x64xf32>
    %20 = vector.extract_strided_slice %18 {offsets = [0, 0], sizes = [128, 64], strides = [1, 1]} : vector<128x192xf32> to vector<128x64xf32>
    %21 = arith.addf %19, %20 : vector<128x64xf32>
    %22 = arith.negf %21 : vector<128x64xf32>
    %23 = math.exp %22 : vector<128x64xf32>
    %cst_20 = arith.constant 1.000000e+00 : f32
    %24 = vector.broadcast %cst_20 : f32 to vector<128x64xf32>
    %25 = arith.addf %24, %23 : vector<128x64xf32>
    %26 = arith.divf %24, %25 : vector<128x64xf32>
    %27 = vector.extract_strided_slice %17 {offsets = [0, 64], sizes = [128, 64], strides = [1, 1]} : vector<128x192xf32> to vector<128x64xf32>
    %28 = vector.extract_strided_slice %18 {offsets = [0, 64], sizes = [128, 64], strides = [1, 1]} : vector<128x192xf32> to vector<128x64xf32>
    %29 = arith.addf %27, %28 : vector<128x64xf32>
    %30 = arith.negf %29 : vector<128x64xf32>
    %31 = math.exp %30 : vector<128x64xf32>
    %cst_21 = arith.constant 1.000000e+00 : f32
    %32 = vector.broadcast %cst_21 : f32 to vector<128x64xf32>
    %33 = arith.addf %32, %31 : vector<128x64xf32>
    %34 = arith.divf %32, %33 : vector<128x64xf32>
    %35 = vector.extract_strided_slice %17 {offsets = [0, 128], sizes = [128, 64], strides = [1, 1]} : vector<128x192xf32> to vector<128x64xf32>
    %36 = vector.extract_strided_slice %18 {offsets = [0, 128], sizes = [128, 64], strides = [1, 1]} : vector<128x192xf32> to vector<128x64xf32>
    %37 = arith.addf %36, %11 : vector<128x64xf32>
    %38 = arith.mulf %26, %37 : vector<128x64xf32>
    %39 = arith.addf %35, %38 : vector<128x64xf32>
    %40 = math.tanh %39 : vector<128x64xf32>
    %cst_22 = arith.constant 1.000000e+00 : f32
    %41 = vector.broadcast %cst_22 : f32 to vector<128x64xf32>
    %42 = arith.subf %41, %34 : vector<128x64xf32>
    %43 = arith.mulf %42, %40 : vector<128x64xf32>
    %44 = arith.mulf %34, %15 : vector<128x64xf32>
    %45 = arith.addf %43, %44 : vector<128x64xf32>
    %46 = tpu.concatenate %45, %16 in 1 : vector<128x64xf32>, vector<128x64xf32> -> vector<128x128xf32>
    %cst_23 = arith.constant dense<0.000000e+00> : vector<128x256xf32>
    %47 = tpu.matmul %46, %8, %cst_23 {dimension_numbers = #tpu.dot_dimension_numbers<[1], [0], [0], [1], [0, 0, 1, 1], [], []>} : vector<128x128xf32>, vector<128x256xf32>, vector<128x256xf32> -> vector<128x256xf32>
    %48 = arith.addf %47, %14 : vector<128x256xf32>
    %49 = vector.extract_strided_slice %48 {offsets = [0, 0], sizes = [128, 64], strides = [1, 1]} : vector<128x256xf32> to vector<128x64xf32>
    %50 = arith.negf %49 : vector<128x64xf32>
    %51 = math.exp %50 : vector<128x64xf32>
    %cst_24 = arith.constant 1.000000e+00 : f32
    %52 = vector.broadcast %cst_24 : f32 to vector<128x64xf32>
    %53 = arith.addf %52, %51 : vector<128x64xf32>
    %54 = arith.divf %52, %53 : vector<128x64xf32>
    %55 = vector.extract_strided_slice %48 {offsets = [0, 64], sizes = [128, 64], strides = [1, 1]} : vector<128x256xf32> to vector<128x64xf32>
    %56 = arith.negf %55 : vector<128x64xf32>
    %57 = math.exp %56 : vector<128x64xf32>
    %cst_25 = arith.constant 1.000000e+00 : f32
    %58 = vector.broadcast %cst_25 : f32 to vector<128x64xf32>
    %59 = arith.addf %58, %57 : vector<128x64xf32>
    %60 = arith.divf %58, %59 : vector<128x64xf32>
    %61 = vector.extract_strided_slice %48 {offsets = [0, 128], sizes = [128, 64], strides = [1, 1]} : vector<128x256xf32> to vector<128x64xf32>
    %62 = vector.extract_strided_slice %48 {offsets = [0, 192], sizes = [128, 64], strides = [1, 1]} : vector<128x256xf32> to vector<128x64xf32>
    %63 = arith.mulf %54, %62 : vector<128x64xf32>
    %64 = arith.addf %61, %63 : vector<128x64xf32>
    %65 = math.tanh %64 : vector<128x64xf32>
    %cst_26 = arith.constant 1.000000e+00 : f32
    %66 = vector.broadcast %cst_26 : f32 to vector<128x64xf32>
    %67 = arith.subf %66, %60 : vector<128x64xf32>
    %68 = arith.mulf %67, %65 : vector<128x64xf32>
    %69 = arith.mulf %60, %16 : vector<128x64xf32>
    %70 = arith.addf %68, %69 : vector<128x64xf32>
    %c128 = arith.constant 128 : index
    %c0_27 = arith.constant 0 : index
    %71 = vector.load %arg9[%c128, %c0_27] : memref<1024x192xf32, #tpu.memory_space<vmem>>, vector<128x192xf32>
    %cst_28 = arith.constant dense<0.000000e+00> : vector<128x192xf32>
    %72 = tpu.matmul %45, %7, %cst_28 {dimension_numbers = #tpu.dot_dimension_numbers<[1], [0], [0], [1], [0, 0, 1, 1], [], []>} : vector<128x64xf32>, vector<64x192xf32>, vector<128x192xf32> -> vector<128x192xf32>
    %73 = vector.extract_strided_slice %71 {offsets = [0, 0], sizes = [128, 64], strides = [1, 1]} : vector<128x192xf32> to vector<128x64xf32>
    %74 = vector.extract_strided_slice %72 {offsets = [0, 0], sizes = [128, 64], strides = [1, 1]} : vector<128x192xf32> to vector<128x64xf32>
    %75 = arith.addf %73, %74 : vector<128x64xf32>
    %76 = arith.negf %75 : vector<128x64xf32>
    %77 = math.exp %76 : vector<128x64xf32>
    %cst_29 = arith.constant 1.000000e+00 : f32
    %78 = vector.broadcast %cst_29 : f32 to vector<128x64xf32>
    %79 = arith.addf %78, %77 : vector<128x64xf32>
    %80 = arith.divf %78, %79 : vector<128x64xf32>
    %81 = vector.extract_strided_slice %71 {offsets = [0, 64], sizes = [128, 64], strides = [1, 1]} : vector<128x192xf32> to vector<128x64xf32>
    %82 = vector.extract_strided_slice %72 {offsets = [0, 64], sizes = [128, 64], strides = [1, 1]} : vector<128x192xf32> to vector<128x64xf32>
    %83 = arith.addf %81, %82 : vector<128x64xf32>
    %84 = arith.negf %83 : vector<128x64xf32>
    %85 = math.exp %84 : vector<128x64xf32>
    %cst_30 = arith.constant 1.000000e+00 : f32
    %86 = vector.broadcast %cst_30 : f32 to vector<128x64xf32>
    %87 = arith.addf %86, %85 : vector<128x64xf32>
    %88 = arith.divf %86, %87 : vector<128x64xf32>
    %89 = vector.extract_strided_slice %71 {offsets = [0, 128], sizes = [128, 64], strides = [1, 1]} : vector<128x192xf32> to vector<128x64xf32>
    %90 = vector.extract_strided_slice %72 {offsets = [0, 128], sizes = [128, 64], strides = [1, 1]} : vector<128x192xf32> to vector<128x64xf32>
    %91 = arith.addf %90, %11 : vector<128x64xf32>
    %92 = arith.mulf %80, %91 : vector<128x64xf32>
    %93 = arith.addf %89, %92 : vector<128x64xf32>
    %94 = math.tanh %93 : vector<128x64xf32>
    %cst_31 = arith.constant 1.000000e+00 : f32
    %95 = vector.broadcast %cst_31 : f32 to vector<128x64xf32>
    %96 = arith.subf %95, %88 : vector<128x64xf32>
    %97 = arith.mulf %96, %94 : vector<128x64xf32>
    %98 = arith.mulf %88, %45 : vector<128x64xf32>
    %99 = arith.addf %97, %98 : vector<128x64xf32>
    %100 = tpu.concatenate %99, %70 in 1 : vector<128x64xf32>, vector<128x64xf32> -> vector<128x128xf32>
    %cst_32 = arith.constant dense<0.000000e+00> : vector<128x256xf32>
    %101 = tpu.matmul %100, %8, %cst_32 {dimension_numbers = #tpu.dot_dimension_numbers<[1], [0], [0], [1], [0, 0, 1, 1], [], []>} : vector<128x128xf32>, vector<128x256xf32>, vector<128x256xf32> -> vector<128x256xf32>
    %102 = arith.addf %101, %14 : vector<128x256xf32>
    %103 = vector.extract_strided_slice %102 {offsets = [0, 0], sizes = [128, 64], strides = [1, 1]} : vector<128x256xf32> to vector<128x64xf32>
    %104 = arith.negf %103 : vector<128x64xf32>
    %105 = math.exp %104 : vector<128x64xf32>
    %cst_33 = arith.constant 1.000000e+00 : f32
    %106 = vector.broadcast %cst_33 : f32 to vector<128x64xf32>
    %107 = arith.addf %106, %105 : vector<128x64xf32>
    %108 = arith.divf %106, %107 : vector<128x64xf32>
    %109 = vector.extract_strided_slice %102 {offsets = [0, 64], sizes = [128, 64], strides = [1, 1]} : vector<128x256xf32> to vector<128x64xf32>
    %110 = arith.negf %109 : vector<128x64xf32>
    %111 = math.exp %110 : vector<128x64xf32>
    %cst_34 = arith.constant 1.000000e+00 : f32
    %112 = vector.broadcast %cst_34 : f32 to vector<128x64xf32>
    %113 = arith.addf %112, %111 : vector<128x64xf32>
    %114 = arith.divf %112, %113 : vector<128x64xf32>
    %115 = vector.extract_strided_slice %102 {offsets = [0, 128], sizes = [128, 64], strides = [1, 1]} : vector<128x256xf32> to vector<128x64xf32>
    %116 = vector.extract_strided_slice %102 {offsets = [0, 192], sizes = [128, 64], strides = [1, 1]} : vector<128x256xf32> to vector<128x64xf32>
    %117 = arith.mulf %108, %116 : vector<128x64xf32>
    %118 = arith.addf %115, %117 : vector<128x64xf32>
    %119 = math.tanh %118 : vector<128x64xf32>
    %cst_35 = arith.constant 1.000000e+00 : f32
    %120 = vector.broadcast %cst_35 : f32 to vector<128x64xf32>
    %121 = arith.subf %120, %114 : vector<128x64xf32>
    %122 = arith.mulf %121, %119 : vector<128x64xf32>
    %123 = arith.mulf %114, %70 : vector<128x64xf32>
    %124 = arith.addf %122, %123 : vector<128x64xf32>
    %c256 = arith.constant 256 : index
    %c0_36 = arith.constant 0 : index
    %125 = vector.load %arg9[%c256, %c0_36] : memref<1024x192xf32, #tpu.memory_space<vmem>>, vector<128x192xf32>
    %cst_37 = arith.constant dense<0.000000e+00> : vector<128x192xf32>
    %126 = tpu.matmul %99, %7, %cst_37 {dimension_numbers = #tpu.dot_dimension_numbers<[1], [0], [0], [1], [0, 0, 1, 1], [], []>} : vector<128x64xf32>, vector<64x192xf32>, vector<128x192xf32> -> vector<128x192xf32>
    %127 = vector.extract_strided_slice %125 {offsets = [0, 0], sizes = [128, 64], strides = [1, 1]} : vector<128x192xf32> to vector<128x64xf32>
    %128 = vector.extract_strided_slice %126 {offsets = [0, 0], sizes = [128, 64], strides = [1, 1]} : vector<128x192xf32> to vector<128x64xf32>
    %129 = arith.addf %127, %128 : vector<128x64xf32>
    %130 = arith.negf %129 : vector<128x64xf32>
    %131 = math.exp %130 : vector<128x64xf32>
    %cst_38 = arith.constant 1.000000e+00 : f32
    %132 = vector.broadcast %cst_38 : f32 to vector<128x64xf32>
    %133 = arith.addf %132, %131 : vector<128x64xf32>
    %134 = arith.divf %132, %133 : vector<128x64xf32>
    %135 = vector.extract_strided_slice %125 {offsets = [0, 64], sizes = [128, 64], strides = [1, 1]} : vector<128x192xf32> to vector<128x64xf32>
    %136 = vector.extract_strided_slice %126 {offsets = [0, 64], sizes = [128, 64], strides = [1, 1]} : vector<128x192xf32> to vector<128x64xf32>
    %137 = arith.addf %135, %136 : vector<128x64xf32>
    %138 = arith.negf %137 : vector<128x64xf32>
    %139 = math.exp %138 : vector<128x64xf32>
    %cst_39 = arith.constant 1.000000e+00 : f32
    %140 = vector.broadcast %cst_39 : f32 to vector<128x64xf32>
    %141 = arith.addf %140, %139 : vector<128x64xf32>
    %142 = arith.divf %140, %141 : vector<128x64xf32>
    %143 = vector.extract_strided_slice %125 {offsets = [0, 128], sizes = [128, 64], strides = [1, 1]} : vector<128x192xf32> to vector<128x64xf32>
    %144 = vector.extract_strided_slice %126 {offsets = [0, 128], sizes = [128, 64], strides = [1, 1]} : vector<128x192xf32> to vector<128x64xf32>
    %145 = arith.addf %144, %11 : vector<128x64xf32>
    %146 = arith.mulf %134, %145 : vector<128x64xf32>
    %147 = arith.addf %143, %146 : vector<128x64xf32>
    %148 = math.tanh %147 : vector<128x64xf32>
    %cst_40 = arith.constant 1.000000e+00 : f32
    %149 = vector.broadcast %cst_40 : f32 to vector<128x64xf32>
    %150 = arith.subf %149, %142 : vector<128x64xf32>
    %151 = arith.mulf %150, %148 : vector<128x64xf32>
    %152 = arith.mulf %142, %99 : vector<128x64xf32>
    %153 = arith.addf %151, %152 : vector<128x64xf32>
    %154 = tpu.concatenate %153, %124 in 1 : vector<128x64xf32>, vector<128x64xf32> -> vector<128x128xf32>
    %cst_41 = arith.constant dense<0.000000e+00> : vector<128x256xf32>
    %155 = tpu.matmul %154, %8, %cst_41 {dimension_numbers = #tpu.dot_dimension_numbers<[1], [0], [0], [1], [0, 0, 1, 1], [], []>} : vector<128x128xf32>, vector<128x256xf32>, vector<128x256xf32> -> vector<128x256xf32>
    %156 = arith.addf %155, %14 : vector<128x256xf32>
    %157 = vector.extract_strided_slice %156 {offsets = [0, 0], sizes = [128, 64], strides = [1, 1]} : vector<128x256xf32> to vector<128x64xf32>
    %158 = arith.negf %157 : vector<128x64xf32>
    %159 = math.exp %158 : vector<128x64xf32>
    %cst_42 = arith.constant 1.000000e+00 : f32
    %160 = vector.broadcast %cst_42 : f32 to vector<128x64xf32>
    %161 = arith.addf %160, %159 : vector<128x64xf32>
    %162 = arith.divf %160, %161 : vector<128x64xf32>
    %163 = vector.extract_strided_slice %156 {offsets = [0, 64], sizes = [128, 64], strides = [1, 1]} : vector<128x256xf32> to vector<128x64xf32>
    %164 = arith.negf %163 : vector<128x64xf32>
    %165 = math.exp %164 : vector<128x64xf32>
    %cst_43 = arith.constant 1.000000e+00 : f32
    %166 = vector.broadcast %cst_43 : f32 to vector<128x64xf32>
    %167 = arith.addf %166, %165 : vector<128x64xf32>
    %168 = arith.divf %166, %167 : vector<128x64xf32>
    %169 = vector.extract_strided_slice %156 {offsets = [0, 128], sizes = [128, 64], strides = [1, 1]} : vector<128x256xf32> to vector<128x64xf32>
    %170 = vector.extract_strided_slice %156 {offsets = [0, 192], sizes = [128, 64], strides = [1, 1]} : vector<128x256xf32> to vector<128x64xf32>
    %171 = arith.mulf %162, %170 : vector<128x64xf32>
    %172 = arith.addf %169, %171 : vector<128x64xf32>
    %173 = math.tanh %172 : vector<128x64xf32>
    %cst_44 = arith.constant 1.000000e+00 : f32
    %174 = vector.broadcast %cst_44 : f32 to vector<128x64xf32>
    %175 = arith.subf %174, %168 : vector<128x64xf32>
    %176 = arith.mulf %175, %173 : vector<128x64xf32>
    %177 = arith.mulf %168, %124 : vector<128x64xf32>
    %178 = arith.addf %176, %177 : vector<128x64xf32>
    %c384 = arith.constant 384 : index
    %c0_45 = arith.constant 0 : index
    %179 = vector.load %arg9[%c384, %c0_45] : memref<1024x192xf32, #tpu.memory_space<vmem>>, vector<128x192xf32>
    %cst_46 = arith.constant dense<0.000000e+00> : vector<128x192xf32>
    %180 = tpu.matmul %153, %7, %cst_46 {dimension_numbers = #tpu.dot_dimension_numbers<[1], [0], [0], [1], [0, 0, 1, 1], [], []>} : vector<128x64xf32>, vector<64x192xf32>, vector<128x192xf32> -> vector<128x192xf32>
    %181 = vector.extract_strided_slice %179 {offsets = [0, 0], sizes = [128, 64], strides = [1, 1]} : vector<128x192xf32> to vector<128x64xf32>
    %182 = vector.extract_strided_slice %180 {offsets = [0, 0], sizes = [128, 64], strides = [1, 1]} : vector<128x192xf32> to vector<128x64xf32>
    %183 = arith.addf %181, %182 : vector<128x64xf32>
    %184 = arith.negf %183 : vector<128x64xf32>
    %185 = math.exp %184 : vector<128x64xf32>
    %cst_47 = arith.constant 1.000000e+00 : f32
    %186 = vector.broadcast %cst_47 : f32 to vector<128x64xf32>
    %187 = arith.addf %186, %185 : vector<128x64xf32>
    %188 = arith.divf %186, %187 : vector<128x64xf32>
    %189 = vector.extract_strided_slice %179 {offsets = [0, 64], sizes = [128, 64], strides = [1, 1]} : vector<128x192xf32> to vector<128x64xf32>
    %190 = vector.extract_strided_slice %180 {offsets = [0, 64], sizes = [128, 64], strides = [1, 1]} : vector<128x192xf32> to vector<128x64xf32>
    %191 = arith.addf %189, %190 : vector<128x64xf32>
    %192 = arith.negf %191 : vector<128x64xf32>
    %193 = math.exp %192 : vector<128x64xf32>
    %cst_48 = arith.constant 1.000000e+00 : f32
    %194 = vector.broadcast %cst_48 : f32 to vector<128x64xf32>
    %195 = arith.addf %194, %193 : vector<128x64xf32>
    %196 = arith.divf %194, %195 : vector<128x64xf32>
    %197 = vector.extract_strided_slice %179 {offsets = [0, 128], sizes = [128, 64], strides = [1, 1]} : vector<128x192xf32> to vector<128x64xf32>
    %198 = vector.extract_strided_slice %180 {offsets = [0, 128], sizes = [128, 64], strides = [1, 1]} : vector<128x192xf32> to vector<128x64xf32>
    %199 = arith.addf %198, %11 : vector<128x64xf32>
    %200 = arith.mulf %188, %199 : vector<128x64xf32>
    %201 = arith.addf %197, %200 : vector<128x64xf32>
    %202 = math.tanh %201 : vector<128x64xf32>
    %cst_49 = arith.constant 1.000000e+00 : f32
    %203 = vector.broadcast %cst_49 : f32 to vector<128x64xf32>
    %204 = arith.subf %203, %196 : vector<128x64xf32>
    %205 = arith.mulf %204, %202 : vector<128x64xf32>
    %206 = arith.mulf %196, %153 : vector<128x64xf32>
    %207 = arith.addf %205, %206 : vector<128x64xf32>
    %208 = tpu.concatenate %207, %178 in 1 : vector<128x64xf32>, vector<128x64xf32> -> vector<128x128xf32>
    %cst_50 = arith.constant dense<0.000000e+00> : vector<128x256xf32>
    %209 = tpu.matmul %208, %8, %cst_50 {dimension_numbers = #tpu.dot_dimension_numbers<[1], [0], [0], [1], [0, 0, 1, 1], [], []>} : vector<128x128xf32>, vector<128x256xf32>, vector<128x256xf32> -> vector<128x256xf32>
    %210 = arith.addf %209, %14 : vector<128x256xf32>
    %211 = vector.extract_strided_slice %210 {offsets = [0, 0], sizes = [128, 64], strides = [1, 1]} : vector<128x256xf32> to vector<128x64xf32>
    %212 = arith.negf %211 : vector<128x64xf32>
    %213 = math.exp %212 : vector<128x64xf32>
    %cst_51 = arith.constant 1.000000e+00 : f32
    %214 = vector.broadcast %cst_51 : f32 to vector<128x64xf32>
    %215 = arith.addf %214, %213 : vector<128x64xf32>
    %216 = arith.divf %214, %215 : vector<128x64xf32>
    %217 = vector.extract_strided_slice %210 {offsets = [0, 64], sizes = [128, 64], strides = [1, 1]} : vector<128x256xf32> to vector<128x64xf32>
    %218 = arith.negf %217 : vector<128x64xf32>
    %219 = math.exp %218 : vector<128x64xf32>
    %cst_52 = arith.constant 1.000000e+00 : f32
    %220 = vector.broadcast %cst_52 : f32 to vector<128x64xf32>
    %221 = arith.addf %220, %219 : vector<128x64xf32>
    %222 = arith.divf %220, %221 : vector<128x64xf32>
    %223 = vector.extract_strided_slice %210 {offsets = [0, 128], sizes = [128, 64], strides = [1, 1]} : vector<128x256xf32> to vector<128x64xf32>
    %224 = vector.extract_strided_slice %210 {offsets = [0, 192], sizes = [128, 64], strides = [1, 1]} : vector<128x256xf32> to vector<128x64xf32>
    %225 = arith.mulf %216, %224 : vector<128x64xf32>
    %226 = arith.addf %223, %225 : vector<128x64xf32>
    %227 = math.tanh %226 : vector<128x64xf32>
    %cst_53 = arith.constant 1.000000e+00 : f32
    %228 = vector.broadcast %cst_53 : f32 to vector<128x64xf32>
    %229 = arith.subf %228, %222 : vector<128x64xf32>
    %230 = arith.mulf %229, %227 : vector<128x64xf32>
    %231 = arith.mulf %222, %178 : vector<128x64xf32>
    %232 = arith.addf %230, %231 : vector<128x64xf32>
    %c512 = arith.constant 512 : index
    %c0_54 = arith.constant 0 : index
    %233 = vector.load %arg9[%c512, %c0_54] : memref<1024x192xf32, #tpu.memory_space<vmem>>, vector<128x192xf32>
    %cst_55 = arith.constant dense<0.000000e+00> : vector<128x192xf32>
    %234 = tpu.matmul %207, %7, %cst_55 {dimension_numbers = #tpu.dot_dimension_numbers<[1], [0], [0], [1], [0, 0, 1, 1], [], []>} : vector<128x64xf32>, vector<64x192xf32>, vector<128x192xf32> -> vector<128x192xf32>
    %235 = vector.extract_strided_slice %233 {offsets = [0, 0], sizes = [128, 64], strides = [1, 1]} : vector<128x192xf32> to vector<128x64xf32>
    %236 = vector.extract_strided_slice %234 {offsets = [0, 0], sizes = [128, 64], strides = [1, 1]} : vector<128x192xf32> to vector<128x64xf32>
    %237 = arith.addf %235, %236 : vector<128x64xf32>
    %238 = arith.negf %237 : vector<128x64xf32>
    %239 = math.exp %238 : vector<128x64xf32>
    %cst_56 = arith.constant 1.000000e+00 : f32
    %240 = vector.broadcast %cst_56 : f32 to vector<128x64xf32>
    %241 = arith.addf %240, %239 : vector<128x64xf32>
    %242 = arith.divf %240, %241 : vector<128x64xf32>
    %243 = vector.extract_strided_slice %233 {offsets = [0, 64], sizes = [128, 64], strides = [1, 1]} : vector<128x192xf32> to vector<128x64xf32>
    %244 = vector.extract_strided_slice %234 {offsets = [0, 64], sizes = [128, 64], strides = [1, 1]} : vector<128x192xf32> to vector<128x64xf32>
    %245 = arith.addf %243, %244 : vector<128x64xf32>
    %246 = arith.negf %245 : vector<128x64xf32>
    %247 = math.exp %246 : vector<128x64xf32>
    %cst_57 = arith.constant 1.000000e+00 : f32
    %248 = vector.broadcast %cst_57 : f32 to vector<128x64xf32>
    %249 = arith.addf %248, %247 : vector<128x64xf32>
    %250 = arith.divf %248, %249 : vector<128x64xf32>
    %251 = vector.extract_strided_slice %233 {offsets = [0, 128], sizes = [128, 64], strides = [1, 1]} : vector<128x192xf32> to vector<128x64xf32>
    %252 = vector.extract_strided_slice %234 {offsets = [0, 128], sizes = [128, 64], strides = [1, 1]} : vector<128x192xf32> to vector<128x64xf32>
    %253 = arith.addf %252, %11 : vector<128x64xf32>
    %254 = arith.mulf %242, %253 : vector<128x64xf32>
    %255 = arith.addf %251, %254 : vector<128x64xf32>
    %256 = math.tanh %255 : vector<128x64xf32>
    %cst_58 = arith.constant 1.000000e+00 : f32
    %257 = vector.broadcast %cst_58 : f32 to vector<128x64xf32>
    %258 = arith.subf %257, %250 : vector<128x64xf32>
    %259 = arith.mulf %258, %256 : vector<128x64xf32>
    %260 = arith.mulf %250, %207 : vector<128x64xf32>
    %261 = arith.addf %259, %260 : vector<128x64xf32>
    %262 = tpu.concatenate %261, %232 in 1 : vector<128x64xf32>, vector<128x64xf32> -> vector<128x128xf32>
    %cst_59 = arith.constant dense<0.000000e+00> : vector<128x256xf32>
    %263 = tpu.matmul %262, %8, %cst_59 {dimension_numbers = #tpu.dot_dimension_numbers<[1], [0], [0], [1], [0, 0, 1, 1], [], []>} : vector<128x128xf32>, vector<128x256xf32>, vector<128x256xf32> -> vector<128x256xf32>
    %264 = arith.addf %263, %14 : vector<128x256xf32>
    %265 = vector.extract_strided_slice %264 {offsets = [0, 0], sizes = [128, 64], strides = [1, 1]} : vector<128x256xf32> to vector<128x64xf32>
    %266 = arith.negf %265 : vector<128x64xf32>
    %267 = math.exp %266 : vector<128x64xf32>
    %cst_60 = arith.constant 1.000000e+00 : f32
    %268 = vector.broadcast %cst_60 : f32 to vector<128x64xf32>
    %269 = arith.addf %268, %267 : vector<128x64xf32>
    %270 = arith.divf %268, %269 : vector<128x64xf32>
    %271 = vector.extract_strided_slice %264 {offsets = [0, 64], sizes = [128, 64], strides = [1, 1]} : vector<128x256xf32> to vector<128x64xf32>
    %272 = arith.negf %271 : vector<128x64xf32>
    %273 = math.exp %272 : vector<128x64xf32>
    %cst_61 = arith.constant 1.000000e+00 : f32
    %274 = vector.broadcast %cst_61 : f32 to vector<128x64xf32>
    %275 = arith.addf %274, %273 : vector<128x64xf32>
    %276 = arith.divf %274, %275 : vector<128x64xf32>
    %277 = vector.extract_strided_slice %264 {offsets = [0, 128], sizes = [128, 64], strides = [1, 1]} : vector<128x256xf32> to vector<128x64xf32>
    %278 = vector.extract_strided_slice %264 {offsets = [0, 192], sizes = [128, 64], strides = [1, 1]} : vector<128x256xf32> to vector<128x64xf32>
    %279 = arith.mulf %270, %278 : vector<128x64xf32>
    %280 = arith.addf %277, %279 : vector<128x64xf32>
    %281 = math.tanh %280 : vector<128x64xf32>
    %cst_62 = arith.constant 1.000000e+00 : f32
    %282 = vector.broadcast %cst_62 : f32 to vector<128x64xf32>
    %283 = arith.subf %282, %276 : vector<128x64xf32>
    %284 = arith.mulf %283, %281 : vector<128x64xf32>
    %285 = arith.mulf %276, %232 : vector<128x64xf32>
    %286 = arith.addf %284, %285 : vector<128x64xf32>
    %c640 = arith.constant 640 : index
    %c0_63 = arith.constant 0 : index
    %287 = vector.load %arg9[%c640, %c0_63] : memref<1024x192xf32, #tpu.memory_space<vmem>>, vector<128x192xf32>
    %cst_64 = arith.constant dense<0.000000e+00> : vector<128x192xf32>
    %288 = tpu.matmul %261, %7, %cst_64 {dimension_numbers = #tpu.dot_dimension_numbers<[1], [0], [0], [1], [0, 0, 1, 1], [], []>} : vector<128x64xf32>, vector<64x192xf32>, vector<128x192xf32> -> vector<128x192xf32>
    %289 = vector.extract_strided_slice %287 {offsets = [0, 0], sizes = [128, 64], strides = [1, 1]} : vector<128x192xf32> to vector<128x64xf32>
    %290 = vector.extract_strided_slice %288 {offsets = [0, 0], sizes = [128, 64], strides = [1, 1]} : vector<128x192xf32> to vector<128x64xf32>
    %291 = arith.addf %289, %290 : vector<128x64xf32>
    %292 = arith.negf %291 : vector<128x64xf32>
    %293 = math.exp %292 : vector<128x64xf32>
    %cst_65 = arith.constant 1.000000e+00 : f32
    %294 = vector.broadcast %cst_65 : f32 to vector<128x64xf32>
    %295 = arith.addf %294, %293 : vector<128x64xf32>
    %296 = arith.divf %294, %295 : vector<128x64xf32>
    %297 = vector.extract_strided_slice %287 {offsets = [0, 64], sizes = [128, 64], strides = [1, 1]} : vector<128x192xf32> to vector<128x64xf32>
    %298 = vector.extract_strided_slice %288 {offsets = [0, 64], sizes = [128, 64], strides = [1, 1]} : vector<128x192xf32> to vector<128x64xf32>
    %299 = arith.addf %297, %298 : vector<128x64xf32>
    %300 = arith.negf %299 : vector<128x64xf32>
    %301 = math.exp %300 : vector<128x64xf32>
    %cst_66 = arith.constant 1.000000e+00 : f32
    %302 = vector.broadcast %cst_66 : f32 to vector<128x64xf32>
    %303 = arith.addf %302, %301 : vector<128x64xf32>
    %304 = arith.divf %302, %303 : vector<128x64xf32>
    %305 = vector.extract_strided_slice %287 {offsets = [0, 128], sizes = [128, 64], strides = [1, 1]} : vector<128x192xf32> to vector<128x64xf32>
    %306 = vector.extract_strided_slice %288 {offsets = [0, 128], sizes = [128, 64], strides = [1, 1]} : vector<128x192xf32> to vector<128x64xf32>
    %307 = arith.addf %306, %11 : vector<128x64xf32>
    %308 = arith.mulf %296, %307 : vector<128x64xf32>
    %309 = arith.addf %305, %308 : vector<128x64xf32>
    %310 = math.tanh %309 : vector<128x64xf32>
    %cst_67 = arith.constant 1.000000e+00 : f32
    %311 = vector.broadcast %cst_67 : f32 to vector<128x64xf32>
    %312 = arith.subf %311, %304 : vector<128x64xf32>
    %313 = arith.mulf %312, %310 : vector<128x64xf32>
    %314 = arith.mulf %304, %261 : vector<128x64xf32>
    %315 = arith.addf %313, %314 : vector<128x64xf32>
    %316 = tpu.concatenate %315, %286 in 1 : vector<128x64xf32>, vector<128x64xf32> -> vector<128x128xf32>
    %cst_68 = arith.constant dense<0.000000e+00> : vector<128x256xf32>
    %317 = tpu.matmul %316, %8, %cst_68 {dimension_numbers = #tpu.dot_dimension_numbers<[1], [0], [0], [1], [0, 0, 1, 1], [], []>} : vector<128x128xf32>, vector<128x256xf32>, vector<128x256xf32> -> vector<128x256xf32>
    %318 = arith.addf %317, %14 : vector<128x256xf32>
    %319 = vector.extract_strided_slice %318 {offsets = [0, 0], sizes = [128, 64], strides = [1, 1]} : vector<128x256xf32> to vector<128x64xf32>
    %320 = arith.negf %319 : vector<128x64xf32>
    %321 = math.exp %320 : vector<128x64xf32>
    %cst_69 = arith.constant 1.000000e+00 : f32
    %322 = vector.broadcast %cst_69 : f32 to vector<128x64xf32>
    %323 = arith.addf %322, %321 : vector<128x64xf32>
    %324 = arith.divf %322, %323 : vector<128x64xf32>
    %325 = vector.extract_strided_slice %318 {offsets = [0, 64], sizes = [128, 64], strides = [1, 1]} : vector<128x256xf32> to vector<128x64xf32>
    %326 = arith.negf %325 : vector<128x64xf32>
    %327 = math.exp %326 : vector<128x64xf32>
    %cst_70 = arith.constant 1.000000e+00 : f32
    %328 = vector.broadcast %cst_70 : f32 to vector<128x64xf32>
    %329 = arith.addf %328, %327 : vector<128x64xf32>
    %330 = arith.divf %328, %329 : vector<128x64xf32>
    %331 = vector.extract_strided_slice %318 {offsets = [0, 128], sizes = [128, 64], strides = [1, 1]} : vector<128x256xf32> to vector<128x64xf32>
    %332 = vector.extract_strided_slice %318 {offsets = [0, 192], sizes = [128, 64], strides = [1, 1]} : vector<128x256xf32> to vector<128x64xf32>
    %333 = arith.mulf %324, %332 : vector<128x64xf32>
    %334 = arith.addf %331, %333 : vector<128x64xf32>
    %335 = math.tanh %334 : vector<128x64xf32>
    %cst_71 = arith.constant 1.000000e+00 : f32
    %336 = vector.broadcast %cst_71 : f32 to vector<128x64xf32>
    %337 = arith.subf %336, %330 : vector<128x64xf32>
    %338 = arith.mulf %337, %335 : vector<128x64xf32>
    %339 = arith.mulf %330, %286 : vector<128x64xf32>
    %340 = arith.addf %338, %339 : vector<128x64xf32>
    %c768 = arith.constant 768 : index
    %c0_72 = arith.constant 0 : index
    %341 = vector.load %arg9[%c768, %c0_72] : memref<1024x192xf32, #tpu.memory_space<vmem>>, vector<128x192xf32>
    %cst_73 = arith.constant dense<0.000000e+00> : vector<128x192xf32>
    %342 = tpu.matmul %315, %7, %cst_73 {dimension_numbers = #tpu.dot_dimension_numbers<[1], [0], [0], [1], [0, 0, 1, 1], [], []>} : vector<128x64xf32>, vector<64x192xf32>, vector<128x192xf32> -> vector<128x192xf32>
    %343 = vector.extract_strided_slice %341 {offsets = [0, 0], sizes = [128, 64], strides = [1, 1]} : vector<128x192xf32> to vector<128x64xf32>
    %344 = vector.extract_strided_slice %342 {offsets = [0, 0], sizes = [128, 64], strides = [1, 1]} : vector<128x192xf32> to vector<128x64xf32>
    %345 = arith.addf %343, %344 : vector<128x64xf32>
    %346 = arith.negf %345 : vector<128x64xf32>
    %347 = math.exp %346 : vector<128x64xf32>
    %cst_74 = arith.constant 1.000000e+00 : f32
    %348 = vector.broadcast %cst_74 : f32 to vector<128x64xf32>
    %349 = arith.addf %348, %347 : vector<128x64xf32>
    %350 = arith.divf %348, %349 : vector<128x64xf32>
    %351 = vector.extract_strided_slice %341 {offsets = [0, 64], sizes = [128, 64], strides = [1, 1]} : vector<128x192xf32> to vector<128x64xf32>
    %352 = vector.extract_strided_slice %342 {offsets = [0, 64], sizes = [128, 64], strides = [1, 1]} : vector<128x192xf32> to vector<128x64xf32>
    %353 = arith.addf %351, %352 : vector<128x64xf32>
    %354 = arith.negf %353 : vector<128x64xf32>
    %355 = math.exp %354 : vector<128x64xf32>
    %cst_75 = arith.constant 1.000000e+00 : f32
    %356 = vector.broadcast %cst_75 : f32 to vector<128x64xf32>
    %357 = arith.addf %356, %355 : vector<128x64xf32>
    %358 = arith.divf %356, %357 : vector<128x64xf32>
    %359 = vector.extract_strided_slice %341 {offsets = [0, 128], sizes = [128, 64], strides = [1, 1]} : vector<128x192xf32> to vector<128x64xf32>
    %360 = vector.extract_strided_slice %342 {offsets = [0, 128], sizes = [128, 64], strides = [1, 1]} : vector<128x192xf32> to vector<128x64xf32>
    %361 = arith.addf %360, %11 : vector<128x64xf32>
    %362 = arith.mulf %350, %361 : vector<128x64xf32>
    %363 = arith.addf %359, %362 : vector<128x64xf32>
    %364 = math.tanh %363 : vector<128x64xf32>
    %cst_76 = arith.constant 1.000000e+00 : f32
    %365 = vector.broadcast %cst_76 : f32 to vector<128x64xf32>
    %366 = arith.subf %365, %358 : vector<128x64xf32>
    %367 = arith.mulf %366, %364 : vector<128x64xf32>
    %368 = arith.mulf %358, %315 : vector<128x64xf32>
    %369 = arith.addf %367, %368 : vector<128x64xf32>
    %370 = tpu.concatenate %369, %340 in 1 : vector<128x64xf32>, vector<128x64xf32> -> vector<128x128xf32>
    %cst_77 = arith.constant dense<0.000000e+00> : vector<128x256xf32>
    %371 = tpu.matmul %370, %8, %cst_77 {dimension_numbers = #tpu.dot_dimension_numbers<[1], [0], [0], [1], [0, 0, 1, 1], [], []>} : vector<128x128xf32>, vector<128x256xf32>, vector<128x256xf32> -> vector<128x256xf32>
    %372 = arith.addf %371, %14 : vector<128x256xf32>
    %373 = vector.extract_strided_slice %372 {offsets = [0, 0], sizes = [128, 64], strides = [1, 1]} : vector<128x256xf32> to vector<128x64xf32>
    %374 = arith.negf %373 : vector<128x64xf32>
    %375 = math.exp %374 : vector<128x64xf32>
    %cst_78 = arith.constant 1.000000e+00 : f32
    %376 = vector.broadcast %cst_78 : f32 to vector<128x64xf32>
    %377 = arith.addf %376, %375 : vector<128x64xf32>
    %378 = arith.divf %376, %377 : vector<128x64xf32>
    %379 = vector.extract_strided_slice %372 {offsets = [0, 64], sizes = [128, 64], strides = [1, 1]} : vector<128x256xf32> to vector<128x64xf32>
    %380 = arith.negf %379 : vector<128x64xf32>
    %381 = math.exp %380 : vector<128x64xf32>
    %cst_79 = arith.constant 1.000000e+00 : f32
    %382 = vector.broadcast %cst_79 : f32 to vector<128x64xf32>
    %383 = arith.addf %382, %381 : vector<128x64xf32>
    %384 = arith.divf %382, %383 : vector<128x64xf32>
    %385 = vector.extract_strided_slice %372 {offsets = [0, 128], sizes = [128, 64], strides = [1, 1]} : vector<128x256xf32> to vector<128x64xf32>
    %386 = vector.extract_strided_slice %372 {offsets = [0, 192], sizes = [128, 64], strides = [1, 1]} : vector<128x256xf32> to vector<128x64xf32>
    %387 = arith.mulf %378, %386 : vector<128x64xf32>
    %388 = arith.addf %385, %387 : vector<128x64xf32>
    %389 = math.tanh %388 : vector<128x64xf32>
    %cst_80 = arith.constant 1.000000e+00 : f32
    %390 = vector.broadcast %cst_80 : f32 to vector<128x64xf32>
    %391 = arith.subf %390, %384 : vector<128x64xf32>
    %392 = arith.mulf %391, %389 : vector<128x64xf32>
    %393 = arith.mulf %384, %340 : vector<128x64xf32>
    %394 = arith.addf %392, %393 : vector<128x64xf32>
    %c896 = arith.constant 896 : index
    %c0_81 = arith.constant 0 : index
    %395 = vector.load %arg9[%c896, %c0_81] : memref<1024x192xf32, #tpu.memory_space<vmem>>, vector<128x192xf32>
    %cst_82 = arith.constant dense<0.000000e+00> : vector<128x192xf32>
    %396 = tpu.matmul %369, %7, %cst_82 {dimension_numbers = #tpu.dot_dimension_numbers<[1], [0], [0], [1], [0, 0, 1, 1], [], []>} : vector<128x64xf32>, vector<64x192xf32>, vector<128x192xf32> -> vector<128x192xf32>
    %397 = vector.extract_strided_slice %395 {offsets = [0, 0], sizes = [128, 64], strides = [1, 1]} : vector<128x192xf32> to vector<128x64xf32>
    %398 = vector.extract_strided_slice %396 {offsets = [0, 0], sizes = [128, 64], strides = [1, 1]} : vector<128x192xf32> to vector<128x64xf32>
    %399 = arith.addf %397, %398 : vector<128x64xf32>
    %400 = arith.negf %399 : vector<128x64xf32>
    %401 = math.exp %400 : vector<128x64xf32>
    %cst_83 = arith.constant 1.000000e+00 : f32
    %402 = vector.broadcast %cst_83 : f32 to vector<128x64xf32>
    %403 = arith.addf %402, %401 : vector<128x64xf32>
    %404 = arith.divf %402, %403 : vector<128x64xf32>
    %405 = vector.extract_strided_slice %395 {offsets = [0, 64], sizes = [128, 64], strides = [1, 1]} : vector<128x192xf32> to vector<128x64xf32>
    %406 = vector.extract_strided_slice %396 {offsets = [0, 64], sizes = [128, 64], strides = [1, 1]} : vector<128x192xf32> to vector<128x64xf32>
    %407 = arith.addf %405, %406 : vector<128x64xf32>
    %408 = arith.negf %407 : vector<128x64xf32>
    %409 = math.exp %408 : vector<128x64xf32>
    %cst_84 = arith.constant 1.000000e+00 : f32
    %410 = vector.broadcast %cst_84 : f32 to vector<128x64xf32>
    %411 = arith.addf %410, %409 : vector<128x64xf32>
    %412 = arith.divf %410, %411 : vector<128x64xf32>
    %413 = vector.extract_strided_slice %395 {offsets = [0, 128], sizes = [128, 64], strides = [1, 1]} : vector<128x192xf32> to vector<128x64xf32>
    %414 = vector.extract_strided_slice %396 {offsets = [0, 128], sizes = [128, 64], strides = [1, 1]} : vector<128x192xf32> to vector<128x64xf32>
    %415 = arith.addf %414, %11 : vector<128x64xf32>
    %416 = arith.mulf %404, %415 : vector<128x64xf32>
    %417 = arith.addf %413, %416 : vector<128x64xf32>
    %418 = math.tanh %417 : vector<128x64xf32>
    %cst_85 = arith.constant 1.000000e+00 : f32
    %419 = vector.broadcast %cst_85 : f32 to vector<128x64xf32>
    %420 = arith.subf %419, %412 : vector<128x64xf32>
    %421 = arith.mulf %420, %418 : vector<128x64xf32>
    %422 = arith.mulf %412, %369 : vector<128x64xf32>
    %423 = arith.addf %421, %422 : vector<128x64xf32>
    %424 = tpu.concatenate %423, %394 in 1 : vector<128x64xf32>, vector<128x64xf32> -> vector<128x128xf32>
    %cst_86 = arith.constant dense<0.000000e+00> : vector<128x256xf32>
    %425 = tpu.matmul %424, %8, %cst_86 {dimension_numbers = #tpu.dot_dimension_numbers<[1], [0], [0], [1], [0, 0, 1, 1], [], []>} : vector<128x128xf32>, vector<128x256xf32>, vector<128x256xf32> -> vector<128x256xf32>
    %426 = arith.addf %425, %14 : vector<128x256xf32>
    %427 = vector.extract_strided_slice %426 {offsets = [0, 0], sizes = [128, 64], strides = [1, 1]} : vector<128x256xf32> to vector<128x64xf32>
    %428 = arith.negf %427 : vector<128x64xf32>
    %429 = math.exp %428 : vector<128x64xf32>
    %cst_87 = arith.constant 1.000000e+00 : f32
    %430 = vector.broadcast %cst_87 : f32 to vector<128x64xf32>
    %431 = arith.addf %430, %429 : vector<128x64xf32>
    %432 = arith.divf %430, %431 : vector<128x64xf32>
    %433 = vector.extract_strided_slice %426 {offsets = [0, 64], sizes = [128, 64], strides = [1, 1]} : vector<128x256xf32> to vector<128x64xf32>
    %434 = arith.negf %433 : vector<128x64xf32>
    %435 = math.exp %434 : vector<128x64xf32>
    %cst_88 = arith.constant 1.000000e+00 : f32
    %436 = vector.broadcast %cst_88 : f32 to vector<128x64xf32>
    %437 = arith.addf %436, %435 : vector<128x64xf32>
    %438 = arith.divf %436, %437 : vector<128x64xf32>
    %439 = vector.extract_strided_slice %426 {offsets = [0, 128], sizes = [128, 64], strides = [1, 1]} : vector<128x256xf32> to vector<128x64xf32>
    %440 = vector.extract_strided_slice %426 {offsets = [0, 192], sizes = [128, 64], strides = [1, 1]} : vector<128x256xf32> to vector<128x64xf32>
    %441 = arith.mulf %432, %440 : vector<128x64xf32>
    %442 = arith.addf %439, %441 : vector<128x64xf32>
    %443 = math.tanh %442 : vector<128x64xf32>
    %cst_89 = arith.constant 1.000000e+00 : f32
    %444 = vector.broadcast %cst_89 : f32 to vector<128x64xf32>
    %445 = arith.subf %444, %438 : vector<128x64xf32>
    %446 = arith.mulf %445, %443 : vector<128x64xf32>
    %447 = arith.mulf %438, %394 : vector<128x64xf32>
    %448 = arith.addf %446, %447 : vector<128x64xf32>
    %cst_90 = arith.constant 0.000000e+00 : f32
    %449 = vector.broadcast %cst_90 : f32 to vector<128x64xf32>
    %450 = tpu.concatenate %448, %449 in 1 : vector<128x64xf32>, vector<128x64xf32> -> vector<128x128xf32>
    %c0_91 = arith.constant 0 : index
    %c0_92 = arith.constant 0 : index
    %451 = vector.load %arg8[%c0_91, %c0_92] : memref<128x128xf32, #tpu.memory_space<vmem>>, vector<128x128xf32>
    tpu.vector_store %arg8[%c0_91, %c0_92], %450 {strides = array<i32>} : memref<128x128xf32, #tpu.memory_space<vmem>>, vector<128x128xf32>,
    return
  }
  func.func @transform_0(%arg0: i32) -> (i32, i32) {
    %c0_i32 = arith.constant 0 : i32
    %c0_i32_0 = arith.constant 0 : i32
    return %arg0, %c0_i32 : i32, i32
  }
  func.func @transform_1(%arg0: i32) -> (i32, i32) {
    %c0_i32 = arith.constant 0 : i32
    %c0_i32_0 = arith.constant 0 : i32
    %c0_i32_1 = arith.constant 0 : i32
    return %c0_i32, %c0_i32_0 : i32, i32
  }
  func.func @transform_2(%arg0: i32) -> (i32, i32) {
    %c0_i32 = arith.constant 0 : i32
    %c0_i32_0 = arith.constant 0 : i32
    %c0_i32_1 = arith.constant 0 : i32
    return %c0_i32, %c0_i32_0 : i32, i32
  }
  func.func @transform_3(%arg0: i32) -> (i32, i32) {
    %c0_i32 = arith.constant 0 : i32
    %c0_i32_0 = arith.constant 0 : i32
    %c0_i32_1 = arith.constant 0 : i32
    return %c0_i32, %c0_i32_0 : i32, i32
  }
  func.func @transform_4(%arg0: i32) -> (i32, i32) {
    %c0_i32 = arith.constant 0 : i32
    %c0_i32_0 = arith.constant 0 : i32
    %c0_i32_1 = arith.constant 0 : i32
    return %c0_i32, %c0_i32_0 : i32, i32
  }
  func.func @transform_5(%arg0: i32) -> (i32, i32) {
    %c0_i32 = arith.constant 0 : i32
    %c0_i32_0 = arith.constant 0 : i32
    %c0_i32_1 = arith.constant 0 : i32
    return %c0_i32, %c0_i32_0 : i32, i32
  }
  func.func @transform_6(%arg0: i32) -> (i32, i32) {
    %c0_i32 = arith.constant 0 : i32
    %c0_i32_0 = arith.constant 0 : i32
    %c0_i32_1 = arith.constant 0 : i32
    return %c0_i32, %c0_i32_0 : i32, i32
  }
  func.func @transform_7(%arg0: i32) -> (i32, i32) {
    %c0_i32 = arith.constant 0 : i32
    %c0_i32_0 = arith.constant 0 : i32
    return %arg0, %c0_i32 : i32, i32
  }
}

</mosaic_0001>

<llo_original>
// kernel: tpu_custom_call.1
$region0: #{tpu_custom_call.1}
  #allocation0 [shape = 'u32[]', space=smem, size = 0x4, offset = 0x4, fixed_abs, tag = 'smem constant byte address 0x4 - core index']
  #allocation1 [shape = 'u32[144,128]{1,0:T(1,128)}', space=vmem, size = 0x12000, scoped, tag = 'internal scratch']
  #allocation2 [shape = 'f32[1024,192]{1,0:T(8,128)}', space=vmem, size = 0x100000, scoped, tag = 'scratch operand']
  %s0 = inlined_call_operand.vmem [shape: f32[2048,6], index: 0, kind: input, shape index: {}]
  %s1 = inlined_call_operand.vmem [shape: f32[6,192], index: 1, kind: input, shape index: {}]
  %s2 = inlined_call_operand.vmem [shape: f32[64,192], index: 2, kind: input, shape index: {}]
  %s3 = inlined_call_operand.vmem [shape: f32[1,192], index: 3, kind: input, shape index: {}]
  %s4 = inlined_call_operand.vmem [shape: f32[1,64], index: 4, kind: input, shape index: {}]
  %s5 = inlined_call_operand.vmem [shape: f32[128,256], index: 5, kind: input, shape index: {}]
  %s6 = inlined_call_operand.vmem [shape: f32[1,256], index: 6, kind: input, shape index: {}]
  %s7 = inlined_call_operand.hbm [shape: f32[256,128], index: 7, kind: output, shape index: {}]
  %s8 = sld [smem:[#allocation0]]
  $region61: #{tpu_custom_call.1} parent=0
    _
  %s10 = ssub.s32 1, %s8
  %s11 = scalar_select 0, %s10, %s8
  $region1: #{tpu_custom_call.1} parent=0
    #allocation3 [shape = 'u8[131072]{0}', space=vmem, size = 0x20000, scoped, tag = 'output window, operand 0']
    #allocation4 [shape = 's32[2]{0}', space=sflag, size = 0x8, scoped, tag = 'scoped memory for tpu_custom_call.1']
    %12 = vsyncpa [#allocation4], 0
    %s13 = scalar_lea.sflag [#allocation4], 1
    %14 = vsyncpa %s13, 0
    loop: start=0, step=1, limit=4
    $region2: #{tpu_custom_call.1} parent=1 // loop_pre_header
      _
    $region3: #{tpu_custom_call.1} parent=1 // loop_header
      %s16 = sphi 0, %s20
      %p17 = scmp.ge.s32.totalorder %s16, 4
      %s26 = sphi 0, %s28
      %s29 = sphi 0, %s26
      %s30 = sphi 0, %s29
      %s46 = sphi 0, %s30
      %s50 = sphi 0, %s50
      %s52 = sphi 0, %s50
      %s53 = sphi 0, %s52
      %s67 = sphi 0, %s53
      %s71 = sphi 0, %s71
      %s73 = sphi 0, %s71
      %s74 = sphi 0, %s73
      %s88 = sphi 0, %s74
      %s92 = sphi 0, %s92
      %s94 = sphi 0, %s92
      %s95 = sphi 0, %s94
      %s109 = sphi 0, %s95
      %s113 = sphi 0, %s113
      %s115 = sphi 0, %s113
      %s116 = sphi 0, %s115
      %s130 = sphi 0, %s116
      %s134 = sphi 0, %s134
      %s136 = sphi 0, %s134
      %s137 = sphi 0, %s136
      %s151 = sphi 0, %s137
      %s155 = sphi 0, %s155
      %s157 = sphi 0, %s155
      %s158 = sphi 0, %s157
      %s172 = sphi 0, %s158
      %s178 = sphi 0, %s180
      %s181 = sphi 0, %s178
      %s182 = sphi 0, %s181
      %s198 = sphi 0, %s182
    $region4: #{tpu_custom_call.1} parent=1 // loop_header_branch
      %19 = sbr.rel (%p17) target = $region8
    $region5: #{tpu_custom_call.1} parent=1 // loop_body
      %s21 = ssub.s32 %s16, 1
      %s22 = ssub.s32 %s16, 2
      %s23 = sadd.s32 %s16, 1
      %s24 = ssub.s32 %s16, %s23
      %p25 = scmp.eq.s32.totalorder %s24, 0
      %s27 = sadd.s32 %s26, 1
      %s28 = scalar_select %p25, %s26, %s27
      %p31 = pneg %p25
      %p32 = scmp.eq.s32.totalorder %s16, 1
      %p33 = por %p31, %p32
      %p34 = scmp.ne.s32.totalorder %s26, %s29
      %p35 = scmp.eq.s32.totalorder %s16, 0
      %p36 = por %p34, %p35
      %p37 = scmp.ne.s32.totalorder %s26, %s29
      %p38 = scmp.eq.s32.totalorder %s21, 1
      %p39 = por %p37, %p38
      %p40 = scmp.ne.s32.totalorder %s29, %s30
      %p41 = scmp.eq.s32.totalorder %s21, 0
      %p42 = por %p40, %p41
      %p43 = scmp.ne.s32.totalorder %s29, %s30
      %p44 = scmp.eq.s32.totalorder %s22, 1
      %p45 = por %p43, %p44
      %p47 = scmp.ne.s32.totalorder %s30, %s46
      %p48 = scmp.eq.s32.totalorder %s22, 0
      %p49 = por %p47, %p48
      %s51 = sadd.s32 %s50, 1
      %p54 = scmp.eq.s32.totalorder %s16, 1
      %p55 = scmp.ne.s32.totalorder %s50, %s52
      %p56 = scmp.eq.s32.totalorder %s16, 0
      %p57 = por %p55, %p56
      %p58 = scmp.ne.s32.totalorder %s50, %s52
      %p59 = scmp.eq.s32.totalorder %s21, 1
      %p60 = por %p58, %p59
      %p61 = scmp.ne.s32.totalorder %s52, %s53
      %p62 = scmp.eq.s32.totalorder %s21, 0
      %p63 = por %p61, %p62
      %p64 = scmp.ne.s32.totalorder %s52, %s53
      %p65 = scmp.eq.s32.totalorder %s22, 1
      %p66 = por %p64, %p65
      %p68 = scmp.ne.s32.totalorder %s53, %s67
      %p69 = scmp.eq.s32.totalorder %s22, 0
      %p70 = por %p68, %p69
      %s72 = sadd.s32 %s71, 1
      %p75 = scmp.eq.s32.totalorder %s16, 1
      %p76 = scmp.ne.s32.totalorder %s71, %s73
      %p77 = scmp.eq.s32.totalorder %s16, 0
      %p78 = por %p76, %p77
      %p79 = scmp.ne.s32.totalorder %s71, %s73
      %p80 = scmp.eq.s32.totalorder %s21, 1
      %p81 = por %p79, %p80
      %p82 = scmp.ne.s32.totalorder %s73, %s74
      %p83 = scmp.eq.s32.totalorder %s21, 0
      %p84 = por %p82, %p83
      %p85 = scmp.ne.s32.totalorder %s73, %s74
      %p86 = scmp.eq.s32.totalorder %s22, 1
      %p87 = por %p85, %p86
      %p89 = scmp.ne.s32.totalorder %s74, %s88
      %p90 = scmp.eq.s32.totalorder %s22, 0
      %p91 = por %p89, %p90
      %s93 = sadd.s32 %s92, 1
      %p96 = scmp.eq.s32.totalorder %s16, 1
      %p97 = scmp.ne.s32.totalorder %s92, %s94
      %p98 = scmp.eq.s32.totalorder %s16, 0
      %p99 = por %p97, %p98
      %p100 = scmp.ne.s32.totalorder %s92, %s94
      %p101 = scmp.eq.s32.totalorder %s21, 1
      %p102 = por %p100, %p101
      %p103 = scmp.ne.s32.totalorder %s94, %s95
      %p104 = scmp.eq.s32.totalorder %s21, 0
      %p105 = por %p103, %p104
      %p106 = scmp.ne.s32.totalorder %s94, %s95
      %p107 = scmp.eq.s32.totalorder %s22, 1
      %p108 = por %p106, %p107
      %p110 = scmp.ne.s32.totalorder %s95, %s109
      %p111 = scmp.eq.s32.totalorder %s22, 0
      %p112 = por %p110, %p111
      %s114 = sadd.s32 %s113, 1
      %p117 = scmp.eq.s32.totalorder %s16, 1
      %p118 = scmp.ne.s32.totalorder %s113, %s115
      %p119 = scmp.eq.s32.totalorder %s16, 0
      %p120 = por %p118, %p119
      %p121 = scmp.ne.s32.totalorder %s113, %s115
      %p122 = scmp.eq.s32.totalorder %s21, 1
      %p123 = por %p121, %p122
      %p124 = scmp.ne.s32.totalorder %s115, %s116
      %p125 = scmp.eq.s32.totalorder %s21, 0
      %p126 = por %p124, %p125
      %p127 = scmp.ne.s32.totalorder %s115, %s116
      %p128 = scmp.eq.s32.totalorder %s22, 1
      %p129 = por %p127, %p128
      %p131 = scmp.ne.s32.totalorder %s116, %s130
      %p132 = scmp.eq.s32.totalorder %s22, 0
      %p133 = por %p131, %p132
      %s135 = sadd.s32 %s134, 1
      %p138 = scmp.eq.s32.totalorder %s16, 1
      %p139 = scmp.ne.s32.totalorder %s134, %s136
      %p140 = scmp.eq.s32.totalorder %s16, 0
      %p141 = por %p139, %p140
      %p142 = scmp.ne.s32.totalorder %s134, %s136
      %p143 = scmp.eq.s32.totalorder %s21, 1
      %p144 = por %p142, %p143
      %p145 = scmp.ne.s32.totalorder %s136, %s137
      %p146 = scmp.eq.s32.totalorder %s21, 0
      %p147 = por %p145, %p146
      %p148 = scmp.ne.s32.totalorder %s136, %s137
      %p149 = scmp.eq.s32.totalorder %s22, 1
      %p150 = por %p148, %p149
      %p152 = scmp.ne.s32.totalorder %s137, %s151
      %p153 = scmp.eq.s32.totalorder %s22, 0
      %p154 = por %p152, %p153
      %s156 = sadd.s32 %s155, 1
      %p159 = scmp.eq.s32.totalorder %s16, 1
      %p160 = scmp.ne.s32.totalorder %s155, %s157
      %p161 = scmp.eq.s32.totalorder %s16, 0
      %p162 = por %p160, %p161
      %p163 = scmp.ne.s32.totalorder %s155, %s157
      %p164 = scmp.eq.s32.totalorder %s21, 1
      %p165 = por %p163, %p164
      %p166 = scmp.ne.s32.totalorder %s157, %s158
      %p167 = scmp.eq.s32.totalorder %s21, 0
      %p168 = por %p166, %p167
      %p169 = scmp.ne.s32.totalorder %s157, %s158
      %p170 = scmp.eq.s32.totalorder %s22, 1
      %p171 = por %p169, %p170
      %p173 = scmp.ne.s32.totalorder %s158, %s172
      %p174 = scmp.eq.s32.totalorder %s22, 0
      %p175 = por %p173, %p174
      %s176 = ssub.s32 %s16, %s23
      %p177 = scmp.eq.s32.totalorder %s176, 0
      %s179 = sadd.s32 %s178, 1
      %s180 = scalar_select %p177, %s178, %s179
      %p183 = pneg %p177
      %p184 = scmp.eq.s32.totalorder %s16, 1
      %p185 = por %p183, %p184
      %p186 = scmp.ne.s32.totalorder %s178, %s181
      %p187 = scmp.eq.s32.totalorder %s16, 0
      %p188 = por %p186, %p187
      %p189 = scmp.ne.s32.totalorder %s178, %s181
      %p190 = scmp.eq.s32.totalorder %s21, 1
      %p191 = por %p189, %p190
      %p192 = scmp.ne.s32.totalorder %s181, %s182
      %p193 = scmp.eq.s32.totalorder %s21, 0
      %p194 = por %p192, %p193
      %p195 = scmp.ne.s32.totalorder %s181, %s182
      %p196 = scmp.eq.s32.totalorder %s22, 1
      %p197 = por %p195, %p196
      %p199 = scmp.ne.s32.totalorder %s182, %s198
      %p200 = scmp.eq.s32.totalorder %s22, 0
      %p201 = por %p199, %p200
      %p202 = scmp.le.s32.totalorder 1, %s16
      %p203 = scmp.lt.s32.totalorder %s16, 3
      %p204 = pnand %p202, %p203
      %p205 = pneg %p204
      // Predicated region
      $region9: #{tpu_custom_call.1} parent=5 // pred_check
        _
      $region10: #{tpu_custom_call.1} parent=5 // pred_check_branch
        %207 = sbr.rel (%p204) target = $region12
      $region11: #{tpu_custom_call.1} parent=5 // pred_region
        %s208 = ssub.s32 %s16, 1
        // Predicated region
        $region13: #{tpu_custom_call.1} parent=11 // pred_check
          %p209 = pneg %p63
        $region14: #{tpu_custom_call.1} parent=11 // pred_check_branch
          %211 = sbr.rel (%p209) target = $region16
        $region15: #{tpu_custom_call.1} parent=11 // pred_region
          _
        $region16: #{tpu_custom_call.1} parent=11 // pred_fallthru
          _
        // Predicated region
        $region17: #{tpu_custom_call.1} parent=11 // pred_check
          %p212 = pneg %p84
        $region18: #{tpu_custom_call.1} parent=11 // pred_check_branch
          %214 = sbr.rel (%p212) target = $region20
        $region19: #{tpu_custom_call.1} parent=11 // pred_region
          _
        $region20: #{tpu_custom_call.1} parent=11 // pred_fallthru
          _
        // Predicated region
        $region21: #{tpu_custom_call.1} parent=11 // pred_check
          %p215 = pneg %p105
        $region22: #{tpu_custom_call.1} parent=11 // pred_check_branch
          %217 = sbr.rel (%p215) target = $region24
        $region23: #{tpu_custom_call.1} parent=11 // pred_region
          _
        $region24: #{tpu_custom_call.1} parent=11 // pred_fallthru
          _
        // Predicated region
        $region25: #{tpu_custom_call.1} parent=11 // pred_check
          %p218 = pneg %p126
        $region26: #{tpu_custom_call.1} parent=11 // pred_check_branch
          %220 = sbr.rel (%p218) target = $region28
        $region27: #{tpu_custom_call.1} parent=11 // pred_region
          _
        $region28: #{tpu_custom_call.1} parent=11 // pred_fallthru
          _
        // Predicated region
        $region29: #{tpu_custom_call.1} parent=11 // pred_check
          %p221 = pneg %p147
        $region30: #{tpu_custom_call.1} parent=11 // pred_check_branch
          %223 = sbr.rel (%p221) target = $region32
        $region31: #{tpu_custom_call.1} parent=11 // pred_region
          _
        $region32: #{tpu_custom_call.1} parent=11 // pred_fallthru
          _
        // Predicated region
        $region33: #{tpu_custom_call.1} parent=11 // pred_check
          %p224 = pneg %p168
        $region34: #{tpu_custom_call.1} parent=11 // pred_check_branch
          %226 = sbr.rel (%p224) target = $region36
        $region35: #{tpu_custom_call.1} parent=11 // pred_region
          _
        $region36: #{tpu_custom_call.1} parent=11 // pred_fallthru
          _
      $region12: #{tpu_custom_call.1} parent=5 // pred_fallthru
        _
      %p227 = scmp.lt.s32.totalorder %s16, 2
      // Predicated region
      $region37: #{tpu_custom_call.1} parent=5 // pred_check
        %p228 = pneg %p227
      $region38: #{tpu_custom_call.1} parent=5 // pred_check_branch
        %230 = sbr.rel (%p228) target = $region40
      $region39: #{tpu_custom_call.1} parent=5 // pred_region
        // Predicated region
        $region41: #{tpu_custom_call.1} parent=39 // pred_check
          %p231 = pneg %p36
        $region42: #{tpu_custom_call.1} parent=39 // pred_check_branch
          %233 = sbr.rel (%p231) target = $region44
        $region43: #{tpu_custom_call.1} parent=39 // pred_region
          %s234 = smul.u32 128, %s16
          %p235 = scmp.lt.s32.totalorder %s234, 255
          %s236 = scalar_select %p235, %s234, 255
          %s237 = smul.addr %s236, 8
          %s238 = scalar_lea.vmem %s0, %s237
          %s239 = smul.u32 128, %s16
        $region44: #{tpu_custom_call.1} parent=39 // pred_fallthru
          _
      $region40: #{tpu_custom_call.1} parent=5 // pred_fallthru
        _
      %p240 = scmp.le.s32.totalorder 1, %s16
      %p241 = scmp.lt.s32.totalorder %s16, 3
      %p242 = pnand %p240, %p241
      %p243 = pneg %p242
      // Predicated region
      $region45: #{tpu_custom_call.1} parent=5 // pred_check
        _
      $region46: #{tpu_custom_call.1} parent=5 // pred_check_branch
        %245 = sbr.rel (%p242) target = $region48
      $region47: #{tpu_custom_call.1} parent=5 // pred_region
        %s246 = ssub.s32 %s16, 1
        %s247 = smul.u32 128, %s21
        %p248 = scmp.lt.s32.totalorder %s247, 255
        %s249 = scalar_select %p248, %s247, 255
        %s250 = smul.addr %s249, 8
        %s251 = scalar_lea.vmem %s0, %s250
        %p252 = pneg %p42
        %p253 = pneg %p39
        %p254 = pneg %p63
        %p255 = pneg %p60
        %p256 = pneg %p84
        %p257 = pneg %p81
        %p258 = pneg %p105
        %p259 = pneg %p102
        %p260 = pneg %p126
        %p261 = pneg %p123
        %p262 = pneg %p147
        %p263 = pneg %p144
        %p264 = pneg %p168
        %p265 = pneg %p165
        %p266 = pneg %p194
        %p267 = pneg %p191
        %s268 = sand.u32 %s181, 1
        %s269 = scalar_lea.sflag [#allocation4], %s268
        %s270 = sand.u32 %s181, 1
        %s271 = smul.addr %s270, 128
        %s272 = scalar_lea.vmem [#allocation3], %s271
        %s273 = smul.u32 128, %s21
        %p274 = scmp.lt.s32.totalorder %s273, 255
        %s275 = scalar_select %p274, %s273, 255
        %s276 = smul.addr %s275, 8
        %s277 = scalar_lea.vmem %s0, %s276
        %s278 = smul.u32 128, %s21
        %s279 = smul.u32 16, %s21
        %v280 = vld [vmem:[%s277] sm:$0xff]
        %v281 = vld [vmem:[%s277 + $0x8] sm:$0xff]
        %v282 = vld [vmem:[%s277 + $0x10] sm:$0xff]
        %v283 = vld [vmem:[%s277 + $0x18] sm:$0xff]
        %v284 = vld [vmem:[%s277 + $0x20] sm:$0xff]
        %v285 = vld [vmem:[%s277 + $0x28] sm:$0xff]
        %v286 = vld [vmem:[%s277 + $0x30] sm:$0xff]
        %v287 = vld [vmem:[%s277 + $0x38] sm:$0xff]
        %v288 = vld [vmem:[%s277 + $0x40] sm:$0xff]
        %v289 = vld [vmem:[%s277 + $0x48] sm:$0xff]
        %v290 = vld [vmem:[%s277 + $0x50] sm:$0xff]
        %v291 = vld [vmem:[%s277 + $0x58] sm:$0xff]
        %v292 = vld [vmem:[%s277 + $0x60] sm:$0xff]
        %v293 = vld [vmem:[%s277 + $0x68] sm:$0xff]
        %v294 = vld [vmem:[%s277 + $0x70] sm:$0xff]
        %v295 = vld [vmem:[%s277 + $0x78] sm:$0xff]
        %v296 = vld [vmem:[%s277 + $0x80] sm:$0xff]
        %v297 = vld [vmem:[%s277 + $0x88] sm:$0xff]
        %v298 = vld [vmem:[%s277 + $0x90] sm:$0xff]
        %v299 = vld [vmem:[%s277 + $0x98] sm:$0xff]
        %v300 = vld [vmem:[%s277 + $0xa0] sm:$0xff]
        %v301 = vld [vmem:[%s277 + $0xa8] sm:$0xff]
        %v302 = vld [vmem:[%s277 + $0xb0] sm:$0xff]
        %v303 = vld [vmem:[%s277 + $0xb8] sm:$0xff]
        %v304 = vld [vmem:[%s277 + $0xc0] sm:$0xff]
        %v305 = vld [vmem:[%s277 + $0xc8] sm:$0xff]
        %v306 = vld [vmem:[%s277 + $0xd0] sm:$0xff]
        %v307 = vld [vmem:[%s277 + $0xd8] sm:$0xff]
        %v308 = vld [vmem:[%s277 + $0xe0] sm:$0xff]
        %v309 = vld [vmem:[%s277 + $0xe8] sm:$0xff]
        %v310 = vld [vmem:[%s277 + $0xf0] sm:$0xff]
        %v311 = vld [vmem:[%s277 + $0xf8] sm:$0xff]
        %v312 = vld [vmem:[%s277 + $0x100] sm:$0xff]
        %v313 = vld [vmem:[%s277 + $0x108] sm:$0xff]
        %v314 = vld [vmem:[%s277 + $0x110] sm:$0xff]
        %v315 = vld [vmem:[%s277 + $0x118] sm:$0xff]
        %v316 = vld [vmem:[%s277 + $0x120] sm:$0xff]
        %v317 = vld [vmem:[%s277 + $0x128] sm:$0xff]
        %v318 = vld [vmem:[%s277 + $0x130] sm:$0xff]
        %v319 = vld [vmem:[%s277 + $0x138] sm:$0xff]
        %v320 = vld [vmem:[%s277 + $0x140] sm:$0xff]
        %v321 = vld [vmem:[%s277 + $0x148] sm:$0xff]
        %v322 = vld [vmem:[%s277 + $0x150] sm:$0xff]
        %v323 = vld [vmem:[%s277 + $0x158] sm:$0xff]
        %v324 = vld [vmem:[%s277 + $0x160] sm:$0xff]
        %v325 = vld [vmem:[%s277 + $0x168] sm:$0xff]
        %v326 = vld [vmem:[%s277 + $0x170] sm:$0xff]
        %v327 = vld [vmem:[%s277 + $0x178] sm:$0xff]
        %v328 = vld [vmem:[%s277 + $0x180] sm:$0xff]
        %v329 = vld [vmem:[%s277 + $0x188] sm:$0xff]
        %v330 = vld [vmem:[%s277 + $0x190] sm:$0xff]
        %v331 = vld [vmem:[%s277 + $0x198] sm:$0xff]
        %v332 = vld [vmem:[%s277 + $0x1a0] sm:$0xff]
        %v333 = vld [vmem:[%s277 + $0x1a8] sm:$0xff]
        %v334 = vld [vmem:[%s277 + $0x1b0] sm:$0xff]
        %v335 = vld [vmem:[%s277 + $0x1b8] sm:$0xff]
        %v336 = vld [vmem:[%s277 + $0x1c0] sm:$0xff]
        %v337 = vld [vmem:[%s277 + $0x1c8] sm:$0xff]
        %v338 = vld [vmem:[%s277 + $0x1d0] sm:$0xff]
        %v339 = vld [vmem:[%s277 + $0x1d8] sm:$0xff]
        %v340 = vld [vmem:[%s277 + $0x1e0] sm:$0xff]
        %v341 = vld [vmem:[%s277 + $0x1e8] sm:$0xff]
        %v342 = vld [vmem:[%s277 + $0x1f0] sm:$0xff]
        %v343 = vld [vmem:[%s277 + $0x1f8] sm:$0xff]
        %v344 = vld [vmem:[%s277 + $0x200] sm:$0xff]
        %v345 = vld [vmem:[%s277 + $0x208] sm:$0xff]
        %v346 = vld [vmem:[%s277 + $0x210] sm:$0xff]
        %v347 = vld [vmem:[%s277 + $0x218] sm:$0xff]
        %v348 = vld [vmem:[%s277 + $0x220] sm:$0xff]
        %v349 = vld [vmem:[%s277 + $0x228] sm:$0xff]
        %v350 = vld [vmem:[%s277 + $0x230] sm:$0xff]
        %v351 = vld [vmem:[%s277 + $0x238] sm:$0xff]
        %v352 = vld [vmem:[%s277 + $0x240] sm:$0xff]
        %v353 = vld [vmem:[%s277 + $0x248] sm:$0xff]
        %v354 = vld [vmem:[%s277 + $0x250] sm:$0xff]
        %v355 = vld [vmem:[%s277 + $0x258] sm:$0xff]
        %v356 = vld [vmem:[%s277 + $0x260] sm:$0xff]
        %v357 = vld [vmem:[%s277 + $0x268] sm:$0xff]
        %v358 = vld [vmem:[%s277 + $0x270] sm:$0xff]
        %v359 = vld [vmem:[%s277 + $0x278] sm:$0xff]
        %v360 = vld [vmem:[%s277 + $0x280] sm:$0xff]
        %v361 = vld [vmem:[%s277 + $0x288] sm:$0xff]
        %v362 = vld [vmem:[%s277 + $0x290] sm:$0xff]
        %v363 = vld [vmem:[%s277 + $0x298] sm:$0xff]
        %v364 = vld [vmem:[%s277 + $0x2a0] sm:$0xff]
        %v365 = vld [vmem:[%s277 + $0x2a8] sm:$0xff]
        %v366 = vld [vmem:[%s277 + $0x2b0] sm:$0xff]
        %v367 = vld [vmem:[%s277 + $0x2b8] sm:$0xff]
        %v368 = vld [vmem:[%s277 + $0x2c0] sm:$0xff]
        %v369 = vld [vmem:[%s277 + $0x2c8] sm:$0xff]
        %v370 = vld [vmem:[%s277 + $0x2d0] sm:$0xff]
        %v371 = vld [vmem:[%s277 + $0x2d8] sm:$0xff]
        %v372 = vld [vmem:[%s277 + $0x2e0] sm:$0xff]
        %v373 = vld [vmem:[%s277 + $0x2e8] sm:$0xff]
        %v374 = vld [vmem:[%s277 + $0x2f0] sm:$0xff]
        %v375 = vld [vmem:[%s277 + $0x2f8] sm:$0xff]
        %v376 = vld [vmem:[%s277 + $0x300] sm:$0xff]
        %v377 = vld [vmem:[%s277 + $0x308] sm:$0xff]
        %v378 = vld [vmem:[%s277 + $0x310] sm:$0xff]
        %v379 = vld [vmem:[%s277 + $0x318] sm:$0xff]
        %v380 = vld [vmem:[%s277 + $0x320] sm:$0xff]
        %v381 = vld [vmem:[%s277 + $0x328] sm:$0xff]
        %v382 = vld [vmem:[%s277 + $0x330] sm:$0xff]
        %v383 = vld [vmem:[%s277 + $0x338] sm:$0xff]
        %v384 = vld [vmem:[%s277 + $0x340] sm:$0xff]
        %v385 = vld [vmem:[%s277 + $0x348] sm:$0xff]
        %v386 = vld [vmem:[%s277 + $0x350] sm:$0xff]
        %v387 = vld [vmem:[%s277 + $0x358] sm:$0xff]
        %v388 = vld [vmem:[%s277 + $0x360] sm:$0xff]
        %v389 = vld [vmem:[%s277 + $0x368] sm:$0xff]
        %v390 = vld [vmem:[%s277 + $0x370] sm:$0xff]
        %v391 = vld [vmem:[%s277 + $0x378] sm:$0xff]
        %v392 = vld [vmem:[%s277 + $0x380] sm:$0xff]
        %v393 = vld [vmem:[%s277 + $0x388] sm:$0xff]
        %v394 = vld [vmem:[%s277 + $0x390] sm:$0xff]
        %v395 = vld [vmem:[%s277 + $0x398] sm:$0xff]
        %v396 = vld [vmem:[%s277 + $0x3a0] sm:$0xff]
        %v397 = vld [vmem:[%s277 + $0x3a8] sm:$0xff]
        %v398 = vld [vmem:[%s277 + $0x3b0] sm:$0xff]
        %v399 = vld [vmem:[%s277 + $0x3b8] sm:$0xff]
        %v400 = vld [vmem:[%s277 + $0x3c0] sm:$0xff]
        %v401 = vld [vmem:[%s277 + $0x3c8] sm:$0xff]
        %v402 = vld [vmem:[%s277 + $0x3d0] sm:$0xff]
        %v403 = vld [vmem:[%s277 + $0x3d8] sm:$0xff]
        %v404 = vld [vmem:[%s277 + $0x3e0] sm:$0xff]
        %v405 = vld [vmem:[%s277 + $0x3e8] sm:$0xff]
        %v406 = vld [vmem:[%s277 + $0x3f0] sm:$0xff]
        %v407 = vld [vmem:[%s277 + $0x3f8] sm:$0xff]
        %v408 = vld [vmem:[%s1] sm:$0x3f]
        %v409 = vld [vmem:[%s1 + $0x8] sm:$0x3f]
        %v410 = vld [vmem:[%s3] sm:$0x3]
        %v412 = vlaneseq
        %v413 = vshrl.u32 %v412, 7
        %v414 = vsub.s32 0, %v413
        %v415 = vrot.slane %v410, %v414
        %v416 = vlaneseq
        %v417 = vshrl.u32 %v416, 7
        %v418 = vsub.s32 1, %v417
        %v419 = vrot.slane %v410, %v418
        %vm422 = vcmask 48128
        %v424 = vsel %vm422, %v280, 0
        %v427 = vsel %vm422, %v281, 0
        %v430 = vsel %vm422, %v282, 0
        %v433 = vsel %vm422, %v283, 0
        %v436 = vsel %vm422, %v284, 0
        %v439 = vsel %vm422, %v285, 0
        %v442 = vsel %vm422, %v286, 0
        %v445 = vsel %vm422, %v287, 0
        %v448 = vsel %vm422, %v288, 0
        %v451 = vsel %vm422, %v289, 0
        %v454 = vsel %vm422, %v290, 0
        %v457 = vsel %vm422, %v291, 0
        %v460 = vsel %vm422, %v292, 0
        %v463 = vsel %vm422, %v293, 0
        %v466 = vsel %vm422, %v294, 0
        %v469 = vsel %vm422, %v295, 0
        %v472 = vsel %vm422, %v296, 0
        %v475 = vsel %vm422, %v297, 0
        %v478 = vsel %vm422, %v298, 0
        %v481 = vsel %vm422, %v299, 0
        %v484 = vsel %vm422, %v300, 0
        %v487 = vsel %vm422, %v301, 0
        %v490 = vsel %vm422, %v302, 0
        %v493 = vsel %vm422, %v303, 0
        %v496 = vsel %vm422, %v304, 0
        %v499 = vsel %vm422, %v305, 0
        %v502 = vsel %vm422, %v306, 0
        %v505 = vsel %vm422, %v307, 0
        %v508 = vsel %vm422, %v308, 0
        %v511 = vsel %vm422, %v309, 0
        %v514 = vsel %vm422, %v310, 0
        %v517 = vsel %vm422, %v311, 0
        %v520 = vsel %vm422, %v312, 0
        %v523 = vsel %vm422, %v313, 0
        %v526 = vsel %vm422, %v314, 0
        %v529 = vsel %vm422, %v315, 0
        %v532 = vsel %vm422, %v316, 0
        %v535 = vsel %vm422, %v317, 0
        %v538 = vsel %vm422, %v318, 0
        %v541 = vsel %vm422, %v319, 0
        %v544 = vsel %vm422, %v320, 0
        %v547 = vsel %vm422, %v321, 0
        %v550 = vsel %vm422, %v322, 0
        %v553 = vsel %vm422, %v323, 0
        %v556 = vsel %vm422, %v324, 0
        %v559 = vsel %vm422, %v325, 0
        %v562 = vsel %vm422, %v326, 0
        %v565 = vsel %vm422, %v327, 0
        %v568 = vsel %vm422, %v328, 0
        %v571 = vsel %vm422, %v329, 0
        %v574 = vsel %vm422, %v330, 0
        %v577 = vsel %vm422, %v331, 0
        %v580 = vsel %vm422, %v332, 0
        %v583 = vsel %vm422, %v333, 0
        %v586 = vsel %vm422, %v334, 0
        %v589 = vsel %vm422, %v335, 0
        %v592 = vsel %vm422, %v336, 0
        %v595 = vsel %vm422, %v337, 0
        %v598 = vsel %vm422, %v338, 0
        %v601 = vsel %vm422, %v339, 0
        %v604 = vsel %vm422, %v340, 0
        %v607 = vsel %vm422, %v341, 0
        %v610 = vsel %vm422, %v342, 0
        %v613 = vsel %vm422, %v343, 0
        %v616 = vsel %vm422, %v344, 0
        %v619 = vsel %vm422, %v345, 0
        %v622 = vsel %vm422, %v346, 0
        %v625 = vsel %vm422, %v347, 0
        %v628 = vsel %vm422, %v348, 0
        %v631 = vsel %vm422, %v349, 0
        %v634 = vsel %vm422, %v350, 0
        %v637 = vsel %vm422, %v351, 0
        %v640 = vsel %vm422, %v352, 0
        %v643 = vsel %vm422, %v353, 0
        %v646 = vsel %vm422, %v354, 0
        %v649 = vsel %vm422, %v355, 0
        %v652 = vsel %vm422, %v356, 0
        %v655 = vsel %vm422, %v357, 0
        %v658 = vsel %vm422, %v358, 0
        %v661 = vsel %vm422, %v359, 0
        %v664 = vsel %vm422, %v360, 0
        %v667 = vsel %vm422, %v361, 0
        %v670 = vsel %vm422, %v362, 0
        %v673 = vsel %vm422, %v363, 0
        %v676 = vsel %vm422, %v364, 0
        %v679 = vsel %vm422, %v365, 0
        %v682 = vsel %vm422, %v366, 0
        %v685 = vsel %vm422, %v367, 0
        %v688 = vsel %vm422, %v368, 0
        %v691 = vsel %vm422, %v369, 0
        %v694 = vsel %vm422, %v370, 0
        %v697 = vsel %vm422, %v371, 0
        %v700 = vsel %vm422, %v372, 0
        %v703 = vsel %vm422, %v373, 0
        %v706 = vsel %vm422, %v374, 0
        %v709 = vsel %vm422, %v375, 0
        %v712 = vsel %vm422, %v376, 0
        %v715 = vsel %vm422, %v377, 0
        %v718 = vsel %vm422, %v378, 0
        %v721 = vsel %vm422, %v379, 0
        %v724 = vsel %vm422, %v380, 0
        %v727 = vsel %vm422, %v381, 0
        %v730 = vsel %vm422, %v382, 0
        %v733 = vsel %vm422, %v383, 0
        %v736 = vsel %vm422, %v384, 0
        %v739 = vsel %vm422, %v385, 0
        %v742 = vsel %vm422, %v386, 0
        %v745 = vsel %vm422, %v387, 0
        %v748 = vsel %vm422, %v388, 0
        %v751 = vsel %vm422, %v389, 0
        %v754 = vsel %vm422, %v390, 0
        %v757 = vsel %vm422, %v391, 0
        %v760 = vsel %vm422, %v392, 0
        %v763 = vsel %vm422, %v393, 0
        %v766 = vsel %vm422, %v394, 0
        %v769 = vsel %vm422, %v395, 0
        %v772 = vsel %vm422, %v396, 0
        %v775 = vsel %vm422, %v397, 0
        %v778 = vsel %vm422, %v398, 0
        %v781 = vsel %vm422, %v399, 0
        %v784 = vsel %vm422, %v400, 0
        %v787 = vsel %vm422, %v401, 0
        %v790 = vsel %vm422, %v402, 0
        %v793 = vsel %vm422, %v403, 0
        %v796 = vsel %vm422, %v404, 0
        %v799 = vsel %vm422, %v405, 0
        %v802 = vsel %vm422, %v406, 0
        %v805 = vsel %vm422, %v407, 0
        %vm807 = vcmask 1045504
        %v809 = vsel %vm807, %v408, 0
        %v812 = vsel %vm807, %v409, 0
        %814 = vmatprep.subr.mxu0 0.0
        %815 = vmatpush1.msra.mxu0 0.0
        %816 = vmatprep.subr.mxu0 0.0
        %817 = vmatpush1.msra.mxu0 0.0
        %818 = vmatprep.subr.mxu0 0.0
        %819 = vmatpush1.msra.mxu0 0.0
        %820 = vmatprep.subr.mxu0 0.0
        %821 = vmatpush1.msra.mxu0 0.0
        %822 = vmatprep.subr.mxu0 0.0
        %823 = vmatpush1.msra.mxu0 0.0
        %824 = vmatprep.subr.mxu0 0.0
        %825 = vmatpush1.msra.mxu0 0.0
        %826 = vmatprep.subr.mxu0 0.0
        %827 = vmatpush1.msra.mxu0 0.0
        %828 = vmatprep.subr.mxu0 0.0
        %829 = vmatpush1.msra.mxu0 0.0
        %830 = vmatprep.subr.mxu0 0.0
        %831 = vmatpush1.msra.mxu0 0.0
        %832 = vmatprep.subr.mxu0 0.0
        %833 = vmatpush1.msra.mxu0 0.0
        %834 = vmatprep.subr.mxu0 0.0
        %835 = vmatpush1.msra.mxu0 0.0
        %836 = vmatprep.subr.mxu0 0.0
        %837 = vmatpush1.msra.mxu0 0.0
        %838 = vmatprep.subr.mxu0 0.0
        %839 = vmatpush1.msra.mxu0 0.0
        %840 = vmatprep.subr.mxu0 0.0
        %841 = vmatpush1.msra.mxu0 0.0
        %842 = vmatprep.subr.mxu0 0.0
        %843 = vmatpush1.msra.mxu0 0.0
        %844 = vmatprep.subr.mxu0 %v812
        %845 = vmatpush1.msra.mxu0 %v809
        %846 = vmatprep.subr.mxu0 0.0
        %847 = vmatpush2.msra.mxu0 0.0
        %848 = vmatprep.subr.mxu0 0.0
        %849 = vmatpush2.msra.mxu0 0.0
        %850 = vmatprep.subr.mxu0 0.0
        %851 = vmatpush2.msra.mxu0 0.0
        %852 = vmatprep.subr.mxu0 0.0
        %853 = vmatpush2.msra.mxu0 0.0
        %854 = vmatprep.subr.mxu0 0.0
        %855 = vmatpush2.msra.mxu0 0.0
        %856 = vmatprep.subr.mxu0 0.0
        %857 = vmatpush2.msra.mxu0 0.0
        %858 = vmatprep.subr.mxu0 0.0
        %859 = vmatpush2.msra.mxu0 0.0
        %860 = vmatprep.subr.mxu0 0.0
        %861 = vmatpush2.msra.mxu0 0.0
        %862 = vmatprep.subr.mxu0 0.0
        %863 = vmatpush2.msra.mxu0 0.0
        %864 = vmatprep.subr.mxu0 0.0
        %865 = vmatpush2.msra.mxu0 0.0
        %866 = vmatprep.subr.mxu0 0.0
        %867 = vmatpush2.msra.mxu0 0.0
        %868 = vmatprep.subr.mxu0 0.0
        %869 = vmatpush2.msra.mxu0 0.0
        %870 = vmatprep.subr.mxu0 0.0
        %871 = vmatpush2.msra.mxu0 0.0
        %872 = vmatprep.subr.mxu0 0.0
        %873 = vmatpush2.msra.mxu0 0.0
        %874 = vmatprep.subr.mxu0 0.0
        %875 = vmatpush2.msra.mxu0 0.0
        %876 = vmatprep.subr.mxu0 0.0
        %877 = vmatpush2.msra.mxu0 0.0
        %878 = vmatprep.mubr.f32.mxu0 0.0
        %879 = vmatmul.mubr.f32.gmra.mxu0 %v424
        %v880 = vpop.f32.mrf.mxu0
        %v881 = vadd.f32 %v415, %v880
        %v882 = vpop.f32.mrf.mxu0
        %v883 = vadd.f32 %v419, %v882
        %884 = vmatprep.mubr.f32.mxu0 0.0
        %885 = vmatmul.mubr.f32.gmra.mxu0 %v427
        %v886 = vpop.f32.mrf.mxu0
        %v887 = vadd.f32 %v415, %v886
        %v888 = vpop.f32.mrf.mxu0
        %v889 = vadd.f32 %v419, %v888
        %890 = vmatprep.mubr.f32.mxu0 0.0
        %891 = vmatmul.mubr.f32.gmra.mxu0 %v430
        %v892 = vpop.f32.mrf.mxu0
        %v893 = vadd.f32 %v415, %v892
        %v894 = vpop.f32.mrf.mxu0
        %v895 = vadd.f32 %v419, %v894
        %896 = vmatprep.mubr.f32.mxu0 0.0
        %897 = vmatmul.mubr.f32.gmra.mxu0 %v433
        %v898 = vpop.f32.mrf.mxu0
        %v899 = vadd.f32 %v415, %v898
        %v900 = vpop.f32.mrf.mxu0
        %v901 = vadd.f32 %v419, %v900
        %902 = vmatprep.mubr.f32.mxu0 0.0
        %903 = vmatmul.mubr.f32.gmra.mxu0 %v436
        %v904 = vpop.f32.mrf.mxu0
        %v905 = vadd.f32 %v415, %v904
        %v906 = vpop.f32.mrf.mxu0
        %v907 = vadd.f32 %v419, %v906
        %908 = vmatprep.mubr.f32.mxu0 0.0
        %909 = vmatmul.mubr.f32.gmra.mxu0 %v439
        %v910 = vpop.f32.mrf.mxu0
        %v911 = vadd.f32 %v415, %v910
        %v912 = vpop.f32.mrf.mxu0
        %v913 = vadd.f32 %v419, %v912
        %914 = vmatprep.mubr.f32.mxu0 0.0
        %915 = vmatmul.mubr.f32.gmra.mxu0 %v442
        %v916 = vpop.f32.mrf.mxu0
        %v917 = vadd.f32 %v415, %v916
        %v918 = vpop.f32.mrf.mxu0
        %v919 = vadd.f32 %v419, %v918
        %920 = vmatprep.mubr.f32.mxu0 0.0
        %921 = vmatmul.mubr.f32.gmra.mxu0 %v445
        %v922 = vpop.f32.mrf.mxu0
        %v923 = vadd.f32 %v415, %v922
        %v924 = vpop.f32.mrf.mxu0
        %v925 = vadd.f32 %v419, %v924
        %926 = vmatprep.mubr.f32.mxu0 0.0
        %927 = vmatmul.mubr.f32.gmra.mxu0 %v448
        %v928 = vpop.f32.mrf.mxu0
        %v929 = vadd.f32 %v415, %v928
        %v930 = vpop.f32.mrf.mxu0
        %v931 = vadd.f32 %v419, %v930
        %932 = vmatprep.mubr.f32.mxu0 0.0
        %933 = vmatmul.mubr.f32.gmra.mxu0 %v451
        %v934 = vpop.f32.mrf.mxu0
        %v935 = vadd.f32 %v415, %v934
        %v936 = vpop.f32.mrf.mxu0
        %v937 = vadd.f32 %v419, %v936
        %938 = vmatprep.mubr.f32.mxu0 0.0
        %939 = vmatmul.mubr.f32.gmra.mxu0 %v454
        %v940 = vpop.f32.mrf.mxu0
        %v941 = vadd.f32 %v415, %v940
        %v942 = vpop.f32.mrf.mxu0
        %v943 = vadd.f32 %v419, %v942
        %944 = vmatprep.mubr.f32.mxu0 0.0
        %945 = vmatmul.mubr.f32.gmra.mxu0 %v457
        %v946 = vpop.f32.mrf.mxu0
        %v947 = vadd.f32 %v415, %v946
        %v948 = vpop.f32.mrf.mxu0
        %v949 = vadd.f32 %v419, %v948
        %950 = vmatprep.mubr.f32.mxu0 0.0
        %951 = vmatmul.mubr.f32.gmra.mxu0 %v460
        %v952 = vpop.f32.mrf.mxu0
        %v953 = vadd.f32 %v415, %v952
        %v954 = vpop.f32.mrf.mxu0
        %v955 = vadd.f32 %v419, %v954
        %956 = vmatprep.mubr.f32.mxu0 0.0
        %957 = vmatmul.mubr.f32.gmra.mxu0 %v463
        %v958 = vpop.f32.mrf.mxu0
        %v959 = vadd.f32 %v415, %v958
        %v960 = vpop.f32.mrf.mxu0
        %v961 = vadd.f32 %v419, %v960
        %962 = vmatprep.mubr.f32.mxu0 0.0
        %963 = vmatmul.mubr.f32.gmra.mxu0 %v466
        %v964 = vpop.f32.mrf.mxu0
        %v965 = vadd.f32 %v415, %v964
        %v966 = vpop.f32.mrf.mxu0
        %v967 = vadd.f32 %v419, %v966
        %968 = vmatprep.mubr.f32.mxu0 0.0
        %969 = vmatmul.mubr.f32.gmra.mxu0 %v469
        %v970 = vpop.f32.mrf.mxu0
        %v971 = vadd.f32 %v415, %v970
        %v972 = vpop.f32.mrf.mxu0
        %v973 = vadd.f32 %v419, %v972
        %974 = vmatprep.mubr.f32.mxu0 0.0
        %975 = vmatmul.mubr.f32.gmra.mxu0 %v472
        %v976 = vpop.f32.mrf.mxu0
        %v977 = vadd.f32 %v415, %v976
        %v978 = vpop.f32.mrf.mxu0
        %v979 = vadd.f32 %v419, %v978
        %980 = vmatprep.mubr.f32.mxu0 0.0
        %981 = vmatmul.mubr.f32.gmra.mxu0 %v475
        %v982 = vpop.f32.mrf.mxu0
        %v983 = vadd.f32 %v415, %v982
        %v984 = vpop.f32.mrf.mxu0
        %v985 = vadd.f32 %v419, %v984
        %986 = vmatprep.mubr.f32.mxu0 0.0
        %987 = vmatmul.mubr.f32.gmra.mxu0 %v478
        %v988 = vpop.f32.mrf.mxu0
        %v989 = vadd.f32 %v415, %v988
        %v990 = vpop.f32.mrf.mxu0
        %v991 = vadd.f32 %v419, %v990
        %992 = vmatprep.mubr.f32.mxu0 0.0
        %993 = vmatmul.mubr.f32.gmra.mxu0 %v481
        %v994 = vpop.f32.mrf.mxu0
        %v995 = vadd.f32 %v415, %v994
        %v996 = vpop.f32.mrf.mxu0
        %v997 = vadd.f32 %v419, %v996
        %998 = vmatprep.mubr.f32.mxu0 0.0
        %999 = vmatmul.mubr.f32.gmra.mxu0 %v484
        %v1000 = vpop.f32.mrf.mxu0
        %v1001 = vadd.f32 %v415, %v1000
        %v1002 = vpop.f32.mrf.mxu0
        %v1003 = vadd.f32 %v419, %v1002
        %1004 = vmatprep.mubr.f32.mxu0 0.0
        %1005 = vmatmul.mubr.f32.gmra.mxu0 %v487
        %v1006 = vpop.f32.mrf.mxu0
        %v1007 = vadd.f32 %v415, %v1006
        %v1008 = vpop.f32.mrf.mxu0
        %v1009 = vadd.f32 %v419, %v1008
        %1010 = vmatprep.mubr.f32.mxu0 0.0
        %1011 = vmatmul.mubr.f32.gmra.mxu0 %v490
        %v1012 = vpop.f32.mrf.mxu0
        %v1013 = vadd.f32 %v415, %v1012
        %v1014 = vpop.f32.mrf.mxu0
        %v1015 = vadd.f32 %v419, %v1014
        %1016 = vmatprep.mubr.f32.mxu0 0.0
        %1017 = vmatmul.mubr.f32.gmra.mxu0 %v493
        %v1018 = vpop.f32.mrf.mxu0
        %v1019 = vadd.f32 %v415, %v1018
        %v1020 = vpop.f32.mrf.mxu0
        %v1021 = vadd.f32 %v419, %v1020
        %1022 = vmatprep.mubr.f32.mxu0 0.0
        %1023 = vmatmul.mubr.f32.gmra.mxu0 %v496
        %v1024 = vpop.f32.mrf.mxu0
        %v1025 = vadd.f32 %v415, %v1024
        %v1026 = vpop.f32.mrf.mxu0
        %v1027 = vadd.f32 %v419, %v1026
        %1028 = vmatprep.mubr.f32.mxu0 0.0
        %1029 = vmatmul.mubr.f32.gmra.mxu0 %v499
        %v1030 = vpop.f32.mrf.mxu0
        %v1031 = vadd.f32 %v415, %v1030
        %v1032 = vpop.f32.mrf.mxu0
        %v1033 = vadd.f32 %v419, %v1032
        %1034 = vmatprep.mubr.f32.mxu0 0.0
        %1035 = vmatmul.mubr.f32.gmra.mxu0 %v502
        %v1036 = vpop.f32.mrf.mxu0
        %v1037 = vadd.f32 %v415, %v1036
        %v1038 = vpop.f32.mrf.mxu0
        %v1039 = vadd.f32 %v419, %v1038
        %1040 = vmatprep.mubr.f32.mxu0 0.0
        %1041 = vmatmul.mubr.f32.gmra.mxu0 %v505
        %v1042 = vpop.f32.mrf.mxu0
        %v1043 = vadd.f32 %v415, %v1042
        %v1044 = vpop.f32.mrf.mxu0
        %v1045 = vadd.f32 %v419, %v1044
        %1046 = vmatprep.mubr.f32.mxu0 0.0
        %1047 = vmatmul.mubr.f32.gmra.mxu0 %v508
        %v1048 = vpop.f32.mrf.mxu0
        %v1049 = vadd.f32 %v415, %v1048
        %v1050 = vpop.f32.mrf.mxu0
        %v1051 = vadd.f32 %v419, %v1050
        %1052 = vmatprep.mubr.f32.mxu0 0.0
        %1053 = vmatmul.mubr.f32.gmra.mxu0 %v511
        %v1054 = vpop.f32.mrf.mxu0
        %v1055 = vadd.f32 %v415, %v1054
        %v1056 = vpop.f32.mrf.mxu0
        %v1057 = vadd.f32 %v419, %v1056
        %1058 = vmatprep.mubr.f32.mxu0 0.0
        %1059 = vmatmul.mubr.f32.gmra.mxu0 %v514
        %v1060 = vpop.f32.mrf.mxu0
        %v1061 = vadd.f32 %v415, %v1060
        %v1062 = vpop.f32.mrf.mxu0
        %v1063 = vadd.f32 %v419, %v1062
        %1064 = vmatprep.mubr.f32.mxu0 0.0
        %1065 = vmatmul.mubr.f32.gmra.mxu0 %v517
        %v1066 = vpop.f32.mrf.mxu0
        %v1067 = vadd.f32 %v415, %v1066
        %v1068 = vpop.f32.mrf.mxu0
        %v1069 = vadd.f32 %v419, %v1068
        %1070 = vmatprep.mubr.f32.mxu0 0.0
        %1071 = vmatmul.mubr.f32.gmra.mxu0 %v520
        %v1072 = vpop.f32.mrf.mxu0
        %v1073 = vadd.f32 %v415, %v1072
        %v1074 = vpop.f32.mrf.mxu0
        %v1075 = vadd.f32 %v419, %v1074
        %1076 = vmatprep.mubr.f32.mxu0 0.0
        %1077 = vmatmul.mubr.f32.gmra.mxu0 %v523
        %v1078 = vpop.f32.mrf.mxu0
        %v1079 = vadd.f32 %v415, %v1078
        %v1080 = vpop.f32.mrf.mxu0
        %v1081 = vadd.f32 %v419, %v1080
        %1082 = vmatprep.mubr.f32.mxu0 0.0
        %1083 = vmatmul.mubr.f32.gmra.mxu0 %v526
        %v1084 = vpop.f32.mrf.mxu0
        %v1085 = vadd.f32 %v415, %v1084
        %v1086 = vpop.f32.mrf.mxu0
        %v1087 = vadd.f32 %v419, %v1086
        %1088 = vmatprep.mubr.f32.mxu0 0.0
        %1089 = vmatmul.mubr.f32.gmra.mxu0 %v529
        %v1090 = vpop.f32.mrf.mxu0
        %v1091 = vadd.f32 %v415, %v1090
        %v1092 = vpop.f32.mrf.mxu0
        %v1093 = vadd.f32 %v419, %v1092
        %1094 = vmatprep.mubr.f32.mxu0 0.0
        %1095 = vmatmul.mubr.f32.gmra.mxu0 %v532
        %v1096 = vpop.f32.mrf.mxu0
        %v1097 = vadd.f32 %v415, %v1096
        %v1098 = vpop.f32.mrf.mxu0
        %v1099 = vadd.f32 %v419, %v1098
        %1100 = vmatprep.mubr.f32.mxu0 0.0
        %1101 = vmatmul.mubr.f32.gmra.mxu0 %v535
        %v1102 = vpop.f32.mrf.mxu0
        %v1103 = vadd.f32 %v415, %v1102
        %v1104 = vpop.f32.mrf.mxu0
        %v1105 = vadd.f32 %v419, %v1104
        %1106 = vmatprep.mubr.f32.mxu0 0.0
        %1107 = vmatmul.mubr.f32.gmra.mxu0 %v538
        %v1108 = vpop.f32.mrf.mxu0
        %v1109 = vadd.f32 %v415, %v1108
        %v1110 = vpop.f32.mrf.mxu0
        %v1111 = vadd.f32 %v419, %v1110
        %1112 = vmatprep.mubr.f32.mxu0 0.0
        %1113 = vmatmul.mubr.f32.gmra.mxu0 %v541
        %v1114 = vpop.f32.mrf.mxu0
        %v1115 = vadd.f32 %v415, %v1114
        %v1116 = vpop.f32.mrf.mxu0
        %v1117 = vadd.f32 %v419, %v1116
        %1118 = vmatprep.mubr.f32.mxu0 0.0
        %1119 = vmatmul.mubr.f32.gmra.mxu0 %v544
        %v1120 = vpop.f32.mrf.mxu0
        %v1121 = vadd.f32 %v415, %v1120
        %v1122 = vpop.f32.mrf.mxu0
        %v1123 = vadd.f32 %v419, %v1122
        %1124 = vmatprep.mubr.f32.mxu0 0.0
        %1125 = vmatmul.mubr.f32.gmra.mxu0 %v547
        %v1126 = vpop.f32.mrf.mxu0
        %v1127 = vadd.f32 %v415, %v1126
        %v1128 = vpop.f32.mrf.mxu0
        %v1129 = vadd.f32 %v419, %v1128
        %1130 = vmatprep.mubr.f32.mxu0 0.0
        %1131 = vmatmul.mubr.f32.gmra.mxu0 %v550
        %v1132 = vpop.f32.mrf.mxu0
        %v1133 = vadd.f32 %v415, %v1132
        %v1134 = vpop.f32.mrf.mxu0
        %v1135 = vadd.f32 %v419, %v1134
        %1136 = vmatprep.mubr.f32.mxu0 0.0
        %1137 = vmatmul.mubr.f32.gmra.mxu0 %v553
        %v1138 = vpop.f32.mrf.mxu0
        %v1139 = vadd.f32 %v415, %v1138
        %v1140 = vpop.f32.mrf.mxu0
        %v1141 = vadd.f32 %v419, %v1140
        %1142 = vmatprep.mubr.f32.mxu0 0.0
        %1143 = vmatmul.mubr.f32.gmra.mxu0 %v556
        %v1144 = vpop.f32.mrf.mxu0
        %v1145 = vadd.f32 %v415, %v1144
        %v1146 = vpop.f32.mrf.mxu0
        %v1147 = vadd.f32 %v419, %v1146
        %1148 = vmatprep.mubr.f32.mxu0 0.0
        %1149 = vmatmul.mubr.f32.gmra.mxu0 %v559
        %v1150 = vpop.f32.mrf.mxu0
        %v1151 = vadd.f32 %v415, %v1150
        %v1152 = vpop.f32.mrf.mxu0
        %v1153 = vadd.f32 %v419, %v1152
        %1154 = vmatprep.mubr.f32.mxu0 0.0
        %1155 = vmatmul.mubr.f32.gmra.mxu0 %v562
        %v1156 = vpop.f32.mrf.mxu0
        %v1157 = vadd.f32 %v415, %v1156
        %v1158 = vpop.f32.mrf.mxu0
        %v1159 = vadd.f32 %v419, %v1158
        %1160 = vmatprep.mubr.f32.mxu0 0.0
        %1161 = vmatmul.mubr.f32.gmra.mxu0 %v565
        %v1162 = vpop.f32.mrf.mxu0
        %v1163 = vadd.f32 %v415, %v1162
        %v1164 = vpop.f32.mrf.mxu0
        %v1165 = vadd.f32 %v419, %v1164
        %1166 = vmatprep.mubr.f32.mxu0 0.0
        %1167 = vmatmul.mubr.f32.gmra.mxu0 %v568
        %v1168 = vpop.f32.mrf.mxu0
        %v1169 = vadd.f32 %v415, %v1168
        %v1170 = vpop.f32.mrf.mxu0
        %v1171 = vadd.f32 %v419, %v1170
        %1172 = vmatprep.mubr.f32.mxu0 0.0
        %1173 = vmatmul.mubr.f32.gmra.mxu0 %v571
        %v1174 = vpop.f32.mrf.mxu0
        %v1175 = vadd.f32 %v415, %v1174
        %v1176 = vpop.f32.mrf.mxu0
        %v1177 = vadd.f32 %v419, %v1176
        %1178 = vmatprep.mubr.f32.mxu0 0.0
        %1179 = vmatmul.mubr.f32.gmra.mxu0 %v574
        %v1180 = vpop.f32.mrf.mxu0
        %v1181 = vadd.f32 %v415, %v1180
        %v1182 = vpop.f32.mrf.mxu0
        %v1183 = vadd.f32 %v419, %v1182
        %1184 = vmatprep.mubr.f32.mxu0 0.0
        %1185 = vmatmul.mubr.f32.gmra.mxu0 %v577
        %v1186 = vpop.f32.mrf.mxu0
        %v1187 = vadd.f32 %v415, %v1186
        %v1188 = vpop.f32.mrf.mxu0
        %v1189 = vadd.f32 %v419, %v1188
        %1190 = vmatprep.mubr.f32.mxu0 0.0
        %1191 = vmatmul.mubr.f32.gmra.mxu0 %v580
        %v1192 = vpop.f32.mrf.mxu0
        %v1193 = vadd.f32 %v415, %v1192
        %v1194 = vpop.f32.mrf.mxu0
        %v1195 = vadd.f32 %v419, %v1194
        %1196 = vmatprep.mubr.f32.mxu0 0.0
        %1197 = vmatmul.mubr.f32.gmra.mxu0 %v583
        %v1198 = vpop.f32.mrf.mxu0
        %v1199 = vadd.f32 %v415, %v1198
        %v1200 = vpop.f32.mrf.mxu0
        %v1201 = vadd.f32 %v419, %v1200
        %1202 = vmatprep.mubr.f32.mxu0 0.0
        %1203 = vmatmul.mubr.f32.gmra.mxu0 %v586
        %v1204 = vpop.f32.mrf.mxu0
        %v1205 = vadd.f32 %v415, %v1204
        %v1206 = vpop.f32.mrf.mxu0
        %v1207 = vadd.f32 %v419, %v1206
        %1208 = vmatprep.mubr.f32.mxu0 0.0
        %1209 = vmatmul.mubr.f32.gmra.mxu0 %v589
        %v1210 = vpop.f32.mrf.mxu0
        %v1211 = vadd.f32 %v415, %v1210
        %v1212 = vpop.f32.mrf.mxu0
        %v1213 = vadd.f32 %v419, %v1212
        %1214 = vmatprep.mubr.f32.mxu0 0.0
        %1215 = vmatmul.mubr.f32.gmra.mxu0 %v592
        %v1216 = vpop.f32.mrf.mxu0
        %v1217 = vadd.f32 %v415, %v1216
        %v1218 = vpop.f32.mrf.mxu0
        %v1219 = vadd.f32 %v419, %v1218
        %1220 = vmatprep.mubr.f32.mxu0 0.0
        %1221 = vmatmul.mubr.f32.gmra.mxu0 %v595
        %v1222 = vpop.f32.mrf.mxu0
        %v1223 = vadd.f32 %v415, %v1222
        %v1224 = vpop.f32.mrf.mxu0
        %v1225 = vadd.f32 %v419, %v1224
        %1226 = vmatprep.mubr.f32.mxu0 0.0
        %1227 = vmatmul.mubr.f32.gmra.mxu0 %v598
        %v1228 = vpop.f32.mrf.mxu0
        %v1229 = vadd.f32 %v415, %v1228
        %v1230 = vpop.f32.mrf.mxu0
        %v1231 = vadd.f32 %v419, %v1230
        %1232 = vmatprep.mubr.f32.mxu0 0.0
        %1233 = vmatmul.mubr.f32.gmra.mxu0 %v601
        %v1234 = vpop.f32.mrf.mxu0
        %v1235 = vadd.f32 %v415, %v1234
        %v1236 = vpop.f32.mrf.mxu0
        %v1237 = vadd.f32 %v419, %v1236
        %1238 = vmatprep.mubr.f32.mxu0 0.0
        %1239 = vmatmul.mubr.f32.gmra.mxu0 %v604
        %v1240 = vpop.f32.mrf.mxu0
        %v1241 = vadd.f32 %v415, %v1240
        %v1242 = vpop.f32.mrf.mxu0
        %v1243 = vadd.f32 %v419, %v1242
        %1244 = vmatprep.mubr.f32.mxu0 0.0
        %1245 = vmatmul.mubr.f32.gmra.mxu0 %v607
        %v1246 = vpop.f32.mrf.mxu0
        %v1247 = vadd.f32 %v415, %v1246
        %v1248 = vpop.f32.mrf.mxu0
        %v1249 = vadd.f32 %v419, %v1248
        %1250 = vmatprep.mubr.f32.mxu0 0.0
        %1251 = vmatmul.mubr.f32.gmra.mxu0 %v610
        %v1252 = vpop.f32.mrf.mxu0
        %v1253 = vadd.f32 %v415, %v1252
        %v1254 = vpop.f32.mrf.mxu0
        %v1255 = vadd.f32 %v419, %v1254
        %1256 = vmatprep.mubr.f32.mxu0 0.0
        %1257 = vmatmul.mubr.f32.gmra.mxu0 %v613
        %v1258 = vpop.f32.mrf.mxu0
        %v1259 = vadd.f32 %v415, %v1258
        %v1260 = vpop.f32.mrf.mxu0
        %v1261 = vadd.f32 %v419, %v1260
        %1262 = vmatprep.mubr.f32.mxu0 0.0
        %1263 = vmatmul.mubr.f32.gmra.mxu0 %v616
        %v1264 = vpop.f32.mrf.mxu0
        %v1265 = vadd.f32 %v415, %v1264
        %v1266 = vpop.f32.mrf.mxu0
        %v1267 = vadd.f32 %v419, %v1266
        %1268 = vmatprep.mubr.f32.mxu0 0.0
        %1269 = vmatmul.mubr.f32.gmra.mxu0 %v619
        %v1270 = vpop.f32.mrf.mxu0
        %v1271 = vadd.f32 %v415, %v1270
        %v1272 = vpop.f32.mrf.mxu0
        %v1273 = vadd.f32 %v419, %v1272
        %1274 = vmatprep.mubr.f32.mxu0 0.0
        %1275 = vmatmul.mubr.f32.gmra.mxu0 %v622
        %v1276 = vpop.f32.mrf.mxu0
        %v1277 = vadd.f32 %v415, %v1276
        %v1278 = vpop.f32.mrf.mxu0
        %v1279 = vadd.f32 %v419, %v1278
        %1280 = vmatprep.mubr.f32.mxu0 0.0
        %1281 = vmatmul.mubr.f32.gmra.mxu0 %v625
        %v1282 = vpop.f32.mrf.mxu0
        %v1283 = vadd.f32 %v415, %v1282
        %v1284 = vpop.f32.mrf.mxu0
        %v1285 = vadd.f32 %v419, %v1284
        %1286 = vmatprep.mubr.f32.mxu0 0.0
        %1287 = vmatmul.mubr.f32.gmra.mxu0 %v628
        %v1288 = vpop.f32.mrf.mxu0
        %v1289 = vadd.f32 %v415, %v1288
        %v1290 = vpop.f32.mrf.mxu0
        %v1291 = vadd.f32 %v419, %v1290
        %1292 = vmatprep.mubr.f32.mxu0 0.0
        %1293 = vmatmul.mubr.f32.gmra.mxu0 %v631
        %v1294 = vpop.f32.mrf.mxu0
        %v1295 = vadd.f32 %v415, %v1294
        %v1296 = vpop.f32.mrf.mxu0
        %v1297 = vadd.f32 %v419, %v1296
        %1298 = vmatprep.mubr.f32.mxu0 0.0
        %1299 = vmatmul.mubr.f32.gmra.mxu0 %v634
        %v1300 = vpop.f32.mrf.mxu0
        %v1301 = vadd.f32 %v415, %v1300
        %v1302 = vpop.f32.mrf.mxu0
        %v1303 = vadd.f32 %v419, %v1302
        %1304 = vmatprep.mubr.f32.mxu0 0.0
        %1305 = vmatmul.mubr.f32.gmra.mxu0 %v637
        %v1306 = vpop.f32.mrf.mxu0
        %v1307 = vadd.f32 %v415, %v1306
        %v1308 = vpop.f32.mrf.mxu0
        %v1309 = vadd.f32 %v419, %v1308
        %1310 = vmatprep.mubr.f32.mxu0 0.0
        %1311 = vmatmul.mubr.f32.gmra.mxu0 %v640
        %v1312 = vpop.f32.mrf.mxu0
        %v1313 = vadd.f32 %v415, %v1312
        %v1314 = vpop.f32.mrf.mxu0
        %v1315 = vadd.f32 %v419, %v1314
        %1316 = vmatprep.mubr.f32.mxu0 0.0
        %1317 = vmatmul.mubr.f32.gmra.mxu0 %v643
        %v1318 = vpop.f32.mrf.mxu0
        %v1319 = vadd.f32 %v415, %v1318
        %v1320 = vpop.f32.mrf.mxu0
        %v1321 = vadd.f32 %v419, %v1320
        %1322 = vmatprep.mubr.f32.mxu0 0.0
        %1323 = vmatmul.mubr.f32.gmra.mxu0 %v646
        %v1324 = vpop.f32.mrf.mxu0
        %v1325 = vadd.f32 %v415, %v1324
        %v1326 = vpop.f32.mrf.mxu0
        %v1327 = vadd.f32 %v419, %v1326
        %1328 = vmatprep.mubr.f32.mxu0 0.0
        %1329 = vmatmul.mubr.f32.gmra.mxu0 %v649
        %v1330 = vpop.f32.mrf.mxu0
        %v1331 = vadd.f32 %v415, %v1330
        %v1332 = vpop.f32.mrf.mxu0
        %v1333 = vadd.f32 %v419, %v1332
        %1334 = vmatprep.mubr.f32.mxu0 0.0
        %1335 = vmatmul.mubr.f32.gmra.mxu0 %v652
        %v1336 = vpop.f32.mrf.mxu0
        %v1337 = vadd.f32 %v415, %v1336
        %v1338 = vpop.f32.mrf.mxu0
        %v1339 = vadd.f32 %v419, %v1338
        %1340 = vmatprep.mubr.f32.mxu0 0.0
        %1341 = vmatmul.mubr.f32.gmra.mxu0 %v655
        %v1342 = vpop.f32.mrf.mxu0
        %v1343 = vadd.f32 %v415, %v1342
        %v1344 = vpop.f32.mrf.mxu0
        %v1345 = vadd.f32 %v419, %v1344
        %1346 = vmatprep.mubr.f32.mxu0 0.0
        %1347 = vmatmul.mubr.f32.gmra.mxu0 %v658
        %v1348 = vpop.f32.mrf.mxu0
        %v1349 = vadd.f32 %v415, %v1348
        %v1350 = vpop.f32.mrf.mxu0
        %v1351 = vadd.f32 %v419, %v1350
        %1352 = vmatprep.mubr.f32.mxu0 0.0
        %1353 = vmatmul.mubr.f32.gmra.mxu0 %v661
        %v1354 = vpop.f32.mrf.mxu0
        %v1355 = vadd.f32 %v415, %v1354
        %v1356 = vpop.f32.mrf.mxu0
        %v1357 = vadd.f32 %v419, %v1356
        %1358 = vmatprep.mubr.f32.mxu0 0.0
        %1359 = vmatmul.mubr.f32.gmra.mxu0 %v664
        %v1360 = vpop.f32.mrf.mxu0
        %v1361 = vadd.f32 %v415, %v1360
        %v1362 = vpop.f32.mrf.mxu0
        %v1363 = vadd.f32 %v419, %v1362
        %1364 = vmatprep.mubr.f32.mxu0 0.0
        %1365 = vmatmul.mubr.f32.gmra.mxu0 %v667
        %v1366 = vpop.f32.mrf.mxu0
        %v1367 = vadd.f32 %v415, %v1366
        %v1368 = vpop.f32.mrf.mxu0
        %v1369 = vadd.f32 %v419, %v1368
        %1370 = vmatprep.mubr.f32.mxu0 0.0
        %1371 = vmatmul.mubr.f32.gmra.mxu0 %v670
        %v1372 = vpop.f32.mrf.mxu0
        %v1373 = vadd.f32 %v415, %v1372
        %v1374 = vpop.f32.mrf.mxu0
        %v1375 = vadd.f32 %v419, %v1374
        %1376 = vmatprep.mubr.f32.mxu0 0.0
        %1377 = vmatmul.mubr.f32.gmra.mxu0 %v673
        %v1378 = vpop.f32.mrf.mxu0
        %v1379 = vadd.f32 %v415, %v1378
        %v1380 = vpop.f32.mrf.mxu0
        %v1381 = vadd.f32 %v419, %v1380
        %1382 = vmatprep.mubr.f32.mxu0 0.0
        %1383 = vmatmul.mubr.f32.gmra.mxu0 %v676
        %v1384 = vpop.f32.mrf.mxu0
        %v1385 = vadd.f32 %v415, %v1384
        %v1386 = vpop.f32.mrf.mxu0
        %v1387 = vadd.f32 %v419, %v1386
        %1388 = vmatprep.mubr.f32.mxu0 0.0
        %1389 = vmatmul.mubr.f32.gmra.mxu0 %v679
        %v1390 = vpop.f32.mrf.mxu0
        %v1391 = vadd.f32 %v415, %v1390
        %v1392 = vpop.f32.mrf.mxu0
        %v1393 = vadd.f32 %v419, %v1392
        %1394 = vmatprep.mubr.f32.mxu0 0.0
        %1395 = vmatmul.mubr.f32.gmra.mxu0 %v682
        %v1396 = vpop.f32.mrf.mxu0
        %v1397 = vadd.f32 %v415, %v1396
        %v1398 = vpop.f32.mrf.mxu0
        %v1399 = vadd.f32 %v419, %v1398
        %1400 = vmatprep.mubr.f32.mxu0 0.0
        %1401 = vmatmul.mubr.f32.gmra.mxu0 %v685
        %v1402 = vpop.f32.mrf.mxu0
        %v1403 = vadd.f32 %v415, %v1402
        %v1404 = vpop.f32.mrf.mxu0
        %v1405 = vadd.f32 %v419, %v1404
        %1406 = vmatprep.mubr.f32.mxu0 0.0
        %1407 = vmatmul.mubr.f32.gmra.mxu0 %v688
        %v1408 = vpop.f32.mrf.mxu0
        %v1409 = vadd.f32 %v415, %v1408
        %v1410 = vpop.f32.mrf.mxu0
        %v1411 = vadd.f32 %v419, %v1410
        %1412 = vmatprep.mubr.f32.mxu0 0.0
        %1413 = vmatmul.mubr.f32.gmra.mxu0 %v691
        %v1414 = vpop.f32.mrf.mxu0
        %v1415 = vadd.f32 %v415, %v1414
        %v1416 = vpop.f32.mrf.mxu0
        %v1417 = vadd.f32 %v419, %v1416
        %1418 = vmatprep.mubr.f32.mxu0 0.0
        %1419 = vmatmul.mubr.f32.gmra.mxu0 %v694
        %v1420 = vpop.f32.mrf.mxu0
        %v1421 = vadd.f32 %v415, %v1420
        %v1422 = vpop.f32.mrf.mxu0
        %v1423 = vadd.f32 %v419, %v1422
        %1424 = vmatprep.mubr.f32.mxu0 0.0
        %1425 = vmatmul.mubr.f32.gmra.mxu0 %v697
        %v1426 = vpop.f32.mrf.mxu0
        %v1427 = vadd.f32 %v415, %v1426
        %v1428 = vpop.f32.mrf.mxu0
        %v1429 = vadd.f32 %v419, %v1428
        %1430 = vmatprep.mubr.f32.mxu0 0.0
        %1431 = vmatmul.mubr.f32.gmra.mxu0 %v700
        %v1432 = vpop.f32.mrf.mxu0
        %v1433 = vadd.f32 %v415, %v1432
        %v1434 = vpop.f32.mrf.mxu0
        %v1435 = vadd.f32 %v419, %v1434
        %1436 = vmatprep.mubr.f32.mxu0 0.0
        %1437 = vmatmul.mubr.f32.gmra.mxu0 %v703
        %v1438 = vpop.f32.mrf.mxu0
        %v1439 = vadd.f32 %v415, %v1438
        %v1440 = vpop.f32.mrf.mxu0
        %v1441 = vadd.f32 %v419, %v1440
        %1442 = vmatprep.mubr.f32.mxu0 0.0
        %1443 = vmatmul.mubr.f32.gmra.mxu0 %v706
        %v1444 = vpop.f32.mrf.mxu0
        %v1445 = vadd.f32 %v415, %v1444
        %v1446 = vpop.f32.mrf.mxu0
        %v1447 = vadd.f32 %v419, %v1446
        %1448 = vmatprep.mubr.f32.mxu0 0.0
        %1449 = vmatmul.mubr.f32.gmra.mxu0 %v709
        %v1450 = vpop.f32.mrf.mxu0
        %v1451 = vadd.f32 %v415, %v1450
        %v1452 = vpop.f32.mrf.mxu0
        %v1453 = vadd.f32 %v419, %v1452
        %1454 = vmatprep.mubr.f32.mxu0 0.0
        %1455 = vmatmul.mubr.f32.gmra.mxu0 %v712
        %v1456 = vpop.f32.mrf.mxu0
        %v1457 = vadd.f32 %v415, %v1456
        %v1458 = vpop.f32.mrf.mxu0
        %v1459 = vadd.f32 %v419, %v1458
        %1460 = vmatprep.mubr.f32.mxu0 0.0
        %1461 = vmatmul.mubr.f32.gmra.mxu0 %v715
        %v1462 = vpop.f32.mrf.mxu0
        %v1463 = vadd.f32 %v415, %v1462
        %v1464 = vpop.f32.mrf.mxu0
        %v1465 = vadd.f32 %v419, %v1464
        %1466 = vmatprep.mubr.f32.mxu0 0.0
        %1467 = vmatmul.mubr.f32.gmra.mxu0 %v718
        %v1468 = vpop.f32.mrf.mxu0
        %v1469 = vadd.f32 %v415, %v1468
        %v1470 = vpop.f32.mrf.mxu0
        %v1471 = vadd.f32 %v419, %v1470
        %1472 = vmatprep.mubr.f32.mxu0 0.0
        %1473 = vmatmul.mubr.f32.gmra.mxu0 %v721
        %v1474 = vpop.f32.mrf.mxu0
        %v1475 = vadd.f32 %v415, %v1474
        %v1476 = vpop.f32.mrf.mxu0
        %v1477 = vadd.f32 %v419, %v1476
        %1478 = vmatprep.mubr.f32.mxu0 0.0
        %1479 = vmatmul.mubr.f32.gmra.mxu0 %v724
        %v1480 = vpop.f32.mrf.mxu0
        %v1481 = vadd.f32 %v415, %v1480
        %v1482 = vpop.f32.mrf.mxu0
        %v1483 = vadd.f32 %v419, %v1482
        %1484 = vmatprep.mubr.f32.mxu0 0.0
        %1485 = vmatmul.mubr.f32.gmra.mxu0 %v727
        %v1486 = vpop.f32.mrf.mxu0
        %v1487 = vadd.f32 %v415, %v1486
        %v1488 = vpop.f32.mrf.mxu0
        %v1489 = vadd.f32 %v419, %v1488
        %1490 = vmatprep.mubr.f32.mxu0 0.0
        %1491 = vmatmul.mubr.f32.gmra.mxu0 %v730
        %v1492 = vpop.f32.mrf.mxu0
        %v1493 = vadd.f32 %v415, %v1492
        %v1494 = vpop.f32.mrf.mxu0
        %v1495 = vadd.f32 %v419, %v1494
        %1496 = vmatprep.mubr.f32.mxu0 0.0
        %1497 = vmatmul.mubr.f32.gmra.mxu0 %v733
        %v1498 = vpop.f32.mrf.mxu0
        %v1499 = vadd.f32 %v415, %v1498
        %v1500 = vpop.f32.mrf.mxu0
        %v1501 = vadd.f32 %v419, %v1500
        %1502 = vmatprep.mubr.f32.mxu0 0.0
        %1503 = vmatmul.mubr.f32.gmra.mxu0 %v736
        %v1504 = vpop.f32.mrf.mxu0
        %v1505 = vadd.f32 %v415, %v1504
        %v1506 = vpop.f32.mrf.mxu0
        %v1507 = vadd.f32 %v419, %v1506
        %1508 = vmatprep.mubr.f32.mxu0 0.0
        %1509 = vmatmul.mubr.f32.gmra.mxu0 %v739
        %v1510 = vpop.f32.mrf.mxu0
        %v1511 = vadd.f32 %v415, %v1510
        %v1512 = vpop.f32.mrf.mxu0
        %v1513 = vadd.f32 %v419, %v1512
        %1514 = vmatprep.mubr.f32.mxu0 0.0
        %1515 = vmatmul.mubr.f32.gmra.mxu0 %v742
        %v1516 = vpop.f32.mrf.mxu0
        %v1517 = vadd.f32 %v415, %v1516
        %v1518 = vpop.f32.mrf.mxu0
        %v1519 = vadd.f32 %v419, %v1518
        %1520 = vmatprep.mubr.f32.mxu0 0.0
        %1521 = vmatmul.mubr.f32.gmra.mxu0 %v745
        %v1522 = vpop.f32.mrf.mxu0
        %v1523 = vadd.f32 %v415, %v1522
        %v1524 = vpop.f32.mrf.mxu0
        %v1525 = vadd.f32 %v419, %v1524
        %1526 = vmatprep.mubr.f32.mxu0 0.0
        %1527 = vmatmul.mubr.f32.gmra.mxu0 %v748
        %v1528 = vpop.f32.mrf.mxu0
        %v1529 = vadd.f32 %v415, %v1528
        %v1530 = vpop.f32.mrf.mxu0
        %v1531 = vadd.f32 %v419, %v1530
        %1532 = vmatprep.mubr.f32.mxu0 0.0
        %1533 = vmatmul.mubr.f32.gmra.mxu0 %v751
        %v1534 = vpop.f32.mrf.mxu0
        %v1535 = vadd.f32 %v415, %v1534
        %v1536 = vpop.f32.mrf.mxu0
        %v1537 = vadd.f32 %v419, %v1536
        %1538 = vmatprep.mubr.f32.mxu0 0.0
        %1539 = vmatmul.mubr.f32.gmra.mxu0 %v754
        %v1540 = vpop.f32.mrf.mxu0
        %v1541 = vadd.f32 %v415, %v1540
        %v1542 = vpop.f32.mrf.mxu0
        %v1543 = vadd.f32 %v419, %v1542
        %1544 = vmatprep.mubr.f32.mxu0 0.0
        %1545 = vmatmul.mubr.f32.gmra.mxu0 %v757
        %v1546 = vpop.f32.mrf.mxu0
        %v1547 = vadd.f32 %v415, %v1546
        %v1548 = vpop.f32.mrf.mxu0
        %v1549 = vadd.f32 %v419, %v1548
        %1550 = vmatprep.mubr.f32.mxu0 0.0
        %1551 = vmatmul.mubr.f32.gmra.mxu0 %v760
        %v1552 = vpop.f32.mrf.mxu0
        %v1553 = vadd.f32 %v415, %v1552
        %v1554 = vpop.f32.mrf.mxu0
        %v1555 = vadd.f32 %v419, %v1554
        %1556 = vmatprep.mubr.f32.mxu0 0.0
        %1557 = vmatmul.mubr.f32.gmra.mxu0 %v763
        %v1558 = vpop.f32.mrf.mxu0
        %v1559 = vadd.f32 %v415, %v1558
        %v1560 = vpop.f32.mrf.mxu0
        %v1561 = vadd.f32 %v419, %v1560
        %1562 = vmatprep.mubr.f32.mxu0 0.0
        %1563 = vmatmul.mubr.f32.gmra.mxu0 %v766
        %v1564 = vpop.f32.mrf.mxu0
        %v1565 = vadd.f32 %v415, %v1564
        %v1566 = vpop.f32.mrf.mxu0
        %v1567 = vadd.f32 %v419, %v1566
        %1568 = vmatprep.mubr.f32.mxu0 0.0
        %1569 = vmatmul.mubr.f32.gmra.mxu0 %v769
        %v1570 = vpop.f32.mrf.mxu0
        %v1571 = vadd.f32 %v415, %v1570
        %v1572 = vpop.f32.mrf.mxu0
        %v1573 = vadd.f32 %v419, %v1572
        %1574 = vmatprep.mubr.f32.mxu0 0.0
        %1575 = vmatmul.mubr.f32.gmra.mxu0 %v772
        %v1576 = vpop.f32.mrf.mxu0
        %v1577 = vadd.f32 %v415, %v1576
        %v1578 = vpop.f32.mrf.mxu0
        %v1579 = vadd.f32 %v419, %v1578
        %1580 = vmatprep.mubr.f32.mxu0 0.0
        %1581 = vmatmul.mubr.f32.gmra.mxu0 %v775
        %v1582 = vpop.f32.mrf.mxu0
        %v1583 = vadd.f32 %v415, %v1582
        %v1584 = vpop.f32.mrf.mxu0
        %v1585 = vadd.f32 %v419, %v1584
        %1586 = vmatprep.mubr.f32.mxu0 0.0
        %1587 = vmatmul.mubr.f32.gmra.mxu0 %v778
        %v1588 = vpop.f32.mrf.mxu0
        %v1589 = vadd.f32 %v415, %v1588
        %v1590 = vpop.f32.mrf.mxu0
        %v1591 = vadd.f32 %v419, %v1590
        %1592 = vmatprep.mubr.f32.mxu0 0.0
        %1593 = vmatmul.mubr.f32.gmra.mxu0 %v781
        %v1594 = vpop.f32.mrf.mxu0
        %v1595 = vadd.f32 %v415, %v1594
        %v1596 = vpop.f32.mrf.mxu0
        %v1597 = vadd.f32 %v419, %v1596
        %1598 = vmatprep.mubr.f32.mxu0 0.0
        %1599 = vmatmul.mubr.f32.gmra.mxu0 %v784
        %v1600 = vpop.f32.mrf.mxu0
        %v1601 = vadd.f32 %v415, %v1600
        %v1602 = vpop.f32.mrf.mxu0
        %v1603 = vadd.f32 %v419, %v1602
        %1604 = vmatprep.mubr.f32.mxu0 0.0
        %1605 = vmatmul.mubr.f32.gmra.mxu0 %v787
        %v1606 = vpop.f32.mrf.mxu0
        %v1607 = vadd.f32 %v415, %v1606
        %v1608 = vpop.f32.mrf.mxu0
        %v1609 = vadd.f32 %v419, %v1608
        %1610 = vmatprep.mubr.f32.mxu0 0.0
        %1611 = vmatmul.mubr.f32.gmra.mxu0 %v790
        %v1612 = vpop.f32.mrf.mxu0
        %v1613 = vadd.f32 %v415, %v1612
        %v1614 = vpop.f32.mrf.mxu0
        %v1615 = vadd.f32 %v419, %v1614
        %1616 = vmatprep.mubr.f32.mxu0 0.0
        %1617 = vmatmul.mubr.f32.gmra.mxu0 %v793
        %v1618 = vpop.f32.mrf.mxu0
        %v1619 = vadd.f32 %v415, %v1618
        %v1620 = vpop.f32.mrf.mxu0
        %v1621 = vadd.f32 %v419, %v1620
        %1622 = vmatprep.mubr.f32.mxu0 0.0
        %1623 = vmatmul.mubr.f32.gmra.mxu0 %v796
        %v1624 = vpop.f32.mrf.mxu0
        %v1625 = vadd.f32 %v415, %v1624
        %v1626 = vpop.f32.mrf.mxu0
        %v1627 = vadd.f32 %v419, %v1626
        %1628 = vmatprep.mubr.f32.mxu0 0.0
        %1629 = vmatmul.mubr.f32.gmra.mxu0 %v799
        %v1630 = vpop.f32.mrf.mxu0
        %v1631 = vadd.f32 %v415, %v1630
        %v1632 = vpop.f32.mrf.mxu0
        %v1633 = vadd.f32 %v419, %v1632
        %1634 = vmatprep.mubr.f32.mxu0 0.0
        %1635 = vmatmul.mubr.f32.gmra.mxu0 %v802
        %v1636 = vpop.f32.mrf.mxu0
        %v1637 = vadd.f32 %v415, %v1636
        %v1638 = vpop.f32.mrf.mxu0
        %v1639 = vadd.f32 %v419, %v1638
        %1640 = vmatprep.mubr.f32.mxu0 0.0
        %1641 = vmatmul.mubr.f32.gmra.mxu0 %v805
        %v1642 = vpop.f32.mrf.mxu0
        %v1643 = vadd.f32 %v415, %v1642
        %v1644 = vpop.f32.mrf.mxu0
        %v1645 = vadd.f32 %v419, %v1644
        %1646 = vdwg.mxu0
        %1647 = vst [vmem:[#allocation2] sm:$0xff] %v881
        %vm1648 = vcmask 523264
        %1649 = vst.msk [vmem:[#allocation2 + $0x8] sm:$0xff] %vm1648, %v883
        %1650 = vst [vmem:[#allocation2 + $0x10] sm:$0xff] %v887
        %1651 = vst.msk [vmem:[#allocation2 + $0x18] sm:$0xff] %vm1648, %v889
        %1652 = vst [vmem:[#allocation2 + $0x20] sm:$0xff] %v893
        %1653 = vst.msk [vmem:[#allocation2 + $0x28] sm:$0xff] %vm1648, %v895
        %1654 = vst [vmem:[#allocation2 + $0x30] sm:$0xff] %v899
        %1655 = vst.msk [vmem:[#allocation2 + $0x38] sm:$0xff] %vm1648, %v901
        %1656 = vst [vmem:[#allocation2 + $0x40] sm:$0xff] %v905
        %1657 = vst.msk [vmem:[#allocation2 + $0x48] sm:$0xff] %vm1648, %v907
        %1658 = vst [vmem:[#allocation2 + $0x50] sm:$0xff] %v911
        %1659 = vst.msk [vmem:[#allocation2 + $0x58] sm:$0xff] %vm1648, %v913
        %1660 = vst [vmem:[#allocation2 + $0x60] sm:$0xff] %v917
        %1661 = vst.msk [vmem:[#allocation2 + $0x68] sm:$0xff] %vm1648, %v919
        %1662 = vst [vmem:[#allocation2 + $0x70] sm:$0xff] %v923
        %1663 = vst.msk [vmem:[#allocation2 + $0x78] sm:$0xff] %vm1648, %v925
        %1664 = vst [vmem:[#allocation2 + $0x80] sm:$0xff] %v929
        %1665 = vst.msk [vmem:[#allocation2 + $0x88] sm:$0xff] %vm1648, %v931
        %1666 = vst [vmem:[#allocation2 + $0x90] sm:$0xff] %v935
        %1667 = vst.msk [vmem:[#allocation2 + $0x98] sm:$0xff] %vm1648, %v937
        %1668 = vst [vmem:[#allocation2 + $0xa0] sm:$0xff] %v941
        %1669 = vst.msk [vmem:[#allocation2 + $0xa8] sm:$0xff] %vm1648, %v943
        %1670 = vst [vmem:[#allocation2 + $0xb0] sm:$0xff] %v947
        %1671 = vst.msk [vmem:[#allocation2 + $0xb8] sm:$0xff] %vm1648, %v949
        %1672 = vst [vmem:[#allocation2 + $0xc0] sm:$0xff] %v953
        %1673 = vst.msk [vmem:[#allocation2 + $0xc8] sm:$0xff] %vm1648, %v955
        %1674 = vst [vmem:[#allocation2 + $0xd0] sm:$0xff] %v959
        %1675 = vst.msk [vmem:[#allocation2 + $0xd8] sm:$0xff] %vm1648, %v961
        %1676 = vst [vmem:[#allocation2 + $0xe0] sm:$0xff] %v965
        %1677 = vst.msk [vmem:[#allocation2 + $0xe8] sm:$0xff] %vm1648, %v967
        %1678 = vst [vmem:[#allocation2 + $0xf0] sm:$0xff] %v971
        %1679 = vst.msk [vmem:[#allocation2 + $0xf8] sm:$0xff] %vm1648, %v973
        %1680 = vst [vmem:[#allocation2 + $0x100] sm:$0xff] %v977
        %1681 = vst.msk [vmem:[#allocation2 + $0x108] sm:$0xff] %vm1648, %v979
        %1682 = vst [vmem:[#allocation2 + $0x110] sm:$0xff] %v983
        %1683 = vst.msk [vmem:[#allocation2 + $0x118] sm:$0xff] %vm1648, %v985
        %1684 = vst [vmem:[#allocation2 + $0x120] sm:$0xff] %v989
        %1685 = vst.msk [vmem:[#allocation2 + $0x128] sm:$0xff] %vm1648, %v991
        %1686 = vst [vmem:[#allocation2 + $0x130] sm:$0xff] %v995
        %1687 = vst.msk [vmem:[#allocation2 + $0x138] sm:$0xff] %vm1648, %v997
        %1688 = vst [vmem:[#allocation2 + $0x140] sm:$0xff] %v1001
        %1689 = vst.msk [vmem:[#allocation2 + $0x148] sm:$0xff] %vm1648, %v1003
        %1690 = vst [vmem:[#allocation2 + $0x150] sm:$0xff] %v1007
        %1691 = vst.msk [vmem:[#allocation2 + $0x158] sm:$0xff] %vm1648, %v1009
        %1692 = vst [vmem:[#allocation2 + $0x160] sm:$0xff] %v1013
        %1693 = vst.msk [vmem:[#allocation2 + $0x168] sm:$0xff] %vm1648, %v1015
        %1694 = vst [vmem:[#allocation2 + $0x170] sm:$0xff] %v1019
        %1695 = vst.msk [vmem:[#allocation2 + $0x178] sm:$0xff] %vm1648, %v1021
        %1696 = vst [vmem:[#allocation2 + $0x180] sm:$0xff] %v1025
        %1697 = vst.msk [vmem:[#allocation2 + $0x188] sm:$0xff] %vm1648, %v1027
        %1698 = vst [vmem:[#allocation2 + $0x190] sm:$0xff] %v1031
        %1699 = vst.msk [vmem:[#allocation2 + $0x198] sm:$0xff] %vm1648, %v1033
        %1700 = vst [vmem:[#allocation2 + $0x1a0] sm:$0xff] %v1037
        %1701 = vst.msk [vmem:[#allocation2 + $0x1a8] sm:$0xff] %vm1648, %v1039
        %1702 = vst [vmem:[#allocation2 + $0x1b0] sm:$0xff] %v1043
        %1703 = vst.msk [vmem:[#allocation2 + $0x1b8] sm:$0xff] %vm1648, %v1045
        %1704 = vst [vmem:[#allocation2 + $0x1c0] sm:$0xff] %v1049
        %1705 = vst.msk [vmem:[#allocation2 + $0x1c8] sm:$0xff] %vm1648, %v1051
        %1706 = vst [vmem:[#allocation2 + $0x1d0] sm:$0xff] %v1055
        %1707 = vst.msk [vmem:[#allocation2 + $0x1d8] sm:$0xff] %vm1648, %v1057
        %1708 = vst [vmem:[#allocation2 + $0x1e0] sm:$0xff] %v1061
        %1709 = vst.msk [vmem:[#allocation2 + $0x1e8] sm:$0xff] %vm1648, %v1063
        %1710 = vst [vmem:[#allocation2 + $0x1f0] sm:$0xff] %v1067
        %1711 = vst.msk [vmem:[#allocation2 + $0x1f8] sm:$0xff] %vm1648, %v1069
        %1712 = vst [vmem:[#allocation2 + $0x200] sm:$0xff] %v1073
        %1713 = vst.msk [vmem:[#allocation2 + $0x208] sm:$0xff] %vm1648, %v1075
        %1714 = vst [vmem:[#allocation2 + $0x210] sm:$0xff] %v1079
        %1715 = vst.msk [vmem:[#allocation2 + $0x218] sm:$0xff] %vm1648, %v1081
        %1716 = vst [vmem:[#allocation2 + $0x220] sm:$0xff] %v1085
        %1717 = vst.msk [vmem:[#allocation2 + $0x228] sm:$0xff] %vm1648, %v1087
        %1718 = vst [vmem:[#allocation2 + $0x230] sm:$0xff] %v1091
        %1719 = vst.msk [vmem:[#allocation2 + $0x238] sm:$0xff] %vm1648, %v1093
        %1720 = vst [vmem:[#allocation2 + $0x240] sm:$0xff] %v1097
        %1721 = vst.msk [vmem:[#allocation2 + $0x248] sm:$0xff] %vm1648, %v1099
        %1722 = vst [vmem:[#allocation2 + $0x250] sm:$0xff] %v1103
        %1723 = vst.msk [vmem:[#allocation2 + $0x258] sm:$0xff] %vm1648, %v1105
        %1724 = vst [vmem:[#allocation2 + $0x260] sm:$0xff] %v1109
        %1725 = vst.msk [vmem:[#allocation2 + $0x268] sm:$0xff] %vm1648, %v1111
        %1726 = vst [vmem:[#allocation2 + $0x270] sm:$0xff] %v1115
        %1727 = vst.msk [vmem:[#allocation2 + $0x278] sm:$0xff] %vm1648, %v1117
        %1728 = vst [vmem:[#allocation2 + $0x280] sm:$0xff] %v1121
        %1729 = vst.msk [vmem:[#allocation2 + $0x288] sm:$0xff] %vm1648, %v1123
        %1730 = vst [vmem:[#allocation2 + $0x290] sm:$0xff] %v1127
        %1731 = vst.msk [vmem:[#allocation2 + $0x298] sm:$0xff] %vm1648, %v1129
        %1732 = vst [vmem:[#allocation2 + $0x2a0] sm:$0xff] %v1133
        %1733 = vst.msk [vmem:[#allocation2 + $0x2a8] sm:$0xff] %vm1648, %v1135
        %1734 = vst [vmem:[#allocation2 + $0x2b0] sm:$0xff] %v1139
        %1735 = vst.msk [vmem:[#allocation2 + $0x2b8] sm:$0xff] %vm1648, %v1141
        %1736 = vst [vmem:[#allocation2 + $0x2c0] sm:$0xff] %v1145
        %1737 = vst.msk [vmem:[#allocation2 + $0x2c8] sm:$0xff] %vm1648, %v1147
        %1738 = vst [vmem:[#allocation2 + $0x2d0] sm:$0xff] %v1151
        %1739 = vst.msk [vmem:[#allocation2 + $0x2d8] sm:$0xff] %vm1648, %v1153
        %1740 = vst [vmem:[#allocation2 + $0x2e0] sm:$0xff] %v1157
        %1741 = vst.msk [vmem:[#allocation2 + $0x2e8] sm:$0xff] %vm1648, %v1159
        %1742 = vst [vmem:[#allocation2 + $0x2f0] sm:$0xff] %v1163
        %1743 = vst.msk [vmem:[#allocation2 + $0x2f8] sm:$0xff] %vm1648, %v1165
        %1744 = vst [vmem:[#allocation2 + $0x300] sm:$0xff] %v1169
        %1745 = vst.msk [vmem:[#allocation2 + $0x308] sm:$0xff] %vm1648, %v1171
        %1746 = vst [vmem:[#allocation2 + $0x310] sm:$0xff] %v1175
        %1747 = vst.msk [vmem:[#allocation2 + $0x318] sm:$0xff] %vm1648, %v1177
        %1748 = vst [vmem:[#allocation2 + $0x320] sm:$0xff] %v1181
        %1749 = vst.msk [vmem:[#allocation2 + $0x328] sm:$0xff] %vm1648, %v1183
        %1750 = vst [vmem:[#allocation2 + $0x330] sm:$0xff] %v1187
        %1751 = vst.msk [vmem:[#allocation2 + $0x338] sm:$0xff] %vm1648, %v1189
        %1752 = vst [vmem:[#allocation2 + $0x340] sm:$0xff] %v1193
        %1753 = vst.msk [vmem:[#allocation2 + $0x348] sm:$0xff] %vm1648, %v1195
        %1754 = vst [vmem:[#allocation2 + $0x350] sm:$0xff] %v1199
        %1755 = vst.msk [vmem:[#allocation2 + $0x358] sm:$0xff] %vm1648, %v1201
        %1756 = vst [vmem:[#allocation2 + $0x360] sm:$0xff] %v1205
        %1757 = vst.msk [vmem:[#allocation2 + $0x368] sm:$0xff] %vm1648, %v1207
        %1758 = vst [vmem:[#allocation2 + $0x370] sm:$0xff] %v1211
        %1759 = vst.msk [vmem:[#allocation2 + $0x378] sm:$0xff] %vm1648, %v1213
        %1760 = vst [vmem:[#allocation2 + $0x380] sm:$0xff] %v1217
        %1761 = vst.msk [vmem:[#allocation2 + $0x388] sm:$0xff] %vm1648, %v1219
        %1762 = vst [vmem:[#allocation2 + $0x390] sm:$0xff] %v1223
        %1763 = vst.msk [vmem:[#allocation2 + $0x398] sm:$0xff] %vm1648, %v1225
        %1764 = vst [vmem:[#allocation2 + $0x3a0] sm:$0xff] %v1229
        %1765 = vst.msk [vmem:[#allocation2 + $0x3a8] sm:$0xff] %vm1648, %v1231
        %1766 = vst [vmem:[#allocation2 + $0x3b0] sm:$0xff] %v1235
        %1767 = vst.msk [vmem:[#allocation2 + $0x3b8] sm:$0xff] %vm1648, %v1237
        %1768 = vst [vmem:[#allocation2 + $0x3c0] sm:$0xff] %v1241
        %1769 = vst.msk [vmem:[#allocation2 + $0x3c8] sm:$0xff] %vm1648, %v1243
        %1770 = vst [vmem:[#allocation2 + $0x3d0] sm:$0xff] %v1247
        %1771 = vst.msk [vmem:[#allocation2 + $0x3d8] sm:$0xff] %vm1648, %v1249
        %1772 = vst [vmem:[#allocation2 + $0x3e0] sm:$0xff] %v1253
        %1773 = vst.msk [vmem:[#allocation2 + $0x3e8] sm:$0xff] %vm1648, %v1255
        %1774 = vst [vmem:[#allocation2 + $0x3f0] sm:$0xff] %v1259
        %1775 = vst.msk [vmem:[#allocation2 + $0x3f8] sm:$0xff] %vm1648, %v1261
        %1776 = vst [vmem:[#allocation2 + $0x400] sm:$0xff] %v1265
        %1777 = vst.msk [vmem:[#allocation2 + $0x408] sm:$0xff] %vm1648, %v1267
        %1778 = vst [vmem:[#allocation2 + $0x410] sm:$0xff] %v1271
        %1779 = vst.msk [vmem:[#allocation2 + $0x418] sm:$0xff] %vm1648, %v1273
        %1780 = vst [vmem:[#allocation2 + $0x420] sm:$0xff] %v1277
        %1781 = vst.msk [vmem:[#allocation2 + $0x428] sm:$0xff] %vm1648, %v1279
        %1782 = vst [vmem:[#allocation2 + $0x430] sm:$0xff] %v1283
        %1783 = vst.msk [vmem:[#allocation2 + $0x438] sm:$0xff] %vm1648, %v1285
        %1784 = vst [vmem:[#allocation2 + $0x440] sm:$0xff] %v1289
        %1785 = vst.msk [vmem:[#allocation2 + $0x448] sm:$0xff] %vm1648, %v1291
        %1786 = vst [vmem:[#allocation2 + $0x450] sm:$0xff] %v1295
        %1787 = vst.msk [vmem:[#allocation2 + $0x458] sm:$0xff] %vm1648, %v1297
        %1788 = vst [vmem:[#allocation2 + $0x460] sm:$0xff] %v1301
        %1789 = vst.msk [vmem:[#allocation2 + $0x468] sm:$0xff] %vm1648, %v1303
        %1790 = vst [vmem:[#allocation2 + $0x470] sm:$0xff] %v1307
        %1791 = vst.msk [vmem:[#allocation2 + $0x478] sm:$0xff] %vm1648, %v1309
        %1792 = vst [vmem:[#allocation2 + $0x480] sm:$0xff] %v1313
        %1793 = vst.msk [vmem:[#allocation2 + $0x488] sm:$0xff] %vm1648, %v1315
        %1794 = vst [vmem:[#allocation2 + $0x490] sm:$0xff] %v1319
        %1795 = vst.msk [vmem:[#allocation2 + $0x498] sm:$0xff] %vm1648, %v1321
        %1796 = vst [vmem:[#allocation2 + $0x4a0] sm:$0xff] %v1325
        %1797 = vst.msk [vmem:[#allocation2 + $0x4a8] sm:$0xff] %vm1648, %v1327
        %1798 = vst [vmem:[#allocation2 + $0x4b0] sm:$0xff] %v1331
        %1799 = vst.msk [vmem:[#allocation2 + $0x4b8] sm:$0xff] %vm1648, %v1333
        %1800 = vst [vmem:[#allocation2 + $0x4c0] sm:$0xff] %v1337
        %1801 = vst.msk [vmem:[#allocation2 + $0x4c8] sm:$0xff] %vm1648, %v1339
        %1802 = vst [vmem:[#allocation2 + $0x4d0] sm:$0xff] %v1343
        %1803 = vst.msk [vmem:[#allocation2 + $0x4d8] sm:$0xff] %vm1648, %v1345
        %1804 = vst [vmem:[#allocation2 + $0x4e0] sm:$0xff] %v1349
        %1805 = vst.msk [vmem:[#allocation2 + $0x4e8] sm:$0xff] %vm1648, %v1351
        %1806 = vst [vmem:[#allocation2 + $0x4f0] sm:$0xff] %v1355
        %1807 = vst.msk [vmem:[#allocation2 + $0x4f8] sm:$0xff] %vm1648, %v1357
        %1808 = vst [vmem:[#allocation2 + $0x500] sm:$0xff] %v1361
        %1809 = vst.msk [vmem:[#allocation2 + $0x508] sm:$0xff] %vm1648, %v1363
        %1810 = vst [vmem:[#allocation2 + $0x510] sm:$0xff] %v1367
        %1811 = vst.msk [vmem:[#allocation2 + $0x518] sm:$0xff] %vm1648, %v1369
        %1812 = vst [vmem:[#allocation2 + $0x520] sm:$0xff] %v1373
        %1813 = vst.msk [vmem:[#allocation2 + $0x528] sm:$0xff] %vm1648, %v1375
        %1814 = vst [vmem:[#allocation2 + $0x530] sm:$0xff] %v1379
        %1815 = vst.msk [vmem:[#allocation2 + $0x538] sm:$0xff] %vm1648, %v1381
        %1816 = vst [vmem:[#allocation2 + $0x540] sm:$0xff] %v1385
        %1817 = vst.msk [vmem:[#allocation2 + $0x548] sm:$0xff] %vm1648, %v1387
        %1818 = vst [vmem:[#allocation2 + $0x550] sm:$0xff] %v1391
        %1819 = vst.msk [vmem:[#allocation2 + $0x558] sm:$0xff] %vm1648, %v1393
        %1820 = vst [vmem:[#allocation2 + $0x560] sm:$0xff] %v1397
        %1821 = vst.msk [vmem:[#allocation2 + $0x568] sm:$0xff] %vm1648, %v1399
        %1822 = vst [vmem:[#allocation2 + $0x570] sm:$0xff] %v1403
        %1823 = vst.msk [vmem:[#allocation2 + $0x578] sm:$0xff] %vm1648, %v1405
        %1824 = vst [vmem:[#allocation2 + $0x580] sm:$0xff] %v1409
        %1825 = vst.msk [vmem:[#allocation2 + $0x588] sm:$0xff] %vm1648, %v1411
        %1826 = vst [vmem:[#allocation2 + $0x590] sm:$0xff] %v1415
        %1827 = vst.msk [vmem:[#allocation2 + $0x598] sm:$0xff] %vm1648, %v1417
        %1828 = vst [vmem:[#allocation2 + $0x5a0] sm:$0xff] %v1421
        %1829 = vst.msk [vmem:[#allocation2 + $0x5a8] sm:$0xff] %vm1648, %v1423
        %1830 = vst [vmem:[#allocation2 + $0x5b0] sm:$0xff] %v1427
        %1831 = vst.msk [vmem:[#allocation2 + $0x5b8] sm:$0xff] %vm1648, %v1429
        %1832 = vst [vmem:[#allocation2 + $0x5c0] sm:$0xff] %v1433
        %1833 = vst.msk [vmem:[#allocation2 + $0x5c8] sm:$0xff] %vm1648, %v1435
        %1834 = vst [vmem:[#allocation2 + $0x5d0] sm:$0xff] %v1439
        %1835 = vst.msk [vmem:[#allocation2 + $0x5d8] sm:$0xff] %vm1648, %v1441
        %1836 = vst [vmem:[#allocation2 + $0x5e0] sm:$0xff] %v1445
        %1837 = vst.msk [vmem:[#allocation2 + $0x5e8] sm:$0xff] %vm1648, %v1447
        %1838 = vst [vmem:[#allocation2 + $0x5f0] sm:$0xff] %v1451
        %1839 = vst.msk [vmem:[#allocation2 + $0x5f8] sm:$0xff] %vm1648, %v1453
        %1840 = vst [vmem:[#allocation2 + $0x600] sm:$0xff] %v1457
        %1841 = vst.msk [vmem:[#allocation2 + $0x608] sm:$0xff] %vm1648, %v1459
        %1842 = vst [vmem:[#allocation2 + $0x610] sm:$0xff] %v1463
        %1843 = vst.msk [vmem:[#allocation2 + $0x618] sm:$0xff] %vm1648, %v1465
        %1844 = vst [vmem:[#allocation2 + $0x620] sm:$0xff] %v1469
        %1845 = vst.msk [vmem:[#allocation2 + $0x628] sm:$0xff] %vm1648, %v1471
        %1846 = vst [vmem:[#allocation2 + $0x630] sm:$0xff] %v1475
        %1847 = vst.msk [vmem:[#allocation2 + $0x638] sm:$0xff] %vm1648, %v1477
        %1848 = vst [vmem:[#allocation2 + $0x640] sm:$0xff] %v1481
        %1849 = vst.msk [vmem:[#allocation2 + $0x648] sm:$0xff] %vm1648, %v1483
        %1850 = vst [vmem:[#allocation2 + $0x650] sm:$0xff] %v1487
        %1851 = vst.msk [vmem:[#allocation2 + $0x658] sm:$0xff] %vm1648, %v1489
        %1852 = vst [vmem:[#allocation2 + $0x660] sm:$0xff] %v1493
        %1853 = vst.msk [vmem:[#allocation2 + $0x668] sm:$0xff] %vm1648, %v1495
        %1854 = vst [vmem:[#allocation2 + $0x670] sm:$0xff] %v1499
        %1855 = vst.msk [vmem:[#allocation2 + $0x678] sm:$0xff] %vm1648, %v1501
        %1856 = vst [vmem:[#allocation2 + $0x680] sm:$0xff] %v1505
        %1857 = vst.msk [vmem:[#allocation2 + $0x688] sm:$0xff] %vm1648, %v1507
        %1858 = vst [vmem:[#allocation2 + $0x690] sm:$0xff] %v1511
        %1859 = vst.msk [vmem:[#allocation2 + $0x698] sm:$0xff] %vm1648, %v1513
        %1860 = vst [vmem:[#allocation2 + $0x6a0] sm:$0xff] %v1517
        %1861 = vst.msk [vmem:[#allocation2 + $0x6a8] sm:$0xff] %vm1648, %v1519
        %1862 = vst [vmem:[#allocation2 + $0x6b0] sm:$0xff] %v1523
        %1863 = vst.msk [vmem:[#allocation2 + $0x6b8] sm:$0xff] %vm1648, %v1525
        %1864 = vst [vmem:[#allocation2 + $0x6c0] sm:$0xff] %v1529
        %1865 = vst.msk [vmem:[#allocation2 + $0x6c8] sm:$0xff] %vm1648, %v1531
        %1866 = vst [vmem:[#allocation2 + $0x6d0] sm:$0xff] %v1535
        %1867 = vst.msk [vmem:[#allocation2 + $0x6d8] sm:$0xff] %vm1648, %v1537
        %1868 = vst [vmem:[#allocation2 + $0x6e0] sm:$0xff] %v1541
        %1869 = vst.msk [vmem:[#allocation2 + $0x6e8] sm:$0xff] %vm1648, %v1543
        %1870 = vst [vmem:[#allocation2 + $0x6f0] sm:$0xff] %v1547
        %1871 = vst.msk [vmem:[#allocation2 + $0x6f8] sm:$0xff] %vm1648, %v1549
        %1872 = vst [vmem:[#allocation2 + $0x700] sm:$0xff] %v1553
        %1873 = vst.msk [vmem:[#allocation2 + $0x708] sm:$0xff] %vm1648, %v1555
        %1874 = vst [vmem:[#allocation2 + $0x710] sm:$0xff] %v1559
        %1875 = vst.msk [vmem:[#allocation2 + $0x718] sm:$0xff] %vm1648, %v1561
        %1876 = vst [vmem:[#allocation2 + $0x720] sm:$0xff] %v1565
        %1877 = vst.msk [vmem:[#allocation2 + $0x728] sm:$0xff] %vm1648, %v1567
        %1878 = vst [vmem:[#allocation2 + $0x730] sm:$0xff] %v1571
        %1879 = vst.msk [vmem:[#allocation2 + $0x738] sm:$0xff] %vm1648, %v1573
        %1880 = vst [vmem:[#allocation2 + $0x740] sm:$0xff] %v1577
        %1881 = vst.msk [vmem:[#allocation2 + $0x748] sm:$0xff] %vm1648, %v1579
        %1882 = vst [vmem:[#allocation2 + $0x750] sm:$0xff] %v1583
        %1883 = vst.msk [vmem:[#allocation2 + $0x758] sm:$0xff] %vm1648, %v1585
        %1884 = vst [vmem:[#allocation2 + $0x760] sm:$0xff] %v1589
        %1885 = vst.msk [vmem:[#allocation2 + $0x768] sm:$0xff] %vm1648, %v1591
        %1886 = vst [vmem:[#allocation2 + $0x770] sm:$0xff] %v1595
        %1887 = vst.msk [vmem:[#allocation2 + $0x778] sm:$0xff] %vm1648, %v1597
        %1888 = vst [vmem:[#allocation2 + $0x780] sm:$0xff] %v1601
        %1889 = vst.msk [vmem:[#allocation2 + $0x788] sm:$0xff] %vm1648, %v1603
        %1890 = vst [vmem:[#allocation2 + $0x790] sm:$0xff] %v1607
        %1891 = vst.msk [vmem:[#allocation2 + $0x798] sm:$0xff] %vm1648, %v1609
        %1892 = vst [vmem:[#allocation2 + $0x7a0] sm:$0xff] %v1613
        %1893 = vst.msk [vmem:[#allocation2 + $0x7a8] sm:$0xff] %vm1648, %v1615
        %1894 = vst [vmem:[#allocation2 + $0x7b0] sm:$0xff] %v1619
        %1895 = vst.msk [vmem:[#allocation2 + $0x7b8] sm:$0xff] %vm1648, %v1621
        %1896 = vst [vmem:[#allocation2 + $0x7c0] sm:$0xff] %v1625
        %1897 = vst.msk [vmem:[#allocation2 + $0x7c8] sm:$0xff] %vm1648, %v1627
        %1898 = vst [vmem:[#allocation2 + $0x7d0] sm:$0xff] %v1631
        %1899 = vst.msk [vmem:[#allocation2 + $0x7d8] sm:$0xff] %vm1648, %v1633
        %1900 = vst [vmem:[#allocation2 + $0x7e0] sm:$0xff] %v1637
        %1901 = vst.msk [vmem:[#allocation2 + $0x7e8] sm:$0xff] %vm1648, %v1639
        %1902 = vst [vmem:[#allocation2 + $0x7f0] sm:$0xff] %v1643
        %1903 = vst.msk [vmem:[#allocation2 + $0x7f8] sm:$0xff] %vm1648, %v1645
        %v1904 = vld [vmem:[%s2] sm:$0xff]
        %v1905 = vld [vmem:[%s2 + $0x8] sm:$0xff]
        %v1906 = vld [vmem:[%s2 + $0x10] sm:$0xff]
        %v1907 = vld [vmem:[%s2 + $0x18] sm:$0xff]
        %v1908 = vld [vmem:[%s2 + $0x20] sm:$0xff]
        %v1909 = vld [vmem:[%s2 + $0x28] sm:$0xff]
        %v1910 = vld [vmem:[%s2 + $0x30] sm:$0xff]
        %v1911 = vld [vmem:[%s2 + $0x38] sm:$0xff]
        %v1912 = vld [vmem:[%s2 + $0x40] sm:$0xff]
        %v1913 = vld [vmem:[%s2 + $0x48] sm:$0xff]
        %v1914 = vld [vmem:[%s2 + $0x50] sm:$0xff]
        %v1915 = vld [vmem:[%s2 + $0x58] sm:$0xff]
        %v1916 = vld [vmem:[%s2 + $0x60] sm:$0xff]
        %v1917 = vld [vmem:[%s2 + $0x68] sm:$0xff]
        %v1918 = vld [vmem:[%s2 + $0x70] sm:$0xff]
        %v1919 = vld [vmem:[%s2 + $0x78] sm:$0xff]
        %v1920 = vld [vmem:[%s5] sm:$0xff]
        %v1921 = vld [vmem:[%s5 + $0x8] sm:$0xff]
        %v1922 = vld [vmem:[%s5 + $0x10] sm:$0xff]
        %v1923 = vld [vmem:[%s5 + $0x18] sm:$0xff]
        %v1924 = vld [vmem:[%s5 + $0x20] sm:$0xff]
        %v1925 = vld [vmem:[%s5 + $0x28] sm:$0xff]
        %v1926 = vld [vmem:[%s5 + $0x30] sm:$0xff]
        %v1927 = vld [vmem:[%s5 + $0x38] sm:$0xff]
        %v1928 = vld [vmem:[%s5 + $0x40] sm:$0xff]
        %v1929 = vld [vmem:[%s5 + $0x48] sm:$0xff]
        %v1930 = vld [vmem:[%s5 + $0x50] sm:$0xff]
        %v1931 = vld [vmem:[%s5 + $0x58] sm:$0xff]
        %v1932 = vld [vmem:[%s5 + $0x60] sm:$0xff]
        %v1933 = vld [vmem:[%s5 + $0x68] sm:$0xff]
        %v1934 = vld [vmem:[%s5 + $0x70] sm:$0xff]
        %v1935 = vld [vmem:[%s5 + $0x78] sm:$0xff]
        %v1936 = vld [vmem:[%s5 + $0x80] sm:$0xff]
        %v1937 = vld [vmem:[%s5 + $0x88] sm:$0xff]
        %v1938 = vld [vmem:[%s5 + $0x90] sm:$0xff]
        %v1939 = vld [vmem:[%s5 + $0x98] sm:$0xff]
        %v1940 = vld [vmem:[%s5 + $0xa0] sm:$0xff]
        %v1941 = vld [vmem:[%s5 + $0xa8] sm:$0xff]
        %v1942 = vld [vmem:[%s5 + $0xb0] sm:$0xff]
        %v1943 = vld [vmem:[%s5 + $0xb8] sm:$0xff]
        %v1944 = vld [vmem:[%s5 + $0xc0] sm:$0xff]
        %v1945 = vld [vmem:[%s5 + $0xc8] sm:$0xff]
        %v1946 = vld [vmem:[%s5 + $0xd0] sm:$0xff]
        %v1947 = vld [vmem:[%s5 + $0xd8] sm:$0xff]
        %v1948 = vld [vmem:[%s5 + $0xe0] sm:$0xff]
        %v1949 = vld [vmem:[%s5 + $0xe8] sm:$0xff]
        %v1950 = vld [vmem:[%s5 + $0xf0] sm:$0xff]
        %v1951 = vld [vmem:[%s5 + $0xf8] sm:$0xff]
        %v1952 = vld [vmem:[%s4] sm:$0x1]
        %v1954 = vlaneseq
        %v1955 = vshrl.u32 %v1954, 7
        %v1956 = vsub.s32 0, %v1955
        %v1957 = vrot.slane %v1952, %v1956
        %v1959 = vld [vmem:[%s6] sm:$0x3]
        %v1961 = vlaneseq
        %v1962 = vshrl.u32 %v1961, 7
        %v1963 = vsub.s32 0, %v1962
        %v1964 = vrot.slane %v1959, %v1963
        %v1965 = vlaneseq
        %v1966 = vshrl.u32 %v1965, 7
        %v1967 = vsub.s32 1, %v1966
        %v1968 = vrot.slane %v1959, %v1967
        %v1971 = vld [vmem:[#allocation2] sm:$0xff]
        %v1972 = vld [vmem:[#allocation2 + $0x8] sm:$0xff]
        %v1973 = vld [vmem:[#allocation2 + $0x10] sm:$0xff]
        %v1974 = vld [vmem:[#allocation2 + $0x18] sm:$0xff]
        %v1975 = vld [vmem:[#allocation2 + $0x20] sm:$0xff]
        %v1976 = vld [vmem:[#allocation2 + $0x28] sm:$0xff]
        %v1977 = vld [vmem:[#allocation2 + $0x30] sm:$0xff]
        %v1978 = vld [vmem:[#allocation2 + $0x38] sm:$0xff]
        %v1979 = vld [vmem:[#allocation2 + $0x40] sm:$0xff]
        %v1980 = vld [vmem:[#allocation2 + $0x48] sm:$0xff]
        %v1981 = vld [vmem:[#allocation2 + $0x50] sm:$0xff]
        %v1982 = vld [vmem:[#allocation2 + $0x58] sm:$0xff]
        %v1983 = vld [vmem:[#allocation2 + $0x60] sm:$0xff]
        %v1984 = vld [vmem:[#allocation2 + $0x68] sm:$0xff]
        %v1985 = vld [vmem:[#allocation2 + $0x70] sm:$0xff]
        %v1986 = vld [vmem:[#allocation2 + $0x78] sm:$0xff]
        %v1987 = vld [vmem:[#allocation2 + $0x80] sm:$0xff]
        %v1988 = vld [vmem:[#allocation2 + $0x88] sm:$0xff]
        %v1989 = vld [vmem:[#allocation2 + $0x90] sm:$0xff]
        %v1990 = vld [vmem:[#allocation2 + $0x98] sm:$0xff]
        %v1991 = vld [vmem:[#allocation2 + $0xa0] sm:$0xff]
        %v1992 = vld [vmem:[#allocation2 + $0xa8] sm:$0xff]
        %v1993 = vld [vmem:[#allocation2 + $0xb0] sm:$0xff]
        %v1994 = vld [vmem:[#allocation2 + $0xb8] sm:$0xff]
        %v1995 = vld [vmem:[#allocation2 + $0xc0] sm:$0xff]
        %v1996 = vld [vmem:[#allocation2 + $0xc8] sm:$0xff]
        %v1997 = vld [vmem:[#allocation2 + $0xd0] sm:$0xff]
        %v1998 = vld [vmem:[#allocation2 + $0xd8] sm:$0xff]
        %v1999 = vld [vmem:[#allocation2 + $0xe0] sm:$0xff]
        %v2000 = vld [vmem:[#allocation2 + $0xe8] sm:$0xff]
        %v2001 = vld [vmem:[#allocation2 + $0xf0] sm:$0xff]
        %v2002 = vld [vmem:[#allocation2 + $0xf8] sm:$0xff]
        %v2004 = vsel %vm1648, 0.0, 0
        %2006 = vmatprep.subr.mxu0 0.0
        %2007 = vmatpush1.msra.mxu0 0.0
        %2008 = vmatprep.subr.mxu0 0.0
        %2009 = vmatpush1.msra.mxu0 0.0
        %2010 = vmatprep.subr.mxu0 0.0
        %2011 = vmatpush1.msra.mxu0 0.0
        %2012 = vmatprep.subr.mxu0 0.0
        %2013 = vmatpush1.msra.mxu0 0.0
        %2014 = vmatprep.subr.mxu0 0.0
        %2015 = vmatpush1.msra.mxu0 0.0
        %2016 = vmatprep.subr.mxu0 0.0
        %2017 = vmatpush1.msra.mxu0 0.0
        %2018 = vmatprep.subr.mxu0 0.0
        %2019 = vmatpush1.msra.mxu0 0.0
        %2020 = vmatprep.subr.mxu0 0.0
        %2021 = vmatpush1.msra.mxu0 0.0
        %2022 = vmatprep.subr.mxu0 %v1919
        %2023 = vmatpush1.msra.mxu0 %v1918
        %2024 = vmatprep.subr.mxu0 %v1917
        %2025 = vmatpush1.msra.mxu0 %v1916
        %2026 = vmatprep.subr.mxu0 %v1915
        %2027 = vmatpush1.msra.mxu0 %v1914
        %2028 = vmatprep.subr.mxu0 %v1913
        %2029 = vmatpush1.msra.mxu0 %v1912
        %2030 = vmatprep.subr.mxu0 %v1911
        %2031 = vmatpush1.msra.mxu0 %v1910
        %2032 = vmatprep.subr.mxu0 %v1909
        %2033 = vmatpush1.msra.mxu0 %v1908
        %2034 = vmatprep.subr.mxu0 %v1907
        %2035 = vmatpush1.msra.mxu0 %v1906
        %2036 = vmatprep.subr.mxu0 %v1905
        %2037 = vmatpush1.msra.mxu0 %v1904
        %2038 = vmatprep.subr.mxu0 0.0
        %2039 = vmatpush2.msra.mxu0 0.0
        %2040 = vmatprep.subr.mxu0 0.0
        %2041 = vmatpush2.msra.mxu0 0.0
        %2042 = vmatprep.subr.mxu0 0.0
        %2043 = vmatpush2.msra.mxu0 0.0
        %2044 = vmatprep.subr.mxu0 0.0
        %2045 = vmatpush2.msra.mxu0 0.0
        %2046 = vmatprep.subr.mxu0 0.0
        %2047 = vmatpush2.msra.mxu0 0.0
        %2048 = vmatprep.subr.mxu0 0.0
        %2049 = vmatpush2.msra.mxu0 0.0
        %2050 = vmatprep.subr.mxu0 0.0
        %2051 = vmatpush2.msra.mxu0 0.0
        %2052 = vmatprep.subr.mxu0 0.0
        %2053 = vmatpush2.msra.mxu0 0.0
        %2054 = vmatprep.subr.mxu0 0.0
        %2055 = vmatpush2.msra.mxu0 0.0
        %2056 = vmatprep.subr.mxu0 0.0
        %2057 = vmatpush2.msra.mxu0 0.0
        %2058 = vmatprep.subr.mxu0 0.0
        %2059 = vmatpush2.msra.mxu0 0.0
        %2060 = vmatprep.subr.mxu0 0.0
        %2061 = vmatpush2.msra.mxu0 0.0
        %2062 = vmatprep.subr.mxu0 0.0
        %2063 = vmatpush2.msra.mxu0 0.0
        %2064 = vmatprep.subr.mxu0 0.0
        %2065 = vmatpush2.msra.mxu0 0.0
        %2066 = vmatprep.subr.mxu0 0.0
        %2067 = vmatpush2.msra.mxu0 0.0
        %2068 = vmatprep.subr.mxu0 0.0
        %2069 = vmatpush2.msra.mxu0 0.0
        %2070 = vmatprep.mubr.f32.mxu0 0.0
        %2071 = vmatmul.mubr.f32.gmra.mxu0 %v2004
        %v2072 = vpop.f32.mrf.mxu0
        %v2073 = vadd.f32 0.0, %v2072
        %v2074 = vpop.f32.mrf.mxu0
        %v2075 = vadd.f32 0.0, %v2074
        %2076 = vmatprep.mubr.f32.mxu0 0.0
        %2077 = vmatmul.mubr.f32.gmra.mxu0 %v2004
        %v2078 = vpop.f32.mrf.mxu0
        %v2079 = vadd.f32 0.0, %v2078
        %v2080 = vpop.f32.mrf.mxu0
        %v2081 = vadd.f32 0.0, %v2080
        %2082 = vmatprep.mubr.f32.mxu0 0.0
        %2083 = vmatmul.mubr.f32.gmra.mxu0 %v2004
        %v2084 = vpop.f32.mrf.mxu0
        %v2085 = vadd.f32 0.0, %v2084
        %v2086 = vpop.f32.mrf.mxu0
        %v2087 = vadd.f32 0.0, %v2086
        %2088 = vmatprep.mubr.f32.mxu0 0.0
        %2089 = vmatmul.mubr.f32.gmra.mxu0 %v2004
        %v2090 = vpop.f32.mrf.mxu0
        %v2091 = vadd.f32 0.0, %v2090
        %v2092 = vpop.f32.mrf.mxu0
        %v2093 = vadd.f32 0.0, %v2092
        %2094 = vmatprep.mubr.f32.mxu0 0.0
        %2095 = vmatmul.mubr.f32.gmra.mxu0 %v2004
        %v2096 = vpop.f32.mrf.mxu0
        %v2097 = vadd.f32 0.0, %v2096
        %v2098 = vpop.f32.mrf.mxu0
        %v2099 = vadd.f32 0.0, %v2098
        %2100 = vmatprep.mubr.f32.mxu0 0.0
        %2101 = vmatmul.mubr.f32.gmra.mxu0 %v2004
        %v2102 = vpop.f32.mrf.mxu0
        %v2103 = vadd.f32 0.0, %v2102
        %v2104 = vpop.f32.mrf.mxu0
        %v2105 = vadd.f32 0.0, %v2104
        %2106 = vmatprep.mubr.f32.mxu0 0.0
        %2107 = vmatmul.mubr.f32.gmra.mxu0 %v2004
        %v2108 = vpop.f32.mrf.mxu0
        %v2109 = vadd.f32 0.0, %v2108
        %v2110 = vpop.f32.mrf.mxu0
        %v2111 = vadd.f32 0.0, %v2110
        %2112 = vmatprep.mubr.f32.mxu0 0.0
        %2113 = vmatmul.mubr.f32.gmra.mxu0 %v2004
        %v2114 = vpop.f32.mrf.mxu0
        %v2115 = vadd.f32 0.0, %v2114
        %v2116 = vpop.f32.mrf.mxu0
        %v2117 = vadd.f32 0.0, %v2116
        %2118 = vmatprep.mubr.f32.mxu0 0.0
        %2119 = vmatmul.mubr.f32.gmra.mxu0 %v2004
        %v2120 = vpop.f32.mrf.mxu0
        %v2121 = vadd.f32 0.0, %v2120
        %v2122 = vpop.f32.mrf.mxu0
        %v2123 = vadd.f32 0.0, %v2122
        %2124 = vmatprep.mubr.f32.mxu0 0.0
        %2125 = vmatmul.mubr.f32.gmra.mxu0 %v2004
        %v2126 = vpop.f32.mrf.mxu0
        %v2127 = vadd.f32 0.0, %v2126
        %v2128 = vpop.f32.mrf.mxu0
        %v2129 = vadd.f32 0.0, %v2128
        %2130 = vmatprep.mubr.f32.mxu0 0.0
        %2131 = vmatmul.mubr.f32.gmra.mxu0 %v2004
        %v2132 = vpop.f32.mrf.mxu0
        %v2133 = vadd.f32 0.0, %v2132
        %v2134 = vpop.f32.mrf.mxu0
        %v2135 = vadd.f32 0.0, %v2134
        %2136 = vmatprep.mubr.f32.mxu0 0.0
        %2137 = vmatmul.mubr.f32.gmra.mxu0 %v2004
        %v2138 = vpop.f32.mrf.mxu0
        %v2139 = vadd.f32 0.0, %v2138
        %v2140 = vpop.f32.mrf.mxu0
        %v2141 = vadd.f32 0.0, %v2140
        %2142 = vmatprep.mubr.f32.mxu0 0.0
        %2143 = vmatmul.mubr.f32.gmra.mxu0 %v2004
        %v2144 = vpop.f32.mrf.mxu0
        %v2145 = vadd.f32 0.0, %v2144
        %v2146 = vpop.f32.mrf.mxu0
        %v2147 = vadd.f32 0.0, %v2146
        %2148 = vmatprep.mubr.f32.mxu0 0.0
        %2149 = vmatmul.mubr.f32.gmra.mxu0 %v2004
        %v2150 = vpop.f32.mrf.mxu0
        %v2151 = vadd.f32 0.0, %v2150
        %v2152 = vpop.f32.mrf.mxu0
        %v2153 = vadd.f32 0.0, %v2152
        %2154 = vmatprep.mubr.f32.mxu0 0.0
        %2155 = vmatmul.mubr.f32.gmra.mxu0 %v2004
        %v2156 = vpop.f32.mrf.mxu0
        %v2157 = vadd.f32 0.0, %v2156
        %v2158 = vpop.f32.mrf.mxu0
        %v2159 = vadd.f32 0.0, %v2158
        %2160 = vmatprep.mubr.f32.mxu0 0.0
        %2161 = vmatmul.mubr.f32.gmra.mxu0 %v2004
        %v2162 = vpop.f32.mrf.mxu0
        %v2163 = vadd.f32 0.0, %v2162
        %v2164 = vpop.f32.mrf.mxu0
        %v2165 = vadd.f32 0.0, %v2164
        %2166 = vdwg.mxu0
        %v2167 = vadd.f32 %v1971, %v2073
        %v2168 = vadd.f32 %v1973, %v2079
        %v2169 = vadd.f32 %v1975, %v2085
        %v2170 = vadd.f32 %v1977, %v2091
        %v2171 = vadd.f32 %v1979, %v2097
        %v2172 = vadd.f32 %v1981, %v2103
        %v2173 = vadd.f32 %v1983, %v2109
        %v2174 = vadd.f32 %v1985, %v2115
        %v2175 = vadd.f32 %v1987, %v2121
        %v2176 = vadd.f32 %v1989, %v2127
        %v2177 = vadd.f32 %v1991, %v2133
        %v2178 = vadd.f32 %v1993, %v2139
        %v2179 = vadd.f32 %v1995, %v2145
        %v2180 = vadd.f32 %v1997, %v2151
        %v2181 = vadd.f32 %v1999, %v2157
        %v2182 = vadd.f32 %v2001, %v2163
        %v2183 = vxor.u32 %v2167, 2147483648
        %v2184 = vxor.u32 %v2168, 2147483648
        %v2185 = vxor.u32 %v2169, 2147483648
        %v2186 = vxor.u32 %v2170, 2147483648
        %v2187 = vxor.u32 %v2171, 2147483648
        %v2188 = vxor.u32 %v2172, 2147483648
        %v2189 = vxor.u32 %v2173, 2147483648
        %v2190 = vxor.u32 %v2174, 2147483648
        %v2191 = vxor.u32 %v2175, 2147483648
        %v2192 = vxor.u32 %v2176, 2147483648
        %v2193 = vxor.u32 %v2177, 2147483648
        %v2194 = vxor.u32 %v2178, 2147483648
        %v2195 = vxor.u32 %v2179, 2147483648
        %v2196 = vxor.u32 %v2180, 2147483648
        %v2197 = vxor.u32 %v2181, 2147483648
        %v2198 = vxor.u32 %v2182, 2147483648
        %v2199 = vmul.f32 %v2183, 1.442695
        %v2200 = vpow.pop %v2199
        %v2201 = vmul.f32 %v2184, 1.442695
        %v2202 = vpow.pop %v2201
        %v2203 = vmul.f32 %v2185, 1.442695
        %v2204 = vpow.pop %v2203
        %v2205 = vmul.f32 %v2186, 1.442695
        %v2206 = vpow.pop %v2205
        %v2207 = vmul.f32 %v2187, 1.442695
        %v2208 = vpow.pop %v2207
        %v2209 = vmul.f32 %v2188, 1.442695
        %v2210 = vpow.pop %v2209
        %v2211 = vmul.f32 %v2189, 1.442695
        %v2212 = vpow.pop %v2211
        %v2213 = vmul.f32 %v2190, 1.442695
        %v2214 = vpow.pop %v2213
        %v2215 = vmul.f32 %v2191, 1.442695
        %v2216 = vpow.pop %v2215
        %v2217 = vmul.f32 %v2192, 1.442695
        %v2218 = vpow.pop %v2217
        %v2219 = vmul.f32 %v2193, 1.442695
        %v2220 = vpow.pop %v2219
        %v2221 = vmul.f32 %v2194, 1.442695
        %v2222 = vpow.pop %v2221
        %v2223 = vmul.f32 %v2195, 1.442695
        %v2224 = vpow.pop %v2223
        %v2225 = vmul.f32 %v2196, 1.442695
        %v2226 = vpow.pop %v2225
        %v2227 = vmul.f32 %v2197, 1.442695
        %v2228 = vpow.pop %v2227
        %v2229 = vmul.f32 %v2198, 1.442695
        %v2230 = vpow.pop %v2229
        %v2231 = vadd.f32 %v2200, 1.0
        %v2232 = vadd.f32 %v2202, 1.0
        %v2233 = vadd.f32 %v2204, 1.0
        %v2234 = vadd.f32 %v2206, 1.0
        %v2235 = vadd.f32 %v2208, 1.0
        %v2236 = vadd.f32 %v2210, 1.0
        %v2237 = vadd.f32 %v2212, 1.0
        %v2238 = vadd.f32 %v2214, 1.0
        %v2239 = vadd.f32 %v2216, 1.0
        %v2240 = vadd.f32 %v2218, 1.0
        %v2241 = vadd.f32 %v2220, 1.0
        %v2242 = vadd.f32 %v2222, 1.0
        %v2243 = vadd.f32 %v2224, 1.0
        %v2244 = vadd.f32 %v2226, 1.0
        %v2245 = vadd.f32 %v2228, 1.0
        %v2246 = vadd.f32 %v2230, 1.0
        %v2247 = vrcp.pop %v2231
        %v2248 = vmul.f32 1.0, %v2247
        %v2249 = vrcp.pop %v2232
        %v2250 = vmul.f32 1.0, %v2249
        %v2251 = vrcp.pop %v2233
        %v2252 = vmul.f32 1.0, %v2251
        %v2253 = vrcp.pop %v2234
        %v2254 = vmul.f32 1.0, %v2253
        %v2255 = vrcp.pop %v2235
        %v2256 = vmul.f32 1.0, %v2255
        %v2257 = vrcp.pop %v2236
        %v2258 = vmul.f32 1.0, %v2257
        %v2259 = vrcp.pop %v2237
        %v2260 = vmul.f32 1.0, %v2259
        %v2261 = vrcp.pop %v2238
        %v2262 = vmul.f32 1.0, %v2261
        %v2263 = vrcp.pop %v2239
        %v2264 = vmul.f32 1.0, %v2263
        %v2265 = vrcp.pop %v2240
        %v2266 = vmul.f32 1.0, %v2265
        %v2267 = vrcp.pop %v2241
        %v2268 = vmul.f32 1.0, %v2267
        %v2269 = vrcp.pop %v2242
        %v2270 = vmul.f32 1.0, %v2269
        %v2271 = vrcp.pop %v2243
        %v2272 = vmul.f32 1.0, %v2271
        %v2273 = vrcp.pop %v2244
        %v2274 = vmul.f32 1.0, %v2273
        %v2275 = vrcp.pop %v2245
        %v2276 = vmul.f32 1.0, %v2275
        %v2277 = vrcp.pop %v2246
        %v2278 = vmul.f32 1.0, %v2277
        %v2279 = vadd.f32 %v2075, %v1957
        %v2280 = vadd.f32 %v2081, %v1957
        %v2281 = vadd.f32 %v2087, %v1957
        %v2282 = vadd.f32 %v2093, %v1957
        %v2283 = vadd.f32 %v2099, %v1957
        %v2284 = vadd.f32 %v2105, %v1957
        %v2285 = vadd.f32 %v2111, %v1957
        %v2286 = vadd.f32 %v2117, %v1957
        %v2287 = vadd.f32 %v2123, %v1957
        %v2288 = vadd.f32 %v2129, %v1957
        %v2289 = vadd.f32 %v2135, %v1957
        %v2290 = vadd.f32 %v2141, %v1957
        %v2291 = vadd.f32 %v2147, %v1957
        %v2292 = vadd.f32 %v2153, %v1957
        %v2293 = vadd.f32 %v2159, %v1957
        %v2294 = vadd.f32 %v2165, %v1957
        %v2295 = vmul.f32 %v2248, %v2279
        %v2296 = vmul.f32 %v2250, %v2280
        %v2297 = vmul.f32 %v2252, %v2281
        %v2298 = vmul.f32 %v2254, %v2282
        %v2299 = vmul.f32 %v2256, %v2283
        %v2300 = vmul.f32 %v2258, %v2284
        %v2301 = vmul.f32 %v2260, %v2285
        %v2302 = vmul.f32 %v2262, %v2286
        %v2303 = vmul.f32 %v2264, %v2287
        %v2304 = vmul.f32 %v2266, %v2288
        %v2305 = vmul.f32 %v2268, %v2289
        %v2306 = vmul.f32 %v2270, %v2290
        %v2307 = vmul.f32 %v2272, %v2291
        %v2308 = vmul.f32 %v2274, %v2292
        %v2309 = vmul.f32 %v2276, %v2293
        %v2310 = vmul.f32 %v2278, %v2294
        %v2311 = vadd.f32 %v1972, %v2295
        %v2312 = vadd.f32 %v1974, %v2296
        %v2313 = vadd.f32 %v1976, %v2297
        %v2314 = vadd.f32 %v1978, %v2298
        %v2315 = vadd.f32 %v1980, %v2299
        %v2316 = vadd.f32 %v1982, %v2300
        %v2317 = vadd.f32 %v1984, %v2301
        %v2318 = vadd.f32 %v1986, %v2302
        %v2319 = vadd.f32 %v1988, %v2303
        %v2320 = vadd.f32 %v1990, %v2304
        %v2321 = vadd.f32 %v1992, %v2305
        %v2322 = vadd.f32 %v1994, %v2306
        %v2323 = vadd.f32 %v1996, %v2307
        %v2324 = vadd.f32 %v1998, %v2308
        %v2325 = vadd.f32 %v2000, %v2309
        %v2326 = vadd.f32 %v2002, %v2310
        %v2327 = vtanh.pop %v2311
        %v2328 = vtanh.pop %v2312
        %v2329 = vtanh.pop %v2313
        %v2330 = vtanh.pop %v2314
        %v2331 = vtanh.pop %v2315
        %v2332 = vtanh.pop %v2316
        %v2333 = vtanh.pop %v2317
        %v2334 = vtanh.pop %v2318
        %v2335 = vtanh.pop %v2319
        %v2336 = vtanh.pop %v2320
        %v2337 = vtanh.pop %v2321
        %v2338 = vtanh.pop %v2322
        %v2339 = vtanh.pop %v2323
        %v2340 = vtanh.pop %v2324
        %v2341 = vtanh.pop %v2325
        %v2342 = vtanh.pop %v2326
        %v2343 = vsub.f32 1.0, %v2248
        %v2344 = vsub.f32 1.0, %v2250
        %v2345 = vsub.f32 1.0, %v2252
        %v2346 = vsub.f32 1.0, %v2254
        %v2347 = vsub.f32 1.0, %v2256
        %v2348 = vsub.f32 1.0, %v2258
        %v2349 = vsub.f32 1.0, %v2260
        %v2350 = vsub.f32 1.0, %v2262
        %v2351 = vsub.f32 1.0, %v2264
        %v2352 = vsub.f32 1.0, %v2266
        %v2353 = vsub.f32 1.0, %v2268
        %v2354 = vsub.f32 1.0, %v2270
        %v2355 = vsub.f32 1.0, %v2272
        %v2356 = vsub.f32 1.0, %v2274
        %v2357 = vsub.f32 1.0, %v2276
        %v2358 = vsub.f32 1.0, %v2278
        %2375 = vrot.lane.b32.xlu0 %v2327, 64
        %v2376 = vpop.permute.xlu0 %2375
        %2377 = vrot.lane.b32.xlu0 %v2328, 64
        %v2378 = vpop.permute.xlu0 %2377
        %2379 = vrot.lane.b32.xlu0 %v2329, 64
        %v2380 = vpop.permute.xlu0 %2379
        %2381 = vrot.lane.b32.xlu0 %v2330, 64
        %v2382 = vpop.permute.xlu0 %2381
        %2383 = vrot.lane.b32.xlu0 %v2331, 64
        %v2384 = vpop.permute.xlu0 %2383
        %2385 = vrot.lane.b32.xlu0 %v2332, 64
        %v2386 = vpop.permute.xlu0 %2385
        %2387 = vrot.lane.b32.xlu0 %v2333, 64
        %v2388 = vpop.permute.xlu0 %2387
        %2389 = vrot.lane.b32.xlu0 %v2334, 64
        %v2390 = vpop.permute.xlu0 %2389
        %2391 = vrot.lane.b32.xlu0 %v2335, 64
        %v2392 = vpop.permute.xlu0 %2391
        %2393 = vrot.lane.b32.xlu0 %v2336, 64
        %v2394 = vpop.permute.xlu0 %2393
        %2395 = vrot.lane.b32.xlu0 %v2337, 64
        %v2396 = vpop.permute.xlu0 %2395
        %2397 = vrot.lane.b32.xlu0 %v2338, 64
        %v2398 = vpop.permute.xlu0 %2397
        %2399 = vrot.lane.b32.xlu0 %v2339, 64
        %v2400 = vpop.permute.xlu0 %2399
        %2401 = vrot.lane.b32.xlu0 %v2340, 64
        %v2402 = vpop.permute.xlu0 %2401
        %2403 = vrot.lane.b32.xlu0 %v2341, 64
        %v2404 = vpop.permute.xlu0 %2403
        %2405 = vrot.lane.b32.xlu0 %v2342, 64
        %v2406 = vpop.permute.xlu0 %2405
        %v2423 = vmul.f32 %v2343, %v2376
        %v2424 = vmul.f32 %v2344, %v2378
        %v2425 = vmul.f32 %v2345, %v2380
        %v2426 = vmul.f32 %v2346, %v2382
        %v2427 = vmul.f32 %v2347, %v2384
        %v2428 = vmul.f32 %v2348, %v2386
        %v2429 = vmul.f32 %v2349, %v2388
        %v2430 = vmul.f32 %v2350, %v2390
        %v2431 = vmul.f32 %v2351, %v2392
        %v2432 = vmul.f32 %v2352, %v2394
        %v2433 = vmul.f32 %v2353, %v2396
        %v2434 = vmul.f32 %v2354, %v2398
        %v2435 = vmul.f32 %v2355, %v2400
        %v2436 = vmul.f32 %v2356, %v2402
        %v2437 = vmul.f32 %v2357, %v2404
        %v2438 = vmul.f32 %v2358, %v2406
        %v2439 = vmul.f32 %v2248, 0.0
        %v2440 = vmul.f32 %v2250, 0.0
        %v2441 = vmul.f32 %v2252, 0.0
        %v2442 = vmul.f32 %v2254, 0.0
        %v2443 = vmul.f32 %v2256, 0.0
        %v2444 = vmul.f32 %v2258, 0.0
        %v2445 = vmul.f32 %v2260, 0.0
        %v2446 = vmul.f32 %v2262, 0.0
        %v2447 = vmul.f32 %v2264, 0.0
        %v2448 = vmul.f32 %v2266, 0.0
        %v2449 = vmul.f32 %v2268, 0.0
        %v2450 = vmul.f32 %v2270, 0.0
        %v2451 = vmul.f32 %v2272, 0.0
        %v2452 = vmul.f32 %v2274, 0.0
        %v2453 = vmul.f32 %v2276, 0.0
        %v2454 = vmul.f32 %v2278, 0.0
        %v2455 = vadd.f32 %v2423, %v2439
        %v2456 = vadd.f32 %v2424, %v2440
        %v2457 = vadd.f32 %v2425, %v2441
        %v2458 = vadd.f32 %v2426, %v2442
        %v2459 = vadd.f32 %v2427, %v2443
        %v2460 = vadd.f32 %v2428, %v2444
        %v2461 = vadd.f32 %v2429, %v2445
        %v2462 = vadd.f32 %v2430, %v2446
        %v2463 = vadd.f32 %v2431, %v2447
        %v2464 = vadd.f32 %v2432, %v2448
        %v2465 = vadd.f32 %v2433, %v2449
        %v2466 = vadd.f32 %v2434, %v2450
        %v2467 = vadd.f32 %v2435, %v2451
        %v2468 = vadd.f32 %v2436, %v2452
        %v2469 = vadd.f32 %v2437, %v2453
        %v2470 = vadd.f32 %v2438, %v2454
        %2487 = vrot.lane.b32.xlu0 %v2455, 64
        %v2488 = vpop.permute.xlu0 %2487
        %2489 = vrot.lane.b32.xlu0 %v2456, 64
        %v2490 = vpop.permute.xlu0 %2489
        %2491 = vrot.lane.b32.xlu0 %v2457, 64
        %v2492 = vpop.permute.xlu0 %2491
        %2493 = vrot.lane.b32.xlu0 %v2458, 64
        %v2494 = vpop.permute.xlu0 %2493
        %2495 = vrot.lane.b32.xlu0 %v2459, 64
        %v2496 = vpop.permute.xlu0 %2495
        %2497 = vrot.lane.b32.xlu0 %v2460, 64
        %v2498 = vpop.permute.xlu0 %2497
        %2499 = vrot.lane.b32.xlu0 %v2461, 64
        %v2500 = vpop.permute.xlu0 %2499
        %2501 = vrot.lane.b32.xlu0 %v2462, 64
        %v2502 = vpop.permute.xlu0 %2501
        %2503 = vrot.lane.b32.xlu0 %v2463, 64
        %v2504 = vpop.permute.xlu0 %2503
        %2505 = vrot.lane.b32.xlu0 %v2464, 64
        %v2506 = vpop.permute.xlu0 %2505
        %2507 = vrot.lane.b32.xlu0 %v2465, 64
        %v2508 = vpop.permute.xlu0 %2507
        %2509 = vrot.lane.b32.xlu0 %v2466, 64
        %v2510 = vpop.permute.xlu0 %2509
        %2511 = vrot.lane.b32.xlu0 %v2467, 64
        %v2512 = vpop.permute.xlu0 %2511
        %2513 = vrot.lane.b32.xlu0 %v2468, 64
        %v2514 = vpop.permute.xlu0 %2513
        %2515 = vrot.lane.b32.xlu0 %v2469, 64
        %v2516 = vpop.permute.xlu0 %2515
        %2517 = vrot.lane.b32.xlu0 %v2470, 64
        %v2518 = vpop.permute.xlu0 %2517
        %v2535 = vsel %vm1648, %v2488, 0.0
        %v2536 = vsel %vm1648, %v2490, 0.0
        %v2537 = vsel %vm1648, %v2492, 0.0
        %v2538 = vsel %vm1648, %v2494, 0.0
        %v2539 = vsel %vm1648, %v2496, 0.0
        %v2540 = vsel %vm1648, %v2498, 0.0
        %v2541 = vsel %vm1648, %v2500, 0.0
        %v2542 = vsel %vm1648, %v2502, 0.0
        %v2543 = vsel %vm1648, %v2504, 0.0
        %v2544 = vsel %vm1648, %v2506, 0.0
        %v2545 = vsel %vm1648, %v2508, 0.0
        %v2546 = vsel %vm1648, %v2510, 0.0
        %v2547 = vsel %vm1648, %v2512, 0.0
        %v2548 = vsel %vm1648, %v2514, 0.0
        %v2549 = vsel %vm1648, %v2516, 0.0
        %v2550 = vsel %vm1648, %v2518, 0.0
        %2551 = vmatprep.subr.mxu0 %v1951
        %2552 = vmatpush1.msra.mxu0 %v1950
        %2553 = vmatprep.subr.mxu0 %v1949
        %2554 = vmatpush1.msra.mxu0 %v1948
        %2555 = vmatprep.subr.mxu0 %v1947
        %2556 = vmatpush1.msra.mxu0 %v1946
        %2557 = vmatprep.subr.mxu0 %v1945
        %2558 = vmatpush1.msra.mxu0 %v1944
        %2559 = vmatprep.subr.mxu0 %v1943
        %2560 = vmatpush1.msra.mxu0 %v1942
        %2561 = vmatprep.subr.mxu0 %v1941
        %2562 = vmatpush1.msra.mxu0 %v1940
        %2563 = vmatprep.subr.mxu0 %v1939
        %2564 = vmatpush1.msra.mxu0 %v1938
        %2565 = vmatprep.subr.mxu0 %v1937
        %2566 = vmatpush1.msra.mxu0 %v1936
        %2567 = vmatprep.subr.mxu0 %v1935
        %2568 = vmatpush1.msra.mxu0 %v1934
        %2569 = vmatprep.subr.mxu0 %v1933
        %2570 = vmatpush1.msra.mxu0 %v1932
        %2571 = vmatprep.subr.mxu0 %v1931
        %2572 = vmatpush1.msra.mxu0 %v1930
        %2573 = vmatprep.subr.mxu0 %v1929
        %2574 = vmatpush1.msra.mxu0 %v1928
        %2575 = vmatprep.subr.mxu0 %v1927
        %2576 = vmatpush1.msra.mxu0 %v1926
        %2577 = vmatprep.subr.mxu0 %v1925
        %2578 = vmatpush1.msra.mxu0 %v1924
        %2579 = vmatprep.subr.mxu0 %v1923
        %2580 = vmatpush1.msra.mxu0 %v1922
        %2581 = vmatprep.subr.mxu0 %v1921
        %2582 = vmatpush1.msra.mxu0 %v1920
        %2583 = vmatprep.subr.mxu0 0.0
        %2584 = vmatpush2.msra.mxu0 0.0
        %2585 = vmatprep.subr.mxu0 0.0
        %2586 = vmatpush2.msra.mxu0 0.0
        %2587 = vmatprep.subr.mxu0 0.0
        %2588 = vmatpush2.msra.mxu0 0.0
        %2589 = vmatprep.subr.mxu0 0.0
        %2590 = vmatpush2.msra.mxu0 0.0
        %2591 = vmatprep.subr.mxu0 0.0
        %2592 = vmatpush2.msra.mxu0 0.0
        %2593 = vmatprep.subr.mxu0 0.0
        %2594 = vmatpush2.msra.mxu0 0.0
        %2595 = vmatprep.subr.mxu0 0.0
        %2596 = vmatpush2.msra.mxu0 0.0
        %2597 = vmatprep.subr.mxu0 0.0
        %2598 = vmatpush2.msra.mxu0 0.0
        %2599 = vmatprep.subr.mxu0 0.0
        %2600 = vmatpush2.msra.mxu0 0.0
        %2601 = vmatprep.subr.mxu0 0.0
        %2602 = vmatpush2.msra.mxu0 0.0
        %2603 = vmatprep.subr.mxu0 0.0
        %2604 = vmatpush2.msra.mxu0 0.0
        %2605 = vmatprep.subr.mxu0 0.0
        %2606 = vmatpush2.msra.mxu0 0.0
        %2607 = vmatprep.subr.mxu0 0.0
        %2608 = vmatpush2.msra.mxu0 0.0
        %2609 = vmatprep.subr.mxu0 0.0
        %2610 = vmatpush2.msra.mxu0 0.0
        %2611 = vmatprep.subr.mxu0 0.0
        %2612 = vmatpush2.msra.mxu0 0.0
        %2613 = vmatprep.subr.mxu0 0.0
        %2614 = vmatpush2.msra.mxu0 0.0
        %2615 = vmatprep.mubr.f32.mxu0 0.0
        %2616 = vmatmul.mubr.f32.gmra.mxu0 %v2535
        %v2617 = vpop.f32.mrf.mxu0
        %v2618 = vadd.f32 %v1964, %v2617
        %v2619 = vpop.f32.mrf.mxu0
        %v2620 = vadd.f32 %v1968, %v2619
        %2621 = vmatprep.mubr.f32.mxu0 0.0
        %2622 = vmatmul.mubr.f32.gmra.mxu0 %v2536
        %v2623 = vpop.f32.mrf.mxu0
        %v2624 = vadd.f32 %v1964, %v2623
        %v2625 = vpop.f32.mrf.mxu0
        %v2626 = vadd.f32 %v1968, %v2625
        %2627 = vmatprep.mubr.f32.mxu0 0.0
        %2628 = vmatmul.mubr.f32.gmra.mxu0 %v2537
        %v2629 = vpop.f32.mrf.mxu0
        %v2630 = vadd.f32 %v1964, %v2629
        %v2631 = vpop.f32.mrf.mxu0
        %v2632 = vadd.f32 %v1968, %v2631
        %2633 = vmatprep.mubr.f32.mxu0 0.0
        %2634 = vmatmul.mubr.f32.gmra.mxu0 %v2538
        %v2635 = vpop.f32.mrf.mxu0
        %v2636 = vadd.f32 %v1964, %v2635
        %v2637 = vpop.f32.mrf.mxu0
        %v2638 = vadd.f32 %v1968, %v2637
        %2639 = vmatprep.mubr.f32.mxu0 0.0
        %2640 = vmatmul.mubr.f32.gmra.mxu0 %v2539
        %v2641 = vpop.f32.mrf.mxu0
        %v2642 = vadd.f32 %v1964, %v2641
        %v2643 = vpop.f32.mrf.mxu0
        %v2644 = vadd.f32 %v1968, %v2643
        %2645 = vmatprep.mubr.f32.mxu0 0.0
        %2646 = vmatmul.mubr.f32.gmra.mxu0 %v2540
        %v2647 = vpop.f32.mrf.mxu0
        %v2648 = vadd.f32 %v1964, %v2647
        %v2649 = vpop.f32.mrf.mxu0
        %v2650 = vadd.f32 %v1968, %v2649
        %2651 = vmatprep.mubr.f32.mxu0 0.0
        %2652 = vmatmul.mubr.f32.gmra.mxu0 %v2541
        %v2653 = vpop.f32.mrf.mxu0
        %v2654 = vadd.f32 %v1964, %v2653
        %v2655 = vpop.f32.mrf.mxu0
        %v2656 = vadd.f32 %v1968, %v2655
        %2657 = vmatprep.mubr.f32.mxu0 0.0
        %2658 = vmatmul.mubr.f32.gmra.mxu0 %v2542
        %v2659 = vpop.f32.mrf.mxu0
        %v2660 = vadd.f32 %v1964, %v2659
        %v2661 = vpop.f32.mrf.mxu0
        %v2662 = vadd.f32 %v1968, %v2661
        %2663 = vmatprep.mubr.f32.mxu0 0.0
        %2664 = vmatmul.mubr.f32.gmra.mxu0 %v2543
        %v2665 = vpop.f32.mrf.mxu0
        %v2666 = vadd.f32 %v1964, %v2665
        %v2667 = vpop.f32.mrf.mxu0
        %v2668 = vadd.f32 %v1968, %v2667
        %2669 = vmatprep.mubr.f32.mxu0 0.0
        %2670 = vmatmul.mubr.f32.gmra.mxu0 %v2544
        %v2671 = vpop.f32.mrf.mxu0
        %v2672 = vadd.f32 %v1964, %v2671
        %v2673 = vpop.f32.mrf.mxu0
        %v2674 = vadd.f32 %v1968, %v2673
        %2675 = vmatprep.mubr.f32.mxu0 0.0
        %2676 = vmatmul.mubr.f32.gmra.mxu0 %v2545
        %v2677 = vpop.f32.mrf.mxu0
        %v2678 = vadd.f32 %v1964, %v2677
        %v2679 = vpop.f32.mrf.mxu0
        %v2680 = vadd.f32 %v1968, %v2679
        %2681 = vmatprep.mubr.f32.mxu0 0.0
        %2682 = vmatmul.mubr.f32.gmra.mxu0 %v2546
        %v2683 = vpop.f32.mrf.mxu0
        %v2684 = vadd.f32 %v1964, %v2683
        %v2685 = vpop.f32.mrf.mxu0
        %v2686 = vadd.f32 %v1968, %v2685
        %2687 = vmatprep.mubr.f32.mxu0 0.0
        %2688 = vmatmul.mubr.f32.gmra.mxu0 %v2547
        %v2689 = vpop.f32.mrf.mxu0
        %v2690 = vadd.f32 %v1964, %v2689
        %v2691 = vpop.f32.mrf.mxu0
        %v2692 = vadd.f32 %v1968, %v2691
        %2693 = vmatprep.mubr.f32.mxu0 0.0
        %2694 = vmatmul.mubr.f32.gmra.mxu0 %v2548
        %v2695 = vpop.f32.mrf.mxu0
        %v2696 = vadd.f32 %v1964, %v2695
        %v2697 = vpop.f32.mrf.mxu0
        %v2698 = vadd.f32 %v1968, %v2697
        %2699 = vmatprep.mubr.f32.mxu0 0.0
        %2700 = vmatmul.mubr.f32.gmra.mxu0 %v2549
        %v2701 = vpop.f32.mrf.mxu0
        %v2702 = vadd.f32 %v1964, %v2701
        %v2703 = vpop.f32.mrf.mxu0
        %v2704 = vadd.f32 %v1968, %v2703
        %2705 = vmatprep.mubr.f32.mxu0 0.0
        %2706 = vmatmul.mubr.f32.gmra.mxu0 %v2550
        %v2707 = vpop.f32.mrf.mxu0
        %v2708 = vadd.f32 %v1964, %v2707
        %v2709 = vpop.f32.mrf.mxu0
        %v2710 = vadd.f32 %v1968, %v2709
        %2711 = vdwg.mxu0
        %v2712 = vxor.u32 %v2618, 2147483648
        %v2713 = vxor.u32 %v2624, 2147483648
        %v2714 = vxor.u32 %v2630, 2147483648
        %v2715 = vxor.u32 %v2636, 2147483648
        %v2716 = vxor.u32 %v2642, 2147483648
        %v2717 = vxor.u32 %v2648, 2147483648
        %v2718 = vxor.u32 %v2654, 2147483648
        %v2719 = vxor.u32 %v2660, 2147483648
        %v2720 = vxor.u32 %v2666, 2147483648
        %v2721 = vxor.u32 %v2672, 2147483648
        %v2722 = vxor.u32 %v2678, 2147483648
        %v2723 = vxor.u32 %v2684, 2147483648
        %v2724 = vxor.u32 %v2690, 2147483648
        %v2725 = vxor.u32 %v2696, 2147483648
        %v2726 = vxor.u32 %v2702, 2147483648
        %v2727 = vxor.u32 %v2708, 2147483648
        %v2728 = vmul.f32 %v2712, 1.442695
        %v2729 = vpow.pop %v2728
        %v2730 = vmul.f32 %v2713, 1.442695
        %v2731 = vpow.pop %v2730
        %v2732 = vmul.f32 %v2714, 1.442695
        %v2733 = vpow.pop %v2732
        %v2734 = vmul.f32 %v2715, 1.442695
        %v2735 = vpow.pop %v2734
        %v2736 = vmul.f32 %v2716, 1.442695
        %v2737 = vpow.pop %v2736
        %v2738 = vmul.f32 %v2717, 1.442695
        %v2739 = vpow.pop %v2738
        %v2740 = vmul.f32 %v2718, 1.442695
        %v2741 = vpow.pop %v2740
        %v2742 = vmul.f32 %v2719, 1.442695
        %v2743 = vpow.pop %v2742
        %v2744 = vmul.f32 %v2720, 1.442695
        %v2745 = vpow.pop %v2744
        %v2746 = vmul.f32 %v2721, 1.442695
        %v2747 = vpow.pop %v2746
        %v2748 = vmul.f32 %v2722, 1.442695
        %v2749 = vpow.pop %v2748
        %v2750 = vmul.f32 %v2723, 1.442695
        %v2751 = vpow.pop %v2750
        %v2752 = vmul.f32 %v2724, 1.442695
        %v2753 = vpow.pop %v2752
        %v2754 = vmul.f32 %v2725, 1.442695
        %v2755 = vpow.pop %v2754
        %v2756 = vmul.f32 %v2726, 1.442695
        %v2757 = vpow.pop %v2756
        %v2758 = vmul.f32 %v2727, 1.442695
        %v2759 = vpow.pop %v2758
        %v2760 = vadd.f32 %v2729, 1.0
        %v2761 = vadd.f32 %v2731, 1.0
        %v2762 = vadd.f32 %v2733, 1.0
        %v2763 = vadd.f32 %v2735, 1.0
        %v2764 = vadd.f32 %v2737, 1.0
        %v2765 = vadd.f32 %v2739, 1.0
        %v2766 = vadd.f32 %v2741, 1.0
        %v2767 = vadd.f32 %v2743, 1.0
        %v2768 = vadd.f32 %v2745, 1.0
        %v2769 = vadd.f32 %v2747, 1.0
        %v2770 = vadd.f32 %v2749, 1.0
        %v2771 = vadd.f32 %v2751, 1.0
        %v2772 = vadd.f32 %v2753, 1.0
        %v2773 = vadd.f32 %v2755, 1.0
        %v2774 = vadd.f32 %v2757, 1.0
        %v2775 = vadd.f32 %v2759, 1.0
        %v2776 = vrcp.pop %v2760
        %v2777 = vmul.f32 1.0, %v2776
        %v2778 = vrcp.pop %v2761
        %v2779 = vmul.f32 1.0, %v2778
        %v2780 = vrcp.pop %v2762
        %v2781 = vmul.f32 1.0, %v2780
        %v2782 = vrcp.pop %v2763
        %v2783 = vmul.f32 1.0, %v2782
        %v2784 = vrcp.pop %v2764
        %v2785 = vmul.f32 1.0, %v2784
        %v2786 = vrcp.pop %v2765
        %v2787 = vmul.f32 1.0, %v2786
        %v2788 = vrcp.pop %v2766
        %v2789 = vmul.f32 1.0, %v2788
        %v2790 = vrcp.pop %v2767
        %v2791 = vmul.f32 1.0, %v2790
        %v2792 = vrcp.pop %v2768
        %v2793 = vmul.f32 1.0, %v2792
        %v2794 = vrcp.pop %v2769
        %v2795 = vmul.f32 1.0, %v2794
        %v2796 = vrcp.pop %v2770
        %v2797 = vmul.f32 1.0, %v2796
        %v2798 = vrcp.pop %v2771
        %v2799 = vmul.f32 1.0, %v2798
        %v2800 = vrcp.pop %v2772
        %v2801 = vmul.f32 1.0, %v2800
        %v2802 = vrcp.pop %v2773
        %v2803 = vmul.f32 1.0, %v2802
        %v2804 = vrcp.pop %v2774
        %v2805 = vmul.f32 1.0, %v2804
        %v2806 = vrcp.pop %v2775
        %v2807 = vmul.f32 1.0, %v2806
        %2824 = vrot.lane.b32.xlu0 %v2620, 64
        %v2825 = vpop.permute.xlu0 %2824
        %2826 = vrot.lane.b32.xlu0 %v2626, 64
        %v2827 = vpop.permute.xlu0 %2826
        %2828 = vrot.lane.b32.xlu0 %v2632, 64
        %v2829 = vpop.permute.xlu0 %2828
        %2830 = vrot.lane.b32.xlu0 %v2638, 64
        %v2831 = vpop.permute.xlu0 %2830
        %2832 = vrot.lane.b32.xlu0 %v2644, 64
        %v2833 = vpop.permute.xlu0 %2832
        %2834 = vrot.lane.b32.xlu0 %v2650, 64
        %v2835 = vpop.permute.xlu0 %2834
        %2836 = vrot.lane.b32.xlu0 %v2656, 64
        %v2837 = vpop.permute.xlu0 %2836
        %2838 = vrot.lane.b32.xlu0 %v2662, 64
        %v2839 = vpop.permute.xlu0 %2838
        %2840 = vrot.lane.b32.xlu0 %v2668, 64
        %v2841 = vpop.permute.xlu0 %2840
        %2842 = vrot.lane.b32.xlu0 %v2674, 64
        %v2843 = vpop.permute.xlu0 %2842
        %2844 = vrot.lane.b32.xlu0 %v2680, 64
        %v2845 = vpop.permute.xlu0 %2844
        %2846 = vrot.lane.b32.xlu0 %v2686, 64
        %v2847 = vpop.permute.xlu0 %2846
        %2848 = vrot.lane.b32.xlu0 %v2692, 64
        %v2849 = vpop.permute.xlu0 %2848
        %2850 = vrot.lane.b32.xlu0 %v2698, 64
        %v2851 = vpop.permute.xlu0 %2850
        %2852 = vrot.lane.b32.xlu0 %v2704, 64
        %v2853 = vpop.permute.xlu0 %2852
        %2854 = vrot.lane.b32.xlu0 %v2710, 64
        %v2855 = vpop.permute.xlu0 %2854
        %v2872 = vmul.f32 %v2777, %v2825
        %v2873 = vmul.f32 %v2779, %v2827
        %v2874 = vmul.f32 %v2781, %v2829
        %v2875 = vmul.f32 %v2783, %v2831
        %v2876 = vmul.f32 %v2785, %v2833
        %v2877 = vmul.f32 %v2787, %v2835
        %v2878 = vmul.f32 %v2789, %v2837
        %v2879 = vmul.f32 %v2791, %v2839
        %v2880 = vmul.f32 %v2793, %v2841
        %v2881 = vmul.f32 %v2795, %v2843
        %v2882 = vmul.f32 %v2797, %v2845
        %v2883 = vmul.f32 %v2799, %v2847
        %v2884 = vmul.f32 %v2801, %v2849
        %v2885 = vmul.f32 %v2803, %v2851
        %v2886 = vmul.f32 %v2805, %v2853
        %v2887 = vmul.f32 %v2807, %v2855
        %v2888 = vadd.f32 %v2620, %v2872
        %v2889 = vadd.f32 %v2626, %v2873
        %v2890 = vadd.f32 %v2632, %v2874
        %v2891 = vadd.f32 %v2638, %v2875
        %v2892 = vadd.f32 %v2644, %v2876
        %v2893 = vadd.f32 %v2650, %v2877
        %v2894 = vadd.f32 %v2656, %v2878
        %v2895 = vadd.f32 %v2662, %v2879
        %v2896 = vadd.f32 %v2668, %v2880
        %v2897 = vadd.f32 %v2674, %v2881
        %v2898 = vadd.f32 %v2680, %v2882
        %v2899 = vadd.f32 %v2686, %v2883
        %v2900 = vadd.f32 %v2692, %v2884
        %v2901 = vadd.f32 %v2698, %v2885
        %v2902 = vadd.f32 %v2704, %v2886
        %v2903 = vadd.f32 %v2710, %v2887
        %v2904 = vtanh.pop %v2888
        %v2905 = vtanh.pop %v2889
        %v2906 = vtanh.pop %v2890
        %v2907 = vtanh.pop %v2891
        %v2908 = vtanh.pop %v2892
        %v2909 = vtanh.pop %v2893
        %v2910 = vtanh.pop %v2894
        %v2911 = vtanh.pop %v2895
        %v2912 = vtanh.pop %v2896
        %v2913 = vtanh.pop %v2897
        %v2914 = vtanh.pop %v2898
        %v2915 = vtanh.pop %v2899
        %v2916 = vtanh.pop %v2900
        %v2917 = vtanh.pop %v2901
        %v2918 = vtanh.pop %v2902
        %v2919 = vtanh.pop %v2903
        %v2920 = vsub.f32 1.0, %v2777
        %v2921 = vsub.f32 1.0, %v2779
        %v2922 = vsub.f32 1.0, %v2781
        %v2923 = vsub.f32 1.0, %v2783
        %v2924 = vsub.f32 1.0, %v2785
        %v2925 = vsub.f32 1.0, %v2787
        %v2926 = vsub.f32 1.0, %v2789
        %v2927 = vsub.f32 1.0, %v2791
        %v2928 = vsub.f32 1.0, %v2793
        %v2929 = vsub.f32 1.0, %v2795
        %v2930 = vsub.f32 1.0, %v2797
        %v2931 = vsub.f32 1.0, %v2799
        %v2932 = vsub.f32 1.0, %v2801
        %v2933 = vsub.f32 1.0, %v2803
        %v2934 = vsub.f32 1.0, %v2805
        %v2935 = vsub.f32 1.0, %v2807
        %2952 = vrot.lane.b32.xlu0 %v2904, 64
        %v2953 = vpop.permute.xlu0 %2952
        %2954 = vrot.lane.b32.xlu0 %v2905, 64
        %v2955 = vpop.permute.xlu0 %2954
        %2956 = vrot.lane.b32.xlu0 %v2906, 64
        %v2957 = vpop.permute.xlu0 %2956
        %2958 = vrot.lane.b32.xlu0 %v2907, 64
        %v2959 = vpop.permute.xlu0 %2958
        %2960 = vrot.lane.b32.xlu0 %v2908, 64
        %v2961 = vpop.permute.xlu0 %2960
        %2962 = vrot.lane.b32.xlu0 %v2909, 64
        %v2963 = vpop.permute.xlu0 %2962
        %2964 = vrot.lane.b32.xlu0 %v2910, 64
        %v2965 = vpop.permute.xlu0 %2964
        %2966 = vrot.lane.b32.xlu0 %v2911, 64
        %v2967 = vpop.permute.xlu0 %2966
        %2968 = vrot.lane.b32.xlu0 %v2912, 64
        %v2969 = vpop.permute.xlu0 %2968
        %2970 = vrot.lane.b32.xlu0 %v2913, 64
        %v2971 = vpop.permute.xlu0 %2970
        %2972 = vrot.lane.b32.xlu0 %v2914, 64
        %v2973 = vpop.permute.xlu0 %2972
        %2974 = vrot.lane.b32.xlu0 %v2915, 64
        %v2975 = vpop.permute.xlu0 %2974
        %2976 = vrot.lane.b32.xlu0 %v2916, 64
        %v2977 = vpop.permute.xlu0 %2976
        %2978 = vrot.lane.b32.xlu0 %v2917, 64
        %v2979 = vpop.permute.xlu0 %2978
        %2980 = vrot.lane.b32.xlu0 %v2918, 64
        %v2981 = vpop.permute.xlu0 %2980
        %2982 = vrot.lane.b32.xlu0 %v2919, 64
        %v2983 = vpop.permute.xlu0 %2982
        %v3000 = vmul.f32 %v2920, %v2953
        %v3001 = vmul.f32 %v2921, %v2955
        %v3002 = vmul.f32 %v2922, %v2957
        %v3003 = vmul.f32 %v2923, %v2959
        %v3004 = vmul.f32 %v2924, %v2961
        %v3005 = vmul.f32 %v2925, %v2963
        %v3006 = vmul.f32 %v2926, %v2965
        %v3007 = vmul.f32 %v2927, %v2967
        %v3008 = vmul.f32 %v2928, %v2969
        %v3009 = vmul.f32 %v2929, %v2971
        %v3010 = vmul.f32 %v2930, %v2973
        %v3011 = vmul.f32 %v2931, %v2975
        %v3012 = vmul.f32 %v2932, %v2977
        %v3013 = vmul.f32 %v2933, %v2979
        %v3014 = vmul.f32 %v2934, %v2981
        %v3015 = vmul.f32 %v2935, %v2983
        %v3016 = vmul.f32 %v2777, 0.0
        %v3017 = vmul.f32 %v2779, 0.0
        %v3018 = vmul.f32 %v2781, 0.0
        %v3019 = vmul.f32 %v2783, 0.0
        %v3020 = vmul.f32 %v2785, 0.0
        %v3021 = vmul.f32 %v2787, 0.0
        %v3022 = vmul.f32 %v2789, 0.0
        %v3023 = vmul.f32 %v2791, 0.0
        %v3024 = vmul.f32 %v2793, 0.0
        %v3025 = vmul.f32 %v2795, 0.0
        %v3026 = vmul.f32 %v2797, 0.0
        %v3027 = vmul.f32 %v2799, 0.0
        %v3028 = vmul.f32 %v2801, 0.0
        %v3029 = vmul.f32 %v2803, 0.0
        %v3030 = vmul.f32 %v2805, 0.0
        %v3031 = vmul.f32 %v2807, 0.0
        %v3032 = vadd.f32 %v3000, %v3016
        %v3033 = vadd.f32 %v3001, %v3017
        %v3034 = vadd.f32 %v3002, %v3018
        %v3035 = vadd.f32 %v3003, %v3019
        %v3036 = vadd.f32 %v3004, %v3020
        %v3037 = vadd.f32 %v3005, %v3021
        %v3038 = vadd.f32 %v3006, %v3022
        %v3039 = vadd.f32 %v3007, %v3023
        %v3040 = vadd.f32 %v3008, %v3024
        %v3041 = vadd.f32 %v3009, %v3025
        %v3042 = vadd.f32 %v3010, %v3026
        %v3043 = vadd.f32 %v3011, %v3027
        %v3044 = vadd.f32 %v3012, %v3028
        %v3045 = vadd.f32 %v3013, %v3029
        %v3046 = vadd.f32 %v3014, %v3030
        %v3047 = vadd.f32 %v3015, %v3031
        %v3048 = vld [vmem:[#allocation2 + $0x100] sm:$0xff]
        %v3049 = vld [vmem:[#allocation2 + $0x108] sm:$0xff]
        %v3050 = vld [vmem:[#allocation2 + $0x110] sm:$0xff]
        %v3051 = vld [vmem:[#allocation2 + $0x118] sm:$0xff]
        %v3052 = vld [vmem:[#allocation2 + $0x120] sm:$0xff]
        %v3053 = vld [vmem:[#allocation2 + $0x128] sm:$0xff]
        %v3054 = vld [vmem:[#allocation2 + $0x130] sm:$0xff]
        %v3055 = vld [vmem:[#allocation2 + $0x138] sm:$0xff]
        %v3056 = vld [vmem:[#allocation2 + $0x140] sm:$0xff]
        %v3057 = vld [vmem:[#allocation2 + $0x148] sm:$0xff]
        %v3058 = vld [vmem:[#allocation2 + $0x150] sm:$0xff]
        %v3059 = vld [vmem:[#allocation2 + $0x158] sm:$0xff]
        %v3060 = vld [vmem:[#allocation2 + $0x160] sm:$0xff]
        %v3061 = vld [vmem:[#allocation2 + $0x168] sm:$0xff]
        %v3062 = vld [vmem:[#allocation2 + $0x170] sm:$0xff]
        %v3063 = vld [vmem:[#allocation2 + $0x178] sm:$0xff]
        %v3064 = vld [vmem:[#allocation2 + $0x180] sm:$0xff]
        %v3065 = vld [vmem:[#allocation2 + $0x188] sm:$0xff]
        %v3066 = vld [vmem:[#allocation2 + $0x190] sm:$0xff]
        %v3067 = vld [vmem:[#allocation2 + $0x198] sm:$0xff]
        %v3068 = vld [vmem:[#allocation2 + $0x1a0] sm:$0xff]
        %v3069 = vld [vmem:[#allocation2 + $0x1a8] sm:$0xff]
        %v3070 = vld [vmem:[#allocation2 + $0x1b0] sm:$0xff]
        %v3071 = vld [vmem:[#allocation2 + $0x1b8] sm:$0xff]
        %v3072 = vld [vmem:[#allocation2 + $0x1c0] sm:$0xff]
        %v3073 = vld [vmem:[#allocation2 + $0x1c8] sm:$0xff]
        %v3074 = vld [vmem:[#allocation2 + $0x1d0] sm:$0xff]
        %v3075 = vld [vmem:[#allocation2 + $0x1d8] sm:$0xff]
        %v3076 = vld [vmem:[#allocation2 + $0x1e0] sm:$0xff]
        %v3077 = vld [vmem:[#allocation2 + $0x1e8] sm:$0xff]
        %v3078 = vld [vmem:[#allocation2 + $0x1f0] sm:$0xff]
        %v3079 = vld [vmem:[#allocation2 + $0x1f8] sm:$0xff]
        %v3080 = vsel %vm1648, %v2488, 0
        %v3082 = vsel %vm1648, %v2490, 0
        %v3084 = vsel %vm1648, %v2492, 0
        %v3086 = vsel %vm1648, %v2494, 0
        %v3088 = vsel %vm1648, %v2496, 0
        %v3090 = vsel %vm1648, %v2498, 0
        %v3092 = vsel %vm1648, %v2500, 0
        %v3094 = vsel %vm1648, %v2502, 0
        %v3096 = vsel %vm1648, %v2504, 0
        %v3098 = vsel %vm1648, %v2506, 0
        %v3100 = vsel %vm1648, %v2508, 0
        %v3102 = vsel %vm1648, %v2510, 0
        %v3104 = vsel %vm1648, %v2512, 0
        %v3106 = vsel %vm1648, %v2514, 0
        %v3108 = vsel %vm1648, %v2516, 0
        %v3110 = vsel %vm1648, %v2518, 0
        %3112 = vmatprep.subr.mxu0 0.0
        %3113 = vmatpush1.msra.mxu0 0.0
        %3114 = vmatprep.subr.mxu0 0.0
        %3115 = vmatpush1.msra.mxu0 0.0
        %3116 = vmatprep.subr.mxu0 0.0
        %3117 = vmatpush1.msra.mxu0 0.0
        %3118 = vmatprep.subr.mxu0 0.0
        %3119 = vmatpush1.msra.mxu0 0.0
        %3120 = vmatprep.subr.mxu0 0.0
        %3121 = vmatpush1.msra.mxu0 0.0
        %3122 = vmatprep.subr.mxu0 0.0
        %3123 = vmatpush1.msra.mxu0 0.0
        %3124 = vmatprep.subr.mxu0 0.0
        %3125 = vmatpush1.msra.mxu0 0.0
        %3126 = vmatprep.subr.mxu0 0.0
        %3127 = vmatpush1.msra.mxu0 0.0
        %3128 = vmatprep.subr.mxu0 %v1919
        %3129 = vmatpush1.msra.mxu0 %v1918
        %3130 = vmatprep.subr.mxu0 %v1917
        %3131 = vmatpush1.msra.mxu0 %v1916
        %3132 = vmatprep.subr.mxu0 %v1915
        %3133 = vmatpush1.msra.mxu0 %v1914
        %3134 = vmatprep.subr.mxu0 %v1913
        %3135 = vmatpush1.msra.mxu0 %v1912
        %3136 = vmatprep.subr.mxu0 %v1911
        %3137 = vmatpush1.msra.mxu0 %v1910
        %3138 = vmatprep.subr.mxu0 %v1909
        %3139 = vmatpush1.msra.mxu0 %v1908
        %3140 = vmatprep.subr.mxu0 %v1907
        %3141 = vmatpush1.msra.mxu0 %v1906
        %3142 = vmatprep.subr.mxu0 %v1905
        %3143 = vmatpush1.msra.mxu0 %v1904
        %3144 = vmatprep.subr.mxu0 0.0
        %3145 = vmatpush2.msra.mxu0 0.0
        %3146 = vmatprep.subr.mxu0 0.0
        %3147 = vmatpush2.msra.mxu0 0.0
        %3148 = vmatprep.subr.mxu0 0.0
        %3149 = vmatpush2.msra.mxu0 0.0
        %3150 = vmatprep.subr.mxu0 0.0
        %3151 = vmatpush2.msra.mxu0 0.0
        %3152 = vmatprep.subr.mxu0 0.0
        %3153 = vmatpush2.msra.mxu0 0.0
        %3154 = vmatprep.subr.mxu0 0.0
        %3155 = vmatpush2.msra.mxu0 0.0
        %3156 = vmatprep.subr.mxu0 0.0
        %3157 = vmatpush2.msra.mxu0 0.0
        %3158 = vmatprep.subr.mxu0 0.0
        %3159 = vmatpush2.msra.mxu0 0.0
        %3160 = vmatprep.subr.mxu0 0.0
        %3161 = vmatpush2.msra.mxu0 0.0
        %3162 = vmatprep.subr.mxu0 0.0
        %3163 = vmatpush2.msra.mxu0 0.0
        %3164 = vmatprep.subr.mxu0 0.0
        %3165 = vmatpush2.msra.mxu0 0.0
        %3166 = vmatprep.subr.mxu0 0.0
        %3167 = vmatpush2.msra.mxu0 0.0
        %3168 = vmatprep.subr.mxu0 0.0
        %3169 = vmatpush2.msra.mxu0 0.0
        %3170 = vmatprep.subr.mxu0 0.0
        %3171 = vmatpush2.msra.mxu0 0.0
        %3172 = vmatprep.subr.mxu0 0.0
        %3173 = vmatpush2.msra.mxu0 0.0
        %3174 = vmatprep.subr.mxu0 0.0
        %3175 = vmatpush2.msra.mxu0 0.0
        %3176 = vmatprep.mubr.f32.mxu0 0.0
        %3177 = vmatmul.mubr.f32.gmra.mxu0 %v3080
        %v3178 = vpop.f32.mrf.mxu0
        %v3179 = vadd.f32 0.0, %v3178
        %v3180 = vpop.f32.mrf.mxu0
        %v3181 = vadd.f32 0.0, %v3180
        %3182 = vmatprep.mubr.f32.mxu0 0.0
        %3183 = vmatmul.mubr.f32.gmra.mxu0 %v3082
        %v3184 = vpop.f32.mrf.mxu0
        %v3185 = vadd.f32 0.0, %v3184
        %v3186 = vpop.f32.mrf.mxu0
        %v3187 = vadd.f32 0.0, %v3186
        %3188 = vmatprep.mubr.f32.mxu0 0.0
        %3189 = vmatmul.mubr.f32.gmra.mxu0 %v3084
        %v3190 = vpop.f32.mrf.mxu0
        %v3191 = vadd.f32 0.0, %v3190
        %v3192 = vpop.f32.mrf.mxu0
        %v3193 = vadd.f32 0.0, %v3192
        %3194 = vmatprep.mubr.f32.mxu0 0.0
        %3195 = vmatmul.mubr.f32.gmra.mxu0 %v3086
        %v3196 = vpop.f32.mrf.mxu0
        %v3197 = vadd.f32 0.0, %v3196
        %v3198 = vpop.f32.mrf.mxu0
        %v3199 = vadd.f32 0.0, %v3198
        %3200 = vmatprep.mubr.f32.mxu0 0.0
        %3201 = vmatmul.mubr.f32.gmra.mxu0 %v3088
        %v3202 = vpop.f32.mrf.mxu0
        %v3203 = vadd.f32 0.0, %v3202
        %v3204 = vpop.f32.mrf.mxu0
        %v3205 = vadd.f32 0.0, %v3204
        %3206 = vmatprep.mubr.f32.mxu0 0.0
        %3207 = vmatmul.mubr.f32.gmra.mxu0 %v3090
        %v3208 = vpop.f32.mrf.mxu0
        %v3209 = vadd.f32 0.0, %v3208
        %v3210 = vpop.f32.mrf.mxu0
        %v3211 = vadd.f32 0.0, %v3210
        %3212 = vmatprep.mubr.f32.mxu0 0.0
        %3213 = vmatmul.mubr.f32.gmra.mxu0 %v3092
        %v3214 = vpop.f32.mrf.mxu0
        %v3215 = vadd.f32 0.0, %v3214
        %v3216 = vpop.f32.mrf.mxu0
        %v3217 = vadd.f32 0.0, %v3216
        %3218 = vmatprep.mubr.f32.mxu0 0.0
        %3219 = vmatmul.mubr.f32.gmra.mxu0 %v3094
        %v3220 = vpop.f32.mrf.mxu0
        %v3221 = vadd.f32 0.0, %v3220
        %v3222 = vpop.f32.mrf.mxu0
        %v3223 = vadd.f32 0.0, %v3222
        %3224 = vmatprep.mubr.f32.mxu0 0.0
        %3225 = vmatmul.mubr.f32.gmra.mxu0 %v3096
        %v3226 = vpop.f32.mrf.mxu0
        %v3227 = vadd.f32 0.0, %v3226
        %v3228 = vpop.f32.mrf.mxu0
        %v3229 = vadd.f32 0.0, %v3228
        %3230 = vmatprep.mubr.f32.mxu0 0.0
        %3231 = vmatmul.mubr.f32.gmra.mxu0 %v3098
        %v3232 = vpop.f32.mrf.mxu0
        %v3233 = vadd.f32 0.0, %v3232
        %v3234 = vpop.f32.mrf.mxu0
        %v3235 = vadd.f32 0.0, %v3234
        %3236 = vmatprep.mubr.f32.mxu0 0.0
        %3237 = vmatmul.mubr.f32.gmra.mxu0 %v3100
        %v3238 = vpop.f32.mrf.mxu0
        %v3239 = vadd.f32 0.0, %v3238
        %v3240 = vpop.f32.mrf.mxu0
        %v3241 = vadd.f32 0.0, %v3240
        %3242 = vmatprep.mubr.f32.mxu0 0.0
        %3243 = vmatmul.mubr.f32.gmra.mxu0 %v3102
        %v3244 = vpop.f32.mrf.mxu0
        %v3245 = vadd.f32 0.0, %v3244
        %v3246 = vpop.f32.mrf.mxu0
        %v3247 = vadd.f32 0.0, %v3246
        %3248 = vmatprep.mubr.f32.mxu0 0.0
        %3249 = vmatmul.mubr.f32.gmra.mxu0 %v3104
        %v3250 = vpop.f32.mrf.mxu0
        %v3251 = vadd.f32 0.0, %v3250
        %v3252 = vpop.f32.mrf.mxu0
        %v3253 = vadd.f32 0.0, %v3252
        %3254 = vmatprep.mubr.f32.mxu0 0.0
        %3255 = vmatmul.mubr.f32.gmra.mxu0 %v3106
        %v3256 = vpop.f32.mrf.mxu0
        %v3257 = vadd.f32 0.0, %v3256
        %v3258 = vpop.f32.mrf.mxu0
        %v3259 = vadd.f32 0.0, %v3258
        %3260 = vmatprep.mubr.f32.mxu0 0.0
        %3261 = vmatmul.mubr.f32.gmra.mxu0 %v3108
        %v3262 = vpop.f32.mrf.mxu0
        %v3263 = vadd.f32 0.0, %v3262
        %v3264 = vpop.f32.mrf.mxu0
        %v3265 = vadd.f32 0.0, %v3264
        %3266 = vmatprep.mubr.f32.mxu0 0.0
        %3267 = vmatmul.mubr.f32.gmra.mxu0 %v3110
        %v3268 = vpop.f32.mrf.mxu0
        %v3269 = vadd.f32 0.0, %v3268
        %v3270 = vpop.f32.mrf.mxu0
        %v3271 = vadd.f32 0.0, %v3270
        %3272 = vdwg.mxu0
        %v3273 = vadd.f32 %v3048, %v3179
        %v3274 = vadd.f32 %v3050, %v3185
        %v3275 = vadd.f32 %v3052, %v3191
        %v3276 = vadd.f32 %v3054, %v3197
        %v3277 = vadd.f32 %v3056, %v3203
        %v3278 = vadd.f32 %v3058, %v3209
        %v3279 = vadd.f32 %v3060, %v3215
        %v3280 = vadd.f32 %v3062, %v3221
        %v3281 = vadd.f32 %v3064, %v3227
        %v3282 = vadd.f32 %v3066, %v3233
        %v3283 = vadd.f32 %v3068, %v3239
        %v3284 = vadd.f32 %v3070, %v3245
        %v3285 = vadd.f32 %v3072, %v3251
        %v3286 = vadd.f32 %v3074, %v3257
        %v3287 = vadd.f32 %v3076, %v3263
        %v3288 = vadd.f32 %v3078, %v3269
        %v3289 = vxor.u32 %v3273, 2147483648
        %v3290 = vxor.u32 %v3274, 2147483648
        %v3291 = vxor.u32 %v3275, 2147483648
        %v3292 = vxor.u32 %v3276, 2147483648
        %v3293 = vxor.u32 %v3277, 2147483648
        %v3294 = vxor.u32 %v3278, 2147483648
        %v3295 = vxor.u32 %v3279, 2147483648
        %v3296 = vxor.u32 %v3280, 2147483648
        %v3297 = vxor.u32 %v3281, 2147483648
        %v3298 = vxor.u32 %v3282, 2147483648
        %v3299 = vxor.u32 %v3283, 2147483648
        %v3300 = vxor.u32 %v3284, 2147483648
        %v3301 = vxor.u32 %v3285, 2147483648
        %v3302 = vxor.u32 %v3286, 2147483648
        %v3303 = vxor.u32 %v3287, 2147483648
        %v3304 = vxor.u32 %v3288, 2147483648
        %v3305 = vmul.f32 %v3289, 1.442695
        %v3306 = vpow.pop %v3305
        %v3307 = vmul.f32 %v3290, 1.442695
        %v3308 = vpow.pop %v3307
        %v3309 = vmul.f32 %v3291, 1.442695
        %v3310 = vpow.pop %v3309
        %v3311 = vmul.f32 %v3292, 1.442695
        %v3312 = vpow.pop %v3311
        %v3313 = vmul.f32 %v3293, 1.442695
        %v3314 = vpow.pop %v3313
        %v3315 = vmul.f32 %v3294, 1.442695
        %v3316 = vpow.pop %v3315
        %v3317 = vmul.f32 %v3295, 1.442695
        %v3318 = vpow.pop %v3317
        %v3319 = vmul.f32 %v3296, 1.442695
        %v3320 = vpow.pop %v3319
        %v3321 = vmul.f32 %v3297, 1.442695
        %v3322 = vpow.pop %v3321
        %v3323 = vmul.f32 %v3298, 1.442695
        %v3324 = vpow.pop %v3323
        %v3325 = vmul.f32 %v3299, 1.442695
        %v3326 = vpow.pop %v3325
        %v3327 = vmul.f32 %v3300, 1.442695
        %v3328 = vpow.pop %v3327
        %v3329 = vmul.f32 %v3301, 1.442695
        %v3330 = vpow.pop %v3329
        %v3331 = vmul.f32 %v3302, 1.442695
        %v3332 = vpow.pop %v3331
        %v3333 = vmul.f32 %v3303, 1.442695
        %v3334 = vpow.pop %v3333
        %v3335 = vmul.f32 %v3304, 1.442695
        %v3336 = vpow.pop %v3335
        %v3337 = vadd.f32 %v3306, 1.0
        %v3338 = vadd.f32 %v3308, 1.0
        %v3339 = vadd.f32 %v3310, 1.0
        %v3340 = vadd.f32 %v3312, 1.0
        %v3341 = vadd.f32 %v3314, 1.0
        %v3342 = vadd.f32 %v3316, 1.0
        %v3343 = vadd.f32 %v3318, 1.0
        %v3344 = vadd.f32 %v3320, 1.0
        %v3345 = vadd.f32 %v3322, 1.0
        %v3346 = vadd.f32 %v3324, 1.0
        %v3347 = vadd.f32 %v3326, 1.0
        %v3348 = vadd.f32 %v3328, 1.0
        %v3349 = vadd.f32 %v3330, 1.0
        %v3350 = vadd.f32 %v3332, 1.0
        %v3351 = vadd.f32 %v3334, 1.0
        %v3352 = vadd.f32 %v3336, 1.0
        %v3353 = vrcp.pop %v3337
        %v3354 = vmul.f32 1.0, %v3353
        %v3355 = vrcp.pop %v3338
        %v3356 = vmul.f32 1.0, %v3355
        %v3357 = vrcp.pop %v3339
        %v3358 = vmul.f32 1.0, %v3357
        %v3359 = vrcp.pop %v3340
        %v3360 = vmul.f32 1.0, %v3359
        %v3361 = vrcp.pop %v3341
        %v3362 = vmul.f32 1.0, %v3361
        %v3363 = vrcp.pop %v3342
        %v3364 = vmul.f32 1.0, %v3363
        %v3365 = vrcp.pop %v3343
        %v3366 = vmul.f32 1.0, %v3365
        %v3367 = vrcp.pop %v3344
        %v3368 = vmul.f32 1.0, %v3367
        %v3369 = vrcp.pop %v3345
        %v3370 = vmul.f32 1.0, %v3369
        %v3371 = vrcp.pop %v3346
        %v3372 = vmul.f32 1.0, %v3371
        %v3373 = vrcp.pop %v3347
        %v3374 = vmul.f32 1.0, %v3373
        %v3375 = vrcp.pop %v3348
        %v3376 = vmul.f32 1.0, %v3375
        %v3377 = vrcp.pop %v3349
        %v3378 = vmul.f32 1.0, %v3377
        %v3379 = vrcp.pop %v3350
        %v3380 = vmul.f32 1.0, %v3379
        %v3381 = vrcp.pop %v3351
        %v3382 = vmul.f32 1.0, %v3381
        %v3383 = vrcp.pop %v3352
        %v3384 = vmul.f32 1.0, %v3383
        %v3385 = vadd.f32 %v3181, %v1957
        %v3386 = vadd.f32 %v3187, %v1957
        %v3387 = vadd.f32 %v3193, %v1957
        %v3388 = vadd.f32 %v3199, %v1957
        %v3389 = vadd.f32 %v3205, %v1957
        %v3390 = vadd.f32 %v3211, %v1957
        %v3391 = vadd.f32 %v3217, %v1957
        %v3392 = vadd.f32 %v3223, %v1957
        %v3393 = vadd.f32 %v3229, %v1957
        %v3394 = vadd.f32 %v3235, %v1957
        %v3395 = vadd.f32 %v3241, %v1957
        %v3396 = vadd.f32 %v3247, %v1957
        %v3397 = vadd.f32 %v3253, %v1957
        %v3398 = vadd.f32 %v3259, %v1957
        %v3399 = vadd.f32 %v3265, %v1957
        %v3400 = vadd.f32 %v3271, %v1957
        %v3401 = vmul.f32 %v3354, %v3385
        %v3402 = vmul.f32 %v3356, %v3386
        %v3403 = vmul.f32 %v3358, %v3387
        %v3404 = vmul.f32 %v3360, %v3388
        %v3405 = vmul.f32 %v3362, %v3389
        %v3406 = vmul.f32 %v3364, %v3390
        %v3407 = vmul.f32 %v3366, %v3391
        %v3408 = vmul.f32 %v3368, %v3392
        %v3409 = vmul.f32 %v3370, %v3393
        %v3410 = vmul.f32 %v3372, %v3394
        %v3411 = vmul.f32 %v3374, %v3395
        %v3412 = vmul.f32 %v3376, %v3396
        %v3413 = vmul.f32 %v3378, %v3397
        %v3414 = vmul.f32 %v3380, %v3398
        %v3415 = vmul.f32 %v3382, %v3399
        %v3416 = vmul.f32 %v3384, %v3400
        %v3417 = vadd.f32 %v3049, %v3401
        %v3418 = vadd.f32 %v3051, %v3402
        %v3419 = vadd.f32 %v3053, %v3403
        %v3420 = vadd.f32 %v3055, %v3404
        %v3421 = vadd.f32 %v3057, %v3405
        %v3422 = vadd.f32 %v3059, %v3406
        %v3423 = vadd.f32 %v3061, %v3407
        %v3424 = vadd.f32 %v3063, %v3408
        %v3425 = vadd.f32 %v3065, %v3409
        %v3426 = vadd.f32 %v3067, %v3410
        %v3427 = vadd.f32 %v3069, %v3411
        %v3428 = vadd.f32 %v3071, %v3412
        %v3429 = vadd.f32 %v3073, %v3413
        %v3430 = vadd.f32 %v3075, %v3414
        %v3431 = vadd.f32 %v3077, %v3415
        %v3432 = vadd.f32 %v3079, %v3416
        %v3433 = vtanh.pop %v3417
        %v3434 = vtanh.pop %v3418
        %v3435 = vtanh.pop %v3419
        %v3436 = vtanh.pop %v3420
        %v3437 = vtanh.pop %v3421
        %v3438 = vtanh.pop %v3422
        %v3439 = vtanh.pop %v3423
        %v3440 = vtanh.pop %v3424
        %v3441 = vtanh.pop %v3425
        %v3442 = vtanh.pop %v3426
        %v3443 = vtanh.pop %v3427
        %v3444 = vtanh.pop %v3428
        %v3445 = vtanh.pop %v3429
        %v3446 = vtanh.pop %v3430
        %v3447 = vtanh.pop %v3431
        %v3448 = vtanh.pop %v3432
        %v3449 = vsub.f32 1.0, %v3354
        %v3450 = vsub.f32 1.0, %v3356
        %v3451 = vsub.f32 1.0, %v3358
        %v3452 = vsub.f32 1.0, %v3360
        %v3453 = vsub.f32 1.0, %v3362
        %v3454 = vsub.f32 1.0, %v3364
        %v3455 = vsub.f32 1.0, %v3366
        %v3456 = vsub.f32 1.0, %v3368
        %v3457 = vsub.f32 1.0, %v3370
        %v3458 = vsub.f32 1.0, %v3372
        %v3459 = vsub.f32 1.0, %v3374
        %v3460 = vsub.f32 1.0, %v3376
        %v3461 = vsub.f32 1.0, %v3378
        %v3462 = vsub.f32 1.0, %v3380
        %v3463 = vsub.f32 1.0, %v3382
        %v3464 = vsub.f32 1.0, %v3384
        %3481 = vrot.lane.b32.xlu0 %v3433, 64
        %v3482 = vpop.permute.xlu0 %3481
        %3483 = vrot.lane.b32.xlu0 %v3434, 64
        %v3484 = vpop.permute.xlu0 %3483
        %3485 = vrot.lane.b32.xlu0 %v3435, 64
        %v3486 = vpop.permute.xlu0 %3485
        %3487 = vrot.lane.b32.xlu0 %v3436, 64
        %v3488 = vpop.permute.xlu0 %3487
        %3489 = vrot.lane.b32.xlu0 %v3437, 64
        %v3490 = vpop.permute.xlu0 %3489
        %3491 = vrot.lane.b32.xlu0 %v3438, 64
        %v3492 = vpop.permute.xlu0 %3491
        %3493 = vrot.lane.b32.xlu0 %v3439, 64
        %v3494 = vpop.permute.xlu0 %3493
        %3495 = vrot.lane.b32.xlu0 %v3440, 64
        %v3496 = vpop.permute.xlu0 %3495
        %3497 = vrot.lane.b32.xlu0 %v3441, 64
        %v3498 = vpop.permute.xlu0 %3497
        %3499 = vrot.lane.b32.xlu0 %v3442, 64
        %v3500 = vpop.permute.xlu0 %3499
        %3501 = vrot.lane.b32.xlu0 %v3443, 64
        %v3502 = vpop.permute.xlu0 %3501
        %3503 = vrot.lane.b32.xlu0 %v3444, 64
        %v3504 = vpop.permute.xlu0 %3503
        %3505 = vrot.lane.b32.xlu0 %v3445, 64
        %v3506 = vpop.permute.xlu0 %3505
        %3507 = vrot.lane.b32.xlu0 %v3446, 64
        %v3508 = vpop.permute.xlu0 %3507
        %3509 = vrot.lane.b32.xlu0 %v3447, 64
        %v3510 = vpop.permute.xlu0 %3509
        %3511 = vrot.lane.b32.xlu0 %v3448, 64
        %v3512 = vpop.permute.xlu0 %3511
        %v3529 = vmul.f32 %v3449, %v3482
        %v3530 = vmul.f32 %v3450, %v3484
        %v3531 = vmul.f32 %v3451, %v3486
        %v3532 = vmul.f32 %v3452, %v3488
        %v3533 = vmul.f32 %v3453, %v3490
        %v3534 = vmul.f32 %v3454, %v3492
        %v3535 = vmul.f32 %v3455, %v3494
        %v3536 = vmul.f32 %v3456, %v3496
        %v3537 = vmul.f32 %v3457, %v3498
        %v3538 = vmul.f32 %v3458, %v3500
        %v3539 = vmul.f32 %v3459, %v3502
        %v3540 = vmul.f32 %v3460, %v3504
        %v3541 = vmul.f32 %v3461, %v3506
        %v3542 = vmul.f32 %v3462, %v3508
        %v3543 = vmul.f32 %v3463, %v3510
        %v3544 = vmul.f32 %v3464, %v3512
        %v3545 = vmul.f32 %v3354, %v2455
        %v3546 = vmul.f32 %v3356, %v2456
        %v3547 = vmul.f32 %v3358, %v2457
        %v3548 = vmul.f32 %v3360, %v2458
        %v3549 = vmul.f32 %v3362, %v2459
        %v3550 = vmul.f32 %v3364, %v2460
        %v3551 = vmul.f32 %v3366, %v2461
        %v3552 = vmul.f32 %v3368, %v2462
        %v3553 = vmul.f32 %v3370, %v2463
        %v3554 = vmul.f32 %v3372, %v2464
        %v3555 = vmul.f32 %v3374, %v2465
        %v3556 = vmul.f32 %v3376, %v2466
        %v3557 = vmul.f32 %v3378, %v2467
        %v3558 = vmul.f32 %v3380, %v2468
        %v3559 = vmul.f32 %v3382, %v2469
        %v3560 = vmul.f32 %v3384, %v2470
        %v3561 = vadd.f32 %v3529, %v3545
        %v3562 = vadd.f32 %v3530, %v3546
        %v3563 = vadd.f32 %v3531, %v3547
        %v3564 = vadd.f32 %v3532, %v3548
        %v3565 = vadd.f32 %v3533, %v3549
        %v3566 = vadd.f32 %v3534, %v3550
        %v3567 = vadd.f32 %v3535, %v3551
        %v3568 = vadd.f32 %v3536, %v3552
        %v3569 = vadd.f32 %v3537, %v3553
        %v3570 = vadd.f32 %v3538, %v3554
        %v3571 = vadd.f32 %v3539, %v3555
        %v3572 = vadd.f32 %v3540, %v3556
        %v3573 = vadd.f32 %v3541, %v3557
        %v3574 = vadd.f32 %v3542, %v3558
        %v3575 = vadd.f32 %v3543, %v3559
        %v3576 = vadd.f32 %v3544, %v3560
        %3593 = vrot.lane.b32.xlu0 %v3561, 64
        %v3594 = vpop.permute.xlu0 %3593
        %3595 = vrot.lane.b32.xlu0 %v3562, 64
        %v3596 = vpop.permute.xlu0 %3595
        %3597 = vrot.lane.b32.xlu0 %v3563, 64
        %v3598 = vpop.permute.xlu0 %3597
        %3599 = vrot.lane.b32.xlu0 %v3564, 64
        %v3600 = vpop.permute.xlu0 %3599
        %3601 = vrot.lane.b32.xlu0 %v3565, 64
        %v3602 = vpop.permute.xlu0 %3601
        %3603 = vrot.lane.b32.xlu0 %v3566, 64
        %v3604 = vpop.permute.xlu0 %3603
        %3605 = vrot.lane.b32.xlu0 %v3567, 64
        %v3606 = vpop.permute.xlu0 %3605
        %3607 = vrot.lane.b32.xlu0 %v3568, 64
        %v3608 = vpop.permute.xlu0 %3607
        %3609 = vrot.lane.b32.xlu0 %v3569, 64
        %v3610 = vpop.permute.xlu0 %3609
        %3611 = vrot.lane.b32.xlu0 %v3570, 64
        %v3612 = vpop.permute.xlu0 %3611
        %3613 = vrot.lane.b32.xlu0 %v3571, 64
        %v3614 = vpop.permute.xlu0 %3613
        %3615 = vrot.lane.b32.xlu0 %v3572, 64
        %v3616 = vpop.permute.xlu0 %3615
        %3617 = vrot.lane.b32.xlu0 %v3573, 64
        %v3618 = vpop.permute.xlu0 %3617
        %3619 = vrot.lane.b32.xlu0 %v3574, 64
        %v3620 = vpop.permute.xlu0 %3619
        %3621 = vrot.lane.b32.xlu0 %v3575, 64
        %v3622 = vpop.permute.xlu0 %3621
        %3623 = vrot.lane.b32.xlu0 %v3576, 64
        %v3624 = vpop.permute.xlu0 %3623
        %v3641 = vsel %vm1648, %v3594, %v3032
        %v3642 = vsel %vm1648, %v3596, %v3033
        %v3643 = vsel %vm1648, %v3598, %v3034
        %v3644 = vsel %vm1648, %v3600, %v3035
        %v3645 = vsel %vm1648, %v3602, %v3036
        %v3646 = vsel %vm1648, %v3604, %v3037
        %v3647 = vsel %vm1648, %v3606, %v3038
        %v3648 = vsel %vm1648, %v3608, %v3039
        %v3649 = vsel %vm1648, %v3610, %v3040
        %v3650 = vsel %vm1648, %v3612, %v3041
        %v3651 = vsel %vm1648, %v3614, %v3042
        %v3652 = vsel %vm1648, %v3616, %v3043
        %v3653 = vsel %vm1648, %v3618, %v3044
        %v3654 = vsel %vm1648, %v3620, %v3045
        %v3655 = vsel %vm1648, %v3622, %v3046
        %v3656 = vsel %vm1648, %v3624, %v3047
        %3657 = vmatprep.subr.mxu0 %v1951
        %3658 = vmatpush1.msra.mxu0 %v1950
        %3659 = vmatprep.subr.mxu0 %v1949
        %3660 = vmatpush1.msra.mxu0 %v1948
        %3661 = vmatprep.subr.mxu0 %v1947
        %3662 = vmatpush1.msra.mxu0 %v1946
        %3663 = vmatprep.subr.mxu0 %v1945
        %3664 = vmatpush1.msra.mxu0 %v1944
        %3665 = vmatprep.subr.mxu0 %v1943
        %3666 = vmatpush1.msra.mxu0 %v1942
        %3667 = vmatprep.subr.mxu0 %v1941
        %3668 = vmatpush1.msra.mxu0 %v1940
        %3669 = vmatprep.subr.mxu0 %v1939
        %3670 = vmatpush1.msra.mxu0 %v1938
        %3671 = vmatprep.subr.mxu0 %v1937
        %3672 = vmatpush1.msra.mxu0 %v1936
        %3673 = vmatprep.subr.mxu0 %v1935
        %3674 = vmatpush1.msra.mxu0 %v1934
        %3675 = vmatprep.subr.mxu0 %v1933
        %3676 = vmatpush1.msra.mxu0 %v1932
        %3677 = vmatprep.subr.mxu0 %v1931
        %3678 = vmatpush1.msra.mxu0 %v1930
        %3679 = vmatprep.subr.mxu0 %v1929
        %3680 = vmatpush1.msra.mxu0 %v1928
        %3681 = vmatprep.subr.mxu0 %v1927
        %3682 = vmatpush1.msra.mxu0 %v1926
        %3683 = vmatprep.subr.mxu0 %v1925
        %3684 = vmatpush1.msra.mxu0 %v1924
        %3685 = vmatprep.subr.mxu0 %v1923
        %3686 = vmatpush1.msra.mxu0 %v1922
        %3687 = vmatprep.subr.mxu0 %v1921
        %3688 = vmatpush1.msra.mxu0 %v1920
        %3689 = vmatprep.subr.mxu0 0.0
        %3690 = vmatpush2.msra.mxu0 0.0
        %3691 = vmatprep.subr.mxu0 0.0
        %3692 = vmatpush2.msra.mxu0 0.0
        %3693 = vmatprep.subr.mxu0 0.0
        %3694 = vmatpush2.msra.mxu0 0.0
        %3695 = vmatprep.subr.mxu0 0.0
        %3696 = vmatpush2.msra.mxu0 0.0
        %3697 = vmatprep.subr.mxu0 0.0
        %3698 = vmatpush2.msra.mxu0 0.0
        %3699 = vmatprep.subr.mxu0 0.0
        %3700 = vmatpush2.msra.mxu0 0.0
        %3701 = vmatprep.subr.mxu0 0.0
        %3702 = vmatpush2.msra.mxu0 0.0
        %3703 = vmatprep.subr.mxu0 0.0
        %3704 = vmatpush2.msra.mxu0 0.0
        %3705 = vmatprep.subr.mxu0 0.0
        %3706 = vmatpush2.msra.mxu0 0.0
        %3707 = vmatprep.subr.mxu0 0.0
        %3708 = vmatpush2.msra.mxu0 0.0
        %3709 = vmatprep.subr.mxu0 0.0
        %3710 = vmatpush2.msra.mxu0 0.0
        %3711 = vmatprep.subr.mxu0 0.0
        %3712 = vmatpush2.msra.mxu0 0.0
        %3713 = vmatprep.subr.mxu0 0.0
        %3714 = vmatpush2.msra.mxu0 0.0
        %3715 = vmatprep.subr.mxu0 0.0
        %3716 = vmatpush2.msra.mxu0 0.0
        %3717 = vmatprep.subr.mxu0 0.0
        %3718 = vmatpush2.msra.mxu0 0.0
        %3719 = vmatprep.subr.mxu0 0.0
        %3720 = vmatpush2.msra.mxu0 0.0
        %3721 = vmatprep.mubr.f32.mxu0 0.0
        %3722 = vmatmul.mubr.f32.gmra.mxu0 %v3641
        %v3723 = vpop.f32.mrf.mxu0
        %v3724 = vadd.f32 %v1964, %v3723
        %v3725 = vpop.f32.mrf.mxu0
        %v3726 = vadd.f32 %v1968, %v3725
        %3727 = vmatprep.mubr.f32.mxu0 0.0
        %3728 = vmatmul.mubr.f32.gmra.mxu0 %v3642
        %v3729 = vpop.f32.mrf.mxu0
        %v3730 = vadd.f32 %v1964, %v3729
        %v3731 = vpop.f32.mrf.mxu0
        %v3732 = vadd.f32 %v1968, %v3731
        %3733 = vmatprep.mubr.f32.mxu0 0.0
        %3734 = vmatmul.mubr.f32.gmra.mxu0 %v3643
        %v3735 = vpop.f32.mrf.mxu0
        %v3736 = vadd.f32 %v1964, %v3735
        %v3737 = vpop.f32.mrf.mxu0
        %v3738 = vadd.f32 %v1968, %v3737
        %3739 = vmatprep.mubr.f32.mxu0 0.0
        %3740 = vmatmul.mubr.f32.gmra.mxu0 %v3644
        %v3741 = vpop.f32.mrf.mxu0
        %v3742 = vadd.f32 %v1964, %v3741
        %v3743 = vpop.f32.mrf.mxu0
        %v3744 = vadd.f32 %v1968, %v3743
        %3745 = vmatprep.mubr.f32.mxu0 0.0
        %3746 = vmatmul.mubr.f32.gmra.mxu0 %v3645
        %v3747 = vpop.f32.mrf.mxu0
        %v3748 = vadd.f32 %v1964, %v3747
        %v3749 = vpop.f32.mrf.mxu0
        %v3750 = vadd.f32 %v1968, %v3749
        %3751 = vmatprep.mubr.f32.mxu0 0.0
        %3752 = vmatmul.mubr.f32.gmra.mxu0 %v3646
        %v3753 = vpop.f32.mrf.mxu0
        %v3754 = vadd.f32 %v1964, %v3753
        %v3755 = vpop.f32.mrf.mxu0
        %v3756 = vadd.f32 %v1968, %v3755
        %3757 = vmatprep.mubr.f32.mxu0 0.0
        %3758 = vmatmul.mubr.f32.gmra.mxu0 %v3647
        %v3759 = vpop.f32.mrf.mxu0
        %v3760 = vadd.f32 %v1964, %v3759
        %v3761 = vpop.f32.mrf.mxu0
        %v3762 = vadd.f32 %v1968, %v3761
        %3763 = vmatprep.mubr.f32.mxu0 0.0
        %3764 = vmatmul.mubr.f32.gmra.mxu0 %v3648
        %v3765 = vpop.f32.mrf.mxu0
        %v3766 = vadd.f32 %v1964, %v3765
        %v3767 = vpop.f32.mrf.mxu0
        %v3768 = vadd.f32 %v1968, %v3767
        %3769 = vmatprep.mubr.f32.mxu0 0.0
        %3770 = vmatmul.mubr.f32.gmra.mxu0 %v3649
        %v3771 = vpop.f32.mrf.mxu0
        %v3772 = vadd.f32 %v1964, %v3771
        %v3773 = vpop.f32.mrf.mxu0
        %v3774 = vadd.f32 %v1968, %v3773
        %3775 = vmatprep.mubr.f32.mxu0 0.0
        %3776 = vmatmul.mubr.f32.gmra.mxu0 %v3650
        %v3777 = vpop.f32.mrf.mxu0
        %v3778 = vadd.f32 %v1964, %v3777
        %v3779 = vpop.f32.mrf.mxu0
        %v3780 = vadd.f32 %v1968, %v3779
        %3781 = vmatprep.mubr.f32.mxu0 0.0
        %3782 = vmatmul.mubr.f32.gmra.mxu0 %v3651
        %v3783 = vpop.f32.mrf.mxu0
        %v3784 = vadd.f32 %v1964, %v3783
        %v3785 = vpop.f32.mrf.mxu0
        %v3786 = vadd.f32 %v1968, %v3785
        %3787 = vmatprep.mubr.f32.mxu0 0.0
        %3788 = vmatmul.mubr.f32.gmra.mxu0 %v3652
        %v3789 = vpop.f32.mrf.mxu0
        %v3790 = vadd.f32 %v1964, %v3789
        %v3791 = vpop.f32.mrf.mxu0
        %v3792 = vadd.f32 %v1968, %v3791
        %3793 = vmatprep.mubr.f32.mxu0 0.0
        %3794 = vmatmul.mubr.f32.gmra.mxu0 %v3653
        %v3795 = vpop.f32.mrf.mxu0
        %v3796 = vadd.f32 %v1964, %v3795
        %v3797 = vpop.f32.mrf.mxu0
        %v3798 = vadd.f32 %v1968, %v3797
        %3799 = vmatprep.mubr.f32.mxu0 0.0
        %3800 = vmatmul.mubr.f32.gmra.mxu0 %v3654
        %v3801 = vpop.f32.mrf.mxu0
        %v3802 = vadd.f32 %v1964, %v3801
        %v3803 = vpop.f32.mrf.mxu0
        %v3804 = vadd.f32 %v1968, %v3803
        %3805 = vmatprep.mubr.f32.mxu0 0.0
        %3806 = vmatmul.mubr.f32.gmra.mxu0 %v3655
        %v3807 = vpop.f32.mrf.mxu0
        %v3808 = vadd.f32 %v1964, %v3807
        %v3809 = vpop.f32.mrf.mxu0
        %v3810 = vadd.f32 %v1968, %v3809
        %3811 = vmatprep.mubr.f32.mxu0 0.0
        %3812 = vmatmul.mubr.f32.gmra.mxu0 %v3656
        %v3813 = vpop.f32.mrf.mxu0
        %v3814 = vadd.f32 %v1964, %v3813
        %v3815 = vpop.f32.mrf.mxu0
        %v3816 = vadd.f32 %v1968, %v3815
        %3817 = vdwg.mxu0
        %v3818 = vxor.u32 %v3724, 2147483648
        %v3819 = vxor.u32 %v3730, 2147483648
        %v3820 = vxor.u32 %v3736, 2147483648
        %v3821 = vxor.u32 %v3742, 2147483648
        %v3822 = vxor.u32 %v3748, 2147483648
        %v3823 = vxor.u32 %v3754, 2147483648
        %v3824 = vxor.u32 %v3760, 2147483648
        %v3825 = vxor.u32 %v3766, 2147483648
        %v3826 = vxor.u32 %v3772, 2147483648
        %v3827 = vxor.u32 %v3778, 2147483648
        %v3828 = vxor.u32 %v3784, 2147483648
        %v3829 = vxor.u32 %v3790, 2147483648
        %v3830 = vxor.u32 %v3796, 2147483648
        %v3831 = vxor.u32 %v3802, 2147483648
        %v3832 = vxor.u32 %v3808, 2147483648
        %v3833 = vxor.u32 %v3814, 2147483648
        %v3834 = vmul.f32 %v3818, 1.442695
        %v3835 = vpow.pop %v3834
        %v3836 = vmul.f32 %v3819, 1.442695
        %v3837 = vpow.pop %v3836
        %v3838 = vmul.f32 %v3820, 1.442695
        %v3839 = vpow.pop %v3838
        %v3840 = vmul.f32 %v3821, 1.442695
        %v3841 = vpow.pop %v3840
        %v3842 = vmul.f32 %v3822, 1.442695
        %v3843 = vpow.pop %v3842
        %v3844 = vmul.f32 %v3823, 1.442695
        %v3845 = vpow.pop %v3844
        %v3846 = vmul.f32 %v3824, 1.442695
        %v3847 = vpow.pop %v3846
        %v3848 = vmul.f32 %v3825, 1.442695
        %v3849 = vpow.pop %v3848
        %v3850 = vmul.f32 %v3826, 1.442695
        %v3851 = vpow.pop %v3850
        %v3852 = vmul.f32 %v3827, 1.442695
        %v3853 = vpow.pop %v3852
        %v3854 = vmul.f32 %v3828, 1.442695
        %v3855 = vpow.pop %v3854
        %v3856 = vmul.f32 %v3829, 1.442695
        %v3857 = vpow.pop %v3856
        %v3858 = vmul.f32 %v3830, 1.442695
        %v3859 = vpow.pop %v3858
        %v3860 = vmul.f32 %v3831, 1.442695
        %v3861 = vpow.pop %v3860
        %v3862 = vmul.f32 %v3832, 1.442695
        %v3863 = vpow.pop %v3862
        %v3864 = vmul.f32 %v3833, 1.442695
        %v3865 = vpow.pop %v3864
        %v3866 = vadd.f32 %v3835, 1.0
        %v3867 = vadd.f32 %v3837, 1.0
        %v3868 = vadd.f32 %v3839, 1.0
        %v3869 = vadd.f32 %v3841, 1.0
        %v3870 = vadd.f32 %v3843, 1.0
        %v3871 = vadd.f32 %v3845, 1.0
        %v3872 = vadd.f32 %v3847, 1.0
        %v3873 = vadd.f32 %v3849, 1.0
        %v3874 = vadd.f32 %v3851, 1.0
        %v3875 = vadd.f32 %v3853, 1.0
        %v3876 = vadd.f32 %v3855, 1.0
        %v3877 = vadd.f32 %v3857, 1.0
        %v3878 = vadd.f32 %v3859, 1.0
        %v3879 = vadd.f32 %v3861, 1.0
        %v3880 = vadd.f32 %v3863, 1.0
        %v3881 = vadd.f32 %v3865, 1.0
        %v3882 = vrcp.pop %v3866
        %v3883 = vmul.f32 1.0, %v3882
        %v3884 = vrcp.pop %v3867
        %v3885 = vmul.f32 1.0, %v3884
        %v3886 = vrcp.pop %v3868
        %v3887 = vmul.f32 1.0, %v3886
        %v3888 = vrcp.pop %v3869
        %v3889 = vmul.f32 1.0, %v3888
        %v3890 = vrcp.pop %v3870
        %v3891 = vmul.f32 1.0, %v3890
        %v3892 = vrcp.pop %v3871
        %v3893 = vmul.f32 1.0, %v3892
        %v3894 = vrcp.pop %v3872
        %v3895 = vmul.f32 1.0, %v3894
        %v3896 = vrcp.pop %v3873
        %v3897 = vmul.f32 1.0, %v3896
        %v3898 = vrcp.pop %v3874
        %v3899 = vmul.f32 1.0, %v3898
        %v3900 = vrcp.pop %v3875
        %v3901 = vmul.f32 1.0, %v3900
        %v3902 = vrcp.pop %v3876
        %v3903 = vmul.f32 1.0, %v3902
        %v3904 = vrcp.pop %v3877
        %v3905 = vmul.f32 1.0, %v3904
        %v3906 = vrcp.pop %v3878
        %v3907 = vmul.f32 1.0, %v3906
        %v3908 = vrcp.pop %v3879
        %v3909 = vmul.f32 1.0, %v3908
        %v3910 = vrcp.pop %v3880
        %v3911 = vmul.f32 1.0, %v3910
        %v3912 = vrcp.pop %v3881
        %v3913 = vmul.f32 1.0, %v3912
        %3930 = vrot.lane.b32.xlu0 %v3726, 64
        %v3931 = vpop.permute.xlu0 %3930
        %3932 = vrot.lane.b32.xlu0 %v3732, 64
        %v3933 = vpop.permute.xlu0 %3932
        %3934 = vrot.lane.b32.xlu0 %v3738, 64
        %v3935 = vpop.permute.xlu0 %3934
        %3936 = vrot.lane.b32.xlu0 %v3744, 64
        %v3937 = vpop.permute.xlu0 %3936
        %3938 = vrot.lane.b32.xlu0 %v3750, 64
        %v3939 = vpop.permute.xlu0 %3938
        %3940 = vrot.lane.b32.xlu0 %v3756, 64
        %v3941 = vpop.permute.xlu0 %3940
        %3942 = vrot.lane.b32.xlu0 %v3762, 64
        %v3943 = vpop.permute.xlu0 %3942
        %3944 = vrot.lane.b32.xlu0 %v3768, 64
        %v3945 = vpop.permute.xlu0 %3944
        %3946 = vrot.lane.b32.xlu0 %v3774, 64
        %v3947 = vpop.permute.xlu0 %3946
        %3948 = vrot.lane.b32.xlu0 %v3780, 64
        %v3949 = vpop.permute.xlu0 %3948
        %3950 = vrot.lane.b32.xlu0 %v3786, 64
        %v3951 = vpop.permute.xlu0 %3950
        %3952 = vrot.lane.b32.xlu0 %v3792, 64
        %v3953 = vpop.permute.xlu0 %3952
        %3954 = vrot.lane.b32.xlu0 %v3798, 64
        %v3955 = vpop.permute.xlu0 %3954
        %3956 = vrot.lane.b32.xlu0 %v3804, 64
        %v3957 = vpop.permute.xlu0 %3956
        %3958 = vrot.lane.b32.xlu0 %v3810, 64
        %v3959 = vpop.permute.xlu0 %3958
        %3960 = vrot.lane.b32.xlu0 %v3816, 64
        %v3961 = vpop.permute.xlu0 %3960
        %v3978 = vmul.f32 %v3883, %v3931
        %v3979 = vmul.f32 %v3885, %v3933
        %v3980 = vmul.f32 %v3887, %v3935
        %v3981 = vmul.f32 %v3889, %v3937
        %v3982 = vmul.f32 %v3891, %v3939
        %v3983 = vmul.f32 %v3893, %v3941
        %v3984 = vmul.f32 %v3895, %v3943
        %v3985 = vmul.f32 %v3897, %v3945
        %v3986 = vmul.f32 %v3899, %v3947
        %v3987 = vmul.f32 %v3901, %v3949
        %v3988 = vmul.f32 %v3903, %v3951
        %v3989 = vmul.f32 %v3905, %v3953
        %v3990 = vmul.f32 %v3907, %v3955
        %v3991 = vmul.f32 %v3909, %v3957
        %v3992 = vmul.f32 %v3911, %v3959
        %v3993 = vmul.f32 %v3913, %v3961
        %v3994 = vadd.f32 %v3726, %v3978
        %v3995 = vadd.f32 %v3732, %v3979
        %v3996 = vadd.f32 %v3738, %v3980
        %v3997 = vadd.f32 %v3744, %v3981
        %v3998 = vadd.f32 %v3750, %v3982
        %v3999 = vadd.f32 %v3756, %v3983
        %v4000 = vadd.f32 %v3762, %v3984
        %v4001 = vadd.f32 %v3768, %v3985
        %v4002 = vadd.f32 %v3774, %v3986
        %v4003 = vadd.f32 %v3780, %v3987
        %v4004 = vadd.f32 %v3786, %v3988
        %v4005 = vadd.f32 %v3792, %v3989
        %v4006 = vadd.f32 %v3798, %v3990
        %v4007 = vadd.f32 %v3804, %v3991
        %v4008 = vadd.f32 %v3810, %v3992
        %v4009 = vadd.f32 %v3816, %v3993
        %v4010 = vtanh.pop %v3994
        %v4011 = vtanh.pop %v3995
        %v4012 = vtanh.pop %v3996
        %v4013 = vtanh.pop %v3997
        %v4014 = vtanh.pop %v3998
        %v4015 = vtanh.pop %v3999
        %v4016 = vtanh.pop %v4000
        %v4017 = vtanh.pop %v4001
        %v4018 = vtanh.pop %v4002
        %v4019 = vtanh.pop %v4003
        %v4020 = vtanh.pop %v4004
        %v4021 = vtanh.pop %v4005
        %v4022 = vtanh.pop %v4006
        %v4023 = vtanh.pop %v4007
        %v4024 = vtanh.pop %v4008
        %v4025 = vtanh.pop %v4009
        %v4026 = vsub.f32 1.0, %v3883
        %v4027 = vsub.f32 1.0, %v3885
        %v4028 = vsub.f32 1.0, %v3887
        %v4029 = vsub.f32 1.0, %v3889
        %v4030 = vsub.f32 1.0, %v3891
        %v4031 = vsub.f32 1.0, %v3893
        %v4032 = vsub.f32 1.0, %v3895
        %v4033 = vsub.f32 1.0, %v3897
        %v4034 = vsub.f32 1.0, %v3899
        %v4035 = vsub.f32 1.0, %v3901
        %v4036 = vsub.f32 1.0, %v3903
        %v4037 = vsub.f32 1.0, %v3905
        %v4038 = vsub.f32 1.0, %v3907
        %v4039 = vsub.f32 1.0, %v3909
        %v4040 = vsub.f32 1.0, %v3911
        %v4041 = vsub.f32 1.0, %v3913
        %4058 = vrot.lane.b32.xlu0 %v4010, 64
        %v4059 = vpop.permute.xlu0 %4058
        %4060 = vrot.lane.b32.xlu0 %v4011, 64
        %v4061 = vpop.permute.xlu0 %4060
        %4062 = vrot.lane.b32.xlu0 %v4012, 64
        %v4063 = vpop.permute.xlu0 %4062
        %4064 = vrot.lane.b32.xlu0 %v4013, 64
        %v4065 = vpop.permute.xlu0 %4064
        %4066 = vrot.lane.b32.xlu0 %v4014, 64
        %v4067 = vpop.permute.xlu0 %4066
        %4068 = vrot.lane.b32.xlu0 %v4015, 64
        %v4069 = vpop.permute.xlu0 %4068
        %4070 = vrot.lane.b32.xlu0 %v4016, 64
        %v4071 = vpop.permute.xlu0 %4070
        %4072 = vrot.lane.b32.xlu0 %v4017, 64
        %v4073 = vpop.permute.xlu0 %4072
        %4074 = vrot.lane.b32.xlu0 %v4018, 64
        %v4075 = vpop.permute.xlu0 %4074
        %4076 = vrot.lane.b32.xlu0 %v4019, 64
        %v4077 = vpop.permute.xlu0 %4076
        %4078 = vrot.lane.b32.xlu0 %v4020, 64
        %v4079 = vpop.permute.xlu0 %4078
        %4080 = vrot.lane.b32.xlu0 %v4021, 64
        %v4081 = vpop.permute.xlu0 %4080
        %4082 = vrot.lane.b32.xlu0 %v4022, 64
        %v4083 = vpop.permute.xlu0 %4082
        %4084 = vrot.lane.b32.xlu0 %v4023, 64
        %v4085 = vpop.permute.xlu0 %4084
        %4086 = vrot.lane.b32.xlu0 %v4024, 64
        %v4087 = vpop.permute.xlu0 %4086
        %4088 = vrot.lane.b32.xlu0 %v4025, 64
        %v4089 = vpop.permute.xlu0 %4088
        %v4106 = vmul.f32 %v4026, %v4059
        %v4107 = vmul.f32 %v4027, %v4061
        %v4108 = vmul.f32 %v4028, %v4063
        %v4109 = vmul.f32 %v4029, %v4065
        %v4110 = vmul.f32 %v4030, %v4067
        %v4111 = vmul.f32 %v4031, %v4069
        %v4112 = vmul.f32 %v4032, %v4071
        %v4113 = vmul.f32 %v4033, %v4073
        %v4114 = vmul.f32 %v4034, %v4075
        %v4115 = vmul.f32 %v4035, %v4077
        %v4116 = vmul.f32 %v4036, %v4079
        %v4117 = vmul.f32 %v4037, %v4081
        %v4118 = vmul.f32 %v4038, %v4083
        %v4119 = vmul.f32 %v4039, %v4085
        %v4120 = vmul.f32 %v4040, %v4087
        %v4121 = vmul.f32 %v4041, %v4089
        %v4122 = vmul.f32 %v3883, %v3032
        %v4123 = vmul.f32 %v3885, %v3033
        %v4124 = vmul.f32 %v3887, %v3034
        %v4125 = vmul.f32 %v3889, %v3035
        %v4126 = vmul.f32 %v3891, %v3036
        %v4127 = vmul.f32 %v3893, %v3037
        %v4128 = vmul.f32 %v3895, %v3038
        %v4129 = vmul.f32 %v3897, %v3039
        %v4130 = vmul.f32 %v3899, %v3040
        %v4131 = vmul.f32 %v3901, %v3041
        %v4132 = vmul.f32 %v3903, %v3042
        %v4133 = vmul.f32 %v3905, %v3043
        %v4134 = vmul.f32 %v3907, %v3044
        %v4135 = vmul.f32 %v3909, %v3045
        %v4136 = vmul.f32 %v3911, %v3046
        %v4137 = vmul.f32 %v3913, %v3047
        %v4138 = vadd.f32 %v4106, %v4122
        %v4139 = vadd.f32 %v4107, %v4123
        %v4140 = vadd.f32 %v4108, %v4124
        %v4141 = vadd.f32 %v4109, %v4125
        %v4142 = vadd.f32 %v4110, %v4126
        %v4143 = vadd.f32 %v4111, %v4127
        %v4144 = vadd.f32 %v4112, %v4128
        %v4145 = vadd.f32 %v4113, %v4129
        %v4146 = vadd.f32 %v4114, %v4130
        %v4147 = vadd.f32 %v4115, %v4131
        %v4148 = vadd.f32 %v4116, %v4132
        %v4149 = vadd.f32 %v4117, %v4133
        %v4150 = vadd.f32 %v4118, %v4134
        %v4151 = vadd.f32 %v4119, %v4135
        %v4152 = vadd.f32 %v4120, %v4136
        %v4153 = vadd.f32 %v4121, %v4137
        %v4154 = vld [vmem:[#allocation2 + $0x200] sm:$0xff]
        %v4155 = vld [vmem:[#allocation2 + $0x208] sm:$0xff]
        %v4156 = vld [vmem:[#allocation2 + $0x210] sm:$0xff]
        %v4157 = vld [vmem:[#allocation2 + $0x218] sm:$0xff]
        %v4158 = vld [vmem:[#allocation2 + $0x220] sm:$0xff]
        %v4159 = vld [vmem:[#allocation2 + $0x228] sm:$0xff]
        %v4160 = vld [vmem:[#allocation2 + $0x230] sm:$0xff]
        %v4161 = vld [vmem:[#allocation2 + $0x238] sm:$0xff]
        %v4162 = vld [vmem:[#allocation2 + $0x240] sm:$0xff]
        %v4163 = vld [vmem:[#allocation2 + $0x248] sm:$0xff]
        %v4164 = vld [vmem:[#allocation2 + $0x250] sm:$0xff]
        %v4165 = vld [vmem:[#allocation2 + $0x258] sm:$0xff]
        %v4166 = vld [vmem:[#allocation2 + $0x260] sm:$0xff]
        %v4167 = vld [vmem:[#allocation2 + $0x268] sm:$0xff]
        %v4168 = vld [vmem:[#allocation2 + $0x270] sm:$0xff]
        %v4169 = vld [vmem:[#allocation2 + $0x278] sm:$0xff]
        %v4170 = vld [vmem:[#allocation2 + $0x280] sm:$0xff]
        %v4171 = vld [vmem:[#allocation2 + $0x288] sm:$0xff]
        %v4172 = vld [vmem:[#allocation2 + $0x290] sm:$0xff]
        %v4173 = vld [vmem:[#allocation2 + $0x298] sm:$0xff]
        %v4174 = vld [vmem:[#allocation2 + $0x2a0] sm:$0xff]
        %v4175 = vld [vmem:[#allocation2 + $0x2a8] sm:$0xff]
        %v4176 = vld [vmem:[#allocation2 + $0x2b0] sm:$0xff]
        %v4177 = vld [vmem:[#allocation2 + $0x2b8] sm:$0xff]
        %v4178 = vld [vmem:[#allocation2 + $0x2c0] sm:$0xff]
        %v4179 = vld [vmem:[#allocation2 + $0x2c8] sm:$0xff]
        %v4180 = vld [vmem:[#allocation2 + $0x2d0] sm:$0xff]
        %v4181 = vld [vmem:[#allocation2 + $0x2d8] sm:$0xff]
        %v4182 = vld [vmem:[#allocation2 + $0x2e0] sm:$0xff]
        %v4183 = vld [vmem:[#allocation2 + $0x2e8] sm:$0xff]
        %v4184 = vld [vmem:[#allocation2 + $0x2f0] sm:$0xff]
        %v4185 = vld [vmem:[#allocation2 + $0x2f8] sm:$0xff]
        %v4186 = vsel %vm1648, %v3594, 0
        %v4188 = vsel %vm1648, %v3596, 0
        %v4190 = vsel %vm1648, %v3598, 0
        %v4192 = vsel %vm1648, %v3600, 0
        %v4194 = vsel %vm1648, %v3602, 0
        %v4196 = vsel %vm1648, %v3604, 0
        %v4198 = vsel %vm1648, %v3606, 0
        %v4200 = vsel %vm1648, %v3608, 0
        %v4202 = vsel %vm1648, %v3610, 0
        %v4204 = vsel %vm1648, %v3612, 0
        %v4206 = vsel %vm1648, %v3614, 0
        %v4208 = vsel %vm1648, %v3616, 0
        %v4210 = vsel %vm1648, %v3618, 0
        %v4212 = vsel %vm1648, %v3620, 0
        %v4214 = vsel %vm1648, %v3622, 0
        %v4216 = vsel %vm1648, %v3624, 0
        %4218 = vmatprep.subr.mxu0 0.0
        %4219 = vmatpush1.msra.mxu0 0.0
        %4220 = vmatprep.subr.mxu0 0.0
        %4221 = vmatpush1.msra.mxu0 0.0
        %4222 = vmatprep.subr.mxu0 0.0
        %4223 = vmatpush1.msra.mxu0 0.0
        %4224 = vmatprep.subr.mxu0 0.0
        %4225 = vmatpush1.msra.mxu0 0.0
        %4226 = vmatprep.subr.mxu0 0.0
        %4227 = vmatpush1.msra.mxu0 0.0
        %4228 = vmatprep.subr.mxu0 0.0
        %4229 = vmatpush1.msra.mxu0 0.0
        %4230 = vmatprep.subr.mxu0 0.0
        %4231 = vmatpush1.msra.mxu0 0.0
        %4232 = vmatprep.subr.mxu0 0.0
        %4233 = vmatpush1.msra.mxu0 0.0
        %4234 = vmatprep.subr.mxu0 %v1919
        %4235 = vmatpush1.msra.mxu0 %v1918
        %4236 = vmatprep.subr.mxu0 %v1917
        %4237 = vmatpush1.msra.mxu0 %v1916
        %4238 = vmatprep.subr.mxu0 %v1915
        %4239 = vmatpush1.msra.mxu0 %v1914
        %4240 = vmatprep.subr.mxu0 %v1913
        %4241 = vmatpush1.msra.mxu0 %v1912
        %4242 = vmatprep.subr.mxu0 %v1911
        %4243 = vmatpush1.msra.mxu0 %v1910
        %4244 = vmatprep.subr.mxu0 %v1909
        %4245 = vmatpush1.msra.mxu0 %v1908
        %4246 = vmatprep.subr.mxu0 %v1907
        %4247 = vmatpush1.msra.mxu0 %v1906
        %4248 = vmatprep.subr.mxu0 %v1905
        %4249 = vmatpush1.msra.mxu0 %v1904
        %4250 = vmatprep.subr.mxu0 0.0
        %4251 = vmatpush2.msra.mxu0 0.0
        %4252 = vmatprep.subr.mxu0 0.0
        %4253 = vmatpush2.msra.mxu0 0.0
        %4254 = vmatprep.subr.mxu0 0.0
        %4255 = vmatpush2.msra.mxu0 0.0
        %4256 = vmatprep.subr.mxu0 0.0
        %4257 = vmatpush2.msra.mxu0 0.0
        %4258 = vmatprep.subr.mxu0 0.0
        %4259 = vmatpush2.msra.mxu0 0.0
        %4260 = vmatprep.subr.mxu0 0.0
        %4261 = vmatpush2.msra.mxu0 0.0
        %4262 = vmatprep.subr.mxu0 0.0
        %4263 = vmatpush2.msra.mxu0 0.0
        %4264 = vmatprep.subr.mxu0 0.0
        %4265 = vmatpush2.msra.mxu0 0.0
        %4266 = vmatprep.subr.mxu0 0.0
        %4267 = vmatpush2.msra.mxu0 0.0
        %4268 = vmatprep.subr.mxu0 0.0
        %4269 = vmatpush2.msra.mxu0 0.0
        %4270 = vmatprep.subr.mxu0 0.0
        %4271 = vmatpush2.msra.mxu0 0.0
        %4272 = vmatprep.subr.mxu0 0.0
        %4273 = vmatpush2.msra.mxu0 0.0
        %4274 = vmatprep.subr.mxu0 0.0
        %4275 = vmatpush2.msra.mxu0 0.0
        %4276 = vmatprep.subr.mxu0 0.0
        %4277 = vmatpush2.msra.mxu0 0.0
        %4278 = vmatprep.subr.mxu0 0.0
        %4279 = vmatpush2.msra.mxu0 0.0
        %4280 = vmatprep.subr.mxu0 0.0
        %4281 = vmatpush2.msra.mxu0 0.0
        %4282 = vmatprep.mubr.f32.mxu0 0.0
        %4283 = vmatmul.mubr.f32.gmra.mxu0 %v4186
        %v4284 = vpop.f32.mrf.mxu0
        %v4285 = vadd.f32 0.0, %v4284
        %v4286 = vpop.f32.mrf.mxu0
        %v4287 = vadd.f32 0.0, %v4286
        %4288 = vmatprep.mubr.f32.mxu0 0.0
        %4289 = vmatmul.mubr.f32.gmra.mxu0 %v4188
        %v4290 = vpop.f32.mrf.mxu0
        %v4291 = vadd.f32 0.0, %v4290
        %v4292 = vpop.f32.mrf.mxu0
        %v4293 = vadd.f32 0.0, %v4292
        %4294 = vmatprep.mubr.f32.mxu0 0.0
        %4295 = vmatmul.mubr.f32.gmra.mxu0 %v4190
        %v4296 = vpop.f32.mrf.mxu0
        %v4297 = vadd.f32 0.0, %v4296
        %v4298 = vpop.f32.mrf.mxu0
        %v4299 = vadd.f32 0.0, %v4298
        %4300 = vmatprep.mubr.f32.mxu0 0.0
        %4301 = vmatmul.mubr.f32.gmra.mxu0 %v4192
        %v4302 = vpop.f32.mrf.mxu0
        %v4303 = vadd.f32 0.0, %v4302
        %v4304 = vpop.f32.mrf.mxu0
        %v4305 = vadd.f32 0.0, %v4304
        %4306 = vmatprep.mubr.f32.mxu0 0.0
        %4307 = vmatmul.mubr.f32.gmra.mxu0 %v4194
        %v4308 = vpop.f32.mrf.mxu0
        %v4309 = vadd.f32 0.0, %v4308
        %v4310 = vpop.f32.mrf.mxu0
        %v4311 = vadd.f32 0.0, %v4310
        %4312 = vmatprep.mubr.f32.mxu0 0.0
        %4313 = vmatmul.mubr.f32.gmra.mxu0 %v4196
        %v4314 = vpop.f32.mrf.mxu0
        %v4315 = vadd.f32 0.0, %v4314
        %v4316 = vpop.f32.mrf.mxu0
        %v4317 = vadd.f32 0.0, %v4316
        %4318 = vmatprep.mubr.f32.mxu0 0.0
        %4319 = vmatmul.mubr.f32.gmra.mxu0 %v4198
        %v4320 = vpop.f32.mrf.mxu0
        %v4321 = vadd.f32 0.0, %v4320
        %v4322 = vpop.f32.mrf.mxu0
        %v4323 = vadd.f32 0.0, %v4322
        %4324 = vmatprep.mubr.f32.mxu0 0.0
        %4325 = vmatmul.mubr.f32.gmra.mxu0 %v4200
        %v4326 = vpop.f32.mrf.mxu0
        %v4327 = vadd.f32 0.0, %v4326
        %v4328 = vpop.f32.mrf.mxu0
        %v4329 = vadd.f32 0.0, %v4328
        %4330 = vmatprep.mubr.f32.mxu0 0.0
        %4331 = vmatmul.mubr.f32.gmra.mxu0 %v4202
        %v4332 = vpop.f32.mrf.mxu0
        %v4333 = vadd.f32 0.0, %v4332
        %v4334 = vpop.f32.mrf.mxu0
        %v4335 = vadd.f32 0.0, %v4334
        %4336 = vmatprep.mubr.f32.mxu0 0.0
        %4337 = vmatmul.mubr.f32.gmra.mxu0 %v4204
        %v4338 = vpop.f32.mrf.mxu0
        %v4339 = vadd.f32 0.0, %v4338
        %v4340 = vpop.f32.mrf.mxu0
        %v4341 = vadd.f32 0.0, %v4340
        %4342 = vmatprep.mubr.f32.mxu0 0.0
        %4343 = vmatmul.mubr.f32.gmra.mxu0 %v4206
        %v4344 = vpop.f32.mrf.mxu0
        %v4345 = vadd.f32 0.0, %v4344
        %v4346 = vpop.f32.mrf.mxu0
        %v4347 = vadd.f32 0.0, %v4346
        %4348 = vmatprep.mubr.f32.mxu0 0.0
        %4349 = vmatmul.mubr.f32.gmra.mxu0 %v4208
        %v4350 = vpop.f32.mrf.mxu0
        %v4351 = vadd.f32 0.0, %v4350
        %v4352 = vpop.f32.mrf.mxu0
        %v4353 = vadd.f32 0.0, %v4352
        %4354 = vmatprep.mubr.f32.mxu0 0.0
        %4355 = vmatmul.mubr.f32.gmra.mxu0 %v4210
        %v4356 = vpop.f32.mrf.mxu0
        %v4357 = vadd.f32 0.0, %v4356
        %v4358 = vpop.f32.mrf.mxu0
        %v4359 = vadd.f32 0.0, %v4358
        %4360 = vmatprep.mubr.f32.mxu0 0.0
        %4361 = vmatmul.mubr.f32.gmra.mxu0 %v4212
        %v4362 = vpop.f32.mrf.mxu0
        %v4363 = vadd.f32 0.0, %v4362
        %v4364 = vpop.f32.mrf.mxu0
        %v4365 = vadd.f32 0.0, %v4364
        %4366 = vmatprep.mubr.f32.mxu0 0.0
        %4367 = vmatmul.mubr.f32.gmra.mxu0 %v4214
        %v4368 = vpop.f32.mrf.mxu0
        %v4369 = vadd.f32 0.0, %v4368
        %v4370 = vpop.f32.mrf.mxu0
        %v4371 = vadd.f32 0.0, %v4370
        %4372 = vmatprep.mubr.f32.mxu0 0.0
        %4373 = vmatmul.mubr.f32.gmra.mxu0 %v4216
        %v4374 = vpop.f32.mrf.mxu0
        %v4375 = vadd.f32 0.0, %v4374
        %v4376 = vpop.f32.mrf.mxu0
        %v4377 = vadd.f32 0.0, %v4376
        %4378 = vdwg.mxu0
        %v4379 = vadd.f32 %v4154, %v4285
        %v4380 = vadd.f32 %v4156, %v4291
        %v4381 = vadd.f32 %v4158, %v4297
        %v4382 = vadd.f32 %v4160, %v4303
        %v4383 = vadd.f32 %v4162, %v4309
        %v4384 = vadd.f32 %v4164, %v4315
        %v4385 = vadd.f32 %v4166, %v4321
        %v4386 = vadd.f32 %v4168, %v4327
        %v4387 = vadd.f32 %v4170, %v4333
        %v4388 = vadd.f32 %v4172, %v4339
        %v4389 = vadd.f32 %v4174, %v4345
        %v4390 = vadd.f32 %v4176, %v4351
        %v4391 = vadd.f32 %v4178, %v4357
        %v4392 = vadd.f32 %v4180, %v4363
        %v4393 = vadd.f32 %v4182, %v4369
        %v4394 = vadd.f32 %v4184, %v4375
        %v4395 = vxor.u32 %v4379, 2147483648
        %v4396 = vxor.u32 %v4380, 2147483648
        %v4397 = vxor.u32 %v4381, 2147483648
        %v4398 = vxor.u32 %v4382, 2147483648
        %v4399 = vxor.u32 %v4383, 2147483648
        %v4400 = vxor.u32 %v4384, 2147483648
        %v4401 = vxor.u32 %v4385, 2147483648
        %v4402 = vxor.u32 %v4386, 2147483648
        %v4403 = vxor.u32 %v4387, 2147483648
        %v4404 = vxor.u32 %v4388, 2147483648
        %v4405 = vxor.u32 %v4389, 2147483648
        %v4406 = vxor.u32 %v4390, 2147483648
        %v4407 = vxor.u32 %v4391, 2147483648
        %v4408 = vxor.u32 %v4392, 2147483648
        %v4409 = vxor.u32 %v4393, 2147483648
        %v4410 = vxor.u32 %v4394, 2147483648
        %v4411 = vmul.f32 %v4395, 1.442695
        %v4412 = vpow.pop %v4411
        %v4413 = vmul.f32 %v4396, 1.442695
        %v4414 = vpow.pop %v4413
        %v4415 = vmul.f32 %v4397, 1.442695
        %v4416 = vpow.pop %v4415
        %v4417 = vmul.f32 %v4398, 1.442695
        %v4418 = vpow.pop %v4417
        %v4419 = vmul.f32 %v4399, 1.442695
        %v4420 = vpow.pop %v4419
        %v4421 = vmul.f32 %v4400, 1.442695
        %v4422 = vpow.pop %v4421
        %v4423 = vmul.f32 %v4401, 1.442695
        %v4424 = vpow.pop %v4423
        %v4425 = vmul.f32 %v4402, 1.442695
        %v4426 = vpow.pop %v4425
        %v4427 = vmul.f32 %v4403, 1.442695
        %v4428 = vpow.pop %v4427
        %v4429 = vmul.f32 %v4404, 1.442695
        %v4430 = vpow.pop %v4429
        %v4431 = vmul.f32 %v4405, 1.442695
        %v4432 = vpow.pop %v4431
        %v4433 = vmul.f32 %v4406, 1.442695
        %v4434 = vpow.pop %v4433
        %v4435 = vmul.f32 %v4407, 1.442695
        %v4436 = vpow.pop %v4435
        %v4437 = vmul.f32 %v4408, 1.442695
        %v4438 = vpow.pop %v4437
        %v4439 = vmul.f32 %v4409, 1.442695
        %v4440 = vpow.pop %v4439
        %v4441 = vmul.f32 %v4410, 1.442695
        %v4442 = vpow.pop %v4441
        %v4443 = vadd.f32 %v4412, 1.0
        %v4444 = vadd.f32 %v4414, 1.0
        %v4445 = vadd.f32 %v4416, 1.0
        %v4446 = vadd.f32 %v4418, 1.0
        %v4447 = vadd.f32 %v4420, 1.0
        %v4448 = vadd.f32 %v4422, 1.0
        %v4449 = vadd.f32 %v4424, 1.0
        %v4450 = vadd.f32 %v4426, 1.0
        %v4451 = vadd.f32 %v4428, 1.0
        %v4452 = vadd.f32 %v4430, 1.0
        %v4453 = vadd.f32 %v4432, 1.0
        %v4454 = vadd.f32 %v4434, 1.0
        %v4455 = vadd.f32 %v4436, 1.0
        %v4456 = vadd.f32 %v4438, 1.0
        %v4457 = vadd.f32 %v4440, 1.0
        %v4458 = vadd.f32 %v4442, 1.0
        %v4459 = vrcp.pop %v4443
        %v4460 = vmul.f32 1.0, %v4459
        %v4461 = vrcp.pop %v4444
        %v4462 = vmul.f32 1.0, %v4461
        %v4463 = vrcp.pop %v4445
        %v4464 = vmul.f32 1.0, %v4463
        %v4465 = vrcp.pop %v4446
        %v4466 = vmul.f32 1.0, %v4465
        %v4467 = vrcp.pop %v4447
        %v4468 = vmul.f32 1.0, %v4467
        %v4469 = vrcp.pop %v4448
        %v4470 = vmul.f32 1.0, %v4469
        %v4471 = vrcp.pop %v4449
        %v4472 = vmul.f32 1.0, %v4471
        %v4473 = vrcp.pop %v4450
        %v4474 = vmul.f32 1.0, %v4473
        %v4475 = vrcp.pop %v4451
        %v4476 = vmul.f32 1.0, %v4475
        %v4477 = vrcp.pop %v4452
        %v4478 = vmul.f32 1.0, %v4477
        %v4479 = vrcp.pop %v4453
        %v4480 = vmul.f32 1.0, %v4479
        %v4481 = vrcp.pop %v4454
        %v4482 = vmul.f32 1.0, %v4481
        %v4483 = vrcp.pop %v4455
        %v4484 = vmul.f32 1.0, %v4483
        %v4485 = vrcp.pop %v4456
        %v4486 = vmul.f32 1.0, %v4485
        %v4487 = vrcp.pop %v4457
        %v4488 = vmul.f32 1.0, %v4487
        %v4489 = vrcp.pop %v4458
        %v4490 = vmul.f32 1.0, %v4489
        %v4491 = vadd.f32 %v4287, %v1957
        %v4492 = vadd.f32 %v4293, %v1957
        %v4493 = vadd.f32 %v4299, %v1957
        %v4494 = vadd.f32 %v4305, %v1957
        %v4495 = vadd.f32 %v4311, %v1957
        %v4496 = vadd.f32 %v4317, %v1957
        %v4497 = vadd.f32 %v4323, %v1957
        %v4498 = vadd.f32 %v4329, %v1957
        %v4499 = vadd.f32 %v4335, %v1957
        %v4500 = vadd.f32 %v4341, %v1957
        %v4501 = vadd.f32 %v4347, %v1957
        %v4502 = vadd.f32 %v4353, %v1957
        %v4503 = vadd.f32 %v4359, %v1957
        %v4504 = vadd.f32 %v4365, %v1957
        %v4505 = vadd.f32 %v4371, %v1957
        %v4506 = vadd.f32 %v4377, %v1957
        %v4507 = vmul.f32 %v4460, %v4491
        %v4508 = vmul.f32 %v4462, %v4492
        %v4509 = vmul.f32 %v4464, %v4493
        %v4510 = vmul.f32 %v4466, %v4494
        %v4511 = vmul.f32 %v4468, %v4495
        %v4512 = vmul.f32 %v4470, %v4496
        %v4513 = vmul.f32 %v4472, %v4497
        %v4514 = vmul.f32 %v4474, %v4498
        %v4515 = vmul.f32 %v4476, %v4499
        %v4516 = vmul.f32 %v4478, %v4500
        %v4517 = vmul.f32 %v4480, %v4501
        %v4518 = vmul.f32 %v4482, %v4502
        %v4519 = vmul.f32 %v4484, %v4503
        %v4520 = vmul.f32 %v4486, %v4504
        %v4521 = vmul.f32 %v4488, %v4505
        %v4522 = vmul.f32 %v4490, %v4506
        %v4523 = vadd.f32 %v4155, %v4507
        %v4524 = vadd.f32 %v4157, %v4508
        %v4525 = vadd.f32 %v4159, %v4509
        %v4526 = vadd.f32 %v4161, %v4510
        %v4527 = vadd.f32 %v4163, %v4511
        %v4528 = vadd.f32 %v4165, %v4512
        %v4529 = vadd.f32 %v4167, %v4513
        %v4530 = vadd.f32 %v4169, %v4514
        %v4531 = vadd.f32 %v4171, %v4515
        %v4532 = vadd.f32 %v4173, %v4516
        %v4533 = vadd.f32 %v4175, %v4517
        %v4534 = vadd.f32 %v4177, %v4518
        %v4535 = vadd.f32 %v4179, %v4519
        %v4536 = vadd.f32 %v4181, %v4520
        %v4537 = vadd.f32 %v4183, %v4521
        %v4538 = vadd.f32 %v4185, %v4522
        %v4539 = vtanh.pop %v4523
        %v4540 = vtanh.pop %v4524
        %v4541 = vtanh.pop %v4525
        %v4542 = vtanh.pop %v4526
        %v4543 = vtanh.pop %v4527
        %v4544 = vtanh.pop %v4528
        %v4545 = vtanh.pop %v4529
        %v4546 = vtanh.pop %v4530
        %v4547 = vtanh.pop %v4531
        %v4548 = vtanh.pop %v4532
        %v4549 = vtanh.pop %v4533
        %v4550 = vtanh.pop %v4534
        %v4551 = vtanh.pop %v4535
        %v4552 = vtanh.pop %v4536
        %v4553 = vtanh.pop %v4537
        %v4554 = vtanh.pop %v4538
        %v4555 = vsub.f32 1.0, %v4460
        %v4556 = vsub.f32 1.0, %v4462
        %v4557 = vsub.f32 1.0, %v4464
        %v4558 = vsub.f32 1.0, %v4466
        %v4559 = vsub.f32 1.0, %v4468
        %v4560 = vsub.f32 1.0, %v4470
        %v4561 = vsub.f32 1.0, %v4472
        %v4562 = vsub.f32 1.0, %v4474
        %v4563 = vsub.f32 1.0, %v4476
        %v4564 = vsub.f32 1.0, %v4478
        %v4565 = vsub.f32 1.0, %v4480
        %v4566 = vsub.f32 1.0, %v4482
        %v4567 = vsub.f32 1.0, %v4484
        %v4568 = vsub.f32 1.0, %v4486
        %v4569 = vsub.f32 1.0, %v4488
        %v4570 = vsub.f32 1.0, %v4490
        %4587 = vrot.lane.b32.xlu0 %v4539, 64
        %v4588 = vpop.permute.xlu0 %4587
        %4589 = vrot.lane.b32.xlu0 %v4540, 64
        %v4590 = vpop.permute.xlu0 %4589
        %4591 = vrot.lane.b32.xlu0 %v4541, 64
        %v4592 = vpop.permute.xlu0 %4591
        %4593 = vrot.lane.b32.xlu0 %v4542, 64
        %v4594 = vpop.permute.xlu0 %4593
        %4595 = vrot.lane.b32.xlu0 %v4543, 64
        %v4596 = vpop.permute.xlu0 %4595
        %4597 = vrot.lane.b32.xlu0 %v4544, 64
        %v4598 = vpop.permute.xlu0 %4597
        %4599 = vrot.lane.b32.xlu0 %v4545, 64
        %v4600 = vpop.permute.xlu0 %4599
        %4601 = vrot.lane.b32.xlu0 %v4546, 64
        %v4602 = vpop.permute.xlu0 %4601
        %4603 = vrot.lane.b32.xlu0 %v4547, 64
        %v4604 = vpop.permute.xlu0 %4603
        %4605 = vrot.lane.b32.xlu0 %v4548, 64
        %v4606 = vpop.permute.xlu0 %4605
        %4607 = vrot.lane.b32.xlu0 %v4549, 64
        %v4608 = vpop.permute.xlu0 %4607
        %4609 = vrot.lane.b32.xlu0 %v4550, 64
        %v4610 = vpop.permute.xlu0 %4609
        %4611 = vrot.lane.b32.xlu0 %v4551, 64
        %v4612 = vpop.permute.xlu0 %4611
        %4613 = vrot.lane.b32.xlu0 %v4552, 64
        %v4614 = vpop.permute.xlu0 %4613
        %4615 = vrot.lane.b32.xlu0 %v4553, 64
        %v4616 = vpop.permute.xlu0 %4615
        %4617 = vrot.lane.b32.xlu0 %v4554, 64
        %v4618 = vpop.permute.xlu0 %4617
        %v4635 = vmul.f32 %v4555, %v4588
        %v4636 = vmul.f32 %v4556, %v4590
        %v4637 = vmul.f32 %v4557, %v4592
        %v4638 = vmul.f32 %v4558, %v4594
        %v4639 = vmul.f32 %v4559, %v4596
        %v4640 = vmul.f32 %v4560, %v4598
        %v4641 = vmul.f32 %v4561, %v4600
        %v4642 = vmul.f32 %v4562, %v4602
        %v4643 = vmul.f32 %v4563, %v4604
        %v4644 = vmul.f32 %v4564, %v4606
        %v4645 = vmul.f32 %v4565, %v4608
        %v4646 = vmul.f32 %v4566, %v4610
        %v4647 = vmul.f32 %v4567, %v4612
        %v4648 = vmul.f32 %v4568, %v4614
        %v4649 = vmul.f32 %v4569, %v4616
        %v4650 = vmul.f32 %v4570, %v4618
        %v4651 = vmul.f32 %v4460, %v3561
        %v4652 = vmul.f32 %v4462, %v3562
        %v4653 = vmul.f32 %v4464, %v3563
        %v4654 = vmul.f32 %v4466, %v3564
        %v4655 = vmul.f32 %v4468, %v3565
        %v4656 = vmul.f32 %v4470, %v3566
        %v4657 = vmul.f32 %v4472, %v3567
        %v4658 = vmul.f32 %v4474, %v3568
        %v4659 = vmul.f32 %v4476, %v3569
        %v4660 = vmul.f32 %v4478, %v3570
        %v4661 = vmul.f32 %v4480, %v3571
        %v4662 = vmul.f32 %v4482, %v3572
        %v4663 = vmul.f32 %v4484, %v3573
        %v4664 = vmul.f32 %v4486, %v3574
        %v4665 = vmul.f32 %v4488, %v3575
        %v4666 = vmul.f32 %v4490, %v3576
        %v4667 = vadd.f32 %v4635, %v4651
        %v4668 = vadd.f32 %v4636, %v4652
        %v4669 = vadd.f32 %v4637, %v4653
        %v4670 = vadd.f32 %v4638, %v4654
        %v4671 = vadd.f32 %v4639, %v4655
        %v4672 = vadd.f32 %v4640, %v4656
        %v4673 = vadd.f32 %v4641, %v4657
        %v4674 = vadd.f32 %v4642, %v4658
        %v4675 = vadd.f32 %v4643, %v4659
        %v4676 = vadd.f32 %v4644, %v4660
        %v4677 = vadd.f32 %v4645, %v4661
        %v4678 = vadd.f32 %v4646, %v4662
        %v4679 = vadd.f32 %v4647, %v4663
        %v4680 = vadd.f32 %v4648, %v4664
        %v4681 = vadd.f32 %v4649, %v4665
        %v4682 = vadd.f32 %v4650, %v4666
        %4699 = vrot.lane.b32.xlu0 %v4667, 64
        %v4700 = vpop.permute.xlu0 %4699
        %4701 = vrot.lane.b32.xlu0 %v4668, 64
        %v4702 = vpop.permute.xlu0 %4701
        %4703 = vrot.lane.b32.xlu0 %v4669, 64
        %v4704 = vpop.permute.xlu0 %4703
        %4705 = vrot.lane.b32.xlu0 %v4670, 64
        %v4706 = vpop.permute.xlu0 %4705
        %4707 = vrot.lane.b32.xlu0 %v4671, 64
        %v4708 = vpop.permute.xlu0 %4707
        %4709 = vrot.lane.b32.xlu0 %v4672, 64
        %v4710 = vpop.permute.xlu0 %4709
        %4711 = vrot.lane.b32.xlu0 %v4673, 64
        %v4712 = vpop.permute.xlu0 %4711
        %4713 = vrot.lane.b32.xlu0 %v4674, 64
        %v4714 = vpop.permute.xlu0 %4713
        %4715 = vrot.lane.b32.xlu0 %v4675, 64
        %v4716 = vpop.permute.xlu0 %4715
        %4717 = vrot.lane.b32.xlu0 %v4676, 64
        %v4718 = vpop.permute.xlu0 %4717
        %4719 = vrot.lane.b32.xlu0 %v4677, 64
        %v4720 = vpop.permute.xlu0 %4719
        %4721 = vrot.lane.b32.xlu0 %v4678, 64
        %v4722 = vpop.permute.xlu0 %4721
        %4723 = vrot.lane.b32.xlu0 %v4679, 64
        %v4724 = vpop.permute.xlu0 %4723
        %4725 = vrot.lane.b32.xlu0 %v4680, 64
        %v4726 = vpop.permute.xlu0 %4725
        %4727 = vrot.lane.b32.xlu0 %v4681, 64
        %v4728 = vpop.permute.xlu0 %4727
        %4729 = vrot.lane.b32.xlu0 %v4682, 64
        %v4730 = vpop.permute.xlu0 %4729
        %v4747 = vsel %vm1648, %v4700, %v4138
        %v4748 = vsel %vm1648, %v4702, %v4139
        %v4749 = vsel %vm1648, %v4704, %v4140
        %v4750 = vsel %vm1648, %v4706, %v4141
        %v4751 = vsel %vm1648, %v4708, %v4142
        %v4752 = vsel %vm1648, %v4710, %v4143
        %v4753 = vsel %vm1648, %v4712, %v4144
        %v4754 = vsel %vm1648, %v4714, %v4145
        %v4755 = vsel %vm1648, %v4716, %v4146
        %v4756 = vsel %vm1648, %v4718, %v4147
        %v4757 = vsel %vm1648, %v4720, %v4148
        %v4758 = vsel %vm1648, %v4722, %v4149
        %v4759 = vsel %vm1648, %v4724, %v4150
        %v4760 = vsel %vm1648, %v4726, %v4151
        %v4761 = vsel %vm1648, %v4728, %v4152
        %v4762 = vsel %vm1648, %v4730, %v4153
        %4763 = vmatprep.subr.mxu0 %v1951
        %4764 = vmatpush1.msra.mxu0 %v1950
        %4765 = vmatprep.subr.mxu0 %v1949
        %4766 = vmatpush1.msra.mxu0 %v1948
        %4767 = vmatprep.subr.mxu0 %v1947
        %4768 = vmatpush1.msra.mxu0 %v1946
        %4769 = vmatprep.subr.mxu0 %v1945
        %4770 = vmatpush1.msra.mxu0 %v1944
        %4771 = vmatprep.subr.mxu0 %v1943
        %4772 = vmatpush1.msra.mxu0 %v1942
        %4773 = vmatprep.subr.mxu0 %v1941
        %4774 = vmatpush1.msra.mxu0 %v1940
        %4775 = vmatprep.subr.mxu0 %v1939
        %4776 = vmatpush1.msra.mxu0 %v1938
        %4777 = vmatprep.subr.mxu0 %v1937
        %4778 = vmatpush1.msra.mxu0 %v1936
        %4779 = vmatprep.subr.mxu0 %v1935
        %4780 = vmatpush1.msra.mxu0 %v1934
        %4781 = vmatprep.subr.mxu0 %v1933
        %4782 = vmatpush1.msra.mxu0 %v1932
        %4783 = vmatprep.subr.mxu0 %v1931
        %4784 = vmatpush1.msra.mxu0 %v1930
        %4785 = vmatprep.subr.mxu0 %v1929
        %4786 = vmatpush1.msra.mxu0 %v1928
        %4787 = vmatprep.subr.mxu0 %v1927
        %4788 = vmatpush1.msra.mxu0 %v1926
        %4789 = vmatprep.subr.mxu0 %v1925
        %4790 = vmatpush1.msra.mxu0 %v1924
        %4791 = vmatprep.subr.mxu0 %v1923
        %4792 = vmatpush1.msra.mxu0 %v1922
        %4793 = vmatprep.subr.mxu0 %v1921
        %4794 = vmatpush1.msra.mxu0 %v1920
        %4795 = vmatprep.subr.mxu0 0.0
        %4796 = vmatpush2.msra.mxu0 0.0
        %4797 = vmatprep.subr.mxu0 0.0
        %4798 = vmatpush2.msra.mxu0 0.0
        %4799 = vmatprep.subr.mxu0 0.0
        %4800 = vmatpush2.msra.mxu0 0.0
        %4801 = vmatprep.subr.mxu0 0.0
        %4802 = vmatpush2.msra.mxu0 0.0
        %4803 = vmatprep.subr.mxu0 0.0
        %4804 = vmatpush2.msra.mxu0 0.0
        %4805 = vmatprep.subr.mxu0 0.0
        %4806 = vmatpush2.msra.mxu0 0.0
        %4807 = vmatprep.subr.mxu0 0.0
        %4808 = vmatpush2.msra.mxu0 0.0
        %4809 = vmatprep.subr.mxu0 0.0
        %4810 = vmatpush2.msra.mxu0 0.0
        %4811 = vmatprep.subr.mxu0 0.0
        %4812 = vmatpush2.msra.mxu0 0.0
        %4813 = vmatprep.subr.mxu0 0.0
        %4814 = vmatpush2.msra.mxu0 0.0
        %4815 = vmatprep.subr.mxu0 0.0
        %4816 = vmatpush2.msra.mxu0 0.0
        %4817 = vmatprep.subr.mxu0 0.0
        %4818 = vmatpush2.msra.mxu0 0.0
        %4819 = vmatprep.subr.mxu0 0.0
        %4820 = vmatpush2.msra.mxu0 0.0
        %4821 = vmatprep.subr.mxu0 0.0
        %4822 = vmatpush2.msra.mxu0 0.0
        %4823 = vmatprep.subr.mxu0 0.0
        %4824 = vmatpush2.msra.mxu0 0.0
        %4825 = vmatprep.subr.mxu0 0.0
        %4826 = vmatpush2.msra.mxu0 0.0
        %4827 = vmatprep.mubr.f32.mxu0 0.0
        %4828 = vmatmul.mubr.f32.gmra.mxu0 %v4747
        %v4829 = vpop.f32.mrf.mxu0
        %v4830 = vadd.f32 %v1964, %v4829
        %v4831 = vpop.f32.mrf.mxu0
        %v4832 = vadd.f32 %v1968, %v4831
        %4833 = vmatprep.mubr.f32.mxu0 0.0
        %4834 = vmatmul.mubr.f32.gmra.mxu0 %v4748
        %v4835 = vpop.f32.mrf.mxu0
        %v4836 = vadd.f32 %v1964, %v4835
        %v4837 = vpop.f32.mrf.mxu0
        %v4838 = vadd.f32 %v1968, %v4837
        %4839 = vmatprep.mubr.f32.mxu0 0.0
        %4840 = vmatmul.mubr.f32.gmra.mxu0 %v4749
        %v4841 = vpop.f32.mrf.mxu0
        %v4842 = vadd.f32 %v1964, %v4841
        %v4843 = vpop.f32.mrf.mxu0
        %v4844 = vadd.f32 %v1968, %v4843
        %4845 = vmatprep.mubr.f32.mxu0 0.0
        %4846 = vmatmul.mubr.f32.gmra.mxu0 %v4750
        %v4847 = vpop.f32.mrf.mxu0
        %v4848 = vadd.f32 %v1964, %v4847
        %v4849 = vpop.f32.mrf.mxu0
        %v4850 = vadd.f32 %v1968, %v4849
        %4851 = vmatprep.mubr.f32.mxu0 0.0
        %4852 = vmatmul.mubr.f32.gmra.mxu0 %v4751
        %v4853 = vpop.f32.mrf.mxu0
        %v4854 = vadd.f32 %v1964, %v4853
        %v4855 = vpop.f32.mrf.mxu0
        %v4856 = vadd.f32 %v1968, %v4855
        %4857 = vmatprep.mubr.f32.mxu0 0.0
        %4858 = vmatmul.mubr.f32.gmra.mxu0 %v4752
        %v4859 = vpop.f32.mrf.mxu0
        %v4860 = vadd.f32 %v1964, %v4859
        %v4861 = vpop.f32.mrf.mxu0
        %v4862 = vadd.f32 %v1968, %v4861
        %4863 = vmatprep.mubr.f32.mxu0 0.0
        %4864 = vmatmul.mubr.f32.gmra.mxu0 %v4753
        %v4865 = vpop.f32.mrf.mxu0
        %v4866 = vadd.f32 %v1964, %v4865
        %v4867 = vpop.f32.mrf.mxu0
        %v4868 = vadd.f32 %v1968, %v4867
        %4869 = vmatprep.mubr.f32.mxu0 0.0
        %4870 = vmatmul.mubr.f32.gmra.mxu0 %v4754
        %v4871 = vpop.f32.mrf.mxu0
        %v4872 = vadd.f32 %v1964, %v4871
        %v4873 = vpop.f32.mrf.mxu0
        %v4874 = vadd.f32 %v1968, %v4873
        %4875 = vmatprep.mubr.f32.mxu0 0.0
        %4876 = vmatmul.mubr.f32.gmra.mxu0 %v4755
        %v4877 = vpop.f32.mrf.mxu0
        %v4878 = vadd.f32 %v1964, %v4877
        %v4879 = vpop.f32.mrf.mxu0
        %v4880 = vadd.f32 %v1968, %v4879
        %4881 = vmatprep.mubr.f32.mxu0 0.0
        %4882 = vmatmul.mubr.f32.gmra.mxu0 %v4756
        %v4883 = vpop.f32.mrf.mxu0
        %v4884 = vadd.f32 %v1964, %v4883
        %v4885 = vpop.f32.mrf.mxu0
        %v4886 = vadd.f32 %v1968, %v4885
        %4887 = vmatprep.mubr.f32.mxu0 0.0
        %4888 = vmatmul.mubr.f32.gmra.mxu0 %v4757
        %v4889 = vpop.f32.mrf.mxu0
        %v4890 = vadd.f32 %v1964, %v4889
        %v4891 = vpop.f32.mrf.mxu0
        %v4892 = vadd.f32 %v1968, %v4891
        %4893 = vmatprep.mubr.f32.mxu0 0.0
        %4894 = vmatmul.mubr.f32.gmra.mxu0 %v4758
        %v4895 = vpop.f32.mrf.mxu0
        %v4896 = vadd.f32 %v1964, %v4895
        %v4897 = vpop.f32.mrf.mxu0
        %v4898 = vadd.f32 %v1968, %v4897
        %4899 = vmatprep.mubr.f32.mxu0 0.0
        %4900 = vmatmul.mubr.f32.gmra.mxu0 %v4759
        %v4901 = vpop.f32.mrf.mxu0
        %v4902 = vadd.f32 %v1964, %v4901
        %v4903 = vpop.f32.mrf.mxu0
        %v4904 = vadd.f32 %v1968, %v4903
        %4905 = vmatprep.mubr.f32.mxu0 0.0
        %4906 = vmatmul.mubr.f32.gmra.mxu0 %v4760
        %v4907 = vpop.f32.mrf.mxu0
        %v4908 = vadd.f32 %v1964, %v4907
        %v4909 = vpop.f32.mrf.mxu0
        %v4910 = vadd.f32 %v1968, %v4909
        %4911 = vmatprep.mubr.f32.mxu0 0.0
        %4912 = vmatmul.mubr.f32.gmra.mxu0 %v4761
        %v4913 = vpop.f32.mrf.mxu0
        %v4914 = vadd.f32 %v1964, %v4913
        %v4915 = vpop.f32.mrf.mxu0
        %v4916 = vadd.f32 %v1968, %v4915
        %4917 = vmatprep.mubr.f32.mxu0 0.0
        %4918 = vmatmul.mubr.f32.gmra.mxu0 %v4762
        %v4919 = vpop.f32.mrf.mxu0
        %v4920 = vadd.f32 %v1964, %v4919
        %v4921 = vpop.f32.mrf.mxu0
        %v4922 = vadd.f32 %v1968, %v4921
        %4923 = vdwg.mxu0
        %v4924 = vxor.u32 %v4830, 2147483648
        %v4925 = vxor.u32 %v4836, 2147483648
        %v4926 = vxor.u32 %v4842, 2147483648
        %v4927 = vxor.u32 %v4848, 2147483648
        %v4928 = vxor.u32 %v4854, 2147483648
        %v4929 = vxor.u32 %v4860, 2147483648
        %v4930 = vxor.u32 %v4866, 2147483648
        %v4931 = vxor.u32 %v4872, 2147483648
        %v4932 = vxor.u32 %v4878, 2147483648
        %v4933 = vxor.u32 %v4884, 2147483648
        %v4934 = vxor.u32 %v4890, 2147483648
        %v4935 = vxor.u32 %v4896, 2147483648
        %v4936 = vxor.u32 %v4902, 2147483648
        %v4937 = vxor.u32 %v4908, 2147483648
        %v4938 = vxor.u32 %v4914, 2147483648
        %v4939 = vxor.u32 %v4920, 2147483648
        %v4940 = vmul.f32 %v4924, 1.442695
        %v4941 = vpow.pop %v4940
        %v4942 = vmul.f32 %v4925, 1.442695
        %v4943 = vpow.pop %v4942
        %v4944 = vmul.f32 %v4926, 1.442695
        %v4945 = vpow.pop %v4944
        %v4946 = vmul.f32 %v4927, 1.442695
        %v4947 = vpow.pop %v4946
        %v4948 = vmul.f32 %v4928, 1.442695
        %v4949 = vpow.pop %v4948
        %v4950 = vmul.f32 %v4929, 1.442695
        %v4951 = vpow.pop %v4950
        %v4952 = vmul.f32 %v4930, 1.442695
        %v4953 = vpow.pop %v4952
        %v4954 = vmul.f32 %v4931, 1.442695
        %v4955 = vpow.pop %v4954
        %v4956 = vmul.f32 %v4932, 1.442695
        %v4957 = vpow.pop %v4956
        %v4958 = vmul.f32 %v4933, 1.442695
        %v4959 = vpow.pop %v4958
        %v4960 = vmul.f32 %v4934, 1.442695
        %v4961 = vpow.pop %v4960
        %v4962 = vmul.f32 %v4935, 1.442695
        %v4963 = vpow.pop %v4962
        %v4964 = vmul.f32 %v4936, 1.442695
        %v4965 = vpow.pop %v4964
        %v4966 = vmul.f32 %v4937, 1.442695
        %v4967 = vpow.pop %v4966
        %v4968 = vmul.f32 %v4938, 1.442695
        %v4969 = vpow.pop %v4968
        %v4970 = vmul.f32 %v4939, 1.442695
        %v4971 = vpow.pop %v4970
        %v4972 = vadd.f32 %v4941, 1.0
        %v4973 = vadd.f32 %v4943, 1.0
        %v4974 = vadd.f32 %v4945, 1.0
        %v4975 = vadd.f32 %v4947, 1.0
        %v4976 = vadd.f32 %v4949, 1.0
        %v4977 = vadd.f32 %v4951, 1.0
        %v4978 = vadd.f32 %v4953, 1.0
        %v4979 = vadd.f32 %v4955, 1.0
        %v4980 = vadd.f32 %v4957, 1.0
        %v4981 = vadd.f32 %v4959, 1.0
        %v4982 = vadd.f32 %v4961, 1.0
        %v4983 = vadd.f32 %v4963, 1.0
        %v4984 = vadd.f32 %v4965, 1.0
        %v4985 = vadd.f32 %v4967, 1.0
        %v4986 = vadd.f32 %v4969, 1.0
        %v4987 = vadd.f32 %v4971, 1.0
        %v4988 = vrcp.pop %v4972
        %v4989 = vmul.f32 1.0, %v4988
        %v4990 = vrcp.pop %v4973
        %v4991 = vmul.f32 1.0, %v4990
        %v4992 = vrcp.pop %v4974
        %v4993 = vmul.f32 1.0, %v4992
        %v4994 = vrcp.pop %v4975
        %v4995 = vmul.f32 1.0, %v4994
        %v4996 = vrcp.pop %v4976
        %v4997 = vmul.f32 1.0, %v4996
        %v4998 = vrcp.pop %v4977
        %v4999 = vmul.f32 1.0, %v4998
        %v5000 = vrcp.pop %v4978
        %v5001 = vmul.f32 1.0, %v5000
        %v5002 = vrcp.pop %v4979
        %v5003 = vmul.f32 1.0, %v5002
        %v5004 = vrcp.pop %v4980
        %v5005 = vmul.f32 1.0, %v5004
        %v5006 = vrcp.pop %v4981
        %v5007 = vmul.f32 1.0, %v5006
        %v5008 = vrcp.pop %v4982
        %v5009 = vmul.f32 1.0, %v5008
        %v5010 = vrcp.pop %v4983
        %v5011 = vmul.f32 1.0, %v5010
        %v5012 = vrcp.pop %v4984
        %v5013 = vmul.f32 1.0, %v5012
        %v5014 = vrcp.pop %v4985
        %v5015 = vmul.f32 1.0, %v5014
        %v5016 = vrcp.pop %v4986
        %v5017 = vmul.f32 1.0, %v5016
        %v5018 = vrcp.pop %v4987
        %v5019 = vmul.f32 1.0, %v5018
        %5036 = vrot.lane.b32.xlu0 %v4832, 64
        %v5037 = vpop.permute.xlu0 %5036
        %5038 = vrot.lane.b32.xlu0 %v4838, 64
        %v5039 = vpop.permute.xlu0 %5038
        %5040 = vrot.lane.b32.xlu0 %v4844, 64
        %v5041 = vpop.permute.xlu0 %5040
        %5042 = vrot.lane.b32.xlu0 %v4850, 64
        %v5043 = vpop.permute.xlu0 %5042
        %5044 = vrot.lane.b32.xlu0 %v4856, 64
        %v5045 = vpop.permute.xlu0 %5044
        %5046 = vrot.lane.b32.xlu0 %v4862, 64
        %v5047 = vpop.permute.xlu0 %5046
        %5048 = vrot.lane.b32.xlu0 %v4868, 64
        %v5049 = vpop.permute.xlu0 %5048
        %5050 = vrot.lane.b32.xlu0 %v4874, 64
        %v5051 = vpop.permute.xlu0 %5050
        %5052 = vrot.lane.b32.xlu0 %v4880, 64
        %v5053 = vpop.permute.xlu0 %5052
        %5054 = vrot.lane.b32.xlu0 %v4886, 64
        %v5055 = vpop.permute.xlu0 %5054
        %5056 = vrot.lane.b32.xlu0 %v4892, 64
        %v5057 = vpop.permute.xlu0 %5056
        %5058 = vrot.lane.b32.xlu0 %v4898, 64
        %v5059 = vpop.permute.xlu0 %5058
        %5060 = vrot.lane.b32.xlu0 %v4904, 64
        %v5061 = vpop.permute.xlu0 %5060
        %5062 = vrot.lane.b32.xlu0 %v4910, 64
        %v5063 = vpop.permute.xlu0 %5062
        %5064 = vrot.lane.b32.xlu0 %v4916, 64
        %v5065 = vpop.permute.xlu0 %5064
        %5066 = vrot.lane.b32.xlu0 %v4922, 64
        %v5067 = vpop.permute.xlu0 %5066
        %v5084 = vmul.f32 %v4989, %v5037
        %v5085 = vmul.f32 %v4991, %v5039
        %v5086 = vmul.f32 %v4993, %v5041
        %v5087 = vmul.f32 %v4995, %v5043
        %v5088 = vmul.f32 %v4997, %v5045
        %v5089 = vmul.f32 %v4999, %v5047
        %v5090 = vmul.f32 %v5001, %v5049
        %v5091 = vmul.f32 %v5003, %v5051
        %v5092 = vmul.f32 %v5005, %v5053
        %v5093 = vmul.f32 %v5007, %v5055
        %v5094 = vmul.f32 %v5009, %v5057
        %v5095 = vmul.f32 %v5011, %v5059
        %v5096 = vmul.f32 %v5013, %v5061
        %v5097 = vmul.f32 %v5015, %v5063
        %v5098 = vmul.f32 %v5017, %v5065
        %v5099 = vmul.f32 %v5019, %v5067
        %v5100 = vadd.f32 %v4832, %v5084
        %v5101 = vadd.f32 %v4838, %v5085
        %v5102 = vadd.f32 %v4844, %v5086
        %v5103 = vadd.f32 %v4850, %v5087
        %v5104 = vadd.f32 %v4856, %v5088
        %v5105 = vadd.f32 %v4862, %v5089
        %v5106 = vadd.f32 %v4868, %v5090
        %v5107 = vadd.f32 %v4874, %v5091
        %v5108 = vadd.f32 %v4880, %v5092
        %v5109 = vadd.f32 %v4886, %v5093
        %v5110 = vadd.f32 %v4892, %v5094
        %v5111 = vadd.f32 %v4898, %v5095
        %v5112 = vadd.f32 %v4904, %v5096
        %v5113 = vadd.f32 %v4910, %v5097
        %v5114 = vadd.f32 %v4916, %v5098
        %v5115 = vadd.f32 %v4922, %v5099
        %v5116 = vtanh.pop %v5100
        %v5117 = vtanh.pop %v5101
        %v5118 = vtanh.pop %v5102
        %v5119 = vtanh.pop %v5103
        %v5120 = vtanh.pop %v5104
        %v5121 = vtanh.pop %v5105
        %v5122 = vtanh.pop %v5106
        %v5123 = vtanh.pop %v5107
        %v5124 = vtanh.pop %v5108
        %v5125 = vtanh.pop %v5109
        %v5126 = vtanh.pop %v5110
        %v5127 = vtanh.pop %v5111
        %v5128 = vtanh.pop %v5112
        %v5129 = vtanh.pop %v5113
        %v5130 = vtanh.pop %v5114
        %v5131 = vtanh.pop %v5115
        %v5132 = vsub.f32 1.0, %v4989
        %v5133 = vsub.f32 1.0, %v4991
        %v5134 = vsub.f32 1.0, %v4993
        %v5135 = vsub.f32 1.0, %v4995
        %v5136 = vsub.f32 1.0, %v4997
        %v5137 = vsub.f32 1.0, %v4999
        %v5138 = vsub.f32 1.0, %v5001
        %v5139 = vsub.f32 1.0, %v5003
        %v5140 = vsub.f32 1.0, %v5005
        %v5141 = vsub.f32 1.0, %v5007
        %v5142 = vsub.f32 1.0, %v5009
        %v5143 = vsub.f32 1.0, %v5011
        %v5144 = vsub.f32 1.0, %v5013
        %v5145 = vsub.f32 1.0, %v5015
        %v5146 = vsub.f32 1.0, %v5017
        %v5147 = vsub.f32 1.0, %v5019
        %5164 = vrot.lane.b32.xlu0 %v5116, 64
        %v5165 = vpop.permute.xlu0 %5164
        %5166 = vrot.lane.b32.xlu0 %v5117, 64
        %v5167 = vpop.permute.xlu0 %5166
        %5168 = vrot.lane.b32.xlu0 %v5118, 64
        %v5169 = vpop.permute.xlu0 %5168
        %5170 = vrot.lane.b32.xlu0 %v5119, 64
        %v5171 = vpop.permute.xlu0 %5170
        %5172 = vrot.lane.b32.xlu0 %v5120, 64
        %v5173 = vpop.permute.xlu0 %5172
        %5174 = vrot.lane.b32.xlu0 %v5121, 64
        %v5175 = vpop.permute.xlu0 %5174
        %5176 = vrot.lane.b32.xlu0 %v5122, 64
        %v5177 = vpop.permute.xlu0 %5176
        %5178 = vrot.lane.b32.xlu0 %v5123, 64
        %v5179 = vpop.permute.xlu0 %5178
        %5180 = vrot.lane.b32.xlu0 %v5124, 64
        %v5181 = vpop.permute.xlu0 %5180
        %5182 = vrot.lane.b32.xlu0 %v5125, 64
        %v5183 = vpop.permute.xlu0 %5182
        %5184 = vrot.lane.b32.xlu0 %v5126, 64
        %v5185 = vpop.permute.xlu0 %5184
        %5186 = vrot.lane.b32.xlu0 %v5127, 64
        %v5187 = vpop.permute.xlu0 %5186
        %5188 = vrot.lane.b32.xlu0 %v5128, 64
        %v5189 = vpop.permute.xlu0 %5188
        %5190 = vrot.lane.b32.xlu0 %v5129, 64
        %v5191 = vpop.permute.xlu0 %5190
        %5192 = vrot.lane.b32.xlu0 %v5130, 64
        %v5193 = vpop.permute.xlu0 %5192
        %5194 = vrot.lane.b32.xlu0 %v5131, 64
        %v5195 = vpop.permute.xlu0 %5194
        %v5212 = vmul.f32 %v5132, %v5165
        %v5213 = vmul.f32 %v5133, %v5167
        %v5214 = vmul.f32 %v5134, %v5169
        %v5215 = vmul.f32 %v5135, %v5171
        %v5216 = vmul.f32 %v5136, %v5173
        %v5217 = vmul.f32 %v5137, %v5175
        %v5218 = vmul.f32 %v5138, %v5177
        %v5219 = vmul.f32 %v5139, %v5179
        %v5220 = vmul.f32 %v5140, %v5181
        %v5221 = vmul.f32 %v5141, %v5183
        %v5222 = vmul.f32 %v5142, %v5185
        %v5223 = vmul.f32 %v5143, %v5187
        %v5224 = vmul.f32 %v5144, %v5189
        %v5225 = vmul.f32 %v5145, %v5191
        %v5226 = vmul.f32 %v5146, %v5193
        %v5227 = vmul.f32 %v5147, %v5195
        %v5228 = vmul.f32 %v4989, %v4138
        %v5229 = vmul.f32 %v4991, %v4139
        %v5230 = vmul.f32 %v4993, %v4140
        %v5231 = vmul.f32 %v4995, %v4141
        %v5232 = vmul.f32 %v4997, %v4142
        %v5233 = vmul.f32 %v4999, %v4143
        %v5234 = vmul.f32 %v5001, %v4144
        %v5235 = vmul.f32 %v5003, %v4145
        %v5236 = vmul.f32 %v5005, %v4146
        %v5237 = vmul.f32 %v5007, %v4147
        %v5238 = vmul.f32 %v5009, %v4148
        %v5239 = vmul.f32 %v5011, %v4149
        %v5240 = vmul.f32 %v5013, %v4150
        %v5241 = vmul.f32 %v5015, %v4151
        %v5242 = vmul.f32 %v5017, %v4152
        %v5243 = vmul.f32 %v5019, %v4153
        %v5244 = vadd.f32 %v5212, %v5228
        %v5245 = vadd.f32 %v5213, %v5229
        %v5246 = vadd.f32 %v5214, %v5230
        %v5247 = vadd.f32 %v5215, %v5231
        %v5248 = vadd.f32 %v5216, %v5232
        %v5249 = vadd.f32 %v5217, %v5233
        %v5250 = vadd.f32 %v5218, %v5234
        %v5251 = vadd.f32 %v5219, %v5235
        %v5252 = vadd.f32 %v5220, %v5236
        %v5253 = vadd.f32 %v5221, %v5237
        %v5254 = vadd.f32 %v5222, %v5238
        %v5255 = vadd.f32 %v5223, %v5239
        %v5256 = vadd.f32 %v5224, %v5240
        %v5257 = vadd.f32 %v5225, %v5241
        %v5258 = vadd.f32 %v5226, %v5242
        %v5259 = vadd.f32 %v5227, %v5243
        %v5260 = vld [vmem:[#allocation2 + $0x300] sm:$0xff]
        %v5261 = vld [vmem:[#allocation2 + $0x308] sm:$0xff]
        %v5262 = vld [vmem:[#allocation2 + $0x310] sm:$0xff]
        %v5263 = vld [vmem:[#allocation2 + $0x318] sm:$0xff]
        %v5264 = vld [vmem:[#allocation2 + $0x320] sm:$0xff]
        %v5265 = vld [vmem:[#allocation2 + $0x328] sm:$0xff]
        %v5266 = vld [vmem:[#allocation2 + $0x330] sm:$0xff]
        %v5267 = vld [vmem:[#allocation2 + $0x338] sm:$0xff]
        %v5268 = vld [vmem:[#allocation2 + $0x340] sm:$0xff]
        %v5269 = vld [vmem:[#allocation2 + $0x348] sm:$0xff]
        %v5270 = vld [vmem:[#allocation2 + $0x350] sm:$0xff]
        %v5271 = vld [vmem:[#allocation2 + $0x358] sm:$0xff]
        %v5272 = vld [vmem:[#allocation2 + $0x360] sm:$0xff]
        %v5273 = vld [vmem:[#allocation2 + $0x368] sm:$0xff]
        %v5274 = vld [vmem:[#allocation2 + $0x370] sm:$0xff]
        %v5275 = vld [vmem:[#allocation2 + $0x378] sm:$0xff]
        %v5276 = vld [vmem:[#allocation2 + $0x380] sm:$0xff]
        %v5277 = vld [vmem:[#allocation2 + $0x388] sm:$0xff]
        %v5278 = vld [vmem:[#allocation2 + $0x390] sm:$0xff]
        %v5279 = vld [vmem:[#allocation2 + $0x398] sm:$0xff]
        %v5280 = vld [vmem:[#allocation2 + $0x3a0] sm:$0xff]
        %v5281 = vld [vmem:[#allocation2 + $0x3a8] sm:$0xff]
        %v5282 = vld [vmem:[#allocation2 + $0x3b0] sm:$0xff]
        %v5283 = vld [vmem:[#allocation2 + $0x3b8] sm:$0xff]
        %v5284 = vld [vmem:[#allocation2 + $0x3c0] sm:$0xff]
        %v5285 = vld [vmem:[#allocation2 + $0x3c8] sm:$0xff]
        %v5286 = vld [vmem:[#allocation2 + $0x3d0] sm:$0xff]
        %v5287 = vld [vmem:[#allocation2 + $0x3d8] sm:$0xff]
        %v5288 = vld [vmem:[#allocation2 + $0x3e0] sm:$0xff]
        %v5289 = vld [vmem:[#allocation2 + $0x3e8] sm:$0xff]
        %v5290 = vld [vmem:[#allocation2 + $0x3f0] sm:$0xff]
        %v5291 = vld [vmem:[#allocation2 + $0x3f8] sm:$0xff]
        %v5292 = vsel %vm1648, %v4700, 0
        %v5294 = vsel %vm1648, %v4702, 0
        %v5296 = vsel %vm1648, %v4704, 0
        %v5298 = vsel %vm1648, %v4706, 0
        %v5300 = vsel %vm1648, %v4708, 0
        %v5302 = vsel %vm1648, %v4710, 0
        %v5304 = vsel %vm1648, %v4712, 0
        %v5306 = vsel %vm1648, %v4714, 0
        %v5308 = vsel %vm1648, %v4716, 0
        %v5310 = vsel %vm1648, %v4718, 0
        %v5312 = vsel %vm1648, %v4720, 0
        %v5314 = vsel %vm1648, %v4722, 0
        %v5316 = vsel %vm1648, %v4724, 0
        %v5318 = vsel %vm1648, %v4726, 0
        %v5320 = vsel %vm1648, %v4728, 0
        %v5322 = vsel %vm1648, %v4730, 0
        %5324 = vmatprep.subr.mxu0 0.0
        %5325 = vmatpush1.msra.mxu0 0.0
        %5326 = vmatprep.subr.mxu0 0.0
        %5327 = vmatpush1.msra.mxu0 0.0
        %5328 = vmatprep.subr.mxu0 0.0
        %5329 = vmatpush1.msra.mxu0 0.0
        %5330 = vmatprep.subr.mxu0 0.0
        %5331 = vmatpush1.msra.mxu0 0.0
        %5332 = vmatprep.subr.mxu0 0.0
        %5333 = vmatpush1.msra.mxu0 0.0
        %5334 = vmatprep.subr.mxu0 0.0
        %5335 = vmatpush1.msra.mxu0 0.0
        %5336 = vmatprep.subr.mxu0 0.0
        %5337 = vmatpush1.msra.mxu0 0.0
        %5338 = vmatprep.subr.mxu0 0.0
        %5339 = vmatpush1.msra.mxu0 0.0
        %5340 = vmatprep.subr.mxu0 %v1919
        %5341 = vmatpush1.msra.mxu0 %v1918
        %5342 = vmatprep.subr.mxu0 %v1917
        %5343 = vmatpush1.msra.mxu0 %v1916
        %5344 = vmatprep.subr.mxu0 %v1915
        %5345 = vmatpush1.msra.mxu0 %v1914
        %5346 = vmatprep.subr.mxu0 %v1913
        %5347 = vmatpush1.msra.mxu0 %v1912
        %5348 = vmatprep.subr.mxu0 %v1911
        %5349 = vmatpush1.msra.mxu0 %v1910
        %5350 = vmatprep.subr.mxu0 %v1909
        %5351 = vmatpush1.msra.mxu0 %v1908
        %5352 = vmatprep.subr.mxu0 %v1907
        %5353 = vmatpush1.msra.mxu0 %v1906
        %5354 = vmatprep.subr.mxu0 %v1905
        %5355 = vmatpush1.msra.mxu0 %v1904
        %5356 = vmatprep.subr.mxu0 0.0
        %5357 = vmatpush2.msra.mxu0 0.0
        %5358 = vmatprep.subr.mxu0 0.0
        %5359 = vmatpush2.msra.mxu0 0.0
        %5360 = vmatprep.subr.mxu0 0.0
        %5361 = vmatpush2.msra.mxu0 0.0
        %5362 = vmatprep.subr.mxu0 0.0
        %5363 = vmatpush2.msra.mxu0 0.0
        %5364 = vmatprep.subr.mxu0 0.0
        %5365 = vmatpush2.msra.mxu0 0.0
        %5366 = vmatprep.subr.mxu0 0.0
        %5367 = vmatpush2.msra.mxu0 0.0
        %5368 = vmatprep.subr.mxu0 0.0
        %5369 = vmatpush2.msra.mxu0 0.0
        %5370 = vmatprep.subr.mxu0 0.0
        %5371 = vmatpush2.msra.mxu0 0.0
        %5372 = vmatprep.subr.mxu0 0.0
        %5373 = vmatpush2.msra.mxu0 0.0
        %5374 = vmatprep.subr.mxu0 0.0
        %5375 = vmatpush2.msra.mxu0 0.0
        %5376 = vmatprep.subr.mxu0 0.0
        %5377 = vmatpush2.msra.mxu0 0.0
        %5378 = vmatprep.subr.mxu0 0.0
        %5379 = vmatpush2.msra.mxu0 0.0
        %5380 = vmatprep.subr.mxu0 0.0
        %5381 = vmatpush2.msra.mxu0 0.0
        %5382 = vmatprep.subr.mxu0 0.0
        %5383 = vmatpush2.msra.mxu0 0.0
        %5384 = vmatprep.subr.mxu0 0.0
        %5385 = vmatpush2.msra.mxu0 0.0
        %5386 = vmatprep.subr.mxu0 0.0
        %5387 = vmatpush2.msra.mxu0 0.0
        %5388 = vmatprep.mubr.f32.mxu0 0.0
        %5389 = vmatmul.mubr.f32.gmra.mxu0 %v5292
        %v5390 = vpop.f32.mrf.mxu0
        %v5391 = vadd.f32 0.0, %v5390
        %v5392 = vpop.f32.mrf.mxu0
        %v5393 = vadd.f32 0.0, %v5392
        %5394 = vmatprep.mubr.f32.mxu0 0.0
        %5395 = vmatmul.mubr.f32.gmra.mxu0 %v5294
        %v5396 = vpop.f32.mrf.mxu0
        %v5397 = vadd.f32 0.0, %v5396
        %v5398 = vpop.f32.mrf.mxu0
        %v5399 = vadd.f32 0.0, %v5398
        %5400 = vmatprep.mubr.f32.mxu0 0.0
        %5401 = vmatmul.mubr.f32.gmra.mxu0 %v5296
        %v5402 = vpop.f32.mrf.mxu0
        %v5403 = vadd.f32 0.0, %v5402
        %v5404 = vpop.f32.mrf.mxu0
        %v5405 = vadd.f32 0.0, %v5404
        %5406 = vmatprep.mubr.f32.mxu0 0.0
        %5407 = vmatmul.mubr.f32.gmra.mxu0 %v5298
        %v5408 = vpop.f32.mrf.mxu0
        %v5409 = vadd.f32 0.0, %v5408
        %v5410 = vpop.f32.mrf.mxu0
        %v5411 = vadd.f32 0.0, %v5410
        %5412 = vmatprep.mubr.f32.mxu0 0.0
        %5413 = vmatmul.mubr.f32.gmra.mxu0 %v5300
        %v5414 = vpop.f32.mrf.mxu0
        %v5415 = vadd.f32 0.0, %v5414
        %v5416 = vpop.f32.mrf.mxu0
        %v5417 = vadd.f32 0.0, %v5416
        %5418 = vmatprep.mubr.f32.mxu0 0.0
        %5419 = vmatmul.mubr.f32.gmra.mxu0 %v5302
        %v5420 = vpop.f32.mrf.mxu0
        %v5421 = vadd.f32 0.0, %v5420
        %v5422 = vpop.f32.mrf.mxu0
        %v5423 = vadd.f32 0.0, %v5422
        %5424 = vmatprep.mubr.f32.mxu0 0.0
        %5425 = vmatmul.mubr.f32.gmra.mxu0 %v5304
        %v5426 = vpop.f32.mrf.mxu0
        %v5427 = vadd.f32 0.0, %v5426
        %v5428 = vpop.f32.mrf.mxu0
        %v5429 = vadd.f32 0.0, %v5428
        %5430 = vmatprep.mubr.f32.mxu0 0.0
        %5431 = vmatmul.mubr.f32.gmra.mxu0 %v5306
        %v5432 = vpop.f32.mrf.mxu0
        %v5433 = vadd.f32 0.0, %v5432
        %v5434 = vpop.f32.mrf.mxu0
        %v5435 = vadd.f32 0.0, %v5434
        %5436 = vmatprep.mubr.f32.mxu0 0.0
        %5437 = vmatmul.mubr.f32.gmra.mxu0 %v5308
        %v5438 = vpop.f32.mrf.mxu0
        %v5439 = vadd.f32 0.0, %v5438
        %v5440 = vpop.f32.mrf.mxu0
        %v5441 = vadd.f32 0.0, %v5440
        %5442 = vmatprep.mubr.f32.mxu0 0.0
        %5443 = vmatmul.mubr.f32.gmra.mxu0 %v5310
        %v5444 = vpop.f32.mrf.mxu0
        %v5445 = vadd.f32 0.0, %v5444
        %v5446 = vpop.f32.mrf.mxu0
        %v5447 = vadd.f32 0.0, %v5446
        %5448 = vmatprep.mubr.f32.mxu0 0.0
        %5449 = vmatmul.mubr.f32.gmra.mxu0 %v5312
        %v5450 = vpop.f32.mrf.mxu0
        %v5451 = vadd.f32 0.0, %v5450
        %v5452 = vpop.f32.mrf.mxu0
        %v5453 = vadd.f32 0.0, %v5452
        %5454 = vmatprep.mubr.f32.mxu0 0.0
        %5455 = vmatmul.mubr.f32.gmra.mxu0 %v5314
        %v5456 = vpop.f32.mrf.mxu0
        %v5457 = vadd.f32 0.0, %v5456
        %v5458 = vpop.f32.mrf.mxu0
        %v5459 = vadd.f32 0.0, %v5458
        %5460 = vmatprep.mubr.f32.mxu0 0.0
        %5461 = vmatmul.mubr.f32.gmra.mxu0 %v5316
        %v5462 = vpop.f32.mrf.mxu0
        %v5463 = vadd.f32 0.0, %v5462
        %v5464 = vpop.f32.mrf.mxu0
        %v5465 = vadd.f32 0.0, %v5464
        %5466 = vmatprep.mubr.f32.mxu0 0.0
        %5467 = vmatmul.mubr.f32.gmra.mxu0 %v5318
        %v5468 = vpop.f32.mrf.mxu0
        %v5469 = vadd.f32 0.0, %v5468
        %v5470 = vpop.f32.mrf.mxu0
        %v5471 = vadd.f32 0.0, %v5470
        %5472 = vmatprep.mubr.f32.mxu0 0.0
        %5473 = vmatmul.mubr.f32.gmra.mxu0 %v5320
        %v5474 = vpop.f32.mrf.mxu0
        %v5475 = vadd.f32 0.0, %v5474
        %v5476 = vpop.f32.mrf.mxu0
        %v5477 = vadd.f32 0.0, %v5476
        %5478 = vmatprep.mubr.f32.mxu0 0.0
        %5479 = vmatmul.mubr.f32.gmra.mxu0 %v5322
        %v5480 = vpop.f32.mrf.mxu0
        %v5481 = vadd.f32 0.0, %v5480
        %v5482 = vpop.f32.mrf.mxu0
        %v5483 = vadd.f32 0.0, %v5482
        %5484 = vdwg.mxu0
        %v5485 = vadd.f32 %v5260, %v5391
        %v5486 = vadd.f32 %v5262, %v5397
        %v5487 = vadd.f32 %v5264, %v5403
        %v5488 = vadd.f32 %v5266, %v5409
        %v5489 = vadd.f32 %v5268, %v5415
        %v5490 = vadd.f32 %v5270, %v5421
        %v5491 = vadd.f32 %v5272, %v5427
        %v5492 = vadd.f32 %v5274, %v5433
        %v5493 = vadd.f32 %v5276, %v5439
        %v5494 = vadd.f32 %v5278, %v5445
        %v5495 = vadd.f32 %v5280, %v5451
        %v5496 = vadd.f32 %v5282, %v5457
        %v5497 = vadd.f32 %v5284, %v5463
        %v5498 = vadd.f32 %v5286, %v5469
        %v5499 = vadd.f32 %v5288, %v5475
        %v5500 = vadd.f32 %v5290, %v5481
        %v5501 = vxor.u32 %v5485, 2147483648
        %v5502 = vxor.u32 %v5486, 2147483648
        %v5503 = vxor.u32 %v5487, 2147483648
        %v5504 = vxor.u32 %v5488, 2147483648
        %v5505 = vxor.u32 %v5489, 2147483648
        %v5506 = vxor.u32 %v5490, 2147483648
        %v5507 = vxor.u32 %v5491, 2147483648
        %v5508 = vxor.u32 %v5492, 2147483648
        %v5509 = vxor.u32 %v5493, 2147483648
        %v5510 = vxor.u32 %v5494, 2147483648
        %v5511 = vxor.u32 %v5495, 2147483648
        %v5512 = vxor.u32 %v5496, 2147483648
        %v5513 = vxor.u32 %v5497, 2147483648
        %v5514 = vxor.u32 %v5498, 2147483648
        %v5515 = vxor.u32 %v5499, 2147483648
        %v5516 = vxor.u32 %v5500, 2147483648
        %v5517 = vmul.f32 %v5501, 1.442695
        %v5518 = vpow.pop %v5517
        %v5519 = vmul.f32 %v5502, 1.442695
        %v5520 = vpow.pop %v5519
        %v5521 = vmul.f32 %v5503, 1.442695
        %v5522 = vpow.pop %v5521
        %v5523 = vmul.f32 %v5504, 1.442695
        %v5524 = vpow.pop %v5523
        %v5525 = vmul.f32 %v5505, 1.442695
        %v5526 = vpow.pop %v5525
        %v5527 = vmul.f32 %v5506, 1.442695
        %v5528 = vpow.pop %v5527
        %v5529 = vmul.f32 %v5507, 1.442695
        %v5530 = vpow.pop %v5529
        %v5531 = vmul.f32 %v5508, 1.442695
        %v5532 = vpow.pop %v5531
        %v5533 = vmul.f32 %v5509, 1.442695
        %v5534 = vpow.pop %v5533
        %v5535 = vmul.f32 %v5510, 1.442695
        %v5536 = vpow.pop %v5535
        %v5537 = vmul.f32 %v5511, 1.442695
        %v5538 = vpow.pop %v5537
        %v5539 = vmul.f32 %v5512, 1.442695
        %v5540 = vpow.pop %v5539
        %v5541 = vmul.f32 %v5513, 1.442695
        %v5542 = vpow.pop %v5541
        %v5543 = vmul.f32 %v5514, 1.442695
        %v5544 = vpow.pop %v5543
        %v5545 = vmul.f32 %v5515, 1.442695
        %v5546 = vpow.pop %v5545
        %v5547 = vmul.f32 %v5516, 1.442695
        %v5548 = vpow.pop %v5547
        %v5549 = vadd.f32 %v5518, 1.0
        %v5550 = vadd.f32 %v5520, 1.0
        %v5551 = vadd.f32 %v5522, 1.0
        %v5552 = vadd.f32 %v5524, 1.0
        %v5553 = vadd.f32 %v5526, 1.0
        %v5554 = vadd.f32 %v5528, 1.0
        %v5555 = vadd.f32 %v5530, 1.0
        %v5556 = vadd.f32 %v5532, 1.0
        %v5557 = vadd.f32 %v5534, 1.0
        %v5558 = vadd.f32 %v5536, 1.0
        %v5559 = vadd.f32 %v5538, 1.0
        %v5560 = vadd.f32 %v5540, 1.0
        %v5561 = vadd.f32 %v5542, 1.0
        %v5562 = vadd.f32 %v5544, 1.0
        %v5563 = vadd.f32 %v5546, 1.0
        %v5564 = vadd.f32 %v5548, 1.0
        %v5565 = vrcp.pop %v5549
        %v5566 = vmul.f32 1.0, %v5565
        %v5567 = vrcp.pop %v5550
        %v5568 = vmul.f32 1.0, %v5567
        %v5569 = vrcp.pop %v5551
        %v5570 = vmul.f32 1.0, %v5569
        %v5571 = vrcp.pop %v5552
        %v5572 = vmul.f32 1.0, %v5571
        %v5573 = vrcp.pop %v5553
        %v5574 = vmul.f32 1.0, %v5573
        %v5575 = vrcp.pop %v5554
        %v5576 = vmul.f32 1.0, %v5575
        %v5577 = vrcp.pop %v5555
        %v5578 = vmul.f32 1.0, %v5577
        %v5579 = vrcp.pop %v5556
        %v5580 = vmul.f32 1.0, %v5579
        %v5581 = vrcp.pop %v5557
        %v5582 = vmul.f32 1.0, %v5581
        %v5583 = vrcp.pop %v5558
        %v5584 = vmul.f32 1.0, %v5583
        %v5585 = vrcp.pop %v5559
        %v5586 = vmul.f32 1.0, %v5585
        %v5587 = vrcp.pop %v5560
        %v5588 = vmul.f32 1.0, %v5587
        %v5589 = vrcp.pop %v5561
        %v5590 = vmul.f32 1.0, %v5589
        %v5591 = vrcp.pop %v5562
        %v5592 = vmul.f32 1.0, %v5591
        %v5593 = vrcp.pop %v5563
        %v5594 = vmul.f32 1.0, %v5593
        %v5595 = vrcp.pop %v5564
        %v5596 = vmul.f32 1.0, %v5595
        %v5597 = vadd.f32 %v5393, %v1957
        %v5598 = vadd.f32 %v5399, %v1957
        %v5599 = vadd.f32 %v5405, %v1957
        %v5600 = vadd.f32 %v5411, %v1957
        %v5601 = vadd.f32 %v5417, %v1957
        %v5602 = vadd.f32 %v5423, %v1957
        %v5603 = vadd.f32 %v5429, %v1957
        %v5604 = vadd.f32 %v5435, %v1957
        %v5605 = vadd.f32 %v5441, %v1957
        %v5606 = vadd.f32 %v5447, %v1957
        %v5607 = vadd.f32 %v5453, %v1957
        %v5608 = vadd.f32 %v5459, %v1957
        %v5609 = vadd.f32 %v5465, %v1957
        %v5610 = vadd.f32 %v5471, %v1957
        %v5611 = vadd.f32 %v5477, %v1957
        %v5612 = vadd.f32 %v5483, %v1957
        %v5613 = vmul.f32 %v5566, %v5597
        %v5614 = vmul.f32 %v5568, %v5598
        %v5615 = vmul.f32 %v5570, %v5599
        %v5616 = vmul.f32 %v5572, %v5600
        %v5617 = vmul.f32 %v5574, %v5601
        %v5618 = vmul.f32 %v5576, %v5602
        %v5619 = vmul.f32 %v5578, %v5603
        %v5620 = vmul.f32 %v5580, %v5604
        %v5621 = vmul.f32 %v5582, %v5605
        %v5622 = vmul.f32 %v5584, %v5606
        %v5623 = vmul.f32 %v5586, %v5607
        %v5624 = vmul.f32 %v5588, %v5608
        %v5625 = vmul.f32 %v5590, %v5609
        %v5626 = vmul.f32 %v5592, %v5610
        %v5627 = vmul.f32 %v5594, %v5611
        %v5628 = vmul.f32 %v5596, %v5612
        %v5629 = vadd.f32 %v5261, %v5613
        %v5630 = vadd.f32 %v5263, %v5614
        %v5631 = vadd.f32 %v5265, %v5615
        %v5632 = vadd.f32 %v5267, %v5616
        %v5633 = vadd.f32 %v5269, %v5617
        %v5634 = vadd.f32 %v5271, %v5618
        %v5635 = vadd.f32 %v5273, %v5619
        %v5636 = vadd.f32 %v5275, %v5620
        %v5637 = vadd.f32 %v5277, %v5621
        %v5638 = vadd.f32 %v5279, %v5622
        %v5639 = vadd.f32 %v5281, %v5623
        %v5640 = vadd.f32 %v5283, %v5624
        %v5641 = vadd.f32 %v5285, %v5625
        %v5642 = vadd.f32 %v5287, %v5626
        %v5643 = vadd.f32 %v5289, %v5627
        %v5644 = vadd.f32 %v5291, %v5628
        %v5645 = vtanh.pop %v5629
        %v5646 = vtanh.pop %v5630
        %v5647 = vtanh.pop %v5631
        %v5648 = vtanh.pop %v5632
        %v5649 = vtanh.pop %v5633
        %v5650 = vtanh.pop %v5634
        %v5651 = vtanh.pop %v5635
        %v5652 = vtanh.pop %v5636
        %v5653 = vtanh.pop %v5637
        %v5654 = vtanh.pop %v5638
        %v5655 = vtanh.pop %v5639
        %v5656 = vtanh.pop %v5640
        %v5657 = vtanh.pop %v5641
        %v5658 = vtanh.pop %v5642
        %v5659 = vtanh.pop %v5643
        %v5660 = vtanh.pop %v5644
        %v5661 = vsub.f32 1.0, %v5566
        %v5662 = vsub.f32 1.0, %v5568
        %v5663 = vsub.f32 1.0, %v5570
        %v5664 = vsub.f32 1.0, %v5572
        %v5665 = vsub.f32 1.0, %v5574
        %v5666 = vsub.f32 1.0, %v5576
        %v5667 = vsub.f32 1.0, %v5578
        %v5668 = vsub.f32 1.0, %v5580
        %v5669 = vsub.f32 1.0, %v5582
        %v5670 = vsub.f32 1.0, %v5584
        %v5671 = vsub.f32 1.0, %v5586
        %v5672 = vsub.f32 1.0, %v5588
        %v5673 = vsub.f32 1.0, %v5590
        %v5674 = vsub.f32 1.0, %v5592
        %v5675 = vsub.f32 1.0, %v5594
        %v5676 = vsub.f32 1.0, %v5596
        %5693 = vrot.lane.b32.xlu0 %v5645, 64
        %v5694 = vpop.permute.xlu0 %5693
        %5695 = vrot.lane.b32.xlu0 %v5646, 64
        %v5696 = vpop.permute.xlu0 %5695
        %5697 = vrot.lane.b32.xlu0 %v5647, 64
        %v5698 = vpop.permute.xlu0 %5697
        %5699 = vrot.lane.b32.xlu0 %v5648, 64
        %v5700 = vpop.permute.xlu0 %5699
        %5701 = vrot.lane.b32.xlu0 %v5649, 64
        %v5702 = vpop.permute.xlu0 %5701
        %5703 = vrot.lane.b32.xlu0 %v5650, 64
        %v5704 = vpop.permute.xlu0 %5703
        %5705 = vrot.lane.b32.xlu0 %v5651, 64
        %v5706 = vpop.permute.xlu0 %5705
        %5707 = vrot.lane.b32.xlu0 %v5652, 64
        %v5708 = vpop.permute.xlu0 %5707
        %5709 = vrot.lane.b32.xlu0 %v5653, 64
        %v5710 = vpop.permute.xlu0 %5709
        %5711 = vrot.lane.b32.xlu0 %v5654, 64
        %v5712 = vpop.permute.xlu0 %5711
        %5713 = vrot.lane.b32.xlu0 %v5655, 64
        %v5714 = vpop.permute.xlu0 %5713
        %5715 = vrot.lane.b32.xlu0 %v5656, 64
        %v5716 = vpop.permute.xlu0 %5715
        %5717 = vrot.lane.b32.xlu0 %v5657, 64
        %v5718 = vpop.permute.xlu0 %5717
        %5719 = vrot.lane.b32.xlu0 %v5658, 64
        %v5720 = vpop.permute.xlu0 %5719
        %5721 = vrot.lane.b32.xlu0 %v5659, 64
        %v5722 = vpop.permute.xlu0 %5721
        %5723 = vrot.lane.b32.xlu0 %v5660, 64
        %v5724 = vpop.permute.xlu0 %5723
        %v5741 = vmul.f32 %v5661, %v5694
        %v5742 = vmul.f32 %v5662, %v5696
        %v5743 = vmul.f32 %v5663, %v5698
        %v5744 = vmul.f32 %v5664, %v5700
        %v5745 = vmul.f32 %v5665, %v5702
        %v5746 = vmul.f32 %v5666, %v5704
        %v5747 = vmul.f32 %v5667, %v5706
        %v5748 = vmul.f32 %v5668, %v5708
        %v5749 = vmul.f32 %v5669, %v5710
        %v5750 = vmul.f32 %v5670, %v5712
        %v5751 = vmul.f32 %v5671, %v5714
        %v5752 = vmul.f32 %v5672, %v5716
        %v5753 = vmul.f32 %v5673, %v5718
        %v5754 = vmul.f32 %v5674, %v5720
        %v5755 = vmul.f32 %v5675, %v5722
        %v5756 = vmul.f32 %v5676, %v5724
        %v5757 = vmul.f32 %v5566, %v4667
        %v5758 = vmul.f32 %v5568, %v4668
        %v5759 = vmul.f32 %v5570, %v4669
        %v5760 = vmul.f32 %v5572, %v4670
        %v5761 = vmul.f32 %v5574, %v4671
        %v5762 = vmul.f32 %v5576, %v4672
        %v5763 = vmul.f32 %v5578, %v4673
        %v5764 = vmul.f32 %v5580, %v4674
        %v5765 = vmul.f32 %v5582, %v4675
        %v5766 = vmul.f32 %v5584, %v4676
        %v5767 = vmul.f32 %v5586, %v4677
        %v5768 = vmul.f32 %v5588, %v4678
        %v5769 = vmul.f32 %v5590, %v4679
        %v5770 = vmul.f32 %v5592, %v4680
        %v5771 = vmul.f32 %v5594, %v4681
        %v5772 = vmul.f32 %v5596, %v4682
        %v5773 = vadd.f32 %v5741, %v5757
        %v5774 = vadd.f32 %v5742, %v5758
        %v5775 = vadd.f32 %v5743, %v5759
        %v5776 = vadd.f32 %v5744, %v5760
        %v5777 = vadd.f32 %v5745, %v5761
        %v5778 = vadd.f32 %v5746, %v5762
        %v5779 = vadd.f32 %v5747, %v5763
        %v5780 = vadd.f32 %v5748, %v5764
        %v5781 = vadd.f32 %v5749, %v5765
        %v5782 = vadd.f32 %v5750, %v5766
        %v5783 = vadd.f32 %v5751, %v5767
        %v5784 = vadd.f32 %v5752, %v5768
        %v5785 = vadd.f32 %v5753, %v5769
        %v5786 = vadd.f32 %v5754, %v5770
        %v5787 = vadd.f32 %v5755, %v5771
        %v5788 = vadd.f32 %v5756, %v5772
        %5805 = vrot.lane.b32.xlu0 %v5773, 64
        %v5806 = vpop.permute.xlu0 %5805
        %5807 = vrot.lane.b32.xlu0 %v5774, 64
        %v5808 = vpop.permute.xlu0 %5807
        %5809 = vrot.lane.b32.xlu0 %v5775, 64
        %v5810 = vpop.permute.xlu0 %5809
        %5811 = vrot.lane.b32.xlu0 %v5776, 64
        %v5812 = vpop.permute.xlu0 %5811
        %5813 = vrot.lane.b32.xlu0 %v5777, 64
        %v5814 = vpop.permute.xlu0 %5813
        %5815 = vrot.lane.b32.xlu0 %v5778, 64
        %v5816 = vpop.permute.xlu0 %5815
        %5817 = vrot.lane.b32.xlu0 %v5779, 64
        %v5818 = vpop.permute.xlu0 %5817
        %5819 = vrot.lane.b32.xlu0 %v5780, 64
        %v5820 = vpop.permute.xlu0 %5819
        %5821 = vrot.lane.b32.xlu0 %v5781, 64
        %v5822 = vpop.permute.xlu0 %5821
        %5823 = vrot.lane.b32.xlu0 %v5782, 64
        %v5824 = vpop.permute.xlu0 %5823
        %5825 = vrot.lane.b32.xlu0 %v5783, 64
        %v5826 = vpop.permute.xlu0 %5825
        %5827 = vrot.lane.b32.xlu0 %v5784, 64
        %v5828 = vpop.permute.xlu0 %5827
        %5829 = vrot.lane.b32.xlu0 %v5785, 64
        %v5830 = vpop.permute.xlu0 %5829
        %5831 = vrot.lane.b32.xlu0 %v5786, 64
        %v5832 = vpop.permute.xlu0 %5831
        %5833 = vrot.lane.b32.xlu0 %v5787, 64
        %v5834 = vpop.permute.xlu0 %5833
        %5835 = vrot.lane.b32.xlu0 %v5788, 64
        %v5836 = vpop.permute.xlu0 %5835
        %v5853 = vsel %vm1648, %v5806, %v5244
        %v5854 = vsel %vm1648, %v5808, %v5245
        %v5855 = vsel %vm1648, %v5810, %v5246
        %v5856 = vsel %vm1648, %v5812, %v5247
        %v5857 = vsel %vm1648, %v5814, %v5248
        %v5858 = vsel %vm1648, %v5816, %v5249
        %v5859 = vsel %vm1648, %v5818, %v5250
        %v5860 = vsel %vm1648, %v5820, %v5251
        %v5861 = vsel %vm1648, %v5822, %v5252
        %v5862 = vsel %vm1648, %v5824, %v5253
        %v5863 = vsel %vm1648, %v5826, %v5254
        %v5864 = vsel %vm1648, %v5828, %v5255
        %v5865 = vsel %vm1648, %v5830, %v5256
        %v5866 = vsel %vm1648, %v5832, %v5257
        %v5867 = vsel %vm1648, %v5834, %v5258
        %v5868 = vsel %vm1648, %v5836, %v5259
        %5869 = vmatprep.subr.mxu0 %v1951
        %5870 = vmatpush1.msra.mxu0 %v1950
        %5871 = vmatprep.subr.mxu0 %v1949
        %5872 = vmatpush1.msra.mxu0 %v1948
        %5873 = vmatprep.subr.mxu0 %v1947
        %5874 = vmatpush1.msra.mxu0 %v1946
        %5875 = vmatprep.subr.mxu0 %v1945
        %5876 = vmatpush1.msra.mxu0 %v1944
        %5877 = vmatprep.subr.mxu0 %v1943
        %5878 = vmatpush1.msra.mxu0 %v1942
        %5879 = vmatprep.subr.mxu0 %v1941
        %5880 = vmatpush1.msra.mxu0 %v1940
        %5881 = vmatprep.subr.mxu0 %v1939
        %5882 = vmatpush1.msra.mxu0 %v1938
        %5883 = vmatprep.subr.mxu0 %v1937
        %5884 = vmatpush1.msra.mxu0 %v1936
        %5885 = vmatprep.subr.mxu0 %v1935
        %5886 = vmatpush1.msra.mxu0 %v1934
        %5887 = vmatprep.subr.mxu0 %v1933
        %5888 = vmatpush1.msra.mxu0 %v1932
        %5889 = vmatprep.subr.mxu0 %v1931
        %5890 = vmatpush1.msra.mxu0 %v1930
        %5891 = vmatprep.subr.mxu0 %v1929
        %5892 = vmatpush1.msra.mxu0 %v1928
        %5893 = vmatprep.subr.mxu0 %v1927
        %5894 = vmatpush1.msra.mxu0 %v1926
        %5895 = vmatprep.subr.mxu0 %v1925
        %5896 = vmatpush1.msra.mxu0 %v1924
        %5897 = vmatprep.subr.mxu0 %v1923
        %5898 = vmatpush1.msra.mxu0 %v1922
        %5899 = vmatprep.subr.mxu0 %v1921
        %5900 = vmatpush1.msra.mxu0 %v1920
        %5901 = vmatprep.subr.mxu0 0.0
        %5902 = vmatpush2.msra.mxu0 0.0
        %5903 = vmatprep.subr.mxu0 0.0
        %5904 = vmatpush2.msra.mxu0 0.0
        %5905 = vmatprep.subr.mxu0 0.0
        %5906 = vmatpush2.msra.mxu0 0.0
        %5907 = vmatprep.subr.mxu0 0.0
        %5908 = vmatpush2.msra.mxu0 0.0
        %5909 = vmatprep.subr.mxu0 0.0
        %5910 = vmatpush2.msra.mxu0 0.0
        %5911 = vmatprep.subr.mxu0 0.0
        %5912 = vmatpush2.msra.mxu0 0.0
        %5913 = vmatprep.subr.mxu0 0.0
        %5914 = vmatpush2.msra.mxu0 0.0
        %5915 = vmatprep.subr.mxu0 0.0
        %5916 = vmatpush2.msra.mxu0 0.0
        %5917 = vmatprep.subr.mxu0 0.0
        %5918 = vmatpush2.msra.mxu0 0.0
        %5919 = vmatprep.subr.mxu0 0.0
        %5920 = vmatpush2.msra.mxu0 0.0
        %5921 = vmatprep.subr.mxu0 0.0
        %5922 = vmatpush2.msra.mxu0 0.0
        %5923 = vmatprep.subr.mxu0 0.0
        %5924 = vmatpush2.msra.mxu0 0.0
        %5925 = vmatprep.subr.mxu0 0.0
        %5926 = vmatpush2.msra.mxu0 0.0
        %5927 = vmatprep.subr.mxu0 0.0
        %5928 = vmatpush2.msra.mxu0 0.0
        %5929 = vmatprep.subr.mxu0 0.0
        %5930 = vmatpush2.msra.mxu0 0.0
        %5931 = vmatprep.subr.mxu0 0.0
        %5932 = vmatpush2.msra.mxu0 0.0
        %5933 = vmatprep.mubr.f32.mxu0 0.0
        %5934 = vmatmul.mubr.f32.gmra.mxu0 %v5853
        %v5935 = vpop.f32.mrf.mxu0
        %v5936 = vadd.f32 %v1964, %v5935
        %v5937 = vpop.f32.mrf.mxu0
        %v5938 = vadd.f32 %v1968, %v5937
        %5939 = vmatprep.mubr.f32.mxu0 0.0
        %5940 = vmatmul.mubr.f32.gmra.mxu0 %v5854
        %v5941 = vpop.f32.mrf.mxu0
        %v5942 = vadd.f32 %v1964, %v5941
        %v5943 = vpop.f32.mrf.mxu0
        %v5944 = vadd.f32 %v1968, %v5943
        %5945 = vmatprep.mubr.f32.mxu0 0.0
        %5946 = vmatmul.mubr.f32.gmra.mxu0 %v5855
        %v5947 = vpop.f32.mrf.mxu0
        %v5948 = vadd.f32 %v1964, %v5947
        %v5949 = vpop.f32.mrf.mxu0
        %v5950 = vadd.f32 %v1968, %v5949
        %5951 = vmatprep.mubr.f32.mxu0 0.0
        %5952 = vmatmul.mubr.f32.gmra.mxu0 %v5856
        %v5953 = vpop.f32.mrf.mxu0
        %v5954 = vadd.f32 %v1964, %v5953
        %v5955 = vpop.f32.mrf.mxu0
        %v5956 = vadd.f32 %v1968, %v5955
        %5957 = vmatprep.mubr.f32.mxu0 0.0
        %5958 = vmatmul.mubr.f32.gmra.mxu0 %v5857
        %v5959 = vpop.f32.mrf.mxu0
        %v5960 = vadd.f32 %v1964, %v5959
        %v5961 = vpop.f32.mrf.mxu0
        %v5962 = vadd.f32 %v1968, %v5961
        %5963 = vmatprep.mubr.f32.mxu0 0.0
        %5964 = vmatmul.mubr.f32.gmra.mxu0 %v5858
        %v5965 = vpop.f32.mrf.mxu0
        %v5966 = vadd.f32 %v1964, %v5965
        %v5967 = vpop.f32.mrf.mxu0
        %v5968 = vadd.f32 %v1968, %v5967
        %5969 = vmatprep.mubr.f32.mxu0 0.0
        %5970 = vmatmul.mubr.f32.gmra.mxu0 %v5859
        %v5971 = vpop.f32.mrf.mxu0
        %v5972 = vadd.f32 %v1964, %v5971
        %v5973 = vpop.f32.mrf.mxu0
        %v5974 = vadd.f32 %v1968, %v5973
        %5975 = vmatprep.mubr.f32.mxu0 0.0
        %5976 = vmatmul.mubr.f32.gmra.mxu0 %v5860
        %v5977 = vpop.f32.mrf.mxu0
        %v5978 = vadd.f32 %v1964, %v5977
        %v5979 = vpop.f32.mrf.mxu0
        %v5980 = vadd.f32 %v1968, %v5979
        %5981 = vmatprep.mubr.f32.mxu0 0.0
        %5982 = vmatmul.mubr.f32.gmra.mxu0 %v5861
        %v5983 = vpop.f32.mrf.mxu0
        %v5984 = vadd.f32 %v1964, %v5983
        %v5985 = vpop.f32.mrf.mxu0
        %v5986 = vadd.f32 %v1968, %v5985
        %5987 = vmatprep.mubr.f32.mxu0 0.0
        %5988 = vmatmul.mubr.f32.gmra.mxu0 %v5862
        %v5989 = vpop.f32.mrf.mxu0
        %v5990 = vadd.f32 %v1964, %v5989
        %v5991 = vpop.f32.mrf.mxu0
        %v5992 = vadd.f32 %v1968, %v5991
        %5993 = vmatprep.mubr.f32.mxu0 0.0
        %5994 = vmatmul.mubr.f32.gmra.mxu0 %v5863
        %v5995 = vpop.f32.mrf.mxu0
        %v5996 = vadd.f32 %v1964, %v5995
        %v5997 = vpop.f32.mrf.mxu0
        %v5998 = vadd.f32 %v1968, %v5997
        %5999 = vmatprep.mubr.f32.mxu0 0.0
        %6000 = vmatmul.mubr.f32.gmra.mxu0 %v5864
        %v6001 = vpop.f32.mrf.mxu0
        %v6002 = vadd.f32 %v1964, %v6001
        %v6003 = vpop.f32.mrf.mxu0
        %v6004 = vadd.f32 %v1968, %v6003
        %6005 = vmatprep.mubr.f32.mxu0 0.0
        %6006 = vmatmul.mubr.f32.gmra.mxu0 %v5865
        %v6007 = vpop.f32.mrf.mxu0
        %v6008 = vadd.f32 %v1964, %v6007
        %v6009 = vpop.f32.mrf.mxu0
        %v6010 = vadd.f32 %v1968, %v6009
        %6011 = vmatprep.mubr.f32.mxu0 0.0
        %6012 = vmatmul.mubr.f32.gmra.mxu0 %v5866
        %v6013 = vpop.f32.mrf.mxu0
        %v6014 = vadd.f32 %v1964, %v6013
        %v6015 = vpop.f32.mrf.mxu0
        %v6016 = vadd.f32 %v1968, %v6015
        %6017 = vmatprep.mubr.f32.mxu0 0.0
        %6018 = vmatmul.mubr.f32.gmra.mxu0 %v5867
        %v6019 = vpop.f32.mrf.mxu0
        %v6020 = vadd.f32 %v1964, %v6019
        %v6021 = vpop.f32.mrf.mxu0
        %v6022 = vadd.f32 %v1968, %v6021
        %6023 = vmatprep.mubr.f32.mxu0 0.0
        %6024 = vmatmul.mubr.f32.gmra.mxu0 %v5868
        %v6025 = vpop.f32.mrf.mxu0
        %v6026 = vadd.f32 %v1964, %v6025
        %v6027 = vpop.f32.mrf.mxu0
        %v6028 = vadd.f32 %v1968, %v6027
        %6029 = vdwg.mxu0
        %v6030 = vxor.u32 %v5936, 2147483648
        %v6031 = vxor.u32 %v5942, 2147483648
        %v6032 = vxor.u32 %v5948, 2147483648
        %v6033 = vxor.u32 %v5954, 2147483648
        %v6034 = vxor.u32 %v5960, 2147483648
        %v6035 = vxor.u32 %v5966, 2147483648
        %v6036 = vxor.u32 %v5972, 2147483648
        %v6037 = vxor.u32 %v5978, 2147483648
        %v6038 = vxor.u32 %v5984, 2147483648
        %v6039 = vxor.u32 %v5990, 2147483648
        %v6040 = vxor.u32 %v5996, 2147483648
        %v6041 = vxor.u32 %v6002, 2147483648
        %v6042 = vxor.u32 %v6008, 2147483648
        %v6043 = vxor.u32 %v6014, 2147483648
        %v6044 = vxor.u32 %v6020, 2147483648
        %v6045 = vxor.u32 %v6026, 2147483648
        %v6046 = vmul.f32 %v6030, 1.442695
        %v6047 = vpow.pop %v6046
        %v6048 = vmul.f32 %v6031, 1.442695
        %v6049 = vpow.pop %v6048
        %v6050 = vmul.f32 %v6032, 1.442695
        %v6051 = vpow.pop %v6050
        %v6052 = vmul.f32 %v6033, 1.442695
        %v6053 = vpow.pop %v6052
        %v6054 = vmul.f32 %v6034, 1.442695
        %v6055 = vpow.pop %v6054
        %v6056 = vmul.f32 %v6035, 1.442695
        %v6057 = vpow.pop %v6056
        %v6058 = vmul.f32 %v6036, 1.442695
        %v6059 = vpow.pop %v6058
        %v6060 = vmul.f32 %v6037, 1.442695
        %v6061 = vpow.pop %v6060
        %v6062 = vmul.f32 %v6038, 1.442695
        %v6063 = vpow.pop %v6062
        %v6064 = vmul.f32 %v6039, 1.442695
        %v6065 = vpow.pop %v6064
        %v6066 = vmul.f32 %v6040, 1.442695
        %v6067 = vpow.pop %v6066
        %v6068 = vmul.f32 %v6041, 1.442695
        %v6069 = vpow.pop %v6068
        %v6070 = vmul.f32 %v6042, 1.442695
        %v6071 = vpow.pop %v6070
        %v6072 = vmul.f32 %v6043, 1.442695
        %v6073 = vpow.pop %v6072
        %v6074 = vmul.f32 %v6044, 1.442695
        %v6075 = vpow.pop %v6074
        %v6076 = vmul.f32 %v6045, 1.442695
        %v6077 = vpow.pop %v6076
        %v6078 = vadd.f32 %v6047, 1.0
        %v6079 = vadd.f32 %v6049, 1.0
        %v6080 = vadd.f32 %v6051, 1.0
        %v6081 = vadd.f32 %v6053, 1.0
        %v6082 = vadd.f32 %v6055, 1.0
        %v6083 = vadd.f32 %v6057, 1.0
        %v6084 = vadd.f32 %v6059, 1.0
        %v6085 = vadd.f32 %v6061, 1.0
        %v6086 = vadd.f32 %v6063, 1.0
        %v6087 = vadd.f32 %v6065, 1.0
        %v6088 = vadd.f32 %v6067, 1.0
        %v6089 = vadd.f32 %v6069, 1.0
        %v6090 = vadd.f32 %v6071, 1.0
        %v6091 = vadd.f32 %v6073, 1.0
        %v6092 = vadd.f32 %v6075, 1.0
        %v6093 = vadd.f32 %v6077, 1.0
        %v6094 = vrcp.pop %v6078
        %v6095 = vmul.f32 1.0, %v6094
        %v6096 = vrcp.pop %v6079
        %v6097 = vmul.f32 1.0, %v6096
        %v6098 = vrcp.pop %v6080
        %v6099 = vmul.f32 1.0, %v6098
        %v6100 = vrcp.pop %v6081
        %v6101 = vmul.f32 1.0, %v6100
        %v6102 = vrcp.pop %v6082
        %v6103 = vmul.f32 1.0, %v6102
        %v6104 = vrcp.pop %v6083
        %v6105 = vmul.f32 1.0, %v6104
        %v6106 = vrcp.pop %v6084
        %v6107 = vmul.f32 1.0, %v6106
        %v6108 = vrcp.pop %v6085
        %v6109 = vmul.f32 1.0, %v6108
        %v6110 = vrcp.pop %v6086
        %v6111 = vmul.f32 1.0, %v6110
        %v6112 = vrcp.pop %v6087
        %v6113 = vmul.f32 1.0, %v6112
        %v6114 = vrcp.pop %v6088
        %v6115 = vmul.f32 1.0, %v6114
        %v6116 = vrcp.pop %v6089
        %v6117 = vmul.f32 1.0, %v6116
        %v6118 = vrcp.pop %v6090
        %v6119 = vmul.f32 1.0, %v6118
        %v6120 = vrcp.pop %v6091
        %v6121 = vmul.f32 1.0, %v6120
        %v6122 = vrcp.pop %v6092
        %v6123 = vmul.f32 1.0, %v6122
        %v6124 = vrcp.pop %v6093
        %v6125 = vmul.f32 1.0, %v6124
        %6142 = vrot.lane.b32.xlu0 %v5938, 64
        %v6143 = vpop.permute.xlu0 %6142
        %6144 = vrot.lane.b32.xlu0 %v5944, 64
        %v6145 = vpop.permute.xlu0 %6144
        %6146 = vrot.lane.b32.xlu0 %v5950, 64
        %v6147 = vpop.permute.xlu0 %6146
        %6148 = vrot.lane.b32.xlu0 %v5956, 64
        %v6149 = vpop.permute.xlu0 %6148
        %6150 = vrot.lane.b32.xlu0 %v5962, 64
        %v6151 = vpop.permute.xlu0 %6150
        %6152 = vrot.lane.b32.xlu0 %v5968, 64
        %v6153 = vpop.permute.xlu0 %6152
        %6154 = vrot.lane.b32.xlu0 %v5974, 64
        %v6155 = vpop.permute.xlu0 %6154
        %6156 = vrot.lane.b32.xlu0 %v5980, 64
        %v6157 = vpop.permute.xlu0 %6156
        %6158 = vrot.lane.b32.xlu0 %v5986, 64
        %v6159 = vpop.permute.xlu0 %6158
        %6160 = vrot.lane.b32.xlu0 %v5992, 64
        %v6161 = vpop.permute.xlu0 %6160
        %6162 = vrot.lane.b32.xlu0 %v5998, 64
        %v6163 = vpop.permute.xlu0 %6162
        %6164 = vrot.lane.b32.xlu0 %v6004, 64
        %v6165 = vpop.permute.xlu0 %6164
        %6166 = vrot.lane.b32.xlu0 %v6010, 64
        %v6167 = vpop.permute.xlu0 %6166
        %6168 = vrot.lane.b32.xlu0 %v6016, 64
        %v6169 = vpop.permute.xlu0 %6168
        %6170 = vrot.lane.b32.xlu0 %v6022, 64
        %v6171 = vpop.permute.xlu0 %6170
        %6172 = vrot.lane.b32.xlu0 %v6028, 64
        %v6173 = vpop.permute.xlu0 %6172
        %v6190 = vmul.f32 %v6095, %v6143
        %v6191 = vmul.f32 %v6097, %v6145
        %v6192 = vmul.f32 %v6099, %v6147
        %v6193 = vmul.f32 %v6101, %v6149
        %v6194 = vmul.f32 %v6103, %v6151
        %v6195 = vmul.f32 %v6105, %v6153
        %v6196 = vmul.f32 %v6107, %v6155
        %v6197 = vmul.f32 %v6109, %v6157
        %v6198 = vmul.f32 %v6111, %v6159
        %v6199 = vmul.f32 %v6113, %v6161
        %v6200 = vmul.f32 %v6115, %v6163
        %v6201 = vmul.f32 %v6117, %v6165
        %v6202 = vmul.f32 %v6119, %v6167
        %v6203 = vmul.f32 %v6121, %v6169
        %v6204 = vmul.f32 %v6123, %v6171
        %v6205 = vmul.f32 %v6125, %v6173
        %v6206 = vadd.f32 %v5938, %v6190
        %v6207 = vadd.f32 %v5944, %v6191
        %v6208 = vadd.f32 %v5950, %v6192
        %v6209 = vadd.f32 %v5956, %v6193
        %v6210 = vadd.f32 %v5962, %v6194
        %v6211 = vadd.f32 %v5968, %v6195
        %v6212 = vadd.f32 %v5974, %v6196
        %v6213 = vadd.f32 %v5980, %v6197
        %v6214 = vadd.f32 %v5986, %v6198
        %v6215 = vadd.f32 %v5992, %v6199
        %v6216 = vadd.f32 %v5998, %v6200
        %v6217 = vadd.f32 %v6004, %v6201
        %v6218 = vadd.f32 %v6010, %v6202
        %v6219 = vadd.f32 %v6016, %v6203
        %v6220 = vadd.f32 %v6022, %v6204
        %v6221 = vadd.f32 %v6028, %v6205
        %v6222 = vtanh.pop %v6206
        %v6223 = vtanh.pop %v6207
        %v6224 = vtanh.pop %v6208
        %v6225 = vtanh.pop %v6209
        %v6226 = vtanh.pop %v6210
        %v6227 = vtanh.pop %v6211
        %v6228 = vtanh.pop %v6212
        %v6229 = vtanh.pop %v6213
        %v6230 = vtanh.pop %v6214
        %v6231 = vtanh.pop %v6215
        %v6232 = vtanh.pop %v6216
        %v6233 = vtanh.pop %v6217
        %v6234 = vtanh.pop %v6218
        %v6235 = vtanh.pop %v6219
        %v6236 = vtanh.pop %v6220
        %v6237 = vtanh.pop %v6221
        %v6238 = vsub.f32 1.0, %v6095
        %v6239 = vsub.f32 1.0, %v6097
        %v6240 = vsub.f32 1.0, %v6099
        %v6241 = vsub.f32 1.0, %v6101
        %v6242 = vsub.f32 1.0, %v6103
        %v6243 = vsub.f32 1.0, %v6105
        %v6244 = vsub.f32 1.0, %v6107
        %v6245 = vsub.f32 1.0, %v6109
        %v6246 = vsub.f32 1.0, %v6111
        %v6247 = vsub.f32 1.0, %v6113
        %v6248 = vsub.f32 1.0, %v6115
        %v6249 = vsub.f32 1.0, %v6117
        %v6250 = vsub.f32 1.0, %v6119
        %v6251 = vsub.f32 1.0, %v6121
        %v6252 = vsub.f32 1.0, %v6123
        %v6253 = vsub.f32 1.0, %v6125
        %6270 = vrot.lane.b32.xlu0 %v6222, 64
        %v6271 = vpop.permute.xlu0 %6270
        %6272 = vrot.lane.b32.xlu0 %v6223, 64
        %v6273 = vpop.permute.xlu0 %6272
        %6274 = vrot.lane.b32.xlu0 %v6224, 64
        %v6275 = vpop.permute.xlu0 %6274
        %6276 = vrot.lane.b32.xlu0 %v6225, 64
        %v6277 = vpop.permute.xlu0 %6276
        %6278 = vrot.lane.b32.xlu0 %v6226, 64
        %v6279 = vpop.permute.xlu0 %6278
        %6280 = vrot.lane.b32.xlu0 %v6227, 64
        %v6281 = vpop.permute.xlu0 %6280
        %6282 = vrot.lane.b32.xlu0 %v6228, 64
        %v6283 = vpop.permute.xlu0 %6282
        %6284 = vrot.lane.b32.xlu0 %v6229, 64
        %v6285 = vpop.permute.xlu0 %6284
        %6286 = vrot.lane.b32.xlu0 %v6230, 64
        %v6287 = vpop.permute.xlu0 %6286
        %6288 = vrot.lane.b32.xlu0 %v6231, 64
        %v6289 = vpop.permute.xlu0 %6288
        %6290 = vrot.lane.b32.xlu0 %v6232, 64
        %v6291 = vpop.permute.xlu0 %6290
        %6292 = vrot.lane.b32.xlu0 %v6233, 64
        %v6293 = vpop.permute.xlu0 %6292
        %6294 = vrot.lane.b32.xlu0 %v6234, 64
        %v6295 = vpop.permute.xlu0 %6294
        %6296 = vrot.lane.b32.xlu0 %v6235, 64
        %v6297 = vpop.permute.xlu0 %6296
        %6298 = vrot.lane.b32.xlu0 %v6236, 64
        %v6299 = vpop.permute.xlu0 %6298
        %6300 = vrot.lane.b32.xlu0 %v6237, 64
        %v6301 = vpop.permute.xlu0 %6300
        %v6318 = vmul.f32 %v6238, %v6271
        %v6319 = vmul.f32 %v6239, %v6273
        %v6320 = vmul.f32 %v6240, %v6275
        %v6321 = vmul.f32 %v6241, %v6277
        %v6322 = vmul.f32 %v6242, %v6279
        %v6323 = vmul.f32 %v6243, %v6281
        %v6324 = vmul.f32 %v6244, %v6283
        %v6325 = vmul.f32 %v6245, %v6285
        %v6326 = vmul.f32 %v6246, %v6287
        %v6327 = vmul.f32 %v6247, %v6289
        %v6328 = vmul.f32 %v6248, %v6291
        %v6329 = vmul.f32 %v6249, %v6293
        %v6330 = vmul.f32 %v6250, %v6295
        %v6331 = vmul.f32 %v6251, %v6297
        %v6332 = vmul.f32 %v6252, %v6299
        %v6333 = vmul.f32 %v6253, %v6301
        %v6334 = vmul.f32 %v6095, %v5244
        %v6335 = vmul.f32 %v6097, %v5245
        %v6336 = vmul.f32 %v6099, %v5246
        %v6337 = vmul.f32 %v6101, %v5247
        %v6338 = vmul.f32 %v6103, %v5248
        %v6339 = vmul.f32 %v6105, %v5249
        %v6340 = vmul.f32 %v6107, %v5250
        %v6341 = vmul.f32 %v6109, %v5251
        %v6342 = vmul.f32 %v6111, %v5252
        %v6343 = vmul.f32 %v6113, %v5253
        %v6344 = vmul.f32 %v6115, %v5254
        %v6345 = vmul.f32 %v6117, %v5255
        %v6346 = vmul.f32 %v6119, %v5256
        %v6347 = vmul.f32 %v6121, %v5257
        %v6348 = vmul.f32 %v6123, %v5258
        %v6349 = vmul.f32 %v6125, %v5259
        %v6350 = vadd.f32 %v6318, %v6334
        %v6351 = vadd.f32 %v6319, %v6335
        %v6352 = vadd.f32 %v6320, %v6336
        %v6353 = vadd.f32 %v6321, %v6337
        %v6354 = vadd.f32 %v6322, %v6338
        %v6355 = vadd.f32 %v6323, %v6339
        %v6356 = vadd.f32 %v6324, %v6340
        %v6357 = vadd.f32 %v6325, %v6341
        %v6358 = vadd.f32 %v6326, %v6342
        %v6359 = vadd.f32 %v6327, %v6343
        %v6360 = vadd.f32 %v6328, %v6344
        %v6361 = vadd.f32 %v6329, %v6345
        %v6362 = vadd.f32 %v6330, %v6346
        %v6363 = vadd.f32 %v6331, %v6347
        %v6364 = vadd.f32 %v6332, %v6348
        %v6365 = vadd.f32 %v6333, %v6349
        %v6366 = vld [vmem:[#allocation2 + $0x400] sm:$0xff]
        %v6367 = vld [vmem:[#allocation2 + $0x408] sm:$0xff]
        %v6368 = vld [vmem:[#allocation2 + $0x410] sm:$0xff]
        %v6369 = vld [vmem:[#allocation2 + $0x418] sm:$0xff]
        %v6370 = vld [vmem:[#allocation2 + $0x420] sm:$0xff]
        %v6371 = vld [vmem:[#allocation2 + $0x428] sm:$0xff]
        %v6372 = vld [vmem:[#allocation2 + $0x430] sm:$0xff]
        %v6373 = vld [vmem:[#allocation2 + $0x438] sm:$0xff]
        %v6374 = vld [vmem:[#allocation2 + $0x440] sm:$0xff]
        %v6375 = vld [vmem:[#allocation2 + $0x448] sm:$0xff]
        %v6376 = vld [vmem:[#allocation2 + $0x450] sm:$0xff]
        %v6377 = vld [vmem:[#allocation2 + $0x458] sm:$0xff]
        %v6378 = vld [vmem:[#allocation2 + $0x460] sm:$0xff]
        %v6379 = vld [vmem:[#allocation2 + $0x468] sm:$0xff]
        %v6380 = vld [vmem:[#allocation2 + $0x470] sm:$0xff]
        %v6381 = vld [vmem:[#allocation2 + $0x478] sm:$0xff]
        %v6382 = vld [vmem:[#allocation2 + $0x480] sm:$0xff]
        %v6383 = vld [vmem:[#allocation2 + $0x488] sm:$0xff]
        %v6384 = vld [vmem:[#allocation2 + $0x490] sm:$0xff]
        %v6385 = vld [vmem:[#allocation2 + $0x498] sm:$0xff]
        %v6386 = vld [vmem:[#allocation2 + $0x4a0] sm:$0xff]
        %v6387 = vld [vmem:[#allocation2 + $0x4a8] sm:$0xff]
        %v6388 = vld [vmem:[#allocation2 + $0x4b0] sm:$0xff]
        %v6389 = vld [vmem:[#allocation2 + $0x4b8] sm:$0xff]
        %v6390 = vld [vmem:[#allocation2 + $0x4c0] sm:$0xff]
        %v6391 = vld [vmem:[#allocation2 + $0x4c8] sm:$0xff]
        %v6392 = vld [vmem:[#allocation2 + $0x4d0] sm:$0xff]
        %v6393 = vld [vmem:[#allocation2 + $0x4d8] sm:$0xff]
        %v6394 = vld [vmem:[#allocation2 + $0x4e0] sm:$0xff]
        %v6395 = vld [vmem:[#allocation2 + $0x4e8] sm:$0xff]
        %v6396 = vld [vmem:[#allocation2 + $0x4f0] sm:$0xff]
        %v6397 = vld [vmem:[#allocation2 + $0x4f8] sm:$0xff]
        %v6398 = vsel %vm1648, %v5806, 0
        %v6400 = vsel %vm1648, %v5808, 0
        %v6402 = vsel %vm1648, %v5810, 0
        %v6404 = vsel %vm1648, %v5812, 0
        %v6406 = vsel %vm1648, %v5814, 0
        %v6408 = vsel %vm1648, %v5816, 0
        %v6410 = vsel %vm1648, %v5818, 0
        %v6412 = vsel %vm1648, %v5820, 0
        %v6414 = vsel %vm1648, %v5822, 0
        %v6416 = vsel %vm1648, %v5824, 0
        %v6418 = vsel %vm1648, %v5826, 0
        %v6420 = vsel %vm1648, %v5828, 0
        %v6422 = vsel %vm1648, %v5830, 0
        %v6424 = vsel %vm1648, %v5832, 0
        %v6426 = vsel %vm1648, %v5834, 0
        %v6428 = vsel %vm1648, %v5836, 0
        %6430 = vmatprep.subr.mxu0 0.0
        %6431 = vmatpush1.msra.mxu0 0.0
        %6432 = vmatprep.subr.mxu0 0.0
        %6433 = vmatpush1.msra.mxu0 0.0
        %6434 = vmatprep.subr.mxu0 0.0
        %6435 = vmatpush1.msra.mxu0 0.0
        %6436 = vmatprep.subr.mxu0 0.0
        %6437 = vmatpush1.msra.mxu0 0.0
        %6438 = vmatprep.subr.mxu0 0.0
        %6439 = vmatpush1.msra.mxu0 0.0
        %6440 = vmatprep.subr.mxu0 0.0
        %6441 = vmatpush1.msra.mxu0 0.0
        %6442 = vmatprep.subr.mxu0 0.0
        %6443 = vmatpush1.msra.mxu0 0.0
        %6444 = vmatprep.subr.mxu0 0.0
        %6445 = vmatpush1.msra.mxu0 0.0
        %6446 = vmatprep.subr.mxu0 %v1919
        %6447 = vmatpush1.msra.mxu0 %v1918
        %6448 = vmatprep.subr.mxu0 %v1917
        %6449 = vmatpush1.msra.mxu0 %v1916
        %6450 = vmatprep.subr.mxu0 %v1915
        %6451 = vmatpush1.msra.mxu0 %v1914
        %6452 = vmatprep.subr.mxu0 %v1913
        %6453 = vmatpush1.msra.mxu0 %v1912
        %6454 = vmatprep.subr.mxu0 %v1911
        %6455 = vmatpush1.msra.mxu0 %v1910
        %6456 = vmatprep.subr.mxu0 %v1909
        %6457 = vmatpush1.msra.mxu0 %v1908
        %6458 = vmatprep.subr.mxu0 %v1907
        %6459 = vmatpush1.msra.mxu0 %v1906
        %6460 = vmatprep.subr.mxu0 %v1905
        %6461 = vmatpush1.msra.mxu0 %v1904
        %6462 = vmatprep.subr.mxu0 0.0
        %6463 = vmatpush2.msra.mxu0 0.0
        %6464 = vmatprep.subr.mxu0 0.0
        %6465 = vmatpush2.msra.mxu0 0.0
        %6466 = vmatprep.subr.mxu0 0.0
        %6467 = vmatpush2.msra.mxu0 0.0
        %6468 = vmatprep.subr.mxu0 0.0
        %6469 = vmatpush2.msra.mxu0 0.0
        %6470 = vmatprep.subr.mxu0 0.0
        %6471 = vmatpush2.msra.mxu0 0.0
        %6472 = vmatprep.subr.mxu0 0.0
        %6473 = vmatpush2.msra.mxu0 0.0
        %6474 = vmatprep.subr.mxu0 0.0
        %6475 = vmatpush2.msra.mxu0 0.0
        %6476 = vmatprep.subr.mxu0 0.0
        %6477 = vmatpush2.msra.mxu0 0.0
        %6478 = vmatprep.subr.mxu0 0.0
        %6479 = vmatpush2.msra.mxu0 0.0
        %6480 = vmatprep.subr.mxu0 0.0
        %6481 = vmatpush2.msra.mxu0 0.0
        %6482 = vmatprep.subr.mxu0 0.0
        %6483 = vmatpush2.msra.mxu0 0.0
        %6484 = vmatprep.subr.mxu0 0.0
        %6485 = vmatpush2.msra.mxu0 0.0
        %6486 = vmatprep.subr.mxu0 0.0
        %6487 = vmatpush2.msra.mxu0 0.0
        %6488 = vmatprep.subr.mxu0 0.0
        %6489 = vmatpush2.msra.mxu0 0.0
        %6490 = vmatprep.subr.mxu0 0.0
        %6491 = vmatpush2.msra.mxu0 0.0
        %6492 = vmatprep.subr.mxu0 0.0
        %6493 = vmatpush2.msra.mxu0 0.0
        %6494 = vmatprep.mubr.f32.mxu0 0.0
        %6495 = vmatmul.mubr.f32.gmra.mxu0 %v6398
        %v6496 = vpop.f32.mrf.mxu0
        %v6497 = vadd.f32 0.0, %v6496
        %v6498 = vpop.f32.mrf.mxu0
        %v6499 = vadd.f32 0.0, %v6498
        %6500 = vmatprep.mubr.f32.mxu0 0.0
        %6501 = vmatmul.mubr.f32.gmra.mxu0 %v6400
        %v6502 = vpop.f32.mrf.mxu0
        %v6503 = vadd.f32 0.0, %v6502
        %v6504 = vpop.f32.mrf.mxu0
        %v6505 = vadd.f32 0.0, %v6504
        %6506 = vmatprep.mubr.f32.mxu0 0.0
        %6507 = vmatmul.mubr.f32.gmra.mxu0 %v6402
        %v6508 = vpop.f32.mrf.mxu0
        %v6509 = vadd.f32 0.0, %v6508
        %v6510 = vpop.f32.mrf.mxu0
        %v6511 = vadd.f32 0.0, %v6510
        %6512 = vmatprep.mubr.f32.mxu0 0.0
        %6513 = vmatmul.mubr.f32.gmra.mxu0 %v6404
        %v6514 = vpop.f32.mrf.mxu0
        %v6515 = vadd.f32 0.0, %v6514
        %v6516 = vpop.f32.mrf.mxu0
        %v6517 = vadd.f32 0.0, %v6516
        %6518 = vmatprep.mubr.f32.mxu0 0.0
        %6519 = vmatmul.mubr.f32.gmra.mxu0 %v6406
        %v6520 = vpop.f32.mrf.mxu0
        %v6521 = vadd.f32 0.0, %v6520
        %v6522 = vpop.f32.mrf.mxu0
        %v6523 = vadd.f32 0.0, %v6522
        %6524 = vmatprep.mubr.f32.mxu0 0.0
        %6525 = vmatmul.mubr.f32.gmra.mxu0 %v6408
        %v6526 = vpop.f32.mrf.mxu0
        %v6527 = vadd.f32 0.0, %v6526
        %v6528 = vpop.f32.mrf.mxu0
        %v6529 = vadd.f32 0.0, %v6528
        %6530 = vmatprep.mubr.f32.mxu0 0.0
        %6531 = vmatmul.mubr.f32.gmra.mxu0 %v6410
        %v6532 = vpop.f32.mrf.mxu0
        %v6533 = vadd.f32 0.0, %v6532
        %v6534 = vpop.f32.mrf.mxu0
        %v6535 = vadd.f32 0.0, %v6534
        %6536 = vmatprep.mubr.f32.mxu0 0.0
        %6537 = vmatmul.mubr.f32.gmra.mxu0 %v6412
        %v6538 = vpop.f32.mrf.mxu0
        %v6539 = vadd.f32 0.0, %v6538
        %v6540 = vpop.f32.mrf.mxu0
        %v6541 = vadd.f32 0.0, %v6540
        %6542 = vmatprep.mubr.f32.mxu0 0.0
        %6543 = vmatmul.mubr.f32.gmra.mxu0 %v6414
        %v6544 = vpop.f32.mrf.mxu0
        %v6545 = vadd.f32 0.0, %v6544
        %v6546 = vpop.f32.mrf.mxu0
        %v6547 = vadd.f32 0.0, %v6546
        %6548 = vmatprep.mubr.f32.mxu0 0.0
        %6549 = vmatmul.mubr.f32.gmra.mxu0 %v6416
        %v6550 = vpop.f32.mrf.mxu0
        %v6551 = vadd.f32 0.0, %v6550
        %v6552 = vpop.f32.mrf.mxu0
        %v6553 = vadd.f32 0.0, %v6552
        %6554 = vmatprep.mubr.f32.mxu0 0.0
        %6555 = vmatmul.mubr.f32.gmra.mxu0 %v6418
        %v6556 = vpop.f32.mrf.mxu0
        %v6557 = vadd.f32 0.0, %v6556
        %v6558 = vpop.f32.mrf.mxu0
        %v6559 = vadd.f32 0.0, %v6558
        %6560 = vmatprep.mubr.f32.mxu0 0.0
        %6561 = vmatmul.mubr.f32.gmra.mxu0 %v6420
        %v6562 = vpop.f32.mrf.mxu0
        %v6563 = vadd.f32 0.0, %v6562
        %v6564 = vpop.f32.mrf.mxu0
        %v6565 = vadd.f32 0.0, %v6564
        %6566 = vmatprep.mubr.f32.mxu0 0.0
        %6567 = vmatmul.mubr.f32.gmra.mxu0 %v6422
        %v6568 = vpop.f32.mrf.mxu0
        %v6569 = vadd.f32 0.0, %v6568
        %v6570 = vpop.f32.mrf.mxu0
        %v6571 = vadd.f32 0.0, %v6570
        %6572 = vmatprep.mubr.f32.mxu0 0.0
        %6573 = vmatmul.mubr.f32.gmra.mxu0 %v6424
        %v6574 = vpop.f32.mrf.mxu0
        %v6575 = vadd.f32 0.0, %v6574
        %v6576 = vpop.f32.mrf.mxu0
        %v6577 = vadd.f32 0.0, %v6576
        %6578 = vmatprep.mubr.f32.mxu0 0.0
        %6579 = vmatmul.mubr.f32.gmra.mxu0 %v6426
        %v6580 = vpop.f32.mrf.mxu0
        %v6581 = vadd.f32 0.0, %v6580
        %v6582 = vpop.f32.mrf.mxu0
        %v6583 = vadd.f32 0.0, %v6582
        %6584 = vmatprep.mubr.f32.mxu0 0.0
        %6585 = vmatmul.mubr.f32.gmra.mxu0 %v6428
        %v6586 = vpop.f32.mrf.mxu0
        %v6587 = vadd.f32 0.0, %v6586
        %v6588 = vpop.f32.mrf.mxu0
        %v6589 = vadd.f32 0.0, %v6588
        %6590 = vdwg.mxu0
        %v6591 = vadd.f32 %v6366, %v6497
        %v6592 = vadd.f32 %v6368, %v6503
        %v6593 = vadd.f32 %v6370, %v6509
        %v6594 = vadd.f32 %v6372, %v6515
        %v6595 = vadd.f32 %v6374, %v6521
        %v6596 = vadd.f32 %v6376, %v6527
        %v6597 = vadd.f32 %v6378, %v6533
        %v6598 = vadd.f32 %v6380, %v6539
        %v6599 = vadd.f32 %v6382, %v6545
        %v6600 = vadd.f32 %v6384, %v6551
        %v6601 = vadd.f32 %v6386, %v6557
        %v6602 = vadd.f32 %v6388, %v6563
        %v6603 = vadd.f32 %v6390, %v6569
        %v6604 = vadd.f32 %v6392, %v6575
        %v6605 = vadd.f32 %v6394, %v6581
        %v6606 = vadd.f32 %v6396, %v6587
        %v6607 = vxor.u32 %v6591, 2147483648
        %v6608 = vxor.u32 %v6592, 2147483648
        %v6609 = vxor.u32 %v6593, 2147483648
        %v6610 = vxor.u32 %v6594, 2147483648
        %v6611 = vxor.u32 %v6595, 2147483648
        %v6612 = vxor.u32 %v6596, 2147483648
        %v6613 = vxor.u32 %v6597, 2147483648
        %v6614 = vxor.u32 %v6598, 2147483648
        %v6615 = vxor.u32 %v6599, 2147483648
        %v6616 = vxor.u32 %v6600, 2147483648
        %v6617 = vxor.u32 %v6601, 2147483648
        %v6618 = vxor.u32 %v6602, 2147483648
        %v6619 = vxor.u32 %v6603, 2147483648
        %v6620 = vxor.u32 %v6604, 2147483648
        %v6621 = vxor.u32 %v6605, 2147483648
        %v6622 = vxor.u32 %v6606, 2147483648
        %v6623 = vmul.f32 %v6607, 1.442695
        %v6624 = vpow.pop %v6623
        %v6625 = vmul.f32 %v6608, 1.442695
        %v6626 = vpow.pop %v6625
        %v6627 = vmul.f32 %v6609, 1.442695
        %v6628 = vpow.pop %v6627
        %v6629 = vmul.f32 %v6610, 1.442695
        %v6630 = vpow.pop %v6629
        %v6631 = vmul.f32 %v6611, 1.442695
        %v6632 = vpow.pop %v6631
        %v6633 = vmul.f32 %v6612, 1.442695
        %v6634 = vpow.pop %v6633
        %v6635 = vmul.f32 %v6613, 1.442695
        %v6636 = vpow.pop %v6635
        %v6637 = vmul.f32 %v6614, 1.442695
        %v6638 = vpow.pop %v6637
        %v6639 = vmul.f32 %v6615, 1.442695
        %v6640 = vpow.pop %v6639
        %v6641 = vmul.f32 %v6616, 1.442695
        %v6642 = vpow.pop %v6641
        %v6643 = vmul.f32 %v6617, 1.442695
        %v6644 = vpow.pop %v6643
        %v6645 = vmul.f32 %v6618, 1.442695
        %v6646 = vpow.pop %v6645
        %v6647 = vmul.f32 %v6619, 1.442695
        %v6648 = vpow.pop %v6647
        %v6649 = vmul.f32 %v6620, 1.442695
        %v6650 = vpow.pop %v6649
        %v6651 = vmul.f32 %v6621, 1.442695
        %v6652 = vpow.pop %v6651
        %v6653 = vmul.f32 %v6622, 1.442695
        %v6654 = vpow.pop %v6653
        %v6655 = vadd.f32 %v6624, 1.0
        %v6656 = vadd.f32 %v6626, 1.0
        %v6657 = vadd.f32 %v6628, 1.0
        %v6658 = vadd.f32 %v6630, 1.0
        %v6659 = vadd.f32 %v6632, 1.0
        %v6660 = vadd.f32 %v6634, 1.0
        %v6661 = vadd.f32 %v6636, 1.0
        %v6662 = vadd.f32 %v6638, 1.0
        %v6663 = vadd.f32 %v6640, 1.0
        %v6664 = vadd.f32 %v6642, 1.0
        %v6665 = vadd.f32 %v6644, 1.0
        %v6666 = vadd.f32 %v6646, 1.0
        %v6667 = vadd.f32 %v6648, 1.0
        %v6668 = vadd.f32 %v6650, 1.0
        %v6669 = vadd.f32 %v6652, 1.0
        %v6670 = vadd.f32 %v6654, 1.0
        %v6671 = vrcp.pop %v6655
        %v6672 = vmul.f32 1.0, %v6671
        %v6673 = vrcp.pop %v6656
        %v6674 = vmul.f32 1.0, %v6673
        %v6675 = vrcp.pop %v6657
        %v6676 = vmul.f32 1.0, %v6675
        %v6677 = vrcp.pop %v6658
        %v6678 = vmul.f32 1.0, %v6677
        %v6679 = vrcp.pop %v6659
        %v6680 = vmul.f32 1.0, %v6679
        %v6681 = vrcp.pop %v6660
        %v6682 = vmul.f32 1.0, %v6681
        %v6683 = vrcp.pop %v6661
        %v6684 = vmul.f32 1.0, %v6683
        %v6685 = vrcp.pop %v6662
        %v6686 = vmul.f32 1.0, %v6685
        %v6687 = vrcp.pop %v6663
        %v6688 = vmul.f32 1.0, %v6687
        %v6689 = vrcp.pop %v6664
        %v6690 = vmul.f32 1.0, %v6689
        %v6691 = vrcp.pop %v6665
        %v6692 = vmul.f32 1.0, %v6691
        %v6693 = vrcp.pop %v6666
        %v6694 = vmul.f32 1.0, %v6693
        %v6695 = vrcp.pop %v6667
        %v6696 = vmul.f32 1.0, %v6695
        %v6697 = vrcp.pop %v6668
        %v6698 = vmul.f32 1.0, %v6697
        %v6699 = vrcp.pop %v6669
        %v6700 = vmul.f32 1.0, %v6699
        %v6701 = vrcp.pop %v6670
        %v6702 = vmul.f32 1.0, %v6701
        %v6703 = vadd.f32 %v6499, %v1957
        %v6704 = vadd.f32 %v6505, %v1957
        %v6705 = vadd.f32 %v6511, %v1957
        %v6706 = vadd.f32 %v6517, %v1957
        %v6707 = vadd.f32 %v6523, %v1957
        %v6708 = vadd.f32 %v6529, %v1957
        %v6709 = vadd.f32 %v6535, %v1957
        %v6710 = vadd.f32 %v6541, %v1957
        %v6711 = vadd.f32 %v6547, %v1957
        %v6712 = vadd.f32 %v6553, %v1957
        %v6713 = vadd.f32 %v6559, %v1957
        %v6714 = vadd.f32 %v6565, %v1957
        %v6715 = vadd.f32 %v6571, %v1957
        %v6716 = vadd.f32 %v6577, %v1957
        %v6717 = vadd.f32 %v6583, %v1957
        %v6718 = vadd.f32 %v6589, %v1957
        %v6719 = vmul.f32 %v6672, %v6703
        %v6720 = vmul.f32 %v6674, %v6704
        %v6721 = vmul.f32 %v6676, %v6705
        %v6722 = vmul.f32 %v6678, %v6706
        %v6723 = vmul.f32 %v6680, %v6707
        %v6724 = vmul.f32 %v6682, %v6708
        %v6725 = vmul.f32 %v6684, %v6709
        %v6726 = vmul.f32 %v6686, %v6710
        %v6727 = vmul.f32 %v6688, %v6711
        %v6728 = vmul.f32 %v6690, %v6712
        %v6729 = vmul.f32 %v6692, %v6713
        %v6730 = vmul.f32 %v6694, %v6714
        %v6731 = vmul.f32 %v6696, %v6715
        %v6732 = vmul.f32 %v6698, %v6716
        %v6733 = vmul.f32 %v6700, %v6717
        %v6734 = vmul.f32 %v6702, %v6718
        %v6735 = vadd.f32 %v6367, %v6719
        %v6736 = vadd.f32 %v6369, %v6720
        %v6737 = vadd.f32 %v6371, %v6721
        %v6738 = vadd.f32 %v6373, %v6722
        %v6739 = vadd.f32 %v6375, %v6723
        %v6740 = vadd.f32 %v6377, %v6724
        %v6741 = vadd.f32 %v6379, %v6725
        %v6742 = vadd.f32 %v6381, %v6726
        %v6743 = vadd.f32 %v6383, %v6727
        %v6744 = vadd.f32 %v6385, %v6728
        %v6745 = vadd.f32 %v6387, %v6729
        %v6746 = vadd.f32 %v6389, %v6730
        %v6747 = vadd.f32 %v6391, %v6731
        %v6748 = vadd.f32 %v6393, %v6732
        %v6749 = vadd.f32 %v6395, %v6733
        %v6750 = vadd.f32 %v6397, %v6734
        %v6751 = vtanh.pop %v6735
        %v6752 = vtanh.pop %v6736
        %v6753 = vtanh.pop %v6737
        %v6754 = vtanh.pop %v6738
        %v6755 = vtanh.pop %v6739
        %v6756 = vtanh.pop %v6740
        %v6757 = vtanh.pop %v6741
        %v6758 = vtanh.pop %v6742
        %v6759 = vtanh.pop %v6743
        %v6760 = vtanh.pop %v6744
        %v6761 = vtanh.pop %v6745
        %v6762 = vtanh.pop %v6746
        %v6763 = vtanh.pop %v6747
        %v6764 = vtanh.pop %v6748
        %v6765 = vtanh.pop %v6749
        %v6766 = vtanh.pop %v6750
        %v6767 = vsub.f32 1.0, %v6672
        %v6768 = vsub.f32 1.0, %v6674
        %v6769 = vsub.f32 1.0, %v6676
        %v6770 = vsub.f32 1.0, %v6678
        %v6771 = vsub.f32 1.0, %v6680
        %v6772 = vsub.f32 1.0, %v6682
        %v6773 = vsub.f32 1.0, %v6684
        %v6774 = vsub.f32 1.0, %v6686
        %v6775 = vsub.f32 1.0, %v6688
        %v6776 = vsub.f32 1.0, %v6690
        %v6777 = vsub.f32 1.0, %v6692
        %v6778 = vsub.f32 1.0, %v6694
        %v6779 = vsub.f32 1.0, %v6696
        %v6780 = vsub.f32 1.0, %v6698
        %v6781 = vsub.f32 1.0, %v6700
        %v6782 = vsub.f32 1.0, %v6702
        %6799 = vrot.lane.b32.xlu0 %v6751, 64
        %v6800 = vpop.permute.xlu0 %6799
        %6801 = vrot.lane.b32.xlu0 %v6752, 64
        %v6802 = vpop.permute.xlu0 %6801
        %6803 = vrot.lane.b32.xlu0 %v6753, 64
        %v6804 = vpop.permute.xlu0 %6803
        %6805 = vrot.lane.b32.xlu0 %v6754, 64
        %v6806 = vpop.permute.xlu0 %6805
        %6807 = vrot.lane.b32.xlu0 %v6755, 64
        %v6808 = vpop.permute.xlu0 %6807
        %6809 = vrot.lane.b32.xlu0 %v6756, 64
        %v6810 = vpop.permute.xlu0 %6809
        %6811 = vrot.lane.b32.xlu0 %v6757, 64
        %v6812 = vpop.permute.xlu0 %6811
        %6813 = vrot.lane.b32.xlu0 %v6758, 64
        %v6814 = vpop.permute.xlu0 %6813
        %6815 = vrot.lane.b32.xlu0 %v6759, 64
        %v6816 = vpop.permute.xlu0 %6815
        %6817 = vrot.lane.b32.xlu0 %v6760, 64
        %v6818 = vpop.permute.xlu0 %6817
        %6819 = vrot.lane.b32.xlu0 %v6761, 64
        %v6820 = vpop.permute.xlu0 %6819
        %6821 = vrot.lane.b32.xlu0 %v6762, 64
        %v6822 = vpop.permute.xlu0 %6821
        %6823 = vrot.lane.b32.xlu0 %v6763, 64
        %v6824 = vpop.permute.xlu0 %6823
        %6825 = vrot.lane.b32.xlu0 %v6764, 64
        %v6826 = vpop.permute.xlu0 %6825
        %6827 = vrot.lane.b32.xlu0 %v6765, 64
        %v6828 = vpop.permute.xlu0 %6827
        %6829 = vrot.lane.b32.xlu0 %v6766, 64
        %v6830 = vpop.permute.xlu0 %6829
        %v6847 = vmul.f32 %v6767, %v6800
        %v6848 = vmul.f32 %v6768, %v6802
        %v6849 = vmul.f32 %v6769, %v6804
        %v6850 = vmul.f32 %v6770, %v6806
        %v6851 = vmul.f32 %v6771, %v6808
        %v6852 = vmul.f32 %v6772, %v6810
        %v6853 = vmul.f32 %v6773, %v6812
        %v6854 = vmul.f32 %v6774, %v6814
        %v6855 = vmul.f32 %v6775, %v6816
        %v6856 = vmul.f32 %v6776, %v6818
        %v6857 = vmul.f32 %v6777, %v6820
        %v6858 = vmul.f32 %v6778, %v6822
        %v6859 = vmul.f32 %v6779, %v6824
        %v6860 = vmul.f32 %v6780, %v6826
        %v6861 = vmul.f32 %v6781, %v6828
        %v6862 = vmul.f32 %v6782, %v6830
        %v6863 = vmul.f32 %v6672, %v5773
        %v6864 = vmul.f32 %v6674, %v5774
        %v6865 = vmul.f32 %v6676, %v5775
        %v6866 = vmul.f32 %v6678, %v5776
        %v6867 = vmul.f32 %v6680, %v5777
        %v6868 = vmul.f32 %v6682, %v5778
        %v6869 = vmul.f32 %v6684, %v5779
        %v6870 = vmul.f32 %v6686, %v5780
        %v6871 = vmul.f32 %v6688, %v5781
        %v6872 = vmul.f32 %v6690, %v5782
        %v6873 = vmul.f32 %v6692, %v5783
        %v6874 = vmul.f32 %v6694, %v5784
        %v6875 = vmul.f32 %v6696, %v5785
        %v6876 = vmul.f32 %v6698, %v5786
        %v6877 = vmul.f32 %v6700, %v5787
        %v6878 = vmul.f32 %v6702, %v5788
        %v6879 = vadd.f32 %v6847, %v6863
        %v6880 = vadd.f32 %v6848, %v6864
        %v6881 = vadd.f32 %v6849, %v6865
        %v6882 = vadd.f32 %v6850, %v6866
        %v6883 = vadd.f32 %v6851, %v6867
        %v6884 = vadd.f32 %v6852, %v6868
        %v6885 = vadd.f32 %v6853, %v6869
        %v6886 = vadd.f32 %v6854, %v6870
        %v6887 = vadd.f32 %v6855, %v6871
        %v6888 = vadd.f32 %v6856, %v6872
        %v6889 = vadd.f32 %v6857, %v6873
        %v6890 = vadd.f32 %v6858, %v6874
        %v6891 = vadd.f32 %v6859, %v6875
        %v6892 = vadd.f32 %v6860, %v6876
        %v6893 = vadd.f32 %v6861, %v6877
        %v6894 = vadd.f32 %v6862, %v6878
        %6911 = vrot.lane.b32.xlu0 %v6879, 64
        %v6912 = vpop.permute.xlu0 %6911
        %6913 = vrot.lane.b32.xlu0 %v6880, 64
        %v6914 = vpop.permute.xlu0 %6913
        %6915 = vrot.lane.b32.xlu0 %v6881, 64
        %v6916 = vpop.permute.xlu0 %6915
        %6917 = vrot.lane.b32.xlu0 %v6882, 64
        %v6918 = vpop.permute.xlu0 %6917
        %6919 = vrot.lane.b32.xlu0 %v6883, 64
        %v6920 = vpop.permute.xlu0 %6919
        %6921 = vrot.lane.b32.xlu0 %v6884, 64
        %v6922 = vpop.permute.xlu0 %6921
        %6923 = vrot.lane.b32.xlu0 %v6885, 64
        %v6924 = vpop.permute.xlu0 %6923
        %6925 = vrot.lane.b32.xlu0 %v6886, 64
        %v6926 = vpop.permute.xlu0 %6925
        %6927 = vrot.lane.b32.xlu0 %v6887, 64
        %v6928 = vpop.permute.xlu0 %6927
        %6929 = vrot.lane.b32.xlu0 %v6888, 64
        %v6930 = vpop.permute.xlu0 %6929
        %6931 = vrot.lane.b32.xlu0 %v6889, 64
        %v6932 = vpop.permute.xlu0 %6931
        %6933 = vrot.lane.b32.xlu0 %v6890, 64
        %v6934 = vpop.permute.xlu0 %6933
        %6935 = vrot.lane.b32.xlu0 %v6891, 64
        %v6936 = vpop.permute.xlu0 %6935
        %6937 = vrot.lane.b32.xlu0 %v6892, 64
        %v6938 = vpop.permute.xlu0 %6937
        %6939 = vrot.lane.b32.xlu0 %v6893, 64
        %v6940 = vpop.permute.xlu0 %6939
        %6941 = vrot.lane.b32.xlu0 %v6894, 64
        %v6942 = vpop.permute.xlu0 %6941
        %v6959 = vsel %vm1648, %v6912, %v6350
        %v6960 = vsel %vm1648, %v6914, %v6351
        %v6961 = vsel %vm1648, %v6916, %v6352
        %v6962 = vsel %vm1648, %v6918, %v6353
        %v6963 = vsel %vm1648, %v6920, %v6354
        %v6964 = vsel %vm1648, %v6922, %v6355
        %v6965 = vsel %vm1648, %v6924, %v6356
        %v6966 = vsel %vm1648, %v6926, %v6357
        %v6967 = vsel %vm1648, %v6928, %v6358
        %v6968 = vsel %vm1648, %v6930, %v6359
        %v6969 = vsel %vm1648, %v6932, %v6360
        %v6970 = vsel %vm1648, %v6934, %v6361
        %v6971 = vsel %vm1648, %v6936, %v6362
        %v6972 = vsel %vm1648, %v6938, %v6363
        %v6973 = vsel %vm1648, %v6940, %v6364
        %v6974 = vsel %vm1648, %v6942, %v6365
        %6975 = vmatprep.subr.mxu0 %v1951
        %6976 = vmatpush1.msra.mxu0 %v1950
        %6977 = vmatprep.subr.mxu0 %v1949
        %6978 = vmatpush1.msra.mxu0 %v1948
        %6979 = vmatprep.subr.mxu0 %v1947
        %6980 = vmatpush1.msra.mxu0 %v1946
        %6981 = vmatprep.subr.mxu0 %v1945
        %6982 = vmatpush1.msra.mxu0 %v1944
        %6983 = vmatprep.subr.mxu0 %v1943
        %6984 = vmatpush1.msra.mxu0 %v1942
        %6985 = vmatprep.subr.mxu0 %v1941
        %6986 = vmatpush1.msra.mxu0 %v1940
        %6987 = vmatprep.subr.mxu0 %v1939
        %6988 = vmatpush1.msra.mxu0 %v1938
        %6989 = vmatprep.subr.mxu0 %v1937
        %6990 = vmatpush1.msra.mxu0 %v1936
        %6991 = vmatprep.subr.mxu0 %v1935
        %6992 = vmatpush1.msra.mxu0 %v1934
        %6993 = vmatprep.subr.mxu0 %v1933
        %6994 = vmatpush1.msra.mxu0 %v1932
        %6995 = vmatprep.subr.mxu0 %v1931
        %6996 = vmatpush1.msra.mxu0 %v1930
        %6997 = vmatprep.subr.mxu0 %v1929
        %6998 = vmatpush1.msra.mxu0 %v1928
        %6999 = vmatprep.subr.mxu0 %v1927
        %7000 = vmatpush1.msra.mxu0 %v1926
        %7001 = vmatprep.subr.mxu0 %v1925
        %7002 = vmatpush1.msra.mxu0 %v1924
        %7003 = vmatprep.subr.mxu0 %v1923
        %7004 = vmatpush1.msra.mxu0 %v1922
        %7005 = vmatprep.subr.mxu0 %v1921
        %7006 = vmatpush1.msra.mxu0 %v1920
        %7007 = vmatprep.subr.mxu0 0.0
        %7008 = vmatpush2.msra.mxu0 0.0
        %7009 = vmatprep.subr.mxu0 0.0
        %7010 = vmatpush2.msra.mxu0 0.0
        %7011 = vmatprep.subr.mxu0 0.0
        %7012 = vmatpush2.msra.mxu0 0.0
        %7013 = vmatprep.subr.mxu0 0.0
        %7014 = vmatpush2.msra.mxu0 0.0
        %7015 = vmatprep.subr.mxu0 0.0
        %7016 = vmatpush2.msra.mxu0 0.0
        %7017 = vmatprep.subr.mxu0 0.0
        %7018 = vmatpush2.msra.mxu0 0.0
        %7019 = vmatprep.subr.mxu0 0.0
        %7020 = vmatpush2.msra.mxu0 0.0
        %7021 = vmatprep.subr.mxu0 0.0
        %7022 = vmatpush2.msra.mxu0 0.0
        %7023 = vmatprep.subr.mxu0 0.0
        %7024 = vmatpush2.msra.mxu0 0.0
        %7025 = vmatprep.subr.mxu0 0.0
        %7026 = vmatpush2.msra.mxu0 0.0
        %7027 = vmatprep.subr.mxu0 0.0
        %7028 = vmatpush2.msra.mxu0 0.0
        %7029 = vmatprep.subr.mxu0 0.0
        %7030 = vmatpush2.msra.mxu0 0.0
        %7031 = vmatprep.subr.mxu0 0.0
        %7032 = vmatpush2.msra.mxu0 0.0
        %7033 = vmatprep.subr.mxu0 0.0
        %7034 = vmatpush2.msra.mxu0 0.0
        %7035 = vmatprep.subr.mxu0 0.0
        %7036 = vmatpush2.msra.mxu0 0.0
        %7037 = vmatprep.subr.mxu0 0.0
        %7038 = vmatpush2.msra.mxu0 0.0
        %7039 = vmatprep.mubr.f32.mxu0 0.0
        %7040 = vmatmul.mubr.f32.gmra.mxu0 %v6959
        %v7041 = vpop.f32.mrf.mxu0
        %v7042 = vadd.f32 %v1964, %v7041
        %v7043 = vpop.f32.mrf.mxu0
        %v7044 = vadd.f32 %v1968, %v7043
        %7045 = vmatprep.mubr.f32.mxu0 0.0
        %7046 = vmatmul.mubr.f32.gmra.mxu0 %v6960
        %v7047 = vpop.f32.mrf.mxu0
        %v7048 = vadd.f32 %v1964, %v7047
        %v7049 = vpop.f32.mrf.mxu0
        %v7050 = vadd.f32 %v1968, %v7049
        %7051 = vmatprep.mubr.f32.mxu0 0.0
        %7052 = vmatmul.mubr.f32.gmra.mxu0 %v6961
        %v7053 = vpop.f32.mrf.mxu0
        %v7054 = vadd.f32 %v1964, %v7053
        %v7055 = vpop.f32.mrf.mxu0
        %v7056 = vadd.f32 %v1968, %v7055
        %7057 = vmatprep.mubr.f32.mxu0 0.0
        %7058 = vmatmul.mubr.f32.gmra.mxu0 %v6962
        %v7059 = vpop.f32.mrf.mxu0
        %v7060 = vadd.f32 %v1964, %v7059
        %v7061 = vpop.f32.mrf.mxu0
        %v7062 = vadd.f32 %v1968, %v7061
        %7063 = vmatprep.mubr.f32.mxu0 0.0
        %7064 = vmatmul.mubr.f32.gmra.mxu0 %v6963
        %v7065 = vpop.f32.mrf.mxu0
        %v7066 = vadd.f32 %v1964, %v7065
        %v7067 = vpop.f32.mrf.mxu0
        %v7068 = vadd.f32 %v1968, %v7067
        %7069 = vmatprep.mubr.f32.mxu0 0.0
        %7070 = vmatmul.mubr.f32.gmra.mxu0 %v6964
        %v7071 = vpop.f32.mrf.mxu0
        %v7072 = vadd.f32 %v1964, %v7071
        %v7073 = vpop.f32.mrf.mxu0
        %v7074 = vadd.f32 %v1968, %v7073
        %7075 = vmatprep.mubr.f32.mxu0 0.0
        %7076 = vmatmul.mubr.f32.gmra.mxu0 %v6965
        %v7077 = vpop.f32.mrf.mxu0
        %v7078 = vadd.f32 %v1964, %v7077
        %v7079 = vpop.f32.mrf.mxu0
        %v7080 = vadd.f32 %v1968, %v7079
        %7081 = vmatprep.mubr.f32.mxu0 0.0
        %7082 = vmatmul.mubr.f32.gmra.mxu0 %v6966
        %v7083 = vpop.f32.mrf.mxu0
        %v7084 = vadd.f32 %v1964, %v7083
        %v7085 = vpop.f32.mrf.mxu0
        %v7086 = vadd.f32 %v1968, %v7085
        %7087 = vmatprep.mubr.f32.mxu0 0.0
        %7088 = vmatmul.mubr.f32.gmra.mxu0 %v6967
        %v7089 = vpop.f32.mrf.mxu0
        %v7090 = vadd.f32 %v1964, %v7089
        %v7091 = vpop.f32.mrf.mxu0
        %v7092 = vadd.f32 %v1968, %v7091
        %7093 = vmatprep.mubr.f32.mxu0 0.0
        %7094 = vmatmul.mubr.f32.gmra.mxu0 %v6968
        %v7095 = vpop.f32.mrf.mxu0
        %v7096 = vadd.f32 %v1964, %v7095
        %v7097 = vpop.f32.mrf.mxu0
        %v7098 = vadd.f32 %v1968, %v7097
        %7099 = vmatprep.mubr.f32.mxu0 0.0
        %7100 = vmatmul.mubr.f32.gmra.mxu0 %v6969
        %v7101 = vpop.f32.mrf.mxu0
        %v7102 = vadd.f32 %v1964, %v7101
        %v7103 = vpop.f32.mrf.mxu0
        %v7104 = vadd.f32 %v1968, %v7103
        %7105 = vmatprep.mubr.f32.mxu0 0.0
        %7106 = vmatmul.mubr.f32.gmra.mxu0 %v6970
        %v7107 = vpop.f32.mrf.mxu0
        %v7108 = vadd.f32 %v1964, %v7107
        %v7109 = vpop.f32.mrf.mxu0
        %v7110 = vadd.f32 %v1968, %v7109
        %7111 = vmatprep.mubr.f32.mxu0 0.0
        %7112 = vmatmul.mubr.f32.gmra.mxu0 %v6971
        %v7113 = vpop.f32.mrf.mxu0
        %v7114 = vadd.f32 %v1964, %v7113
        %v7115 = vpop.f32.mrf.mxu0
        %v7116 = vadd.f32 %v1968, %v7115
        %7117 = vmatprep.mubr.f32.mxu0 0.0
        %7118 = vmatmul.mubr.f32.gmra.mxu0 %v6972
        %v7119 = vpop.f32.mrf.mxu0
        %v7120 = vadd.f32 %v1964, %v7119
        %v7121 = vpop.f32.mrf.mxu0
        %v7122 = vadd.f32 %v1968, %v7121
        %7123 = vmatprep.mubr.f32.mxu0 0.0
        %7124 = vmatmul.mubr.f32.gmra.mxu0 %v6973
        %v7125 = vpop.f32.mrf.mxu0
        %v7126 = vadd.f32 %v1964, %v7125
        %v7127 = vpop.f32.mrf.mxu0
        %v7128 = vadd.f32 %v1968, %v7127
        %7129 = vmatprep.mubr.f32.mxu0 0.0
        %7130 = vmatmul.mubr.f32.gmra.mxu0 %v6974
        %v7131 = vpop.f32.mrf.mxu0
        %v7132 = vadd.f32 %v1964, %v7131
        %v7133 = vpop.f32.mrf.mxu0
        %v7134 = vadd.f32 %v1968, %v7133
        %7135 = vdwg.mxu0
        %v7136 = vxor.u32 %v7042, 2147483648
        %v7137 = vxor.u32 %v7048, 2147483648
        %v7138 = vxor.u32 %v7054, 2147483648
        %v7139 = vxor.u32 %v7060, 2147483648
        %v7140 = vxor.u32 %v7066, 2147483648
        %v7141 = vxor.u32 %v7072, 2147483648
        %v7142 = vxor.u32 %v7078, 2147483648
        %v7143 = vxor.u32 %v7084, 2147483648
        %v7144 = vxor.u32 %v7090, 2147483648
        %v7145 = vxor.u32 %v7096, 2147483648
        %v7146 = vxor.u32 %v7102, 2147483648
        %v7147 = vxor.u32 %v7108, 2147483648
        %v7148 = vxor.u32 %v7114, 2147483648
        %v7149 = vxor.u32 %v7120, 2147483648
        %v7150 = vxor.u32 %v7126, 2147483648
        %v7151 = vxor.u32 %v7132, 2147483648
        %v7152 = vmul.f32 %v7136, 1.442695
        %v7153 = vpow.pop %v7152
        %v7154 = vmul.f32 %v7137, 1.442695
        %v7155 = vpow.pop %v7154
        %v7156 = vmul.f32 %v7138, 1.442695
        %v7157 = vpow.pop %v7156
        %v7158 = vmul.f32 %v7139, 1.442695
        %v7159 = vpow.pop %v7158
        %v7160 = vmul.f32 %v7140, 1.442695
        %v7161 = vpow.pop %v7160
        %v7162 = vmul.f32 %v7141, 1.442695
        %v7163 = vpow.pop %v7162
        %v7164 = vmul.f32 %v7142, 1.442695
        %v7165 = vpow.pop %v7164
        %v7166 = vmul.f32 %v7143, 1.442695
        %v7167 = vpow.pop %v7166
        %v7168 = vmul.f32 %v7144, 1.442695
        %v7169 = vpow.pop %v7168
        %v7170 = vmul.f32 %v7145, 1.442695
        %v7171 = vpow.pop %v7170
        %v7172 = vmul.f32 %v7146, 1.442695
        %v7173 = vpow.pop %v7172
        %v7174 = vmul.f32 %v7147, 1.442695
        %v7175 = vpow.pop %v7174
        %v7176 = vmul.f32 %v7148, 1.442695
        %v7177 = vpow.pop %v7176
        %v7178 = vmul.f32 %v7149, 1.442695
        %v7179 = vpow.pop %v7178
        %v7180 = vmul.f32 %v7150, 1.442695
        %v7181 = vpow.pop %v7180
        %v7182 = vmul.f32 %v7151, 1.442695
        %v7183 = vpow.pop %v7182
        %v7184 = vadd.f32 %v7153, 1.0
        %v7185 = vadd.f32 %v7155, 1.0
        %v7186 = vadd.f32 %v7157, 1.0
        %v7187 = vadd.f32 %v7159, 1.0
        %v7188 = vadd.f32 %v7161, 1.0
        %v7189 = vadd.f32 %v7163, 1.0
        %v7190 = vadd.f32 %v7165, 1.0
        %v7191 = vadd.f32 %v7167, 1.0
        %v7192 = vadd.f32 %v7169, 1.0
        %v7193 = vadd.f32 %v7171, 1.0
        %v7194 = vadd.f32 %v7173, 1.0
        %v7195 = vadd.f32 %v7175, 1.0
        %v7196 = vadd.f32 %v7177, 1.0
        %v7197 = vadd.f32 %v7179, 1.0
        %v7198 = vadd.f32 %v7181, 1.0
        %v7199 = vadd.f32 %v7183, 1.0
        %v7200 = vrcp.pop %v7184
        %v7201 = vmul.f32 1.0, %v7200
        %v7202 = vrcp.pop %v7185
        %v7203 = vmul.f32 1.0, %v7202
        %v7204 = vrcp.pop %v7186
        %v7205 = vmul.f32 1.0, %v7204
        %v7206 = vrcp.pop %v7187
        %v7207 = vmul.f32 1.0, %v7206
        %v7208 = vrcp.pop %v7188
        %v7209 = vmul.f32 1.0, %v7208
        %v7210 = vrcp.pop %v7189
        %v7211 = vmul.f32 1.0, %v7210
        %v7212 = vrcp.pop %v7190
        %v7213 = vmul.f32 1.0, %v7212
        %v7214 = vrcp.pop %v7191
        %v7215 = vmul.f32 1.0, %v7214
        %v7216 = vrcp.pop %v7192
        %v7217 = vmul.f32 1.0, %v7216
        %v7218 = vrcp.pop %v7193
        %v7219 = vmul.f32 1.0, %v7218
        %v7220 = vrcp.pop %v7194
        %v7221 = vmul.f32 1.0, %v7220
        %v7222 = vrcp.pop %v7195
        %v7223 = vmul.f32 1.0, %v7222
        %v7224 = vrcp.pop %v7196
        %v7225 = vmul.f32 1.0, %v7224
        %v7226 = vrcp.pop %v7197
        %v7227 = vmul.f32 1.0, %v7226
        %v7228 = vrcp.pop %v7198
        %v7229 = vmul.f32 1.0, %v7228
        %v7230 = vrcp.pop %v7199
        %v7231 = vmul.f32 1.0, %v7230
        %7248 = vrot.lane.b32.xlu0 %v7044, 64
        %v7249 = vpop.permute.xlu0 %7248
        %7250 = vrot.lane.b32.xlu0 %v7050, 64
        %v7251 = vpop.permute.xlu0 %7250
        %7252 = vrot.lane.b32.xlu0 %v7056, 64
        %v7253 = vpop.permute.xlu0 %7252
        %7254 = vrot.lane.b32.xlu0 %v7062, 64
        %v7255 = vpop.permute.xlu0 %7254
        %7256 = vrot.lane.b32.xlu0 %v7068, 64
        %v7257 = vpop.permute.xlu0 %7256
        %7258 = vrot.lane.b32.xlu0 %v7074, 64
        %v7259 = vpop.permute.xlu0 %7258
        %7260 = vrot.lane.b32.xlu0 %v7080, 64
        %v7261 = vpop.permute.xlu0 %7260
        %7262 = vrot.lane.b32.xlu0 %v7086, 64
        %v7263 = vpop.permute.xlu0 %7262
        %7264 = vrot.lane.b32.xlu0 %v7092, 64
        %v7265 = vpop.permute.xlu0 %7264
        %7266 = vrot.lane.b32.xlu0 %v7098, 64
        %v7267 = vpop.permute.xlu0 %7266
        %7268 = vrot.lane.b32.xlu0 %v7104, 64
        %v7269 = vpop.permute.xlu0 %7268
        %7270 = vrot.lane.b32.xlu0 %v7110, 64
        %v7271 = vpop.permute.xlu0 %7270
        %7272 = vrot.lane.b32.xlu0 %v7116, 64
        %v7273 = vpop.permute.xlu0 %7272
        %7274 = vrot.lane.b32.xlu0 %v7122, 64
        %v7275 = vpop.permute.xlu0 %7274
        %7276 = vrot.lane.b32.xlu0 %v7128, 64
        %v7277 = vpop.permute.xlu0 %7276
        %7278 = vrot.lane.b32.xlu0 %v7134, 64
        %v7279 = vpop.permute.xlu0 %7278
        %v7296 = vmul.f32 %v7201, %v7249
        %v7297 = vmul.f32 %v7203, %v7251
        %v7298 = vmul.f32 %v7205, %v7253
        %v7299 = vmul.f32 %v7207, %v7255
        %v7300 = vmul.f32 %v7209, %v7257
        %v7301 = vmul.f32 %v7211, %v7259
        %v7302 = vmul.f32 %v7213, %v7261
        %v7303 = vmul.f32 %v7215, %v7263
        %v7304 = vmul.f32 %v7217, %v7265
        %v7305 = vmul.f32 %v7219, %v7267
        %v7306 = vmul.f32 %v7221, %v7269
        %v7307 = vmul.f32 %v7223, %v7271
        %v7308 = vmul.f32 %v7225, %v7273
        %v7309 = vmul.f32 %v7227, %v7275
        %v7310 = vmul.f32 %v7229, %v7277
        %v7311 = vmul.f32 %v7231, %v7279
        %v7312 = vadd.f32 %v7044, %v7296
        %v7313 = vadd.f32 %v7050, %v7297
        %v7314 = vadd.f32 %v7056, %v7298
        %v7315 = vadd.f32 %v7062, %v7299
        %v7316 = vadd.f32 %v7068, %v7300
        %v7317 = vadd.f32 %v7074, %v7301
        %v7318 = vadd.f32 %v7080, %v7302
        %v7319 = vadd.f32 %v7086, %v7303
        %v7320 = vadd.f32 %v7092, %v7304
        %v7321 = vadd.f32 %v7098, %v7305
        %v7322 = vadd.f32 %v7104, %v7306
        %v7323 = vadd.f32 %v7110, %v7307
        %v7324 = vadd.f32 %v7116, %v7308
        %v7325 = vadd.f32 %v7122, %v7309
        %v7326 = vadd.f32 %v7128, %v7310
        %v7327 = vadd.f32 %v7134, %v7311
        %v7328 = vtanh.pop %v7312
        %v7329 = vtanh.pop %v7313
        %v7330 = vtanh.pop %v7314
        %v7331 = vtanh.pop %v7315
        %v7332 = vtanh.pop %v7316
        %v7333 = vtanh.pop %v7317
        %v7334 = vtanh.pop %v7318
        %v7335 = vtanh.pop %v7319
        %v7336 = vtanh.pop %v7320
        %v7337 = vtanh.pop %v7321
        %v7338 = vtanh.pop %v7322
        %v7339 = vtanh.pop %v7323
        %v7340 = vtanh.pop %v7324
        %v7341 = vtanh.pop %v7325
        %v7342 = vtanh.pop %v7326
        %v7343 = vtanh.pop %v7327
        %v7344 = vsub.f32 1.0, %v7201
        %v7345 = vsub.f32 1.0, %v7203
        %v7346 = vsub.f32 1.0, %v7205
        %v7347 = vsub.f32 1.0, %v7207
        %v7348 = vsub.f32 1.0, %v7209
        %v7349 = vsub.f32 1.0, %v7211
        %v7350 = vsub.f32 1.0, %v7213
        %v7351 = vsub.f32 1.0, %v7215
        %v7352 = vsub.f32 1.0, %v7217
        %v7353 = vsub.f32 1.0, %v7219
        %v7354 = vsub.f32 1.0, %v7221
        %v7355 = vsub.f32 1.0, %v7223
        %v7356 = vsub.f32 1.0, %v7225
        %v7357 = vsub.f32 1.0, %v7227
        %v7358 = vsub.f32 1.0, %v7229
        %v7359 = vsub.f32 1.0, %v7231
        %7376 = vrot.lane.b32.xlu0 %v7328, 64
        %v7377 = vpop.permute.xlu0 %7376
        %7378 = vrot.lane.b32.xlu0 %v7329, 64
        %v7379 = vpop.permute.xlu0 %7378
        %7380 = vrot.lane.b32.xlu0 %v7330, 64
        %v7381 = vpop.permute.xlu0 %7380
        %7382 = vrot.lane.b32.xlu0 %v7331, 64
        %v7383 = vpop.permute.xlu0 %7382
        %7384 = vrot.lane.b32.xlu0 %v7332, 64
        %v7385 = vpop.permute.xlu0 %7384
        %7386 = vrot.lane.b32.xlu0 %v7333, 64
        %v7387 = vpop.permute.xlu0 %7386
        %7388 = vrot.lane.b32.xlu0 %v7334, 64
        %v7389 = vpop.permute.xlu0 %7388
        %7390 = vrot.lane.b32.xlu0 %v7335, 64
        %v7391 = vpop.permute.xlu0 %7390
        %7392 = vrot.lane.b32.xlu0 %v7336, 64
        %v7393 = vpop.permute.xlu0 %7392
        %7394 = vrot.lane.b32.xlu0 %v7337, 64
        %v7395 = vpop.permute.xlu0 %7394
        %7396 = vrot.lane.b32.xlu0 %v7338, 64
        %v7397 = vpop.permute.xlu0 %7396
        %7398 = vrot.lane.b32.xlu0 %v7339, 64
        %v7399 = vpop.permute.xlu0 %7398
        %7400 = vrot.lane.b32.xlu0 %v7340, 64
        %v7401 = vpop.permute.xlu0 %7400
        %7402 = vrot.lane.b32.xlu0 %v7341, 64
        %v7403 = vpop.permute.xlu0 %7402
        %7404 = vrot.lane.b32.xlu0 %v7342, 64
        %v7405 = vpop.permute.xlu0 %7404
        %7406 = vrot.lane.b32.xlu0 %v7343, 64
        %v7407 = vpop.permute.xlu0 %7406
        %v7424 = vmul.f32 %v7344, %v7377
        %v7425 = vmul.f32 %v7345, %v7379
        %v7426 = vmul.f32 %v7346, %v7381
        %v7427 = vmul.f32 %v7347, %v7383
        %v7428 = vmul.f32 %v7348, %v7385
        %v7429 = vmul.f32 %v7349, %v7387
        %v7430 = vmul.f32 %v7350, %v7389
        %v7431 = vmul.f32 %v7351, %v7391
        %v7432 = vmul.f32 %v7352, %v7393
        %v7433 = vmul.f32 %v7353, %v7395
        %v7434 = vmul.f32 %v7354, %v7397
        %v7435 = vmul.f32 %v7355, %v7399
        %v7436 = vmul.f32 %v7356, %v7401
        %v7437 = vmul.f32 %v7357, %v7403
        %v7438 = vmul.f32 %v7358, %v7405
        %v7439 = vmul.f32 %v7359, %v7407
        %v7440 = vmul.f32 %v7201, %v6350
        %v7441 = vmul.f32 %v7203, %v6351
        %v7442 = vmul.f32 %v7205, %v6352
        %v7443 = vmul.f32 %v7207, %v6353
        %v7444 = vmul.f32 %v7209, %v6354
        %v7445 = vmul.f32 %v7211, %v6355
        %v7446 = vmul.f32 %v7213, %v6356
        %v7447 = vmul.f32 %v7215, %v6357
        %v7448 = vmul.f32 %v7217, %v6358
        %v7449 = vmul.f32 %v7219, %v6359
        %v7450 = vmul.f32 %v7221, %v6360
        %v7451 = vmul.f32 %v7223, %v6361
        %v7452 = vmul.f32 %v7225, %v6362
        %v7453 = vmul.f32 %v7227, %v6363
        %v7454 = vmul.f32 %v7229, %v6364
        %v7455 = vmul.f32 %v7231, %v6365
        %v7456 = vadd.f32 %v7424, %v7440
        %v7457 = vadd.f32 %v7425, %v7441
        %v7458 = vadd.f32 %v7426, %v7442
        %v7459 = vadd.f32 %v7427, %v7443
        %v7460 = vadd.f32 %v7428, %v7444
        %v7461 = vadd.f32 %v7429, %v7445
        %v7462 = vadd.f32 %v7430, %v7446
        %v7463 = vadd.f32 %v7431, %v7447
        %v7464 = vadd.f32 %v7432, %v7448
        %v7465 = vadd.f32 %v7433, %v7449
        %v7466 = vadd.f32 %v7434, %v7450
        %v7467 = vadd.f32 %v7435, %v7451
        %v7468 = vadd.f32 %v7436, %v7452
        %v7469 = vadd.f32 %v7437, %v7453
        %v7470 = vadd.f32 %v7438, %v7454
        %v7471 = vadd.f32 %v7439, %v7455
        %v7472 = vld [vmem:[#allocation2 + $0x500] sm:$0xff]
        %v7473 = vld [vmem:[#allocation2 + $0x508] sm:$0xff]
        %v7474 = vld [vmem:[#allocation2 + $0x510] sm:$0xff]
        %v7475 = vld [vmem:[#allocation2 + $0x518] sm:$0xff]
        %v7476 = vld [vmem:[#allocation2 + $0x520] sm:$0xff]
        %v7477 = vld [vmem:[#allocation2 + $0x528] sm:$0xff]
        %v7478 = vld [vmem:[#allocation2 + $0x530] sm:$0xff]
        %v7479 = vld [vmem:[#allocation2 + $0x538] sm:$0xff]
        %v7480 = vld [vmem:[#allocation2 + $0x540] sm:$0xff]
        %v7481 = vld [vmem:[#allocation2 + $0x548] sm:$0xff]
        %v7482 = vld [vmem:[#allocation2 + $0x550] sm:$0xff]
        %v7483 = vld [vmem:[#allocation2 + $0x558] sm:$0xff]
        %v7484 = vld [vmem:[#allocation2 + $0x560] sm:$0xff]
        %v7485 = vld [vmem:[#allocation2 + $0x568] sm:$0xff]
        %v7486 = vld [vmem:[#allocation2 + $0x570] sm:$0xff]
        %v7487 = vld [vmem:[#allocation2 + $0x578] sm:$0xff]
        %v7488 = vld [vmem:[#allocation2 + $0x580] sm:$0xff]
        %v7489 = vld [vmem:[#allocation2 + $0x588] sm:$0xff]
        %v7490 = vld [vmem:[#allocation2 + $0x590] sm:$0xff]
        %v7491 = vld [vmem:[#allocation2 + $0x598] sm:$0xff]
        %v7492 = vld [vmem:[#allocation2 + $0x5a0] sm:$0xff]
        %v7493 = vld [vmem:[#allocation2 + $0x5a8] sm:$0xff]
        %v7494 = vld [vmem:[#allocation2 + $0x5b0] sm:$0xff]
        %v7495 = vld [vmem:[#allocation2 + $0x5b8] sm:$0xff]
        %v7496 = vld [vmem:[#allocation2 + $0x5c0] sm:$0xff]
        %v7497 = vld [vmem:[#allocation2 + $0x5c8] sm:$0xff]
        %v7498 = vld [vmem:[#allocation2 + $0x5d0] sm:$0xff]
        %v7499 = vld [vmem:[#allocation2 + $0x5d8] sm:$0xff]
        %v7500 = vld [vmem:[#allocation2 + $0x5e0] sm:$0xff]
        %v7501 = vld [vmem:[#allocation2 + $0x5e8] sm:$0xff]
        %v7502 = vld [vmem:[#allocation2 + $0x5f0] sm:$0xff]
        %v7503 = vld [vmem:[#allocation2 + $0x5f8] sm:$0xff]
        %v7504 = vsel %vm1648, %v6912, 0
        %v7506 = vsel %vm1648, %v6914, 0
        %v7508 = vsel %vm1648, %v6916, 0
        %v7510 = vsel %vm1648, %v6918, 0
        %v7512 = vsel %vm1648, %v6920, 0
        %v7514 = vsel %vm1648, %v6922, 0
        %v7516 = vsel %vm1648, %v6924, 0
        %v7518 = vsel %vm1648, %v6926, 0
        %v7520 = vsel %vm1648, %v6928, 0
        %v7522 = vsel %vm1648, %v6930, 0
        %v7524 = vsel %vm1648, %v6932, 0
        %v7526 = vsel %vm1648, %v6934, 0
        %v7528 = vsel %vm1648, %v6936, 0
        %v7530 = vsel %vm1648, %v6938, 0
        %v7532 = vsel %vm1648, %v6940, 0
        %v7534 = vsel %vm1648, %v6942, 0
        %7536 = vmatprep.subr.mxu0 0.0
        %7537 = vmatpush1.msra.mxu0 0.0
        %7538 = vmatprep.subr.mxu0 0.0
        %7539 = vmatpush1.msra.mxu0 0.0
        %7540 = vmatprep.subr.mxu0 0.0
        %7541 = vmatpush1.msra.mxu0 0.0
        %7542 = vmatprep.subr.mxu0 0.0
        %7543 = vmatpush1.msra.mxu0 0.0
        %7544 = vmatprep.subr.mxu0 0.0
        %7545 = vmatpush1.msra.mxu0 0.0
        %7546 = vmatprep.subr.mxu0 0.0
        %7547 = vmatpush1.msra.mxu0 0.0
        %7548 = vmatprep.subr.mxu0 0.0
        %7549 = vmatpush1.msra.mxu0 0.0
        %7550 = vmatprep.subr.mxu0 0.0
        %7551 = vmatpush1.msra.mxu0 0.0
        %7552 = vmatprep.subr.mxu0 %v1919
        %7553 = vmatpush1.msra.mxu0 %v1918
        %7554 = vmatprep.subr.mxu0 %v1917
        %7555 = vmatpush1.msra.mxu0 %v1916
        %7556 = vmatprep.subr.mxu0 %v1915
        %7557 = vmatpush1.msra.mxu0 %v1914
        %7558 = vmatprep.subr.mxu0 %v1913
        %7559 = vmatpush1.msra.mxu0 %v1912
        %7560 = vmatprep.subr.mxu0 %v1911
        %7561 = vmatpush1.msra.mxu0 %v1910
        %7562 = vmatprep.subr.mxu0 %v1909
        %7563 = vmatpush1.msra.mxu0 %v1908
        %7564 = vmatprep.subr.mxu0 %v1907
        %7565 = vmatpush1.msra.mxu0 %v1906
        %7566 = vmatprep.subr.mxu0 %v1905
        %7567 = vmatpush1.msra.mxu0 %v1904
        %7568 = vmatprep.subr.mxu0 0.0
        %7569 = vmatpush2.msra.mxu0 0.0
        %7570 = vmatprep.subr.mxu0 0.0
        %7571 = vmatpush2.msra.mxu0 0.0
        %7572 = vmatprep.subr.mxu0 0.0
        %7573 = vmatpush2.msra.mxu0 0.0
        %7574 = vmatprep.subr.mxu0 0.0
        %7575 = vmatpush2.msra.mxu0 0.0
        %7576 = vmatprep.subr.mxu0 0.0
        %7577 = vmatpush2.msra.mxu0 0.0
        %7578 = vmatprep.subr.mxu0 0.0
        %7579 = vmatpush2.msra.mxu0 0.0
        %7580 = vmatprep.subr.mxu0 0.0
        %7581 = vmatpush2.msra.mxu0 0.0
        %7582 = vmatprep.subr.mxu0 0.0
        %7583 = vmatpush2.msra.mxu0 0.0
        %7584 = vmatprep.subr.mxu0 0.0
        %7585 = vmatpush2.msra.mxu0 0.0
        %7586 = vmatprep.subr.mxu0 0.0
        %7587 = vmatpush2.msra.mxu0 0.0
        %7588 = vmatprep.subr.mxu0 0.0
        %7589 = vmatpush2.msra.mxu0 0.0
        %7590 = vmatprep.subr.mxu0 0.0
        %7591 = vmatpush2.msra.mxu0 0.0
        %7592 = vmatprep.subr.mxu0 0.0
        %7593 = vmatpush2.msra.mxu0 0.0
        %7594 = vmatprep.subr.mxu0 0.0
        %7595 = vmatpush2.msra.mxu0 0.0
        %7596 = vmatprep.subr.mxu0 0.0
        %7597 = vmatpush2.msra.mxu0 0.0
        %7598 = vmatprep.subr.mxu0 0.0
        %7599 = vmatpush2.msra.mxu0 0.0
        %7600 = vmatprep.mubr.f32.mxu0 0.0
        %7601 = vmatmul.mubr.f32.gmra.mxu0 %v7504
        %v7602 = vpop.f32.mrf.mxu0
        %v7603 = vadd.f32 0.0, %v7602
        %v7604 = vpop.f32.mrf.mxu0
        %v7605 = vadd.f32 0.0, %v7604
        %7606 = vmatprep.mubr.f32.mxu0 0.0
        %7607 = vmatmul.mubr.f32.gmra.mxu0 %v7506
        %v7608 = vpop.f32.mrf.mxu0
        %v7609 = vadd.f32 0.0, %v7608
        %v7610 = vpop.f32.mrf.mxu0
        %v7611 = vadd.f32 0.0, %v7610
        %7612 = vmatprep.mubr.f32.mxu0 0.0
        %7613 = vmatmul.mubr.f32.gmra.mxu0 %v7508
        %v7614 = vpop.f32.mrf.mxu0
        %v7615 = vadd.f32 0.0, %v7614
        %v7616 = vpop.f32.mrf.mxu0
        %v7617 = vadd.f32 0.0, %v7616
        %7618 = vmatprep.mubr.f32.mxu0 0.0
        %7619 = vmatmul.mubr.f32.gmra.mxu0 %v7510
        %v7620 = vpop.f32.mrf.mxu0
        %v7621 = vadd.f32 0.0, %v7620
        %v7622 = vpop.f32.mrf.mxu0
        %v7623 = vadd.f32 0.0, %v7622
        %7624 = vmatprep.mubr.f32.mxu0 0.0
        %7625 = vmatmul.mubr.f32.gmra.mxu0 %v7512
        %v7626 = vpop.f32.mrf.mxu0
        %v7627 = vadd.f32 0.0, %v7626
        %v7628 = vpop.f32.mrf.mxu0
        %v7629 = vadd.f32 0.0, %v7628
        %7630 = vmatprep.mubr.f32.mxu0 0.0
        %7631 = vmatmul.mubr.f32.gmra.mxu0 %v7514
        %v7632 = vpop.f32.mrf.mxu0
        %v7633 = vadd.f32 0.0, %v7632
        %v7634 = vpop.f32.mrf.mxu0
        %v7635 = vadd.f32 0.0, %v7634
        %7636 = vmatprep.mubr.f32.mxu0 0.0
        %7637 = vmatmul.mubr.f32.gmra.mxu0 %v7516
        %v7638 = vpop.f32.mrf.mxu0
        %v7639 = vadd.f32 0.0, %v7638
        %v7640 = vpop.f32.mrf.mxu0
        %v7641 = vadd.f32 0.0, %v7640
        %7642 = vmatprep.mubr.f32.mxu0 0.0
        %7643 = vmatmul.mubr.f32.gmra.mxu0 %v7518
        %v7644 = vpop.f32.mrf.mxu0
        %v7645 = vadd.f32 0.0, %v7644
        %v7646 = vpop.f32.mrf.mxu0
        %v7647 = vadd.f32 0.0, %v7646
        %7648 = vmatprep.mubr.f32.mxu0 0.0
        %7649 = vmatmul.mubr.f32.gmra.mxu0 %v7520
        %v7650 = vpop.f32.mrf.mxu0
        %v7651 = vadd.f32 0.0, %v7650
        %v7652 = vpop.f32.mrf.mxu0
        %v7653 = vadd.f32 0.0, %v7652
        %7654 = vmatprep.mubr.f32.mxu0 0.0
        %7655 = vmatmul.mubr.f32.gmra.mxu0 %v7522
        %v7656 = vpop.f32.mrf.mxu0
        %v7657 = vadd.f32 0.0, %v7656
        %v7658 = vpop.f32.mrf.mxu0
        %v7659 = vadd.f32 0.0, %v7658
        %7660 = vmatprep.mubr.f32.mxu0 0.0
        %7661 = vmatmul.mubr.f32.gmra.mxu0 %v7524
        %v7662 = vpop.f32.mrf.mxu0
        %v7663 = vadd.f32 0.0, %v7662
        %v7664 = vpop.f32.mrf.mxu0
        %v7665 = vadd.f32 0.0, %v7664
        %7666 = vmatprep.mubr.f32.mxu0 0.0
        %7667 = vmatmul.mubr.f32.gmra.mxu0 %v7526
        %v7668 = vpop.f32.mrf.mxu0
        %v7669 = vadd.f32 0.0, %v7668
        %v7670 = vpop.f32.mrf.mxu0
        %v7671 = vadd.f32 0.0, %v7670
        %7672 = vmatprep.mubr.f32.mxu0 0.0
        %7673 = vmatmul.mubr.f32.gmra.mxu0 %v7528
        %v7674 = vpop.f32.mrf.mxu0
        %v7675 = vadd.f32 0.0, %v7674
        %v7676 = vpop.f32.mrf.mxu0
        %v7677 = vadd.f32 0.0, %v7676
        %7678 = vmatprep.mubr.f32.mxu0 0.0
        %7679 = vmatmul.mubr.f32.gmra.mxu0 %v7530
        %v7680 = vpop.f32.mrf.mxu0
        %v7681 = vadd.f32 0.0, %v7680
        %v7682 = vpop.f32.mrf.mxu0
        %v7683 = vadd.f32 0.0, %v7682
        %7684 = vmatprep.mubr.f32.mxu0 0.0
        %7685 = vmatmul.mubr.f32.gmra.mxu0 %v7532
        %v7686 = vpop.f32.mrf.mxu0
        %v7687 = vadd.f32 0.0, %v7686
        %v7688 = vpop.f32.mrf.mxu0
        %v7689 = vadd.f32 0.0, %v7688
        %7690 = vmatprep.mubr.f32.mxu0 0.0
        %7691 = vmatmul.mubr.f32.gmra.mxu0 %v7534
        %v7692 = vpop.f32.mrf.mxu0
        %v7693 = vadd.f32 0.0, %v7692
        %v7694 = vpop.f32.mrf.mxu0
        %v7695 = vadd.f32 0.0, %v7694
        %7696 = vdwg.mxu0
        %v7697 = vadd.f32 %v7472, %v7603
        %v7698 = vadd.f32 %v7474, %v7609
        %v7699 = vadd.f32 %v7476, %v7615
        %v7700 = vadd.f32 %v7478, %v7621
        %v7701 = vadd.f32 %v7480, %v7627
        %v7702 = vadd.f32 %v7482, %v7633
        %v7703 = vadd.f32 %v7484, %v7639
        %v7704 = vadd.f32 %v7486, %v7645
        %v7705 = vadd.f32 %v7488, %v7651
        %v7706 = vadd.f32 %v7490, %v7657
        %v7707 = vadd.f32 %v7492, %v7663
        %v7708 = vadd.f32 %v7494, %v7669
        %v7709 = vadd.f32 %v7496, %v7675
        %v7710 = vadd.f32 %v7498, %v7681
        %v7711 = vadd.f32 %v7500, %v7687
        %v7712 = vadd.f32 %v7502, %v7693
        %v7713 = vxor.u32 %v7697, 2147483648
        %v7714 = vxor.u32 %v7698, 2147483648
        %v7715 = vxor.u32 %v7699, 2147483648
        %v7716 = vxor.u32 %v7700, 2147483648
        %v7717 = vxor.u32 %v7701, 2147483648
        %v7718 = vxor.u32 %v7702, 2147483648
        %v7719 = vxor.u32 %v7703, 2147483648
        %v7720 = vxor.u32 %v7704, 2147483648
        %v7721 = vxor.u32 %v7705, 2147483648
        %v7722 = vxor.u32 %v7706, 2147483648
        %v7723 = vxor.u32 %v7707, 2147483648
        %v7724 = vxor.u32 %v7708, 2147483648
        %v7725 = vxor.u32 %v7709, 2147483648
        %v7726 = vxor.u32 %v7710, 2147483648
        %v7727 = vxor.u32 %v7711, 2147483648
        %v7728 = vxor.u32 %v7712, 2147483648
        %v7729 = vmul.f32 %v7713, 1.442695
        %v7730 = vpow.pop %v7729
        %v7731 = vmul.f32 %v7714, 1.442695
        %v7732 = vpow.pop %v7731
        %v7733 = vmul.f32 %v7715, 1.442695
        %v7734 = vpow.pop %v7733
        %v7735 = vmul.f32 %v7716, 1.442695
        %v7736 = vpow.pop %v7735
        %v7737 = vmul.f32 %v7717, 1.442695
        %v7738 = vpow.pop %v7737
        %v7739 = vmul.f32 %v7718, 1.442695
        %v7740 = vpow.pop %v7739
        %v7741 = vmul.f32 %v7719, 1.442695
        %v7742 = vpow.pop %v7741
        %v7743 = vmul.f32 %v7720, 1.442695
        %v7744 = vpow.pop %v7743
        %v7745 = vmul.f32 %v7721, 1.442695
        %v7746 = vpow.pop %v7745
        %v7747 = vmul.f32 %v7722, 1.442695
        %v7748 = vpow.pop %v7747
        %v7749 = vmul.f32 %v7723, 1.442695
        %v7750 = vpow.pop %v7749
        %v7751 = vmul.f32 %v7724, 1.442695
        %v7752 = vpow.pop %v7751
        %v7753 = vmul.f32 %v7725, 1.442695
        %v7754 = vpow.pop %v7753
        %v7755 = vmul.f32 %v7726, 1.442695
        %v7756 = vpow.pop %v7755
        %v7757 = vmul.f32 %v7727, 1.442695
        %v7758 = vpow.pop %v7757
        %v7759 = vmul.f32 %v7728, 1.442695
        %v7760 = vpow.pop %v7759
        %v7761 = vadd.f32 %v7730, 1.0
        %v7762 = vadd.f32 %v7732, 1.0
        %v7763 = vadd.f32 %v7734, 1.0
        %v7764 = vadd.f32 %v7736, 1.0
        %v7765 = vadd.f32 %v7738, 1.0
        %v7766 = vadd.f32 %v7740, 1.0
        %v7767 = vadd.f32 %v7742, 1.0
        %v7768 = vadd.f32 %v7744, 1.0
        %v7769 = vadd.f32 %v7746, 1.0
        %v7770 = vadd.f32 %v7748, 1.0
        %v7771 = vadd.f32 %v7750, 1.0
        %v7772 = vadd.f32 %v7752, 1.0
        %v7773 = vadd.f32 %v7754, 1.0
        %v7774 = vadd.f32 %v7756, 1.0
        %v7775 = vadd.f32 %v7758, 1.0
        %v7776 = vadd.f32 %v7760, 1.0
        %v7777 = vrcp.pop %v7761
        %v7778 = vmul.f32 1.0, %v7777
        %v7779 = vrcp.pop %v7762
        %v7780 = vmul.f32 1.0, %v7779
        %v7781 = vrcp.pop %v7763
        %v7782 = vmul.f32 1.0, %v7781
        %v7783 = vrcp.pop %v7764
        %v7784 = vmul.f32 1.0, %v7783
        %v7785 = vrcp.pop %v7765
        %v7786 = vmul.f32 1.0, %v7785
        %v7787 = vrcp.pop %v7766
        %v7788 = vmul.f32 1.0, %v7787
        %v7789 = vrcp.pop %v7767
        %v7790 = vmul.f32 1.0, %v7789
        %v7791 = vrcp.pop %v7768
        %v7792 = vmul.f32 1.0, %v7791
        %v7793 = vrcp.pop %v7769
        %v7794 = vmul.f32 1.0, %v7793
        %v7795 = vrcp.pop %v7770
        %v7796 = vmul.f32 1.0, %v7795
        %v7797 = vrcp.pop %v7771
        %v7798 = vmul.f32 1.0, %v7797
        %v7799 = vrcp.pop %v7772
        %v7800 = vmul.f32 1.0, %v7799
        %v7801 = vrcp.pop %v7773
        %v7802 = vmul.f32 1.0, %v7801
        %v7803 = vrcp.pop %v7774
        %v7804 = vmul.f32 1.0, %v7803
        %v7805 = vrcp.pop %v7775
        %v7806 = vmul.f32 1.0, %v7805
        %v7807 = vrcp.pop %v7776
        %v7808 = vmul.f32 1.0, %v7807
        %v7809 = vadd.f32 %v7605, %v1957
        %v7810 = vadd.f32 %v7611, %v1957
        %v7811 = vadd.f32 %v7617, %v1957
        %v7812 = vadd.f32 %v7623, %v1957
        %v7813 = vadd.f32 %v7629, %v1957
        %v7814 = vadd.f32 %v7635, %v1957
        %v7815 = vadd.f32 %v7641, %v1957
        %v7816 = vadd.f32 %v7647, %v1957
        %v7817 = vadd.f32 %v7653, %v1957
        %v7818 = vadd.f32 %v7659, %v1957
        %v7819 = vadd.f32 %v7665, %v1957
        %v7820 = vadd.f32 %v7671, %v1957
        %v7821 = vadd.f32 %v7677, %v1957
        %v7822 = vadd.f32 %v7683, %v1957
        %v7823 = vadd.f32 %v7689, %v1957
        %v7824 = vadd.f32 %v7695, %v1957
        %v7825 = vmul.f32 %v7778, %v7809
        %v7826 = vmul.f32 %v7780, %v7810
        %v7827 = vmul.f32 %v7782, %v7811
        %v7828 = vmul.f32 %v7784, %v7812
        %v7829 = vmul.f32 %v7786, %v7813
        %v7830 = vmul.f32 %v7788, %v7814
        %v7831 = vmul.f32 %v7790, %v7815
        %v7832 = vmul.f32 %v7792, %v7816
        %v7833 = vmul.f32 %v7794, %v7817
        %v7834 = vmul.f32 %v7796, %v7818
        %v7835 = vmul.f32 %v7798, %v7819
        %v7836 = vmul.f32 %v7800, %v7820
        %v7837 = vmul.f32 %v7802, %v7821
        %v7838 = vmul.f32 %v7804, %v7822
        %v7839 = vmul.f32 %v7806, %v7823
        %v7840 = vmul.f32 %v7808, %v7824
        %v7841 = vadd.f32 %v7473, %v7825
        %v7842 = vadd.f32 %v7475, %v7826
        %v7843 = vadd.f32 %v7477, %v7827
        %v7844 = vadd.f32 %v7479, %v7828
        %v7845 = vadd.f32 %v7481, %v7829
        %v7846 = vadd.f32 %v7483, %v7830
        %v7847 = vadd.f32 %v7485, %v7831
        %v7848 = vadd.f32 %v7487, %v7832
        %v7849 = vadd.f32 %v7489, %v7833
        %v7850 = vadd.f32 %v7491, %v7834
        %v7851 = vadd.f32 %v7493, %v7835
        %v7852 = vadd.f32 %v7495, %v7836
        %v7853 = vadd.f32 %v7497, %v7837
        %v7854 = vadd.f32 %v7499, %v7838
        %v7855 = vadd.f32 %v7501, %v7839
        %v7856 = vadd.f32 %v7503, %v7840
        %v7857 = vtanh.pop %v7841
        %v7858 = vtanh.pop %v7842
        %v7859 = vtanh.pop %v7843
        %v7860 = vtanh.pop %v7844
        %v7861 = vtanh.pop %v7845
        %v7862 = vtanh.pop %v7846
        %v7863 = vtanh.pop %v7847
        %v7864 = vtanh.pop %v7848
        %v7865 = vtanh.pop %v7849
        %v7866 = vtanh.pop %v7850
        %v7867 = vtanh.pop %v7851
        %v7868 = vtanh.pop %v7852
        %v7869 = vtanh.pop %v7853
        %v7870 = vtanh.pop %v7854
        %v7871 = vtanh.pop %v7855
        %v7872 = vtanh.pop %v7856
        %v7873 = vsub.f32 1.0, %v7778
        %v7874 = vsub.f32 1.0, %v7780
        %v7875 = vsub.f32 1.0, %v7782
        %v7876 = vsub.f32 1.0, %v7784
        %v7877 = vsub.f32 1.0, %v7786
        %v7878 = vsub.f32 1.0, %v7788
        %v7879 = vsub.f32 1.0, %v7790
        %v7880 = vsub.f32 1.0, %v7792
        %v7881 = vsub.f32 1.0, %v7794
        %v7882 = vsub.f32 1.0, %v7796
        %v7883 = vsub.f32 1.0, %v7798
        %v7884 = vsub.f32 1.0, %v7800
        %v7885 = vsub.f32 1.0, %v7802
        %v7886 = vsub.f32 1.0, %v7804
        %v7887 = vsub.f32 1.0, %v7806
        %v7888 = vsub.f32 1.0, %v7808
        %7905 = vrot.lane.b32.xlu0 %v7857, 64
        %v7906 = vpop.permute.xlu0 %7905
        %7907 = vrot.lane.b32.xlu0 %v7858, 64
        %v7908 = vpop.permute.xlu0 %7907
        %7909 = vrot.lane.b32.xlu0 %v7859, 64
        %v7910 = vpop.permute.xlu0 %7909
        %7911 = vrot.lane.b32.xlu0 %v7860, 64
        %v7912 = vpop.permute.xlu0 %7911
        %7913 = vrot.lane.b32.xlu0 %v7861, 64
        %v7914 = vpop.permute.xlu0 %7913
        %7915 = vrot.lane.b32.xlu0 %v7862, 64
        %v7916 = vpop.permute.xlu0 %7915
        %7917 = vrot.lane.b32.xlu0 %v7863, 64
        %v7918 = vpop.permute.xlu0 %7917
        %7919 = vrot.lane.b32.xlu0 %v7864, 64
        %v7920 = vpop.permute.xlu0 %7919
        %7921 = vrot.lane.b32.xlu0 %v7865, 64
        %v7922 = vpop.permute.xlu0 %7921
        %7923 = vrot.lane.b32.xlu0 %v7866, 64
        %v7924 = vpop.permute.xlu0 %7923
        %7925 = vrot.lane.b32.xlu0 %v7867, 64
        %v7926 = vpop.permute.xlu0 %7925
        %7927 = vrot.lane.b32.xlu0 %v7868, 64
        %v7928 = vpop.permute.xlu0 %7927
        %7929 = vrot.lane.b32.xlu0 %v7869, 64
        %v7930 = vpop.permute.xlu0 %7929
        %7931 = vrot.lane.b32.xlu0 %v7870, 64
        %v7932 = vpop.permute.xlu0 %7931
        %7933 = vrot.lane.b32.xlu0 %v7871, 64
        %v7934 = vpop.permute.xlu0 %7933
        %7935 = vrot.lane.b32.xlu0 %v7872, 64
        %v7936 = vpop.permute.xlu0 %7935
        %v7953 = vmul.f32 %v7873, %v7906
        %v7954 = vmul.f32 %v7874, %v7908
        %v7955 = vmul.f32 %v7875, %v7910
        %v7956 = vmul.f32 %v7876, %v7912
        %v7957 = vmul.f32 %v7877, %v7914
        %v7958 = vmul.f32 %v7878, %v7916
        %v7959 = vmul.f32 %v7879, %v7918
        %v7960 = vmul.f32 %v7880, %v7920
        %v7961 = vmul.f32 %v7881, %v7922
        %v7962 = vmul.f32 %v7882, %v7924
        %v7963 = vmul.f32 %v7883, %v7926
        %v7964 = vmul.f32 %v7884, %v7928
        %v7965 = vmul.f32 %v7885, %v7930
        %v7966 = vmul.f32 %v7886, %v7932
        %v7967 = vmul.f32 %v7887, %v7934
        %v7968 = vmul.f32 %v7888, %v7936
        %v7969 = vmul.f32 %v7778, %v6879
        %v7970 = vmul.f32 %v7780, %v6880
        %v7971 = vmul.f32 %v7782, %v6881
        %v7972 = vmul.f32 %v7784, %v6882
        %v7973 = vmul.f32 %v7786, %v6883
        %v7974 = vmul.f32 %v7788, %v6884
        %v7975 = vmul.f32 %v7790, %v6885
        %v7976 = vmul.f32 %v7792, %v6886
        %v7977 = vmul.f32 %v7794, %v6887
        %v7978 = vmul.f32 %v7796, %v6888
        %v7979 = vmul.f32 %v7798, %v6889
        %v7980 = vmul.f32 %v7800, %v6890
        %v7981 = vmul.f32 %v7802, %v6891
        %v7982 = vmul.f32 %v7804, %v6892
        %v7983 = vmul.f32 %v7806, %v6893
        %v7984 = vmul.f32 %v7808, %v6894
        %v7985 = vadd.f32 %v7953, %v7969
        %v7986 = vadd.f32 %v7954, %v7970
        %v7987 = vadd.f32 %v7955, %v7971
        %v7988 = vadd.f32 %v7956, %v7972
        %v7989 = vadd.f32 %v7957, %v7973
        %v7990 = vadd.f32 %v7958, %v7974
        %v7991 = vadd.f32 %v7959, %v7975
        %v7992 = vadd.f32 %v7960, %v7976
        %v7993 = vadd.f32 %v7961, %v7977
        %v7994 = vadd.f32 %v7962, %v7978
        %v7995 = vadd.f32 %v7963, %v7979
        %v7996 = vadd.f32 %v7964, %v7980
        %v7997 = vadd.f32 %v7965, %v7981
        %v7998 = vadd.f32 %v7966, %v7982
        %v7999 = vadd.f32 %v7967, %v7983
        %v8000 = vadd.f32 %v7968, %v7984
        %8017 = vrot.lane.b32.xlu0 %v7985, 64
        %v8018 = vpop.permute.xlu0 %8017
        %8019 = vrot.lane.b32.xlu0 %v7986, 64
        %v8020 = vpop.permute.xlu0 %8019
        %8021 = vrot.lane.b32.xlu0 %v7987, 64
        %v8022 = vpop.permute.xlu0 %8021
        %8023 = vrot.lane.b32.xlu0 %v7988, 64
        %v8024 = vpop.permute.xlu0 %8023
        %8025 = vrot.lane.b32.xlu0 %v7989, 64
        %v8026 = vpop.permute.xlu0 %8025
        %8027 = vrot.lane.b32.xlu0 %v7990, 64
        %v8028 = vpop.permute.xlu0 %8027
        %8029 = vrot.lane.b32.xlu0 %v7991, 64
        %v8030 = vpop.permute.xlu0 %8029
        %8031 = vrot.lane.b32.xlu0 %v7992, 64
        %v8032 = vpop.permute.xlu0 %8031
        %8033 = vrot.lane.b32.xlu0 %v7993, 64
        %v8034 = vpop.permute.xlu0 %8033
        %8035 = vrot.lane.b32.xlu0 %v7994, 64
        %v8036 = vpop.permute.xlu0 %8035
        %8037 = vrot.lane.b32.xlu0 %v7995, 64
        %v8038 = vpop.permute.xlu0 %8037
        %8039 = vrot.lane.b32.xlu0 %v7996, 64
        %v8040 = vpop.permute.xlu0 %8039
        %8041 = vrot.lane.b32.xlu0 %v7997, 64
        %v8042 = vpop.permute.xlu0 %8041
        %8043 = vrot.lane.b32.xlu0 %v7998, 64
        %v8044 = vpop.permute.xlu0 %8043
        %8045 = vrot.lane.b32.xlu0 %v7999, 64
        %v8046 = vpop.permute.xlu0 %8045
        %8047 = vrot.lane.b32.xlu0 %v8000, 64
        %v8048 = vpop.permute.xlu0 %8047
        %v8065 = vsel %vm1648, %v8018, %v7456
        %v8066 = vsel %vm1648, %v8020, %v7457
        %v8067 = vsel %vm1648, %v8022, %v7458
        %v8068 = vsel %vm1648, %v8024, %v7459
        %v8069 = vsel %vm1648, %v8026, %v7460
        %v8070 = vsel %vm1648, %v8028, %v7461
        %v8071 = vsel %vm1648, %v8030, %v7462
        %v8072 = vsel %vm1648, %v8032, %v7463
        %v8073 = vsel %vm1648, %v8034, %v7464
        %v8074 = vsel %vm1648, %v8036, %v7465
        %v8075 = vsel %vm1648, %v8038, %v7466
        %v8076 = vsel %vm1648, %v8040, %v7467
        %v8077 = vsel %vm1648, %v8042, %v7468
        %v8078 = vsel %vm1648, %v8044, %v7469
        %v8079 = vsel %vm1648, %v8046, %v7470
        %v8080 = vsel %vm1648, %v8048, %v7471
        %8081 = vmatprep.subr.mxu0 %v1951
        %8082 = vmatpush1.msra.mxu0 %v1950
        %8083 = vmatprep.subr.mxu0 %v1949
        %8084 = vmatpush1.msra.mxu0 %v1948
        %8085 = vmatprep.subr.mxu0 %v1947
        %8086 = vmatpush1.msra.mxu0 %v1946
        %8087 = vmatprep.subr.mxu0 %v1945
        %8088 = vmatpush1.msra.mxu0 %v1944
        %8089 = vmatprep.subr.mxu0 %v1943
        %8090 = vmatpush1.msra.mxu0 %v1942
        %8091 = vmatprep.subr.mxu0 %v1941
        %8092 = vmatpush1.msra.mxu0 %v1940
        %8093 = vmatprep.subr.mxu0 %v1939
        %8094 = vmatpush1.msra.mxu0 %v1938
        %8095 = vmatprep.subr.mxu0 %v1937
        %8096 = vmatpush1.msra.mxu0 %v1936
        %8097 = vmatprep.subr.mxu0 %v1935
        %8098 = vmatpush1.msra.mxu0 %v1934
        %8099 = vmatprep.subr.mxu0 %v1933
        %8100 = vmatpush1.msra.mxu0 %v1932
        %8101 = vmatprep.subr.mxu0 %v1931
        %8102 = vmatpush1.msra.mxu0 %v1930
        %8103 = vmatprep.subr.mxu0 %v1929
        %8104 = vmatpush1.msra.mxu0 %v1928
        %8105 = vmatprep.subr.mxu0 %v1927
        %8106 = vmatpush1.msra.mxu0 %v1926
        %8107 = vmatprep.subr.mxu0 %v1925
        %8108 = vmatpush1.msra.mxu0 %v1924
        %8109 = vmatprep.subr.mxu0 %v1923
        %8110 = vmatpush1.msra.mxu0 %v1922
        %8111 = vmatprep.subr.mxu0 %v1921
        %8112 = vmatpush1.msra.mxu0 %v1920
        %8113 = vmatprep.subr.mxu0 0.0
        %8114 = vmatpush2.msra.mxu0 0.0
        %8115 = vmatprep.subr.mxu0 0.0
        %8116 = vmatpush2.msra.mxu0 0.0
        %8117 = vmatprep.subr.mxu0 0.0
        %8118 = vmatpush2.msra.mxu0 0.0
        %8119 = vmatprep.subr.mxu0 0.0
        %8120 = vmatpush2.msra.mxu0 0.0
        %8121 = vmatprep.subr.mxu0 0.0
        %8122 = vmatpush2.msra.mxu0 0.0
        %8123 = vmatprep.subr.mxu0 0.0
        %8124 = vmatpush2.msra.mxu0 0.0
        %8125 = vmatprep.subr.mxu0 0.0
        %8126 = vmatpush2.msra.mxu0 0.0
        %8127 = vmatprep.subr.mxu0 0.0
        %8128 = vmatpush2.msra.mxu0 0.0
        %8129 = vmatprep.subr.mxu0 0.0
        %8130 = vmatpush2.msra.mxu0 0.0
        %8131 = vmatprep.subr.mxu0 0.0
        %8132 = vmatpush2.msra.mxu0 0.0
        %8133 = vmatprep.subr.mxu0 0.0
        %8134 = vmatpush2.msra.mxu0 0.0
        %8135 = vmatprep.subr.mxu0 0.0
        %8136 = vmatpush2.msra.mxu0 0.0
        %8137 = vmatprep.subr.mxu0 0.0
        %8138 = vmatpush2.msra.mxu0 0.0
        %8139 = vmatprep.subr.mxu0 0.0
        %8140 = vmatpush2.msra.mxu0 0.0
        %8141 = vmatprep.subr.mxu0 0.0
        %8142 = vmatpush2.msra.mxu0 0.0
        %8143 = vmatprep.subr.mxu0 0.0
        %8144 = vmatpush2.msra.mxu0 0.0
        %8145 = vmatprep.mubr.f32.mxu0 0.0
        %8146 = vmatmul.mubr.f32.gmra.mxu0 %v8065
        %v8147 = vpop.f32.mrf.mxu0
        %v8148 = vadd.f32 %v1964, %v8147
        %v8149 = vpop.f32.mrf.mxu0
        %v8150 = vadd.f32 %v1968, %v8149
        %8151 = vmatprep.mubr.f32.mxu0 0.0
        %8152 = vmatmul.mubr.f32.gmra.mxu0 %v8066
        %v8153 = vpop.f32.mrf.mxu0
        %v8154 = vadd.f32 %v1964, %v8153
        %v8155 = vpop.f32.mrf.mxu0
        %v8156 = vadd.f32 %v1968, %v8155
        %8157 = vmatprep.mubr.f32.mxu0 0.0
        %8158 = vmatmul.mubr.f32.gmra.mxu0 %v8067
        %v8159 = vpop.f32.mrf.mxu0
        %v8160 = vadd.f32 %v1964, %v8159
        %v8161 = vpop.f32.mrf.mxu0
        %v8162 = vadd.f32 %v1968, %v8161
        %8163 = vmatprep.mubr.f32.mxu0 0.0
        %8164 = vmatmul.mubr.f32.gmra.mxu0 %v8068
        %v8165 = vpop.f32.mrf.mxu0
        %v8166 = vadd.f32 %v1964, %v8165
        %v8167 = vpop.f32.mrf.mxu0
        %v8168 = vadd.f32 %v1968, %v8167
        %8169 = vmatprep.mubr.f32.mxu0 0.0
        %8170 = vmatmul.mubr.f32.gmra.mxu0 %v8069
        %v8171 = vpop.f32.mrf.mxu0
        %v8172 = vadd.f32 %v1964, %v8171
        %v8173 = vpop.f32.mrf.mxu0
        %v8174 = vadd.f32 %v1968, %v8173
        %8175 = vmatprep.mubr.f32.mxu0 0.0
        %8176 = vmatmul.mubr.f32.gmra.mxu0 %v8070
        %v8177 = vpop.f32.mrf.mxu0
        %v8178 = vadd.f32 %v1964, %v8177
        %v8179 = vpop.f32.mrf.mxu0
        %v8180 = vadd.f32 %v1968, %v8179
        %8181 = vmatprep.mubr.f32.mxu0 0.0
        %8182 = vmatmul.mubr.f32.gmra.mxu0 %v8071
        %v8183 = vpop.f32.mrf.mxu0
        %v8184 = vadd.f32 %v1964, %v8183
        %v8185 = vpop.f32.mrf.mxu0
        %v8186 = vadd.f32 %v1968, %v8185
        %8187 = vmatprep.mubr.f32.mxu0 0.0
        %8188 = vmatmul.mubr.f32.gmra.mxu0 %v8072
        %v8189 = vpop.f32.mrf.mxu0
        %v8190 = vadd.f32 %v1964, %v8189
        %v8191 = vpop.f32.mrf.mxu0
        %v8192 = vadd.f32 %v1968, %v8191
        %8193 = vmatprep.mubr.f32.mxu0 0.0
        %8194 = vmatmul.mubr.f32.gmra.mxu0 %v8073
        %v8195 = vpop.f32.mrf.mxu0
        %v8196 = vadd.f32 %v1964, %v8195
        %v8197 = vpop.f32.mrf.mxu0
        %v8198 = vadd.f32 %v1968, %v8197
        %8199 = vmatprep.mubr.f32.mxu0 0.0
        %8200 = vmatmul.mubr.f32.gmra.mxu0 %v8074
        %v8201 = vpop.f32.mrf.mxu0
        %v8202 = vadd.f32 %v1964, %v8201
        %v8203 = vpop.f32.mrf.mxu0
        %v8204 = vadd.f32 %v1968, %v8203
        %8205 = vmatprep.mubr.f32.mxu0 0.0
        %8206 = vmatmul.mubr.f32.gmra.mxu0 %v8075
        %v8207 = vpop.f32.mrf.mxu0
        %v8208 = vadd.f32 %v1964, %v8207
        %v8209 = vpop.f32.mrf.mxu0
        %v8210 = vadd.f32 %v1968, %v8209
        %8211 = vmatprep.mubr.f32.mxu0 0.0
        %8212 = vmatmul.mubr.f32.gmra.mxu0 %v8076
        %v8213 = vpop.f32.mrf.mxu0
        %v8214 = vadd.f32 %v1964, %v8213
        %v8215 = vpop.f32.mrf.mxu0
        %v8216 = vadd.f32 %v1968, %v8215
        %8217 = vmatprep.mubr.f32.mxu0 0.0
        %8218 = vmatmul.mubr.f32.gmra.mxu0 %v8077
        %v8219 = vpop.f32.mrf.mxu0
        %v8220 = vadd.f32 %v1964, %v8219
        %v8221 = vpop.f32.mrf.mxu0
        %v8222 = vadd.f32 %v1968, %v8221
        %8223 = vmatprep.mubr.f32.mxu0 0.0
        %8224 = vmatmul.mubr.f32.gmra.mxu0 %v8078
        %v8225 = vpop.f32.mrf.mxu0
        %v8226 = vadd.f32 %v1964, %v8225
        %v8227 = vpop.f32.mrf.mxu0
        %v8228 = vadd.f32 %v1968, %v8227
        %8229 = vmatprep.mubr.f32.mxu0 0.0
        %8230 = vmatmul.mubr.f32.gmra.mxu0 %v8079
        %v8231 = vpop.f32.mrf.mxu0
        %v8232 = vadd.f32 %v1964, %v8231
        %v8233 = vpop.f32.mrf.mxu0
        %v8234 = vadd.f32 %v1968, %v8233
        %8235 = vmatprep.mubr.f32.mxu0 0.0
        %8236 = vmatmul.mubr.f32.gmra.mxu0 %v8080
        %v8237 = vpop.f32.mrf.mxu0
        %v8238 = vadd.f32 %v1964, %v8237
        %v8239 = vpop.f32.mrf.mxu0
        %v8240 = vadd.f32 %v1968, %v8239
        %8241 = vdwg.mxu0
        %v8242 = vxor.u32 %v8148, 2147483648
        %v8243 = vxor.u32 %v8154, 2147483648
        %v8244 = vxor.u32 %v8160, 2147483648
        %v8245 = vxor.u32 %v8166, 2147483648
        %v8246 = vxor.u32 %v8172, 2147483648
        %v8247 = vxor.u32 %v8178, 2147483648
        %v8248 = vxor.u32 %v8184, 2147483648
        %v8249 = vxor.u32 %v8190, 2147483648
        %v8250 = vxor.u32 %v8196, 2147483648
        %v8251 = vxor.u32 %v8202, 2147483648
        %v8252 = vxor.u32 %v8208, 2147483648
        %v8253 = vxor.u32 %v8214, 2147483648
        %v8254 = vxor.u32 %v8220, 2147483648
        %v8255 = vxor.u32 %v8226, 2147483648
        %v8256 = vxor.u32 %v8232, 2147483648
        %v8257 = vxor.u32 %v8238, 2147483648
        %v8258 = vmul.f32 %v8242, 1.442695
        %v8259 = vpow.pop %v8258
        %v8260 = vmul.f32 %v8243, 1.442695
        %v8261 = vpow.pop %v8260
        %v8262 = vmul.f32 %v8244, 1.442695
        %v8263 = vpow.pop %v8262
        %v8264 = vmul.f32 %v8245, 1.442695
        %v8265 = vpow.pop %v8264
        %v8266 = vmul.f32 %v8246, 1.442695
        %v8267 = vpow.pop %v8266
        %v8268 = vmul.f32 %v8247, 1.442695
        %v8269 = vpow.pop %v8268
        %v8270 = vmul.f32 %v8248, 1.442695
        %v8271 = vpow.pop %v8270
        %v8272 = vmul.f32 %v8249, 1.442695
        %v8273 = vpow.pop %v8272
        %v8274 = vmul.f32 %v8250, 1.442695
        %v8275 = vpow.pop %v8274
        %v8276 = vmul.f32 %v8251, 1.442695
        %v8277 = vpow.pop %v8276
        %v8278 = vmul.f32 %v8252, 1.442695
        %v8279 = vpow.pop %v8278
        %v8280 = vmul.f32 %v8253, 1.442695
        %v8281 = vpow.pop %v8280
        %v8282 = vmul.f32 %v8254, 1.442695
        %v8283 = vpow.pop %v8282
        %v8284 = vmul.f32 %v8255, 1.442695
        %v8285 = vpow.pop %v8284
        %v8286 = vmul.f32 %v8256, 1.442695
        %v8287 = vpow.pop %v8286
        %v8288 = vmul.f32 %v8257, 1.442695
        %v8289 = vpow.pop %v8288
        %v8290 = vadd.f32 %v8259, 1.0
        %v8291 = vadd.f32 %v8261, 1.0
        %v8292 = vadd.f32 %v8263, 1.0
        %v8293 = vadd.f32 %v8265, 1.0
        %v8294 = vadd.f32 %v8267, 1.0
        %v8295 = vadd.f32 %v8269, 1.0
        %v8296 = vadd.f32 %v8271, 1.0
        %v8297 = vadd.f32 %v8273, 1.0
        %v8298 = vadd.f32 %v8275, 1.0
        %v8299 = vadd.f32 %v8277, 1.0
        %v8300 = vadd.f32 %v8279, 1.0
        %v8301 = vadd.f32 %v8281, 1.0
        %v8302 = vadd.f32 %v8283, 1.0
        %v8303 = vadd.f32 %v8285, 1.0
        %v8304 = vadd.f32 %v8287, 1.0
        %v8305 = vadd.f32 %v8289, 1.0
        %v8306 = vrcp.pop %v8290
        %v8307 = vmul.f32 1.0, %v8306
        %v8308 = vrcp.pop %v8291
        %v8309 = vmul.f32 1.0, %v8308
        %v8310 = vrcp.pop %v8292
        %v8311 = vmul.f32 1.0, %v8310
        %v8312 = vrcp.pop %v8293
        %v8313 = vmul.f32 1.0, %v8312
        %v8314 = vrcp.pop %v8294
        %v8315 = vmul.f32 1.0, %v8314
        %v8316 = vrcp.pop %v8295
        %v8317 = vmul.f32 1.0, %v8316
        %v8318 = vrcp.pop %v8296
        %v8319 = vmul.f32 1.0, %v8318
        %v8320 = vrcp.pop %v8297
        %v8321 = vmul.f32 1.0, %v8320
        %v8322 = vrcp.pop %v8298
        %v8323 = vmul.f32 1.0, %v8322
        %v8324 = vrcp.pop %v8299
        %v8325 = vmul.f32 1.0, %v8324
        %v8326 = vrcp.pop %v8300
        %v8327 = vmul.f32 1.0, %v8326
        %v8328 = vrcp.pop %v8301
        %v8329 = vmul.f32 1.0, %v8328
        %v8330 = vrcp.pop %v8302
        %v8331 = vmul.f32 1.0, %v8330
        %v8332 = vrcp.pop %v8303
        %v8333 = vmul.f32 1.0, %v8332
        %v8334 = vrcp.pop %v8304
        %v8335 = vmul.f32 1.0, %v8334
        %v8336 = vrcp.pop %v8305
        %v8337 = vmul.f32 1.0, %v8336
        %8354 = vrot.lane.b32.xlu0 %v8150, 64
        %v8355 = vpop.permute.xlu0 %8354
        %8356 = vrot.lane.b32.xlu0 %v8156, 64
        %v8357 = vpop.permute.xlu0 %8356
        %8358 = vrot.lane.b32.xlu0 %v8162, 64
        %v8359 = vpop.permute.xlu0 %8358
        %8360 = vrot.lane.b32.xlu0 %v8168, 64
        %v8361 = vpop.permute.xlu0 %8360
        %8362 = vrot.lane.b32.xlu0 %v8174, 64
        %v8363 = vpop.permute.xlu0 %8362
        %8364 = vrot.lane.b32.xlu0 %v8180, 64
        %v8365 = vpop.permute.xlu0 %8364
        %8366 = vrot.lane.b32.xlu0 %v8186, 64
        %v8367 = vpop.permute.xlu0 %8366
        %8368 = vrot.lane.b32.xlu0 %v8192, 64
        %v8369 = vpop.permute.xlu0 %8368
        %8370 = vrot.lane.b32.xlu0 %v8198, 64
        %v8371 = vpop.permute.xlu0 %8370
        %8372 = vrot.lane.b32.xlu0 %v8204, 64
        %v8373 = vpop.permute.xlu0 %8372
        %8374 = vrot.lane.b32.xlu0 %v8210, 64
        %v8375 = vpop.permute.xlu0 %8374
        %8376 = vrot.lane.b32.xlu0 %v8216, 64
        %v8377 = vpop.permute.xlu0 %8376
        %8378 = vrot.lane.b32.xlu0 %v8222, 64
        %v8379 = vpop.permute.xlu0 %8378
        %8380 = vrot.lane.b32.xlu0 %v8228, 64
        %v8381 = vpop.permute.xlu0 %8380
        %8382 = vrot.lane.b32.xlu0 %v8234, 64
        %v8383 = vpop.permute.xlu0 %8382
        %8384 = vrot.lane.b32.xlu0 %v8240, 64
        %v8385 = vpop.permute.xlu0 %8384
        %v8402 = vmul.f32 %v8307, %v8355
        %v8403 = vmul.f32 %v8309, %v8357
        %v8404 = vmul.f32 %v8311, %v8359
        %v8405 = vmul.f32 %v8313, %v8361
        %v8406 = vmul.f32 %v8315, %v8363
        %v8407 = vmul.f32 %v8317, %v8365
        %v8408 = vmul.f32 %v8319, %v8367
        %v8409 = vmul.f32 %v8321, %v8369
        %v8410 = vmul.f32 %v8323, %v8371
        %v8411 = vmul.f32 %v8325, %v8373
        %v8412 = vmul.f32 %v8327, %v8375
        %v8413 = vmul.f32 %v8329, %v8377
        %v8414 = vmul.f32 %v8331, %v8379
        %v8415 = vmul.f32 %v8333, %v8381
        %v8416 = vmul.f32 %v8335, %v8383
        %v8417 = vmul.f32 %v8337, %v8385
        %v8418 = vadd.f32 %v8150, %v8402
        %v8419 = vadd.f32 %v8156, %v8403
        %v8420 = vadd.f32 %v8162, %v8404
        %v8421 = vadd.f32 %v8168, %v8405
        %v8422 = vadd.f32 %v8174, %v8406
        %v8423 = vadd.f32 %v8180, %v8407
        %v8424 = vadd.f32 %v8186, %v8408
        %v8425 = vadd.f32 %v8192, %v8409
        %v8426 = vadd.f32 %v8198, %v8410
        %v8427 = vadd.f32 %v8204, %v8411
        %v8428 = vadd.f32 %v8210, %v8412
        %v8429 = vadd.f32 %v8216, %v8413
        %v8430 = vadd.f32 %v8222, %v8414
        %v8431 = vadd.f32 %v8228, %v8415
        %v8432 = vadd.f32 %v8234, %v8416
        %v8433 = vadd.f32 %v8240, %v8417
        %v8434 = vtanh.pop %v8418
        %v8435 = vtanh.pop %v8419
        %v8436 = vtanh.pop %v8420
        %v8437 = vtanh.pop %v8421
        %v8438 = vtanh.pop %v8422
        %v8439 = vtanh.pop %v8423
        %v8440 = vtanh.pop %v8424
        %v8441 = vtanh.pop %v8425
        %v8442 = vtanh.pop %v8426
        %v8443 = vtanh.pop %v8427
        %v8444 = vtanh.pop %v8428
        %v8445 = vtanh.pop %v8429
        %v8446 = vtanh.pop %v8430
        %v8447 = vtanh.pop %v8431
        %v8448 = vtanh.pop %v8432
        %v8449 = vtanh.pop %v8433
        %v8450 = vsub.f32 1.0, %v8307
        %v8451 = vsub.f32 1.0, %v8309
        %v8452 = vsub.f32 1.0, %v8311
        %v8453 = vsub.f32 1.0, %v8313
        %v8454 = vsub.f32 1.0, %v8315
        %v8455 = vsub.f32 1.0, %v8317
        %v8456 = vsub.f32 1.0, %v8319
        %v8457 = vsub.f32 1.0, %v8321
        %v8458 = vsub.f32 1.0, %v8323
        %v8459 = vsub.f32 1.0, %v8325
        %v8460 = vsub.f32 1.0, %v8327
        %v8461 = vsub.f32 1.0, %v8329
        %v8462 = vsub.f32 1.0, %v8331
        %v8463 = vsub.f32 1.0, %v8333
        %v8464 = vsub.f32 1.0, %v8335
        %v8465 = vsub.f32 1.0, %v8337
        %8482 = vrot.lane.b32.xlu0 %v8434, 64
        %v8483 = vpop.permute.xlu0 %8482
        %8484 = vrot.lane.b32.xlu0 %v8435, 64
        %v8485 = vpop.permute.xlu0 %8484
        %8486 = vrot.lane.b32.xlu0 %v8436, 64
        %v8487 = vpop.permute.xlu0 %8486
        %8488 = vrot.lane.b32.xlu0 %v8437, 64
        %v8489 = vpop.permute.xlu0 %8488
        %8490 = vrot.lane.b32.xlu0 %v8438, 64
        %v8491 = vpop.permute.xlu0 %8490
        %8492 = vrot.lane.b32.xlu0 %v8439, 64
        %v8493 = vpop.permute.xlu0 %8492
        %8494 = vrot.lane.b32.xlu0 %v8440, 64
        %v8495 = vpop.permute.xlu0 %8494
        %8496 = vrot.lane.b32.xlu0 %v8441, 64
        %v8497 = vpop.permute.xlu0 %8496
        %8498 = vrot.lane.b32.xlu0 %v8442, 64
        %v8499 = vpop.permute.xlu0 %8498
        %8500 = vrot.lane.b32.xlu0 %v8443, 64
        %v8501 = vpop.permute.xlu0 %8500
        %8502 = vrot.lane.b32.xlu0 %v8444, 64
        %v8503 = vpop.permute.xlu0 %8502
        %8504 = vrot.lane.b32.xlu0 %v8445, 64
        %v8505 = vpop.permute.xlu0 %8504
        %8506 = vrot.lane.b32.xlu0 %v8446, 64
        %v8507 = vpop.permute.xlu0 %8506
        %8508 = vrot.lane.b32.xlu0 %v8447, 64
        %v8509 = vpop.permute.xlu0 %8508
        %8510 = vrot.lane.b32.xlu0 %v8448, 64
        %v8511 = vpop.permute.xlu0 %8510
        %8512 = vrot.lane.b32.xlu0 %v8449, 64
        %v8513 = vpop.permute.xlu0 %8512
        %v8530 = vmul.f32 %v8450, %v8483
        %v8531 = vmul.f32 %v8451, %v8485
        %v8532 = vmul.f32 %v8452, %v8487
        %v8533 = vmul.f32 %v8453, %v8489
        %v8534 = vmul.f32 %v8454, %v8491
        %v8535 = vmul.f32 %v8455, %v8493
        %v8536 = vmul.f32 %v8456, %v8495
        %v8537 = vmul.f32 %v8457, %v8497
        %v8538 = vmul.f32 %v8458, %v8499
        %v8539 = vmul.f32 %v8459, %v8501
        %v8540 = vmul.f32 %v8460, %v8503
        %v8541 = vmul.f32 %v8461, %v8505
        %v8542 = vmul.f32 %v8462, %v8507
        %v8543 = vmul.f32 %v8463, %v8509
        %v8544 = vmul.f32 %v8464, %v8511
        %v8545 = vmul.f32 %v8465, %v8513
        %v8546 = vmul.f32 %v8307, %v7456
        %v8547 = vmul.f32 %v8309, %v7457
        %v8548 = vmul.f32 %v8311, %v7458
        %v8549 = vmul.f32 %v8313, %v7459
        %v8550 = vmul.f32 %v8315, %v7460
        %v8551 = vmul.f32 %v8317, %v7461
        %v8552 = vmul.f32 %v8319, %v7462
        %v8553 = vmul.f32 %v8321, %v7463
        %v8554 = vmul.f32 %v8323, %v7464
        %v8555 = vmul.f32 %v8325, %v7465
        %v8556 = vmul.f32 %v8327, %v7466
        %v8557 = vmul.f32 %v8329, %v7467
        %v8558 = vmul.f32 %v8331, %v7468
        %v8559 = vmul.f32 %v8333, %v7469
        %v8560 = vmul.f32 %v8335, %v7470
        %v8561 = vmul.f32 %v8337, %v7471
        %v8562 = vadd.f32 %v8530, %v8546
        %v8563 = vadd.f32 %v8531, %v8547
        %v8564 = vadd.f32 %v8532, %v8548
        %v8565 = vadd.f32 %v8533, %v8549
        %v8566 = vadd.f32 %v8534, %v8550
        %v8567 = vadd.f32 %v8535, %v8551
        %v8568 = vadd.f32 %v8536, %v8552
        %v8569 = vadd.f32 %v8537, %v8553
        %v8570 = vadd.f32 %v8538, %v8554
        %v8571 = vadd.f32 %v8539, %v8555
        %v8572 = vadd.f32 %v8540, %v8556
        %v8573 = vadd.f32 %v8541, %v8557
        %v8574 = vadd.f32 %v8542, %v8558
        %v8575 = vadd.f32 %v8543, %v8559
        %v8576 = vadd.f32 %v8544, %v8560
        %v8577 = vadd.f32 %v8545, %v8561
        %v8578 = vld [vmem:[#allocation2 + $0x600] sm:$0xff]
        %v8579 = vld [vmem:[#allocation2 + $0x608] sm:$0xff]
        %v8580 = vld [vmem:[#allocation2 + $0x610] sm:$0xff]
        %v8581 = vld [vmem:[#allocation2 + $0x618] sm:$0xff]
        %v8582 = vld [vmem:[#allocation2 + $0x620] sm:$0xff]
        %v8583 = vld [vmem:[#allocation2 + $0x628] sm:$0xff]
        %v8584 = vld [vmem:[#allocation2 + $0x630] sm:$0xff]
        %v8585 = vld [vmem:[#allocation2 + $0x638] sm:$0xff]
        %v8586 = vld [vmem:[#allocation2 + $0x640] sm:$0xff]
        %v8587 = vld [vmem:[#allocation2 + $0x648] sm:$0xff]
        %v8588 = vld [vmem:[#allocation2 + $0x650] sm:$0xff]
        %v8589 = vld [vmem:[#allocation2 + $0x658] sm:$0xff]
        %v8590 = vld [vmem:[#allocation2 + $0x660] sm:$0xff]
        %v8591 = vld [vmem:[#allocation2 + $0x668] sm:$0xff]
        %v8592 = vld [vmem:[#allocation2 + $0x670] sm:$0xff]
        %v8593 = vld [vmem:[#allocation2 + $0x678] sm:$0xff]
        %v8594 = vld [vmem:[#allocation2 + $0x680] sm:$0xff]
        %v8595 = vld [vmem:[#allocation2 + $0x688] sm:$0xff]
        %v8596 = vld [vmem:[#allocation2 + $0x690] sm:$0xff]
        %v8597 = vld [vmem:[#allocation2 + $0x698] sm:$0xff]
        %v8598 = vld [vmem:[#allocation2 + $0x6a0] sm:$0xff]
        %v8599 = vld [vmem:[#allocation2 + $0x6a8] sm:$0xff]
        %v8600 = vld [vmem:[#allocation2 + $0x6b0] sm:$0xff]
        %v8601 = vld [vmem:[#allocation2 + $0x6b8] sm:$0xff]
        %v8602 = vld [vmem:[#allocation2 + $0x6c0] sm:$0xff]
        %v8603 = vld [vmem:[#allocation2 + $0x6c8] sm:$0xff]
        %v8604 = vld [vmem:[#allocation2 + $0x6d0] sm:$0xff]
        %v8605 = vld [vmem:[#allocation2 + $0x6d8] sm:$0xff]
        %v8606 = vld [vmem:[#allocation2 + $0x6e0] sm:$0xff]
        %v8607 = vld [vmem:[#allocation2 + $0x6e8] sm:$0xff]
        %v8608 = vld [vmem:[#allocation2 + $0x6f0] sm:$0xff]
        %v8609 = vld [vmem:[#allocation2 + $0x6f8] sm:$0xff]
        %v8610 = vsel %vm1648, %v8018, 0
        %v8612 = vsel %vm1648, %v8020, 0
        %v8614 = vsel %vm1648, %v8022, 0
        %v8616 = vsel %vm1648, %v8024, 0
        %v8618 = vsel %vm1648, %v8026, 0
        %v8620 = vsel %vm1648, %v8028, 0
        %v8622 = vsel %vm1648, %v8030, 0
        %v8624 = vsel %vm1648, %v8032, 0
        %v8626 = vsel %vm1648, %v8034, 0
        %v8628 = vsel %vm1648, %v8036, 0
        %v8630 = vsel %vm1648, %v8038, 0
        %v8632 = vsel %vm1648, %v8040, 0
        %v8634 = vsel %vm1648, %v8042, 0
        %v8636 = vsel %vm1648, %v8044, 0
        %v8638 = vsel %vm1648, %v8046, 0
        %v8640 = vsel %vm1648, %v8048, 0
        %8642 = vmatprep.subr.mxu0 0.0
        %8643 = vmatpush1.msra.mxu0 0.0
        %8644 = vmatprep.subr.mxu0 0.0
        %8645 = vmatpush1.msra.mxu0 0.0
        %8646 = vmatprep.subr.mxu0 0.0
        %8647 = vmatpush1.msra.mxu0 0.0
        %8648 = vmatprep.subr.mxu0 0.0
        %8649 = vmatpush1.msra.mxu0 0.0
        %8650 = vmatprep.subr.mxu0 0.0
        %8651 = vmatpush1.msra.mxu0 0.0
        %8652 = vmatprep.subr.mxu0 0.0
        %8653 = vmatpush1.msra.mxu0 0.0
        %8654 = vmatprep.subr.mxu0 0.0
        %8655 = vmatpush1.msra.mxu0 0.0
        %8656 = vmatprep.subr.mxu0 0.0
        %8657 = vmatpush1.msra.mxu0 0.0
        %8658 = vmatprep.subr.mxu0 %v1919
        %8659 = vmatpush1.msra.mxu0 %v1918
        %8660 = vmatprep.subr.mxu0 %v1917
        %8661 = vmatpush1.msra.mxu0 %v1916
        %8662 = vmatprep.subr.mxu0 %v1915
        %8663 = vmatpush1.msra.mxu0 %v1914
        %8664 = vmatprep.subr.mxu0 %v1913
        %8665 = vmatpush1.msra.mxu0 %v1912
        %8666 = vmatprep.subr.mxu0 %v1911
        %8667 = vmatpush1.msra.mxu0 %v1910
        %8668 = vmatprep.subr.mxu0 %v1909
        %8669 = vmatpush1.msra.mxu0 %v1908
        %8670 = vmatprep.subr.mxu0 %v1907
        %8671 = vmatpush1.msra.mxu0 %v1906
        %8672 = vmatprep.subr.mxu0 %v1905
        %8673 = vmatpush1.msra.mxu0 %v1904
        %8674 = vmatprep.subr.mxu0 0.0
        %8675 = vmatpush2.msra.mxu0 0.0
        %8676 = vmatprep.subr.mxu0 0.0
        %8677 = vmatpush2.msra.mxu0 0.0
        %8678 = vmatprep.subr.mxu0 0.0
        %8679 = vmatpush2.msra.mxu0 0.0
        %8680 = vmatprep.subr.mxu0 0.0
        %8681 = vmatpush2.msra.mxu0 0.0
        %8682 = vmatprep.subr.mxu0 0.0
        %8683 = vmatpush2.msra.mxu0 0.0
        %8684 = vmatprep.subr.mxu0 0.0
        %8685 = vmatpush2.msra.mxu0 0.0
        %8686 = vmatprep.subr.mxu0 0.0
        %8687 = vmatpush2.msra.mxu0 0.0
        %8688 = vmatprep.subr.mxu0 0.0
        %8689 = vmatpush2.msra.mxu0 0.0
        %8690 = vmatprep.subr.mxu0 0.0
        %8691 = vmatpush2.msra.mxu0 0.0
        %8692 = vmatprep.subr.mxu0 0.0
        %8693 = vmatpush2.msra.mxu0 0.0
        %8694 = vmatprep.subr.mxu0 0.0
        %8695 = vmatpush2.msra.mxu0 0.0
        %8696 = vmatprep.subr.mxu0 0.0
        %8697 = vmatpush2.msra.mxu0 0.0
        %8698 = vmatprep.subr.mxu0 0.0
        %8699 = vmatpush2.msra.mxu0 0.0
        %8700 = vmatprep.subr.mxu0 0.0
        %8701 = vmatpush2.msra.mxu0 0.0
        %8702 = vmatprep.subr.mxu0 0.0
        %8703 = vmatpush2.msra.mxu0 0.0
        %8704 = vmatprep.subr.mxu0 0.0
        %8705 = vmatpush2.msra.mxu0 0.0
        %8706 = vmatprep.mubr.f32.mxu0 0.0
        %8707 = vmatmul.mubr.f32.gmra.mxu0 %v8610
        %v8708 = vpop.f32.mrf.mxu0
        %v8709 = vadd.f32 0.0, %v8708
        %v8710 = vpop.f32.mrf.mxu0
        %v8711 = vadd.f32 0.0, %v8710
        %8712 = vmatprep.mubr.f32.mxu0 0.0
        %8713 = vmatmul.mubr.f32.gmra.mxu0 %v8612
        %v8714 = vpop.f32.mrf.mxu0
        %v8715 = vadd.f32 0.0, %v8714
        %v8716 = vpop.f32.mrf.mxu0
        %v8717 = vadd.f32 0.0, %v8716
        %8718 = vmatprep.mubr.f32.mxu0 0.0
        %8719 = vmatmul.mubr.f32.gmra.mxu0 %v8614
        %v8720 = vpop.f32.mrf.mxu0
        %v8721 = vadd.f32 0.0, %v8720
        %v8722 = vpop.f32.mrf.mxu0
        %v8723 = vadd.f32 0.0, %v8722
        %8724 = vmatprep.mubr.f32.mxu0 0.0
        %8725 = vmatmul.mubr.f32.gmra.mxu0 %v8616
        %v8726 = vpop.f32.mrf.mxu0
        %v8727 = vadd.f32 0.0, %v8726
        %v8728 = vpop.f32.mrf.mxu0
        %v8729 = vadd.f32 0.0, %v8728
        %8730 = vmatprep.mubr.f32.mxu0 0.0
        %8731 = vmatmul.mubr.f32.gmra.mxu0 %v8618
        %v8732 = vpop.f32.mrf.mxu0
        %v8733 = vadd.f32 0.0, %v8732
        %v8734 = vpop.f32.mrf.mxu0
        %v8735 = vadd.f32 0.0, %v8734
        %8736 = vmatprep.mubr.f32.mxu0 0.0
        %8737 = vmatmul.mubr.f32.gmra.mxu0 %v8620
        %v8738 = vpop.f32.mrf.mxu0
        %v8739 = vadd.f32 0.0, %v8738
        %v8740 = vpop.f32.mrf.mxu0
        %v8741 = vadd.f32 0.0, %v8740
        %8742 = vmatprep.mubr.f32.mxu0 0.0
        %8743 = vmatmul.mubr.f32.gmra.mxu0 %v8622
        %v8744 = vpop.f32.mrf.mxu0
        %v8745 = vadd.f32 0.0, %v8744
        %v8746 = vpop.f32.mrf.mxu0
        %v8747 = vadd.f32 0.0, %v8746
        %8748 = vmatprep.mubr.f32.mxu0 0.0
        %8749 = vmatmul.mubr.f32.gmra.mxu0 %v8624
        %v8750 = vpop.f32.mrf.mxu0
        %v8751 = vadd.f32 0.0, %v8750
        %v8752 = vpop.f32.mrf.mxu0
        %v8753 = vadd.f32 0.0, %v8752
        %8754 = vmatprep.mubr.f32.mxu0 0.0
        %8755 = vmatmul.mubr.f32.gmra.mxu0 %v8626
        %v8756 = vpop.f32.mrf.mxu0
        %v8757 = vadd.f32 0.0, %v8756
        %v8758 = vpop.f32.mrf.mxu0
        %v8759 = vadd.f32 0.0, %v8758
        %8760 = vmatprep.mubr.f32.mxu0 0.0
        %8761 = vmatmul.mubr.f32.gmra.mxu0 %v8628
        %v8762 = vpop.f32.mrf.mxu0
        %v8763 = vadd.f32 0.0, %v8762
        %v8764 = vpop.f32.mrf.mxu0
        %v8765 = vadd.f32 0.0, %v8764
        %8766 = vmatprep.mubr.f32.mxu0 0.0
        %8767 = vmatmul.mubr.f32.gmra.mxu0 %v8630
        %v8768 = vpop.f32.mrf.mxu0
        %v8769 = vadd.f32 0.0, %v8768
        %v8770 = vpop.f32.mrf.mxu0
        %v8771 = vadd.f32 0.0, %v8770
        %8772 = vmatprep.mubr.f32.mxu0 0.0
        %8773 = vmatmul.mubr.f32.gmra.mxu0 %v8632
        %v8774 = vpop.f32.mrf.mxu0
        %v8775 = vadd.f32 0.0, %v8774
        %v8776 = vpop.f32.mrf.mxu0
        %v8777 = vadd.f32 0.0, %v8776
        %8778 = vmatprep.mubr.f32.mxu0 0.0
        %8779 = vmatmul.mubr.f32.gmra.mxu0 %v8634
        %v8780 = vpop.f32.mrf.mxu0
        %v8781 = vadd.f32 0.0, %v8780
        %v8782 = vpop.f32.mrf.mxu0
        %v8783 = vadd.f32 0.0, %v8782
        %8784 = vmatprep.mubr.f32.mxu0 0.0
        %8785 = vmatmul.mubr.f32.gmra.mxu0 %v8636
        %v8786 = vpop.f32.mrf.mxu0
        %v8787 = vadd.f32 0.0, %v8786
        %v8788 = vpop.f32.mrf.mxu0
        %v8789 = vadd.f32 0.0, %v8788
        %8790 = vmatprep.mubr.f32.mxu0 0.0
        %8791 = vmatmul.mubr.f32.gmra.mxu0 %v8638
        %v8792 = vpop.f32.mrf.mxu0
        %v8793 = vadd.f32 0.0, %v8792
        %v8794 = vpop.f32.mrf.mxu0
        %v8795 = vadd.f32 0.0, %v8794
        %8796 = vmatprep.mubr.f32.mxu0 0.0
        %8797 = vmatmul.mubr.f32.gmra.mxu0 %v8640
        %v8798 = vpop.f32.mrf.mxu0
        %v8799 = vadd.f32 0.0, %v8798
        %v8800 = vpop.f32.mrf.mxu0
        %v8801 = vadd.f32 0.0, %v8800
        %8802 = vdwg.mxu0
        %v8803 = vadd.f32 %v8578, %v8709
        %v8804 = vadd.f32 %v8580, %v8715
        %v8805 = vadd.f32 %v8582, %v8721
        %v8806 = vadd.f32 %v8584, %v8727
        %v8807 = vadd.f32 %v8586, %v8733
        %v8808 = vadd.f32 %v8588, %v8739
        %v8809 = vadd.f32 %v8590, %v8745
        %v8810 = vadd.f32 %v8592, %v8751
        %v8811 = vadd.f32 %v8594, %v8757
        %v8812 = vadd.f32 %v8596, %v8763
        %v8813 = vadd.f32 %v8598, %v8769
        %v8814 = vadd.f32 %v8600, %v8775
        %v8815 = vadd.f32 %v8602, %v8781
        %v8816 = vadd.f32 %v8604, %v8787
        %v8817 = vadd.f32 %v8606, %v8793
        %v8818 = vadd.f32 %v8608, %v8799
        %v8819 = vxor.u32 %v8803, 2147483648
        %v8820 = vxor.u32 %v8804, 2147483648
        %v8821 = vxor.u32 %v8805, 2147483648
        %v8822 = vxor.u32 %v8806, 2147483648
        %v8823 = vxor.u32 %v8807, 2147483648
        %v8824 = vxor.u32 %v8808, 2147483648
        %v8825 = vxor.u32 %v8809, 2147483648
        %v8826 = vxor.u32 %v8810, 2147483648
        %v8827 = vxor.u32 %v8811, 2147483648
        %v8828 = vxor.u32 %v8812, 2147483648
        %v8829 = vxor.u32 %v8813, 2147483648
        %v8830 = vxor.u32 %v8814, 2147483648
        %v8831 = vxor.u32 %v8815, 2147483648
        %v8832 = vxor.u32 %v8816, 2147483648
        %v8833 = vxor.u32 %v8817, 2147483648
        %v8834 = vxor.u32 %v8818, 2147483648
        %v8835 = vmul.f32 %v8819, 1.442695
        %v8836 = vpow.pop %v8835
        %v8837 = vmul.f32 %v8820, 1.442695
        %v8838 = vpow.pop %v8837
        %v8839 = vmul.f32 %v8821, 1.442695
        %v8840 = vpow.pop %v8839
        %v8841 = vmul.f32 %v8822, 1.442695
        %v8842 = vpow.pop %v8841
        %v8843 = vmul.f32 %v8823, 1.442695
        %v8844 = vpow.pop %v8843
        %v8845 = vmul.f32 %v8824, 1.442695
        %v8846 = vpow.pop %v8845
        %v8847 = vmul.f32 %v8825, 1.442695
        %v8848 = vpow.pop %v8847
        %v8849 = vmul.f32 %v8826, 1.442695
        %v8850 = vpow.pop %v8849
        %v8851 = vmul.f32 %v8827, 1.442695
        %v8852 = vpow.pop %v8851
        %v8853 = vmul.f32 %v8828, 1.442695
        %v8854 = vpow.pop %v8853
        %v8855 = vmul.f32 %v8829, 1.442695
        %v8856 = vpow.pop %v8855
        %v8857 = vmul.f32 %v8830, 1.442695
        %v8858 = vpow.pop %v8857
        %v8859 = vmul.f32 %v8831, 1.442695
        %v8860 = vpow.pop %v8859
        %v8861 = vmul.f32 %v8832, 1.442695
        %v8862 = vpow.pop %v8861
        %v8863 = vmul.f32 %v8833, 1.442695
        %v8864 = vpow.pop %v8863
        %v8865 = vmul.f32 %v8834, 1.442695
        %v8866 = vpow.pop %v8865
        %v8867 = vadd.f32 %v8836, 1.0
        %v8868 = vadd.f32 %v8838, 1.0
        %v8869 = vadd.f32 %v8840, 1.0
        %v8870 = vadd.f32 %v8842, 1.0
        %v8871 = vadd.f32 %v8844, 1.0
        %v8872 = vadd.f32 %v8846, 1.0
        %v8873 = vadd.f32 %v8848, 1.0
        %v8874 = vadd.f32 %v8850, 1.0
        %v8875 = vadd.f32 %v8852, 1.0
        %v8876 = vadd.f32 %v8854, 1.0
        %v8877 = vadd.f32 %v8856, 1.0
        %v8878 = vadd.f32 %v8858, 1.0
        %v8879 = vadd.f32 %v8860, 1.0
        %v8880 = vadd.f32 %v8862, 1.0
        %v8881 = vadd.f32 %v8864, 1.0
        %v8882 = vadd.f32 %v8866, 1.0
        %v8883 = vrcp.pop %v8867
        %v8884 = vmul.f32 1.0, %v8883
        %v8885 = vrcp.pop %v8868
        %v8886 = vmul.f32 1.0, %v8885
        %v8887 = vrcp.pop %v8869
        %v8888 = vmul.f32 1.0, %v8887
        %v8889 = vrcp.pop %v8870
        %v8890 = vmul.f32 1.0, %v8889
        %v8891 = vrcp.pop %v8871
        %v8892 = vmul.f32 1.0, %v8891
        %v8893 = vrcp.pop %v8872
        %v8894 = vmul.f32 1.0, %v8893
        %v8895 = vrcp.pop %v8873
        %v8896 = vmul.f32 1.0, %v8895
        %v8897 = vrcp.pop %v8874
        %v8898 = vmul.f32 1.0, %v8897
        %v8899 = vrcp.pop %v8875
        %v8900 = vmul.f32 1.0, %v8899
        %v8901 = vrcp.pop %v8876
        %v8902 = vmul.f32 1.0, %v8901
        %v8903 = vrcp.pop %v8877
        %v8904 = vmul.f32 1.0, %v8903
        %v8905 = vrcp.pop %v8878
        %v8906 = vmul.f32 1.0, %v8905
        %v8907 = vrcp.pop %v8879
        %v8908 = vmul.f32 1.0, %v8907
        %v8909 = vrcp.pop %v8880
        %v8910 = vmul.f32 1.0, %v8909
        %v8911 = vrcp.pop %v8881
        %v8912 = vmul.f32 1.0, %v8911
        %v8913 = vrcp.pop %v8882
        %v8914 = vmul.f32 1.0, %v8913
        %v8915 = vadd.f32 %v8711, %v1957
        %v8916 = vadd.f32 %v8717, %v1957
        %v8917 = vadd.f32 %v8723, %v1957
        %v8918 = vadd.f32 %v8729, %v1957
        %v8919 = vadd.f32 %v8735, %v1957
        %v8920 = vadd.f32 %v8741, %v1957
        %v8921 = vadd.f32 %v8747, %v1957
        %v8922 = vadd.f32 %v8753, %v1957
        %v8923 = vadd.f32 %v8759, %v1957
        %v8924 = vadd.f32 %v8765, %v1957
        %v8925 = vadd.f32 %v8771, %v1957
        %v8926 = vadd.f32 %v8777, %v1957
        %v8927 = vadd.f32 %v8783, %v1957
        %v8928 = vadd.f32 %v8789, %v1957
        %v8929 = vadd.f32 %v8795, %v1957
        %v8930 = vadd.f32 %v8801, %v1957
        %v8931 = vmul.f32 %v8884, %v8915
        %v8932 = vmul.f32 %v8886, %v8916
        %v8933 = vmul.f32 %v8888, %v8917
        %v8934 = vmul.f32 %v8890, %v8918
        %v8935 = vmul.f32 %v8892, %v8919
        %v8936 = vmul.f32 %v8894, %v8920
        %v8937 = vmul.f32 %v8896, %v8921
        %v8938 = vmul.f32 %v8898, %v8922
        %v8939 = vmul.f32 %v8900, %v8923
        %v8940 = vmul.f32 %v8902, %v8924
        %v8941 = vmul.f32 %v8904, %v8925
        %v8942 = vmul.f32 %v8906, %v8926
        %v8943 = vmul.f32 %v8908, %v8927
        %v8944 = vmul.f32 %v8910, %v8928
        %v8945 = vmul.f32 %v8912, %v8929
        %v8946 = vmul.f32 %v8914, %v8930
        %v8947 = vadd.f32 %v8579, %v8931
        %v8948 = vadd.f32 %v8581, %v8932
        %v8949 = vadd.f32 %v8583, %v8933
        %v8950 = vadd.f32 %v8585, %v8934
        %v8951 = vadd.f32 %v8587, %v8935
        %v8952 = vadd.f32 %v8589, %v8936
        %v8953 = vadd.f32 %v8591, %v8937
        %v8954 = vadd.f32 %v8593, %v8938
        %v8955 = vadd.f32 %v8595, %v8939
        %v8956 = vadd.f32 %v8597, %v8940
        %v8957 = vadd.f32 %v8599, %v8941
        %v8958 = vadd.f32 %v8601, %v8942
        %v8959 = vadd.f32 %v8603, %v8943
        %v8960 = vadd.f32 %v8605, %v8944
        %v8961 = vadd.f32 %v8607, %v8945
        %v8962 = vadd.f32 %v8609, %v8946
        %v8963 = vtanh.pop %v8947
        %v8964 = vtanh.pop %v8948
        %v8965 = vtanh.pop %v8949
        %v8966 = vtanh.pop %v8950
        %v8967 = vtanh.pop %v8951
        %v8968 = vtanh.pop %v8952
        %v8969 = vtanh.pop %v8953
        %v8970 = vtanh.pop %v8954
        %v8971 = vtanh.pop %v8955
        %v8972 = vtanh.pop %v8956
        %v8973 = vtanh.pop %v8957
        %v8974 = vtanh.pop %v8958
        %v8975 = vtanh.pop %v8959
        %v8976 = vtanh.pop %v8960
        %v8977 = vtanh.pop %v8961
        %v8978 = vtanh.pop %v8962
        %v8979 = vsub.f32 1.0, %v8884
        %v8980 = vsub.f32 1.0, %v8886
        %v8981 = vsub.f32 1.0, %v8888
        %v8982 = vsub.f32 1.0, %v8890
        %v8983 = vsub.f32 1.0, %v8892
        %v8984 = vsub.f32 1.0, %v8894
        %v8985 = vsub.f32 1.0, %v8896
        %v8986 = vsub.f32 1.0, %v8898
        %v8987 = vsub.f32 1.0, %v8900
        %v8988 = vsub.f32 1.0, %v8902
        %v8989 = vsub.f32 1.0, %v8904
        %v8990 = vsub.f32 1.0, %v8906
        %v8991 = vsub.f32 1.0, %v8908
        %v8992 = vsub.f32 1.0, %v8910
        %v8993 = vsub.f32 1.0, %v8912
        %v8994 = vsub.f32 1.0, %v8914
        %9011 = vrot.lane.b32.xlu0 %v8963, 64
        %v9012 = vpop.permute.xlu0 %9011
        %9013 = vrot.lane.b32.xlu0 %v8964, 64
        %v9014 = vpop.permute.xlu0 %9013
        %9015 = vrot.lane.b32.xlu0 %v8965, 64
        %v9016 = vpop.permute.xlu0 %9015
        %9017 = vrot.lane.b32.xlu0 %v8966, 64
        %v9018 = vpop.permute.xlu0 %9017
        %9019 = vrot.lane.b32.xlu0 %v8967, 64
        %v9020 = vpop.permute.xlu0 %9019
        %9021 = vrot.lane.b32.xlu0 %v8968, 64
        %v9022 = vpop.permute.xlu0 %9021
        %9023 = vrot.lane.b32.xlu0 %v8969, 64
        %v9024 = vpop.permute.xlu0 %9023
        %9025 = vrot.lane.b32.xlu0 %v8970, 64
        %v9026 = vpop.permute.xlu0 %9025
        %9027 = vrot.lane.b32.xlu0 %v8971, 64
        %v9028 = vpop.permute.xlu0 %9027
        %9029 = vrot.lane.b32.xlu0 %v8972, 64
        %v9030 = vpop.permute.xlu0 %9029
        %9031 = vrot.lane.b32.xlu0 %v8973, 64
        %v9032 = vpop.permute.xlu0 %9031
        %9033 = vrot.lane.b32.xlu0 %v8974, 64
        %v9034 = vpop.permute.xlu0 %9033
        %9035 = vrot.lane.b32.xlu0 %v8975, 64
        %v9036 = vpop.permute.xlu0 %9035
        %9037 = vrot.lane.b32.xlu0 %v8976, 64
        %v9038 = vpop.permute.xlu0 %9037
        %9039 = vrot.lane.b32.xlu0 %v8977, 64
        %v9040 = vpop.permute.xlu0 %9039
        %9041 = vrot.lane.b32.xlu0 %v8978, 64
        %v9042 = vpop.permute.xlu0 %9041
        %v9059 = vmul.f32 %v8979, %v9012
        %v9060 = vmul.f32 %v8980, %v9014
        %v9061 = vmul.f32 %v8981, %v9016
        %v9062 = vmul.f32 %v8982, %v9018
        %v9063 = vmul.f32 %v8983, %v9020
        %v9064 = vmul.f32 %v8984, %v9022
        %v9065 = vmul.f32 %v8985, %v9024
        %v9066 = vmul.f32 %v8986, %v9026
        %v9067 = vmul.f32 %v8987, %v9028
        %v9068 = vmul.f32 %v8988, %v9030
        %v9069 = vmul.f32 %v8989, %v9032
        %v9070 = vmul.f32 %v8990, %v9034
        %v9071 = vmul.f32 %v8991, %v9036
        %v9072 = vmul.f32 %v8992, %v9038
        %v9073 = vmul.f32 %v8993, %v9040
        %v9074 = vmul.f32 %v8994, %v9042
        %v9075 = vmul.f32 %v8884, %v7985
        %v9076 = vmul.f32 %v8886, %v7986
        %v9077 = vmul.f32 %v8888, %v7987
        %v9078 = vmul.f32 %v8890, %v7988
        %v9079 = vmul.f32 %v8892, %v7989
        %v9080 = vmul.f32 %v8894, %v7990
        %v9081 = vmul.f32 %v8896, %v7991
        %v9082 = vmul.f32 %v8898, %v7992
        %v9083 = vmul.f32 %v8900, %v7993
        %v9084 = vmul.f32 %v8902, %v7994
        %v9085 = vmul.f32 %v8904, %v7995
        %v9086 = vmul.f32 %v8906, %v7996
        %v9087 = vmul.f32 %v8908, %v7997
        %v9088 = vmul.f32 %v8910, %v7998
        %v9089 = vmul.f32 %v8912, %v7999
        %v9090 = vmul.f32 %v8914, %v8000
        %v9091 = vadd.f32 %v9059, %v9075
        %v9092 = vadd.f32 %v9060, %v9076
        %v9093 = vadd.f32 %v9061, %v9077
        %v9094 = vadd.f32 %v9062, %v9078
        %v9095 = vadd.f32 %v9063, %v9079
        %v9096 = vadd.f32 %v9064, %v9080
        %v9097 = vadd.f32 %v9065, %v9081
        %v9098 = vadd.f32 %v9066, %v9082
        %v9099 = vadd.f32 %v9067, %v9083
        %v9100 = vadd.f32 %v9068, %v9084
        %v9101 = vadd.f32 %v9069, %v9085
        %v9102 = vadd.f32 %v9070, %v9086
        %v9103 = vadd.f32 %v9071, %v9087
        %v9104 = vadd.f32 %v9072, %v9088
        %v9105 = vadd.f32 %v9073, %v9089
        %v9106 = vadd.f32 %v9074, %v9090
        %9123 = vrot.lane.b32.xlu0 %v9091, 64
        %v9124 = vpop.permute.xlu0 %9123
        %9125 = vrot.lane.b32.xlu0 %v9092, 64
        %v9126 = vpop.permute.xlu0 %9125
        %9127 = vrot.lane.b32.xlu0 %v9093, 64
        %v9128 = vpop.permute.xlu0 %9127
        %9129 = vrot.lane.b32.xlu0 %v9094, 64
        %v9130 = vpop.permute.xlu0 %9129
        %9131 = vrot.lane.b32.xlu0 %v9095, 64
        %v9132 = vpop.permute.xlu0 %9131
        %9133 = vrot.lane.b32.xlu0 %v9096, 64
        %v9134 = vpop.permute.xlu0 %9133
        %9135 = vrot.lane.b32.xlu0 %v9097, 64
        %v9136 = vpop.permute.xlu0 %9135
        %9137 = vrot.lane.b32.xlu0 %v9098, 64
        %v9138 = vpop.permute.xlu0 %9137
        %9139 = vrot.lane.b32.xlu0 %v9099, 64
        %v9140 = vpop.permute.xlu0 %9139
        %9141 = vrot.lane.b32.xlu0 %v9100, 64
        %v9142 = vpop.permute.xlu0 %9141
        %9143 = vrot.lane.b32.xlu0 %v9101, 64
        %v9144 = vpop.permute.xlu0 %9143
        %9145 = vrot.lane.b32.xlu0 %v9102, 64
        %v9146 = vpop.permute.xlu0 %9145
        %9147 = vrot.lane.b32.xlu0 %v9103, 64
        %v9148 = vpop.permute.xlu0 %9147
        %9149 = vrot.lane.b32.xlu0 %v9104, 64
        %v9150 = vpop.permute.xlu0 %9149
        %9151 = vrot.lane.b32.xlu0 %v9105, 64
        %v9152 = vpop.permute.xlu0 %9151
        %9153 = vrot.lane.b32.xlu0 %v9106, 64
        %v9154 = vpop.permute.xlu0 %9153
        %v9171 = vsel %vm1648, %v9124, %v8562
        %v9172 = vsel %vm1648, %v9126, %v8563
        %v9173 = vsel %vm1648, %v9128, %v8564
        %v9174 = vsel %vm1648, %v9130, %v8565
        %v9175 = vsel %vm1648, %v9132, %v8566
        %v9176 = vsel %vm1648, %v9134, %v8567
        %v9177 = vsel %vm1648, %v9136, %v8568
        %v9178 = vsel %vm1648, %v9138, %v8569
        %v9179 = vsel %vm1648, %v9140, %v8570
        %v9180 = vsel %vm1648, %v9142, %v8571
        %v9181 = vsel %vm1648, %v9144, %v8572
        %v9182 = vsel %vm1648, %v9146, %v8573
        %v9183 = vsel %vm1648, %v9148, %v8574
        %v9184 = vsel %vm1648, %v9150, %v8575
        %v9185 = vsel %vm1648, %v9152, %v8576
        %v9186 = vsel %vm1648, %v9154, %v8577
        %9187 = vmatprep.subr.mxu0 %v1951
        %9188 = vmatpush1.msra.mxu0 %v1950
        %9189 = vmatprep.subr.mxu0 %v1949
        %9190 = vmatpush1.msra.mxu0 %v1948
        %9191 = vmatprep.subr.mxu0 %v1947
        %9192 = vmatpush1.msra.mxu0 %v1946
        %9193 = vmatprep.subr.mxu0 %v1945
        %9194 = vmatpush1.msra.mxu0 %v1944
        %9195 = vmatprep.subr.mxu0 %v1943
        %9196 = vmatpush1.msra.mxu0 %v1942
        %9197 = vmatprep.subr.mxu0 %v1941
        %9198 = vmatpush1.msra.mxu0 %v1940
        %9199 = vmatprep.subr.mxu0 %v1939
        %9200 = vmatpush1.msra.mxu0 %v1938
        %9201 = vmatprep.subr.mxu0 %v1937
        %9202 = vmatpush1.msra.mxu0 %v1936
        %9203 = vmatprep.subr.mxu0 %v1935
        %9204 = vmatpush1.msra.mxu0 %v1934
        %9205 = vmatprep.subr.mxu0 %v1933
        %9206 = vmatpush1.msra.mxu0 %v1932
        %9207 = vmatprep.subr.mxu0 %v1931
        %9208 = vmatpush1.msra.mxu0 %v1930
        %9209 = vmatprep.subr.mxu0 %v1929
        %9210 = vmatpush1.msra.mxu0 %v1928
        %9211 = vmatprep.subr.mxu0 %v1927
        %9212 = vmatpush1.msra.mxu0 %v1926
        %9213 = vmatprep.subr.mxu0 %v1925
        %9214 = vmatpush1.msra.mxu0 %v1924
        %9215 = vmatprep.subr.mxu0 %v1923
        %9216 = vmatpush1.msra.mxu0 %v1922
        %9217 = vmatprep.subr.mxu0 %v1921
        %9218 = vmatpush1.msra.mxu0 %v1920
        %9219 = vmatprep.subr.mxu0 0.0
        %9220 = vmatpush2.msra.mxu0 0.0
        %9221 = vmatprep.subr.mxu0 0.0
        %9222 = vmatpush2.msra.mxu0 0.0
        %9223 = vmatprep.subr.mxu0 0.0
        %9224 = vmatpush2.msra.mxu0 0.0
        %9225 = vmatprep.subr.mxu0 0.0
        %9226 = vmatpush2.msra.mxu0 0.0
        %9227 = vmatprep.subr.mxu0 0.0
        %9228 = vmatpush2.msra.mxu0 0.0
        %9229 = vmatprep.subr.mxu0 0.0
        %9230 = vmatpush2.msra.mxu0 0.0
        %9231 = vmatprep.subr.mxu0 0.0
        %9232 = vmatpush2.msra.mxu0 0.0
        %9233 = vmatprep.subr.mxu0 0.0
        %9234 = vmatpush2.msra.mxu0 0.0
        %9235 = vmatprep.subr.mxu0 0.0
        %9236 = vmatpush2.msra.mxu0 0.0
        %9237 = vmatprep.subr.mxu0 0.0
        %9238 = vmatpush2.msra.mxu0 0.0
        %9239 = vmatprep.subr.mxu0 0.0
        %9240 = vmatpush2.msra.mxu0 0.0
        %9241 = vmatprep.subr.mxu0 0.0
        %9242 = vmatpush2.msra.mxu0 0.0
        %9243 = vmatprep.subr.mxu0 0.0
        %9244 = vmatpush2.msra.mxu0 0.0
        %9245 = vmatprep.subr.mxu0 0.0
        %9246 = vmatpush2.msra.mxu0 0.0
        %9247 = vmatprep.subr.mxu0 0.0
        %9248 = vmatpush2.msra.mxu0 0.0
        %9249 = vmatprep.subr.mxu0 0.0
        %9250 = vmatpush2.msra.mxu0 0.0
        %9251 = vmatprep.mubr.f32.mxu0 0.0
        %9252 = vmatmul.mubr.f32.gmra.mxu0 %v9171
        %v9253 = vpop.f32.mrf.mxu0
        %v9254 = vadd.f32 %v1964, %v9253
        %v9255 = vpop.f32.mrf.mxu0
        %v9256 = vadd.f32 %v1968, %v9255
        %9257 = vmatprep.mubr.f32.mxu0 0.0
        %9258 = vmatmul.mubr.f32.gmra.mxu0 %v9172
        %v9259 = vpop.f32.mrf.mxu0
        %v9260 = vadd.f32 %v1964, %v9259
        %v9261 = vpop.f32.mrf.mxu0
        %v9262 = vadd.f32 %v1968, %v9261
        %9263 = vmatprep.mubr.f32.mxu0 0.0
        %9264 = vmatmul.mubr.f32.gmra.mxu0 %v9173
        %v9265 = vpop.f32.mrf.mxu0
        %v9266 = vadd.f32 %v1964, %v9265
        %v9267 = vpop.f32.mrf.mxu0
        %v9268 = vadd.f32 %v1968, %v9267
        %9269 = vmatprep.mubr.f32.mxu0 0.0
        %9270 = vmatmul.mubr.f32.gmra.mxu0 %v9174
        %v9271 = vpop.f32.mrf.mxu0
        %v9272 = vadd.f32 %v1964, %v9271
        %v9273 = vpop.f32.mrf.mxu0
        %v9274 = vadd.f32 %v1968, %v9273
        %9275 = vmatprep.mubr.f32.mxu0 0.0
        %9276 = vmatmul.mubr.f32.gmra.mxu0 %v9175
        %v9277 = vpop.f32.mrf.mxu0
        %v9278 = vadd.f32 %v1964, %v9277
        %v9279 = vpop.f32.mrf.mxu0
        %v9280 = vadd.f32 %v1968, %v9279
        %9281 = vmatprep.mubr.f32.mxu0 0.0
        %9282 = vmatmul.mubr.f32.gmra.mxu0 %v9176
        %v9283 = vpop.f32.mrf.mxu0
        %v9284 = vadd.f32 %v1964, %v9283
        %v9285 = vpop.f32.mrf.mxu0
        %v9286 = vadd.f32 %v1968, %v9285
        %9287 = vmatprep.mubr.f32.mxu0 0.0
        %9288 = vmatmul.mubr.f32.gmra.mxu0 %v9177
        %v9289 = vpop.f32.mrf.mxu0
        %v9290 = vadd.f32 %v1964, %v9289
        %v9291 = vpop.f32.mrf.mxu0
        %v9292 = vadd.f32 %v1968, %v9291
        %9293 = vmatprep.mubr.f32.mxu0 0.0
        %9294 = vmatmul.mubr.f32.gmra.mxu0 %v9178
        %v9295 = vpop.f32.mrf.mxu0
        %v9296 = vadd.f32 %v1964, %v9295
        %v9297 = vpop.f32.mrf.mxu0
        %v9298 = vadd.f32 %v1968, %v9297
        %9299 = vmatprep.mubr.f32.mxu0 0.0
        %9300 = vmatmul.mubr.f32.gmra.mxu0 %v9179
        %v9301 = vpop.f32.mrf.mxu0
        %v9302 = vadd.f32 %v1964, %v9301
        %v9303 = vpop.f32.mrf.mxu0
        %v9304 = vadd.f32 %v1968, %v9303
        %9305 = vmatprep.mubr.f32.mxu0 0.0
        %9306 = vmatmul.mubr.f32.gmra.mxu0 %v9180
        %v9307 = vpop.f32.mrf.mxu0
        %v9308 = vadd.f32 %v1964, %v9307
        %v9309 = vpop.f32.mrf.mxu0
        %v9310 = vadd.f32 %v1968, %v9309
        %9311 = vmatprep.mubr.f32.mxu0 0.0
        %9312 = vmatmul.mubr.f32.gmra.mxu0 %v9181
        %v9313 = vpop.f32.mrf.mxu0
        %v9314 = vadd.f32 %v1964, %v9313
        %v9315 = vpop.f32.mrf.mxu0
        %v9316 = vadd.f32 %v1968, %v9315
        %9317 = vmatprep.mubr.f32.mxu0 0.0
        %9318 = vmatmul.mubr.f32.gmra.mxu0 %v9182
        %v9319 = vpop.f32.mrf.mxu0
        %v9320 = vadd.f32 %v1964, %v9319
        %v9321 = vpop.f32.mrf.mxu0
        %v9322 = vadd.f32 %v1968, %v9321
        %9323 = vmatprep.mubr.f32.mxu0 0.0
        %9324 = vmatmul.mubr.f32.gmra.mxu0 %v9183
        %v9325 = vpop.f32.mrf.mxu0
        %v9326 = vadd.f32 %v1964, %v9325
        %v9327 = vpop.f32.mrf.mxu0
        %v9328 = vadd.f32 %v1968, %v9327
        %9329 = vmatprep.mubr.f32.mxu0 0.0
        %9330 = vmatmul.mubr.f32.gmra.mxu0 %v9184
        %v9331 = vpop.f32.mrf.mxu0
        %v9332 = vadd.f32 %v1964, %v9331
        %v9333 = vpop.f32.mrf.mxu0
        %v9334 = vadd.f32 %v1968, %v9333
        %9335 = vmatprep.mubr.f32.mxu0 0.0
        %9336 = vmatmul.mubr.f32.gmra.mxu0 %v9185
        %v9337 = vpop.f32.mrf.mxu0
        %v9338 = vadd.f32 %v1964, %v9337
        %v9339 = vpop.f32.mrf.mxu0
        %v9340 = vadd.f32 %v1968, %v9339
        %9341 = vmatprep.mubr.f32.mxu0 0.0
        %9342 = vmatmul.mubr.f32.gmra.mxu0 %v9186
        %v9343 = vpop.f32.mrf.mxu0
        %v9344 = vadd.f32 %v1964, %v9343
        %v9345 = vpop.f32.mrf.mxu0
        %v9346 = vadd.f32 %v1968, %v9345
        %9347 = vdwg.mxu0
        %v9348 = vxor.u32 %v9254, 2147483648
        %v9349 = vxor.u32 %v9260, 2147483648
        %v9350 = vxor.u32 %v9266, 2147483648
        %v9351 = vxor.u32 %v9272, 2147483648
        %v9352 = vxor.u32 %v9278, 2147483648
        %v9353 = vxor.u32 %v9284, 2147483648
        %v9354 = vxor.u32 %v9290, 2147483648
        %v9355 = vxor.u32 %v9296, 2147483648
        %v9356 = vxor.u32 %v9302, 2147483648
        %v9357 = vxor.u32 %v9308, 2147483648
        %v9358 = vxor.u32 %v9314, 2147483648
        %v9359 = vxor.u32 %v9320, 2147483648
        %v9360 = vxor.u32 %v9326, 2147483648
        %v9361 = vxor.u32 %v9332, 2147483648
        %v9362 = vxor.u32 %v9338, 2147483648
        %v9363 = vxor.u32 %v9344, 2147483648
        %v9364 = vmul.f32 %v9348, 1.442695
        %v9365 = vpow.pop %v9364
        %v9366 = vmul.f32 %v9349, 1.442695
        %v9367 = vpow.pop %v9366
        %v9368 = vmul.f32 %v9350, 1.442695
        %v9369 = vpow.pop %v9368
        %v9370 = vmul.f32 %v9351, 1.442695
        %v9371 = vpow.pop %v9370
        %v9372 = vmul.f32 %v9352, 1.442695
        %v9373 = vpow.pop %v9372
        %v9374 = vmul.f32 %v9353, 1.442695
        %v9375 = vpow.pop %v9374
        %v9376 = vmul.f32 %v9354, 1.442695
        %v9377 = vpow.pop %v9376
        %v9378 = vmul.f32 %v9355, 1.442695
        %v9379 = vpow.pop %v9378
        %v9380 = vmul.f32 %v9356, 1.442695
        %v9381 = vpow.pop %v9380
        %v9382 = vmul.f32 %v9357, 1.442695
        %v9383 = vpow.pop %v9382
        %v9384 = vmul.f32 %v9358, 1.442695
        %v9385 = vpow.pop %v9384
        %v9386 = vmul.f32 %v9359, 1.442695
        %v9387 = vpow.pop %v9386
        %v9388 = vmul.f32 %v9360, 1.442695
        %v9389 = vpow.pop %v9388
        %v9390 = vmul.f32 %v9361, 1.442695
        %v9391 = vpow.pop %v9390
        %v9392 = vmul.f32 %v9362, 1.442695
        %v9393 = vpow.pop %v9392
        %v9394 = vmul.f32 %v9363, 1.442695
        %v9395 = vpow.pop %v9394
        %v9396 = vadd.f32 %v9365, 1.0
        %v9397 = vadd.f32 %v9367, 1.0
        %v9398 = vadd.f32 %v9369, 1.0
        %v9399 = vadd.f32 %v9371, 1.0
        %v9400 = vadd.f32 %v9373, 1.0
        %v9401 = vadd.f32 %v9375, 1.0
        %v9402 = vadd.f32 %v9377, 1.0
        %v9403 = vadd.f32 %v9379, 1.0
        %v9404 = vadd.f32 %v9381, 1.0
        %v9405 = vadd.f32 %v9383, 1.0
        %v9406 = vadd.f32 %v9385, 1.0
        %v9407 = vadd.f32 %v9387, 1.0
        %v9408 = vadd.f32 %v9389, 1.0
        %v9409 = vadd.f32 %v9391, 1.0
        %v9410 = vadd.f32 %v9393, 1.0
        %v9411 = vadd.f32 %v9395, 1.0
        %v9412 = vrcp.pop %v9396
        %v9413 = vmul.f32 1.0, %v9412
        %v9414 = vrcp.pop %v9397
        %v9415 = vmul.f32 1.0, %v9414
        %v9416 = vrcp.pop %v9398
        %v9417 = vmul.f32 1.0, %v9416
        %v9418 = vrcp.pop %v9399
        %v9419 = vmul.f32 1.0, %v9418
        %v9420 = vrcp.pop %v9400
        %v9421 = vmul.f32 1.0, %v9420
        %v9422 = vrcp.pop %v9401
        %v9423 = vmul.f32 1.0, %v9422
        %v9424 = vrcp.pop %v9402
        %v9425 = vmul.f32 1.0, %v9424
        %v9426 = vrcp.pop %v9403
        %v9427 = vmul.f32 1.0, %v9426
        %v9428 = vrcp.pop %v9404
        %v9429 = vmul.f32 1.0, %v9428
        %v9430 = vrcp.pop %v9405
        %v9431 = vmul.f32 1.0, %v9430
        %v9432 = vrcp.pop %v9406
        %v9433 = vmul.f32 1.0, %v9432
        %v9434 = vrcp.pop %v9407
        %v9435 = vmul.f32 1.0, %v9434
        %v9436 = vrcp.pop %v9408
        %v9437 = vmul.f32 1.0, %v9436
        %v9438 = vrcp.pop %v9409
        %v9439 = vmul.f32 1.0, %v9438
        %v9440 = vrcp.pop %v9410
        %v9441 = vmul.f32 1.0, %v9440
        %v9442 = vrcp.pop %v9411
        %v9443 = vmul.f32 1.0, %v9442
        %9460 = vrot.lane.b32.xlu0 %v9256, 64
        %v9461 = vpop.permute.xlu0 %9460
        %9462 = vrot.lane.b32.xlu0 %v9262, 64
        %v9463 = vpop.permute.xlu0 %9462
        %9464 = vrot.lane.b32.xlu0 %v9268, 64
        %v9465 = vpop.permute.xlu0 %9464
        %9466 = vrot.lane.b32.xlu0 %v9274, 64
        %v9467 = vpop.permute.xlu0 %9466
        %9468 = vrot.lane.b32.xlu0 %v9280, 64
        %v9469 = vpop.permute.xlu0 %9468
        %9470 = vrot.lane.b32.xlu0 %v9286, 64
        %v9471 = vpop.permute.xlu0 %9470
        %9472 = vrot.lane.b32.xlu0 %v9292, 64
        %v9473 = vpop.permute.xlu0 %9472
        %9474 = vrot.lane.b32.xlu0 %v9298, 64
        %v9475 = vpop.permute.xlu0 %9474
        %9476 = vrot.lane.b32.xlu0 %v9304, 64
        %v9477 = vpop.permute.xlu0 %9476
        %9478 = vrot.lane.b32.xlu0 %v9310, 64
        %v9479 = vpop.permute.xlu0 %9478
        %9480 = vrot.lane.b32.xlu0 %v9316, 64
        %v9481 = vpop.permute.xlu0 %9480
        %9482 = vrot.lane.b32.xlu0 %v9322, 64
        %v9483 = vpop.permute.xlu0 %9482
        %9484 = vrot.lane.b32.xlu0 %v9328, 64
        %v9485 = vpop.permute.xlu0 %9484
        %9486 = vrot.lane.b32.xlu0 %v9334, 64
        %v9487 = vpop.permute.xlu0 %9486
        %9488 = vrot.lane.b32.xlu0 %v9340, 64
        %v9489 = vpop.permute.xlu0 %9488
        %9490 = vrot.lane.b32.xlu0 %v9346, 64
        %v9491 = vpop.permute.xlu0 %9490
        %v9508 = vmul.f32 %v9413, %v9461
        %v9509 = vmul.f32 %v9415, %v9463
        %v9510 = vmul.f32 %v9417, %v9465
        %v9511 = vmul.f32 %v9419, %v9467
        %v9512 = vmul.f32 %v9421, %v9469
        %v9513 = vmul.f32 %v9423, %v9471
        %v9514 = vmul.f32 %v9425, %v9473
        %v9515 = vmul.f32 %v9427, %v9475
        %v9516 = vmul.f32 %v9429, %v9477
        %v9517 = vmul.f32 %v9431, %v9479
        %v9518 = vmul.f32 %v9433, %v9481
        %v9519 = vmul.f32 %v9435, %v9483
        %v9520 = vmul.f32 %v9437, %v9485
        %v9521 = vmul.f32 %v9439, %v9487
        %v9522 = vmul.f32 %v9441, %v9489
        %v9523 = vmul.f32 %v9443, %v9491
        %v9524 = vadd.f32 %v9256, %v9508
        %v9525 = vadd.f32 %v9262, %v9509
        %v9526 = vadd.f32 %v9268, %v9510
        %v9527 = vadd.f32 %v9274, %v9511
        %v9528 = vadd.f32 %v9280, %v9512
        %v9529 = vadd.f32 %v9286, %v9513
        %v9530 = vadd.f32 %v9292, %v9514
        %v9531 = vadd.f32 %v9298, %v9515
        %v9532 = vadd.f32 %v9304, %v9516
        %v9533 = vadd.f32 %v9310, %v9517
        %v9534 = vadd.f32 %v9316, %v9518
        %v9535 = vadd.f32 %v9322, %v9519
        %v9536 = vadd.f32 %v9328, %v9520
        %v9537 = vadd.f32 %v9334, %v9521
        %v9538 = vadd.f32 %v9340, %v9522
        %v9539 = vadd.f32 %v9346, %v9523
        %v9540 = vtanh.pop %v9524
        %v9541 = vtanh.pop %v9525
        %v9542 = vtanh.pop %v9526
        %v9543 = vtanh.pop %v9527
        %v9544 = vtanh.pop %v9528
        %v9545 = vtanh.pop %v9529
        %v9546 = vtanh.pop %v9530
        %v9547 = vtanh.pop %v9531
        %v9548 = vtanh.pop %v9532
        %v9549 = vtanh.pop %v9533
        %v9550 = vtanh.pop %v9534
        %v9551 = vtanh.pop %v9535
        %v9552 = vtanh.pop %v9536
        %v9553 = vtanh.pop %v9537
        %v9554 = vtanh.pop %v9538
        %v9555 = vtanh.pop %v9539
        %v9556 = vsub.f32 1.0, %v9413
        %v9557 = vsub.f32 1.0, %v9415
        %v9558 = vsub.f32 1.0, %v9417
        %v9559 = vsub.f32 1.0, %v9419
        %v9560 = vsub.f32 1.0, %v9421
        %v9561 = vsub.f32 1.0, %v9423
        %v9562 = vsub.f32 1.0, %v9425
        %v9563 = vsub.f32 1.0, %v9427
        %v9564 = vsub.f32 1.0, %v9429
        %v9565 = vsub.f32 1.0, %v9431
        %v9566 = vsub.f32 1.0, %v9433
        %v9567 = vsub.f32 1.0, %v9435
        %v9568 = vsub.f32 1.0, %v9437
        %v9569 = vsub.f32 1.0, %v9439
        %v9570 = vsub.f32 1.0, %v9441
        %v9571 = vsub.f32 1.0, %v9443
        %9588 = vrot.lane.b32.xlu0 %v9540, 64
        %v9589 = vpop.permute.xlu0 %9588
        %9590 = vrot.lane.b32.xlu0 %v9541, 64
        %v9591 = vpop.permute.xlu0 %9590
        %9592 = vrot.lane.b32.xlu0 %v9542, 64
        %v9593 = vpop.permute.xlu0 %9592
        %9594 = vrot.lane.b32.xlu0 %v9543, 64
        %v9595 = vpop.permute.xlu0 %9594
        %9596 = vrot.lane.b32.xlu0 %v9544, 64
        %v9597 = vpop.permute.xlu0 %9596
        %9598 = vrot.lane.b32.xlu0 %v9545, 64
        %v9599 = vpop.permute.xlu0 %9598
        %9600 = vrot.lane.b32.xlu0 %v9546, 64
        %v9601 = vpop.permute.xlu0 %9600
        %9602 = vrot.lane.b32.xlu0 %v9547, 64
        %v9603 = vpop.permute.xlu0 %9602
        %9604 = vrot.lane.b32.xlu0 %v9548, 64
        %v9605 = vpop.permute.xlu0 %9604
        %9606 = vrot.lane.b32.xlu0 %v9549, 64
        %v9607 = vpop.permute.xlu0 %9606
        %9608 = vrot.lane.b32.xlu0 %v9550, 64
        %v9609 = vpop.permute.xlu0 %9608
        %9610 = vrot.lane.b32.xlu0 %v9551, 64
        %v9611 = vpop.permute.xlu0 %9610
        %9612 = vrot.lane.b32.xlu0 %v9552, 64
        %v9613 = vpop.permute.xlu0 %9612
        %9614 = vrot.lane.b32.xlu0 %v9553, 64
        %v9615 = vpop.permute.xlu0 %9614
        %9616 = vrot.lane.b32.xlu0 %v9554, 64
        %v9617 = vpop.permute.xlu0 %9616
        %9618 = vrot.lane.b32.xlu0 %v9555, 64
        %v9619 = vpop.permute.xlu0 %9618
        %v9636 = vmul.f32 %v9556, %v9589
        %v9637 = vmul.f32 %v9557, %v9591
        %v9638 = vmul.f32 %v9558, %v9593
        %v9639 = vmul.f32 %v9559, %v9595
        %v9640 = vmul.f32 %v9560, %v9597
        %v9641 = vmul.f32 %v9561, %v9599
        %v9642 = vmul.f32 %v9562, %v9601
        %v9643 = vmul.f32 %v9563, %v9603
        %v9644 = vmul.f32 %v9564, %v9605
        %v9645 = vmul.f32 %v9565, %v9607
        %v9646 = vmul.f32 %v9566, %v9609
        %v9647 = vmul.f32 %v9567, %v9611
        %v9648 = vmul.f32 %v9568, %v9613
        %v9649 = vmul.f32 %v9569, %v9615
        %v9650 = vmul.f32 %v9570, %v9617
        %v9651 = vmul.f32 %v9571, %v9619
        %v9652 = vmul.f32 %v9413, %v8562
        %v9653 = vmul.f32 %v9415, %v8563
        %v9654 = vmul.f32 %v9417, %v8564
        %v9655 = vmul.f32 %v9419, %v8565
        %v9656 = vmul.f32 %v9421, %v8566
        %v9657 = vmul.f32 %v9423, %v8567
        %v9658 = vmul.f32 %v9425, %v8568
        %v9659 = vmul.f32 %v9427, %v8569
        %v9660 = vmul.f32 %v9429, %v8570
        %v9661 = vmul.f32 %v9431, %v8571
        %v9662 = vmul.f32 %v9433, %v8572
        %v9663 = vmul.f32 %v9435, %v8573
        %v9664 = vmul.f32 %v9437, %v8574
        %v9665 = vmul.f32 %v9439, %v8575
        %v9666 = vmul.f32 %v9441, %v8576
        %v9667 = vmul.f32 %v9443, %v8577
        %v9668 = vadd.f32 %v9636, %v9652
        %v9669 = vadd.f32 %v9637, %v9653
        %v9670 = vadd.f32 %v9638, %v9654
        %v9671 = vadd.f32 %v9639, %v9655
        %v9672 = vadd.f32 %v9640, %v9656
        %v9673 = vadd.f32 %v9641, %v9657
        %v9674 = vadd.f32 %v9642, %v9658
        %v9675 = vadd.f32 %v9643, %v9659
        %v9676 = vadd.f32 %v9644, %v9660
        %v9677 = vadd.f32 %v9645, %v9661
        %v9678 = vadd.f32 %v9646, %v9662
        %v9679 = vadd.f32 %v9647, %v9663
        %v9680 = vadd.f32 %v9648, %v9664
        %v9681 = vadd.f32 %v9649, %v9665
        %v9682 = vadd.f32 %v9650, %v9666
        %v9683 = vadd.f32 %v9651, %v9667
        %v9684 = vld [vmem:[#allocation2 + $0x700] sm:$0xff]
        %v9685 = vld [vmem:[#allocation2 + $0x708] sm:$0xff]
        %v9686 = vld [vmem:[#allocation2 + $0x710] sm:$0xff]
        %v9687 = vld [vmem:[#allocation2 + $0x718] sm:$0xff]
        %v9688 = vld [vmem:[#allocation2 + $0x720] sm:$0xff]
        %v9689 = vld [vmem:[#allocation2 + $0x728] sm:$0xff]
        %v9690 = vld [vmem:[#allocation2 + $0x730] sm:$0xff]
        %v9691 = vld [vmem:[#allocation2 + $0x738] sm:$0xff]
        %v9692 = vld [vmem:[#allocation2 + $0x740] sm:$0xff]
        %v9693 = vld [vmem:[#allocation2 + $0x748] sm:$0xff]
        %v9694 = vld [vmem:[#allocation2 + $0x750] sm:$0xff]
        %v9695 = vld [vmem:[#allocation2 + $0x758] sm:$0xff]
        %v9696 = vld [vmem:[#allocation2 + $0x760] sm:$0xff]
        %v9697 = vld [vmem:[#allocation2 + $0x768] sm:$0xff]
        %v9698 = vld [vmem:[#allocation2 + $0x770] sm:$0xff]
        %v9699 = vld [vmem:[#allocation2 + $0x778] sm:$0xff]
        %v9700 = vld [vmem:[#allocation2 + $0x780] sm:$0xff]
        %v9701 = vld [vmem:[#allocation2 + $0x788] sm:$0xff]
        %v9702 = vld [vmem:[#allocation2 + $0x790] sm:$0xff]
        %v9703 = vld [vmem:[#allocation2 + $0x798] sm:$0xff]
        %v9704 = vld [vmem:[#allocation2 + $0x7a0] sm:$0xff]
        %v9705 = vld [vmem:[#allocation2 + $0x7a8] sm:$0xff]
        %v9706 = vld [vmem:[#allocation2 + $0x7b0] sm:$0xff]
        %v9707 = vld [vmem:[#allocation2 + $0x7b8] sm:$0xff]
        %v9708 = vld [vmem:[#allocation2 + $0x7c0] sm:$0xff]
        %v9709 = vld [vmem:[#allocation2 + $0x7c8] sm:$0xff]
        %v9710 = vld [vmem:[#allocation2 + $0x7d0] sm:$0xff]
        %v9711 = vld [vmem:[#allocation2 + $0x7d8] sm:$0xff]
        %v9712 = vld [vmem:[#allocation2 + $0x7e0] sm:$0xff]
        %v9713 = vld [vmem:[#allocation2 + $0x7e8] sm:$0xff]
        %v9714 = vld [vmem:[#allocation2 + $0x7f0] sm:$0xff]
        %v9715 = vld [vmem:[#allocation2 + $0x7f8] sm:$0xff]
        %v9716 = vsel %vm1648, %v9124, 0
        %v9718 = vsel %vm1648, %v9126, 0
        %v9720 = vsel %vm1648, %v9128, 0
        %v9722 = vsel %vm1648, %v9130, 0
        %v9724 = vsel %vm1648, %v9132, 0
        %v9726 = vsel %vm1648, %v9134, 0
        %v9728 = vsel %vm1648, %v9136, 0
        %v9730 = vsel %vm1648, %v9138, 0
        %v9732 = vsel %vm1648, %v9140, 0
        %v9734 = vsel %vm1648, %v9142, 0
        %v9736 = vsel %vm1648, %v9144, 0
        %v9738 = vsel %vm1648, %v9146, 0
        %v9740 = vsel %vm1648, %v9148, 0
        %v9742 = vsel %vm1648, %v9150, 0
        %v9744 = vsel %vm1648, %v9152, 0
        %v9746 = vsel %vm1648, %v9154, 0
        %9748 = vmatprep.subr.mxu0 0.0
        %9749 = vmatpush1.msra.mxu0 0.0
        %9750 = vmatprep.subr.mxu0 0.0
        %9751 = vmatpush1.msra.mxu0 0.0
        %9752 = vmatprep.subr.mxu0 0.0
        %9753 = vmatpush1.msra.mxu0 0.0
        %9754 = vmatprep.subr.mxu0 0.0
        %9755 = vmatpush1.msra.mxu0 0.0
        %9756 = vmatprep.subr.mxu0 0.0
        %9757 = vmatpush1.msra.mxu0 0.0
        %9758 = vmatprep.subr.mxu0 0.0
        %9759 = vmatpush1.msra.mxu0 0.0
        %9760 = vmatprep.subr.mxu0 0.0
        %9761 = vmatpush1.msra.mxu0 0.0
        %9762 = vmatprep.subr.mxu0 0.0
        %9763 = vmatpush1.msra.mxu0 0.0
        %9764 = vmatprep.subr.mxu0 %v1919
        %9765 = vmatpush1.msra.mxu0 %v1918
        %9766 = vmatprep.subr.mxu0 %v1917
        %9767 = vmatpush1.msra.mxu0 %v1916
        %9768 = vmatprep.subr.mxu0 %v1915
        %9769 = vmatpush1.msra.mxu0 %v1914
        %9770 = vmatprep.subr.mxu0 %v1913
        %9771 = vmatpush1.msra.mxu0 %v1912
        %9772 = vmatprep.subr.mxu0 %v1911
        %9773 = vmatpush1.msra.mxu0 %v1910
        %9774 = vmatprep.subr.mxu0 %v1909
        %9775 = vmatpush1.msra.mxu0 %v1908
        %9776 = vmatprep.subr.mxu0 %v1907
        %9777 = vmatpush1.msra.mxu0 %v1906
        %9778 = vmatprep.subr.mxu0 %v1905
        %9779 = vmatpush1.msra.mxu0 %v1904
        %9780 = vmatprep.subr.mxu0 0.0
        %9781 = vmatpush2.msra.mxu0 0.0
        %9782 = vmatprep.subr.mxu0 0.0
        %9783 = vmatpush2.msra.mxu0 0.0
        %9784 = vmatprep.subr.mxu0 0.0
        %9785 = vmatpush2.msra.mxu0 0.0
        %9786 = vmatprep.subr.mxu0 0.0
        %9787 = vmatpush2.msra.mxu0 0.0
        %9788 = vmatprep.subr.mxu0 0.0
        %9789 = vmatpush2.msra.mxu0 0.0
        %9790 = vmatprep.subr.mxu0 0.0
        %9791 = vmatpush2.msra.mxu0 0.0
        %9792 = vmatprep.subr.mxu0 0.0
        %9793 = vmatpush2.msra.mxu0 0.0
        %9794 = vmatprep.subr.mxu0 0.0
        %9795 = vmatpush2.msra.mxu0 0.0
        %9796 = vmatprep.subr.mxu0 0.0
        %9797 = vmatpush2.msra.mxu0 0.0
        %9798 = vmatprep.subr.mxu0 0.0
        %9799 = vmatpush2.msra.mxu0 0.0
        %9800 = vmatprep.subr.mxu0 0.0
        %9801 = vmatpush2.msra.mxu0 0.0
        %9802 = vmatprep.subr.mxu0 0.0
        %9803 = vmatpush2.msra.mxu0 0.0
        %9804 = vmatprep.subr.mxu0 0.0
        %9805 = vmatpush2.msra.mxu0 0.0
        %9806 = vmatprep.subr.mxu0 0.0
        %9807 = vmatpush2.msra.mxu0 0.0
        %9808 = vmatprep.subr.mxu0 0.0
        %9809 = vmatpush2.msra.mxu0 0.0
        %9810 = vmatprep.subr.mxu0 0.0
        %9811 = vmatpush2.msra.mxu0 0.0
        %9812 = vmatprep.mubr.f32.mxu0 0.0
        %9813 = vmatmul.mubr.f32.gmra.mxu0 %v9716
        %v9814 = vpop.f32.mrf.mxu0
        %v9815 = vadd.f32 0.0, %v9814
        %v9816 = vpop.f32.mrf.mxu0
        %v9817 = vadd.f32 0.0, %v9816
        %9818 = vmatprep.mubr.f32.mxu0 0.0
        %9819 = vmatmul.mubr.f32.gmra.mxu0 %v9718
        %v9820 = vpop.f32.mrf.mxu0
        %v9821 = vadd.f32 0.0, %v9820
        %v9822 = vpop.f32.mrf.mxu0
        %v9823 = vadd.f32 0.0, %v9822
        %9824 = vmatprep.mubr.f32.mxu0 0.0
        %9825 = vmatmul.mubr.f32.gmra.mxu0 %v9720
        %v9826 = vpop.f32.mrf.mxu0
        %v9827 = vadd.f32 0.0, %v9826
        %v9828 = vpop.f32.mrf.mxu0
        %v9829 = vadd.f32 0.0, %v9828
        %9830 = vmatprep.mubr.f32.mxu0 0.0
        %9831 = vmatmul.mubr.f32.gmra.mxu0 %v9722
        %v9832 = vpop.f32.mrf.mxu0
        %v9833 = vadd.f32 0.0, %v9832
        %v9834 = vpop.f32.mrf.mxu0
        %v9835 = vadd.f32 0.0, %v9834
        %9836 = vmatprep.mubr.f32.mxu0 0.0
        %9837 = vmatmul.mubr.f32.gmra.mxu0 %v9724
        %v9838 = vpop.f32.mrf.mxu0
        %v9839 = vadd.f32 0.0, %v9838
        %v9840 = vpop.f32.mrf.mxu0
        %v9841 = vadd.f32 0.0, %v9840
        %9842 = vmatprep.mubr.f32.mxu0 0.0
        %9843 = vmatmul.mubr.f32.gmra.mxu0 %v9726
        %v9844 = vpop.f32.mrf.mxu0
        %v9845 = vadd.f32 0.0, %v9844
        %v9846 = vpop.f32.mrf.mxu0
        %v9847 = vadd.f32 0.0, %v9846
        %9848 = vmatprep.mubr.f32.mxu0 0.0
        %9849 = vmatmul.mubr.f32.gmra.mxu0 %v9728
        %v9850 = vpop.f32.mrf.mxu0
        %v9851 = vadd.f32 0.0, %v9850
        %v9852 = vpop.f32.mrf.mxu0
        %v9853 = vadd.f32 0.0, %v9852
        %9854 = vmatprep.mubr.f32.mxu0 0.0
        %9855 = vmatmul.mubr.f32.gmra.mxu0 %v9730
        %v9856 = vpop.f32.mrf.mxu0
        %v9857 = vadd.f32 0.0, %v9856
        %v9858 = vpop.f32.mrf.mxu0
        %v9859 = vadd.f32 0.0, %v9858
        %9860 = vmatprep.mubr.f32.mxu0 0.0
        %9861 = vmatmul.mubr.f32.gmra.mxu0 %v9732
        %v9862 = vpop.f32.mrf.mxu0
        %v9863 = vadd.f32 0.0, %v9862
        %v9864 = vpop.f32.mrf.mxu0
        %v9865 = vadd.f32 0.0, %v9864
        %9866 = vmatprep.mubr.f32.mxu0 0.0
        %9867 = vmatmul.mubr.f32.gmra.mxu0 %v9734
        %v9868 = vpop.f32.mrf.mxu0
        %v9869 = vadd.f32 0.0, %v9868
        %v9870 = vpop.f32.mrf.mxu0
        %v9871 = vadd.f32 0.0, %v9870
        %9872 = vmatprep.mubr.f32.mxu0 0.0
        %9873 = vmatmul.mubr.f32.gmra.mxu0 %v9736
        %v9874 = vpop.f32.mrf.mxu0
        %v9875 = vadd.f32 0.0, %v9874
        %v9876 = vpop.f32.mrf.mxu0
        %v9877 = vadd.f32 0.0, %v9876
        %9878 = vmatprep.mubr.f32.mxu0 0.0
        %9879 = vmatmul.mubr.f32.gmra.mxu0 %v9738
        %v9880 = vpop.f32.mrf.mxu0
        %v9881 = vadd.f32 0.0, %v9880
        %v9882 = vpop.f32.mrf.mxu0
        %v9883 = vadd.f32 0.0, %v9882
        %9884 = vmatprep.mubr.f32.mxu0 0.0
        %9885 = vmatmul.mubr.f32.gmra.mxu0 %v9740
        %v9886 = vpop.f32.mrf.mxu0
        %v9887 = vadd.f32 0.0, %v9886
        %v9888 = vpop.f32.mrf.mxu0
        %v9889 = vadd.f32 0.0, %v9888
        %9890 = vmatprep.mubr.f32.mxu0 0.0
        %9891 = vmatmul.mubr.f32.gmra.mxu0 %v9742
        %v9892 = vpop.f32.mrf.mxu0
        %v9893 = vadd.f32 0.0, %v9892
        %v9894 = vpop.f32.mrf.mxu0
        %v9895 = vadd.f32 0.0, %v9894
        %9896 = vmatprep.mubr.f32.mxu0 0.0
        %9897 = vmatmul.mubr.f32.gmra.mxu0 %v9744
        %v9898 = vpop.f32.mrf.mxu0
        %v9899 = vadd.f32 0.0, %v9898
        %v9900 = vpop.f32.mrf.mxu0
        %v9901 = vadd.f32 0.0, %v9900
        %9902 = vmatprep.mubr.f32.mxu0 0.0
        %9903 = vmatmul.mubr.f32.gmra.mxu0 %v9746
        %v9904 = vpop.f32.mrf.mxu0
        %v9905 = vadd.f32 0.0, %v9904
        %v9906 = vpop.f32.mrf.mxu0
        %v9907 = vadd.f32 0.0, %v9906
        %9908 = vdwg.mxu0
        %v9909 = vadd.f32 %v9684, %v9815
        %v9910 = vadd.f32 %v9686, %v9821
        %v9911 = vadd.f32 %v9688, %v9827
        %v9912 = vadd.f32 %v9690, %v9833
        %v9913 = vadd.f32 %v9692, %v9839
        %v9914 = vadd.f32 %v9694, %v9845
        %v9915 = vadd.f32 %v9696, %v9851
        %v9916 = vadd.f32 %v9698, %v9857
        %v9917 = vadd.f32 %v9700, %v9863
        %v9918 = vadd.f32 %v9702, %v9869
        %v9919 = vadd.f32 %v9704, %v9875
        %v9920 = vadd.f32 %v9706, %v9881
        %v9921 = vadd.f32 %v9708, %v9887
        %v9922 = vadd.f32 %v9710, %v9893
        %v9923 = vadd.f32 %v9712, %v9899
        %v9924 = vadd.f32 %v9714, %v9905
        %v9925 = vxor.u32 %v9909, 2147483648
        %v9926 = vxor.u32 %v9910, 2147483648
        %v9927 = vxor.u32 %v9911, 2147483648
        %v9928 = vxor.u32 %v9912, 2147483648
        %v9929 = vxor.u32 %v9913, 2147483648
        %v9930 = vxor.u32 %v9914, 2147483648
        %v9931 = vxor.u32 %v9915, 2147483648
        %v9932 = vxor.u32 %v9916, 2147483648
        %v9933 = vxor.u32 %v9917, 2147483648
        %v9934 = vxor.u32 %v9918, 2147483648
        %v9935 = vxor.u32 %v9919, 2147483648
        %v9936 = vxor.u32 %v9920, 2147483648
        %v9937 = vxor.u32 %v9921, 2147483648
        %v9938 = vxor.u32 %v9922, 2147483648
        %v9939 = vxor.u32 %v9923, 2147483648
        %v9940 = vxor.u32 %v9924, 2147483648
        %v9941 = vmul.f32 %v9925, 1.442695
        %v9942 = vpow.pop %v9941
        %v9943 = vmul.f32 %v9926, 1.442695
        %v9944 = vpow.pop %v9943
        %v9945 = vmul.f32 %v9927, 1.442695
        %v9946 = vpow.pop %v9945
        %v9947 = vmul.f32 %v9928, 1.442695
        %v9948 = vpow.pop %v9947
        %v9949 = vmul.f32 %v9929, 1.442695
        %v9950 = vpow.pop %v9949
        %v9951 = vmul.f32 %v9930, 1.442695
        %v9952 = vpow.pop %v9951
        %v9953 = vmul.f32 %v9931, 1.442695
        %v9954 = vpow.pop %v9953
        %v9955 = vmul.f32 %v9932, 1.442695
        %v9956 = vpow.pop %v9955
        %v9957 = vmul.f32 %v9933, 1.442695
        %v9958 = vpow.pop %v9957
        %v9959 = vmul.f32 %v9934, 1.442695
        %v9960 = vpow.pop %v9959
        %v9961 = vmul.f32 %v9935, 1.442695
        %v9962 = vpow.pop %v9961
        %v9963 = vmul.f32 %v9936, 1.442695
        %v9964 = vpow.pop %v9963
        %v9965 = vmul.f32 %v9937, 1.442695
        %v9966 = vpow.pop %v9965
        %v9967 = vmul.f32 %v9938, 1.442695
        %v9968 = vpow.pop %v9967
        %v9969 = vmul.f32 %v9939, 1.442695
        %v9970 = vpow.pop %v9969
        %v9971 = vmul.f32 %v9940, 1.442695
        %v9972 = vpow.pop %v9971
        %v9973 = vadd.f32 %v9942, 1.0
        %v9974 = vadd.f32 %v9944, 1.0
        %v9975 = vadd.f32 %v9946, 1.0
        %v9976 = vadd.f32 %v9948, 1.0
        %v9977 = vadd.f32 %v9950, 1.0
        %v9978 = vadd.f32 %v9952, 1.0
        %v9979 = vadd.f32 %v9954, 1.0
        %v9980 = vadd.f32 %v9956, 1.0
        %v9981 = vadd.f32 %v9958, 1.0
        %v9982 = vadd.f32 %v9960, 1.0
        %v9983 = vadd.f32 %v9962, 1.0
        %v9984 = vadd.f32 %v9964, 1.0
        %v9985 = vadd.f32 %v9966, 1.0
        %v9986 = vadd.f32 %v9968, 1.0
        %v9987 = vadd.f32 %v9970, 1.0
        %v9988 = vadd.f32 %v9972, 1.0
        %v9989 = vrcp.pop %v9973
        %v9990 = vmul.f32 1.0, %v9989
        %v9991 = vrcp.pop %v9974
        %v9992 = vmul.f32 1.0, %v9991
        %v9993 = vrcp.pop %v9975
        %v9994 = vmul.f32 1.0, %v9993
        %v9995 = vrcp.pop %v9976
        %v9996 = vmul.f32 1.0, %v9995
        %v9997 = vrcp.pop %v9977
        %v9998 = vmul.f32 1.0, %v9997
        %v9999 = vrcp.pop %v9978
        %v10000 = vmul.f32 1.0, %v9999
        %v10001 = vrcp.pop %v9979
        %v10002 = vmul.f32 1.0, %v10001
        %v10003 = vrcp.pop %v9980
        %v10004 = vmul.f32 1.0, %v10003
        %v10005 = vrcp.pop %v9981
        %v10006 = vmul.f32 1.0, %v10005
        %v10007 = vrcp.pop %v9982
        %v10008 = vmul.f32 1.0, %v10007
        %v10009 = vrcp.pop %v9983
        %v10010 = vmul.f32 1.0, %v10009
        %v10011 = vrcp.pop %v9984
        %v10012 = vmul.f32 1.0, %v10011
        %v10013 = vrcp.pop %v9985
        %v10014 = vmul.f32 1.0, %v10013
        %v10015 = vrcp.pop %v9986
        %v10016 = vmul.f32 1.0, %v10015
        %v10017 = vrcp.pop %v9987
        %v10018 = vmul.f32 1.0, %v10017
        %v10019 = vrcp.pop %v9988
        %v10020 = vmul.f32 1.0, %v10019
        %v10021 = vadd.f32 %v9817, %v1957
        %v10022 = vadd.f32 %v9823, %v1957
        %v10023 = vadd.f32 %v9829, %v1957
        %v10024 = vadd.f32 %v9835, %v1957
        %v10025 = vadd.f32 %v9841, %v1957
        %v10026 = vadd.f32 %v9847, %v1957
        %v10027 = vadd.f32 %v9853, %v1957
        %v10028 = vadd.f32 %v9859, %v1957
        %v10029 = vadd.f32 %v9865, %v1957
        %v10030 = vadd.f32 %v9871, %v1957
        %v10031 = vadd.f32 %v9877, %v1957
        %v10032 = vadd.f32 %v9883, %v1957
        %v10033 = vadd.f32 %v9889, %v1957
        %v10034 = vadd.f32 %v9895, %v1957
        %v10035 = vadd.f32 %v9901, %v1957
        %v10036 = vadd.f32 %v9907, %v1957
        %v10037 = vmul.f32 %v9990, %v10021
        %v10038 = vmul.f32 %v9992, %v10022
        %v10039 = vmul.f32 %v9994, %v10023
        %v10040 = vmul.f32 %v9996, %v10024
        %v10041 = vmul.f32 %v9998, %v10025
        %v10042 = vmul.f32 %v10000, %v10026
        %v10043 = vmul.f32 %v10002, %v10027
        %v10044 = vmul.f32 %v10004, %v10028
        %v10045 = vmul.f32 %v10006, %v10029
        %v10046 = vmul.f32 %v10008, %v10030
        %v10047 = vmul.f32 %v10010, %v10031
        %v10048 = vmul.f32 %v10012, %v10032
        %v10049 = vmul.f32 %v10014, %v10033
        %v10050 = vmul.f32 %v10016, %v10034
        %v10051 = vmul.f32 %v10018, %v10035
        %v10052 = vmul.f32 %v10020, %v10036
        %v10053 = vadd.f32 %v9685, %v10037
        %v10054 = vadd.f32 %v9687, %v10038
        %v10055 = vadd.f32 %v9689, %v10039
        %v10056 = vadd.f32 %v9691, %v10040
        %v10057 = vadd.f32 %v9693, %v10041
        %v10058 = vadd.f32 %v9695, %v10042
        %v10059 = vadd.f32 %v9697, %v10043
        %v10060 = vadd.f32 %v9699, %v10044
        %v10061 = vadd.f32 %v9701, %v10045
        %v10062 = vadd.f32 %v9703, %v10046
        %v10063 = vadd.f32 %v9705, %v10047
        %v10064 = vadd.f32 %v9707, %v10048
        %v10065 = vadd.f32 %v9709, %v10049
        %v10066 = vadd.f32 %v9711, %v10050
        %v10067 = vadd.f32 %v9713, %v10051
        %v10068 = vadd.f32 %v9715, %v10052
        %v10069 = vtanh.pop %v10053
        %v10070 = vtanh.pop %v10054
        %v10071 = vtanh.pop %v10055
        %v10072 = vtanh.pop %v10056
        %v10073 = vtanh.pop %v10057
        %v10074 = vtanh.pop %v10058
        %v10075 = vtanh.pop %v10059
        %v10076 = vtanh.pop %v10060
        %v10077 = vtanh.pop %v10061
        %v10078 = vtanh.pop %v10062
        %v10079 = vtanh.pop %v10063
        %v10080 = vtanh.pop %v10064
        %v10081 = vtanh.pop %v10065
        %v10082 = vtanh.pop %v10066
        %v10083 = vtanh.pop %v10067
        %v10084 = vtanh.pop %v10068
        %v10085 = vsub.f32 1.0, %v9990
        %v10086 = vsub.f32 1.0, %v9992
        %v10087 = vsub.f32 1.0, %v9994
        %v10088 = vsub.f32 1.0, %v9996
        %v10089 = vsub.f32 1.0, %v9998
        %v10090 = vsub.f32 1.0, %v10000
        %v10091 = vsub.f32 1.0, %v10002
        %v10092 = vsub.f32 1.0, %v10004
        %v10093 = vsub.f32 1.0, %v10006
        %v10094 = vsub.f32 1.0, %v10008
        %v10095 = vsub.f32 1.0, %v10010
        %v10096 = vsub.f32 1.0, %v10012
        %v10097 = vsub.f32 1.0, %v10014
        %v10098 = vsub.f32 1.0, %v10016
        %v10099 = vsub.f32 1.0, %v10018
        %v10100 = vsub.f32 1.0, %v10020
        %10117 = vrot.lane.b32.xlu0 %v10069, 64
        %v10118 = vpop.permute.xlu0 %10117
        %10119 = vrot.lane.b32.xlu0 %v10070, 64
        %v10120 = vpop.permute.xlu0 %10119
        %10121 = vrot.lane.b32.xlu0 %v10071, 64
        %v10122 = vpop.permute.xlu0 %10121
        %10123 = vrot.lane.b32.xlu0 %v10072, 64
        %v10124 = vpop.permute.xlu0 %10123
        %10125 = vrot.lane.b32.xlu0 %v10073, 64
        %v10126 = vpop.permute.xlu0 %10125
        %10127 = vrot.lane.b32.xlu0 %v10074, 64
        %v10128 = vpop.permute.xlu0 %10127
        %10129 = vrot.lane.b32.xlu0 %v10075, 64
        %v10130 = vpop.permute.xlu0 %10129
        %10131 = vrot.lane.b32.xlu0 %v10076, 64
        %v10132 = vpop.permute.xlu0 %10131
        %10133 = vrot.lane.b32.xlu0 %v10077, 64
        %v10134 = vpop.permute.xlu0 %10133
        %10135 = vrot.lane.b32.xlu0 %v10078, 64
        %v10136 = vpop.permute.xlu0 %10135
        %10137 = vrot.lane.b32.xlu0 %v10079, 64
        %v10138 = vpop.permute.xlu0 %10137
        %10139 = vrot.lane.b32.xlu0 %v10080, 64
        %v10140 = vpop.permute.xlu0 %10139
        %10141 = vrot.lane.b32.xlu0 %v10081, 64
        %v10142 = vpop.permute.xlu0 %10141
        %10143 = vrot.lane.b32.xlu0 %v10082, 64
        %v10144 = vpop.permute.xlu0 %10143
        %10145 = vrot.lane.b32.xlu0 %v10083, 64
        %v10146 = vpop.permute.xlu0 %10145
        %10147 = vrot.lane.b32.xlu0 %v10084, 64
        %v10148 = vpop.permute.xlu0 %10147
        %v10165 = vmul.f32 %v10085, %v10118
        %v10166 = vmul.f32 %v10086, %v10120
        %v10167 = vmul.f32 %v10087, %v10122
        %v10168 = vmul.f32 %v10088, %v10124
        %v10169 = vmul.f32 %v10089, %v10126
        %v10170 = vmul.f32 %v10090, %v10128
        %v10171 = vmul.f32 %v10091, %v10130
        %v10172 = vmul.f32 %v10092, %v10132
        %v10173 = vmul.f32 %v10093, %v10134
        %v10174 = vmul.f32 %v10094, %v10136
        %v10175 = vmul.f32 %v10095, %v10138
        %v10176 = vmul.f32 %v10096, %v10140
        %v10177 = vmul.f32 %v10097, %v10142
        %v10178 = vmul.f32 %v10098, %v10144
        %v10179 = vmul.f32 %v10099, %v10146
        %v10180 = vmul.f32 %v10100, %v10148
        %v10181 = vmul.f32 %v9990, %v9091
        %v10182 = vmul.f32 %v9992, %v9092
        %v10183 = vmul.f32 %v9994, %v9093
        %v10184 = vmul.f32 %v9996, %v9094
        %v10185 = vmul.f32 %v9998, %v9095
        %v10186 = vmul.f32 %v10000, %v9096
        %v10187 = vmul.f32 %v10002, %v9097
        %v10188 = vmul.f32 %v10004, %v9098
        %v10189 = vmul.f32 %v10006, %v9099
        %v10190 = vmul.f32 %v10008, %v9100
        %v10191 = vmul.f32 %v10010, %v9101
        %v10192 = vmul.f32 %v10012, %v9102
        %v10193 = vmul.f32 %v10014, %v9103
        %v10194 = vmul.f32 %v10016, %v9104
        %v10195 = vmul.f32 %v10018, %v9105
        %v10196 = vmul.f32 %v10020, %v9106
        %v10197 = vadd.f32 %v10165, %v10181
        %v10198 = vadd.f32 %v10166, %v10182
        %v10199 = vadd.f32 %v10167, %v10183
        %v10200 = vadd.f32 %v10168, %v10184
        %v10201 = vadd.f32 %v10169, %v10185
        %v10202 = vadd.f32 %v10170, %v10186
        %v10203 = vadd.f32 %v10171, %v10187
        %v10204 = vadd.f32 %v10172, %v10188
        %v10205 = vadd.f32 %v10173, %v10189
        %v10206 = vadd.f32 %v10174, %v10190
        %v10207 = vadd.f32 %v10175, %v10191
        %v10208 = vadd.f32 %v10176, %v10192
        %v10209 = vadd.f32 %v10177, %v10193
        %v10210 = vadd.f32 %v10178, %v10194
        %v10211 = vadd.f32 %v10179, %v10195
        %v10212 = vadd.f32 %v10180, %v10196
        %10229 = vrot.lane.b32.xlu0 %v10197, 64
        %v10230 = vpop.permute.xlu0 %10229
        %10231 = vrot.lane.b32.xlu0 %v10198, 64
        %v10232 = vpop.permute.xlu0 %10231
        %10233 = vrot.lane.b32.xlu0 %v10199, 64
        %v10234 = vpop.permute.xlu0 %10233
        %10235 = vrot.lane.b32.xlu0 %v10200, 64
        %v10236 = vpop.permute.xlu0 %10235
        %10237 = vrot.lane.b32.xlu0 %v10201, 64
        %v10238 = vpop.permute.xlu0 %10237
        %10239 = vrot.lane.b32.xlu0 %v10202, 64
        %v10240 = vpop.permute.xlu0 %10239
        %10241 = vrot.lane.b32.xlu0 %v10203, 64
        %v10242 = vpop.permute.xlu0 %10241
        %10243 = vrot.lane.b32.xlu0 %v10204, 64
        %v10244 = vpop.permute.xlu0 %10243
        %10245 = vrot.lane.b32.xlu0 %v10205, 64
        %v10246 = vpop.permute.xlu0 %10245
        %10247 = vrot.lane.b32.xlu0 %v10206, 64
        %v10248 = vpop.permute.xlu0 %10247
        %10249 = vrot.lane.b32.xlu0 %v10207, 64
        %v10250 = vpop.permute.xlu0 %10249
        %10251 = vrot.lane.b32.xlu0 %v10208, 64
        %v10252 = vpop.permute.xlu0 %10251
        %10253 = vrot.lane.b32.xlu0 %v10209, 64
        %v10254 = vpop.permute.xlu0 %10253
        %10255 = vrot.lane.b32.xlu0 %v10210, 64
        %v10256 = vpop.permute.xlu0 %10255
        %10257 = vrot.lane.b32.xlu0 %v10211, 64
        %v10258 = vpop.permute.xlu0 %10257
        %10259 = vrot.lane.b32.xlu0 %v10212, 64
        %v10260 = vpop.permute.xlu0 %10259
        %v10277 = vsel %vm1648, %v10230, %v9668
        %v10278 = vsel %vm1648, %v10232, %v9669
        %v10279 = vsel %vm1648, %v10234, %v9670
        %v10280 = vsel %vm1648, %v10236, %v9671
        %v10281 = vsel %vm1648, %v10238, %v9672
        %v10282 = vsel %vm1648, %v10240, %v9673
        %v10283 = vsel %vm1648, %v10242, %v9674
        %v10284 = vsel %vm1648, %v10244, %v9675
        %v10285 = vsel %vm1648, %v10246, %v9676
        %v10286 = vsel %vm1648, %v10248, %v9677
        %v10287 = vsel %vm1648, %v10250, %v9678
        %v10288 = vsel %vm1648, %v10252, %v9679
        %v10289 = vsel %vm1648, %v10254, %v9680
        %v10290 = vsel %vm1648, %v10256, %v9681
        %v10291 = vsel %vm1648, %v10258, %v9682
        %v10292 = vsel %vm1648, %v10260, %v9683
        %10293 = vmatprep.subr.mxu0 %v1951
        %10294 = vmatpush1.msra.mxu0 %v1950
        %10295 = vmatprep.subr.mxu0 %v1949
        %10296 = vmatpush1.msra.mxu0 %v1948
        %10297 = vmatprep.subr.mxu0 %v1947
        %10298 = vmatpush1.msra.mxu0 %v1946
        %10299 = vmatprep.subr.mxu0 %v1945
        %10300 = vmatpush1.msra.mxu0 %v1944
        %10301 = vmatprep.subr.mxu0 %v1943
        %10302 = vmatpush1.msra.mxu0 %v1942
        %10303 = vmatprep.subr.mxu0 %v1941
        %10304 = vmatpush1.msra.mxu0 %v1940
        %10305 = vmatprep.subr.mxu0 %v1939
        %10306 = vmatpush1.msra.mxu0 %v1938
        %10307 = vmatprep.subr.mxu0 %v1937
        %10308 = vmatpush1.msra.mxu0 %v1936
        %10309 = vmatprep.subr.mxu0 %v1935
        %10310 = vmatpush1.msra.mxu0 %v1934
        %10311 = vmatprep.subr.mxu0 %v1933
        %10312 = vmatpush1.msra.mxu0 %v1932
        %10313 = vmatprep.subr.mxu0 %v1931
        %10314 = vmatpush1.msra.mxu0 %v1930
        %10315 = vmatprep.subr.mxu0 %v1929
        %10316 = vmatpush1.msra.mxu0 %v1928
        %10317 = vmatprep.subr.mxu0 %v1927
        %10318 = vmatpush1.msra.mxu0 %v1926
        %10319 = vmatprep.subr.mxu0 %v1925
        %10320 = vmatpush1.msra.mxu0 %v1924
        %10321 = vmatprep.subr.mxu0 %v1923
        %10322 = vmatpush1.msra.mxu0 %v1922
        %10323 = vmatprep.subr.mxu0 %v1921
        %10324 = vmatpush1.msra.mxu0 %v1920
        %10325 = vmatprep.subr.mxu0 0.0
        %10326 = vmatpush2.msra.mxu0 0.0
        %10327 = vmatprep.subr.mxu0 0.0
        %10328 = vmatpush2.msra.mxu0 0.0
        %10329 = vmatprep.subr.mxu0 0.0
        %10330 = vmatpush2.msra.mxu0 0.0
        %10331 = vmatprep.subr.mxu0 0.0
        %10332 = vmatpush2.msra.mxu0 0.0
        %10333 = vmatprep.subr.mxu0 0.0
        %10334 = vmatpush2.msra.mxu0 0.0
        %10335 = vmatprep.subr.mxu0 0.0
        %10336 = vmatpush2.msra.mxu0 0.0
        %10337 = vmatprep.subr.mxu0 0.0
        %10338 = vmatpush2.msra.mxu0 0.0
        %10339 = vmatprep.subr.mxu0 0.0
        %10340 = vmatpush2.msra.mxu0 0.0
        %10341 = vmatprep.subr.mxu0 0.0
        %10342 = vmatpush2.msra.mxu0 0.0
        %10343 = vmatprep.subr.mxu0 0.0
        %10344 = vmatpush2.msra.mxu0 0.0
        %10345 = vmatprep.subr.mxu0 0.0
        %10346 = vmatpush2.msra.mxu0 0.0
        %10347 = vmatprep.subr.mxu0 0.0
        %10348 = vmatpush2.msra.mxu0 0.0
        %10349 = vmatprep.subr.mxu0 0.0
        %10350 = vmatpush2.msra.mxu0 0.0
        %10351 = vmatprep.subr.mxu0 0.0
        %10352 = vmatpush2.msra.mxu0 0.0
        %10353 = vmatprep.subr.mxu0 0.0
        %10354 = vmatpush2.msra.mxu0 0.0
        %10355 = vmatprep.subr.mxu0 0.0
        %10356 = vmatpush2.msra.mxu0 0.0
        %10357 = vmatprep.mubr.f32.mxu0 0.0
        %10358 = vmatmul.mubr.f32.gmra.mxu0 %v10277
        %v10359 = vpop.f32.mrf.mxu0
        %v10360 = vadd.f32 %v1964, %v10359
        %v10361 = vpop.f32.mrf.mxu0
        %v10362 = vadd.f32 %v1968, %v10361
        %10363 = vmatprep.mubr.f32.mxu0 0.0
        %10364 = vmatmul.mubr.f32.gmra.mxu0 %v10278
        %v10365 = vpop.f32.mrf.mxu0
        %v10366 = vadd.f32 %v1964, %v10365
        %v10367 = vpop.f32.mrf.mxu0
        %v10368 = vadd.f32 %v1968, %v10367
        %10369 = vmatprep.mubr.f32.mxu0 0.0
        %10370 = vmatmul.mubr.f32.gmra.mxu0 %v10279
        %v10371 = vpop.f32.mrf.mxu0
        %v10372 = vadd.f32 %v1964, %v10371
        %v10373 = vpop.f32.mrf.mxu0
        %v10374 = vadd.f32 %v1968, %v10373
        %10375 = vmatprep.mubr.f32.mxu0 0.0
        %10376 = vmatmul.mubr.f32.gmra.mxu0 %v10280
        %v10377 = vpop.f32.mrf.mxu0
        %v10378 = vadd.f32 %v1964, %v10377
        %v10379 = vpop.f32.mrf.mxu0
        %v10380 = vadd.f32 %v1968, %v10379
        %10381 = vmatprep.mubr.f32.mxu0 0.0
        %10382 = vmatmul.mubr.f32.gmra.mxu0 %v10281
        %v10383 = vpop.f32.mrf.mxu0
        %v10384 = vadd.f32 %v1964, %v10383
        %v10385 = vpop.f32.mrf.mxu0
        %v10386 = vadd.f32 %v1968, %v10385
        %10387 = vmatprep.mubr.f32.mxu0 0.0
        %10388 = vmatmul.mubr.f32.gmra.mxu0 %v10282
        %v10389 = vpop.f32.mrf.mxu0
        %v10390 = vadd.f32 %v1964, %v10389
        %v10391 = vpop.f32.mrf.mxu0
        %v10392 = vadd.f32 %v1968, %v10391
        %10393 = vmatprep.mubr.f32.mxu0 0.0
        %10394 = vmatmul.mubr.f32.gmra.mxu0 %v10283
        %v10395 = vpop.f32.mrf.mxu0
        %v10396 = vadd.f32 %v1964, %v10395
        %v10397 = vpop.f32.mrf.mxu0
        %v10398 = vadd.f32 %v1968, %v10397
        %10399 = vmatprep.mubr.f32.mxu0 0.0
        %10400 = vmatmul.mubr.f32.gmra.mxu0 %v10284
        %v10401 = vpop.f32.mrf.mxu0
        %v10402 = vadd.f32 %v1964, %v10401
        %v10403 = vpop.f32.mrf.mxu0
        %v10404 = vadd.f32 %v1968, %v10403
        %10405 = vmatprep.mubr.f32.mxu0 0.0
        %10406 = vmatmul.mubr.f32.gmra.mxu0 %v10285
        %v10407 = vpop.f32.mrf.mxu0
        %v10408 = vadd.f32 %v1964, %v10407
        %v10409 = vpop.f32.mrf.mxu0
        %v10410 = vadd.f32 %v1968, %v10409
        %10411 = vmatprep.mubr.f32.mxu0 0.0
        %10412 = vmatmul.mubr.f32.gmra.mxu0 %v10286
        %v10413 = vpop.f32.mrf.mxu0
        %v10414 = vadd.f32 %v1964, %v10413
        %v10415 = vpop.f32.mrf.mxu0
        %v10416 = vadd.f32 %v1968, %v10415
        %10417 = vmatprep.mubr.f32.mxu0 0.0
        %10418 = vmatmul.mubr.f32.gmra.mxu0 %v10287
        %v10419 = vpop.f32.mrf.mxu0
        %v10420 = vadd.f32 %v1964, %v10419
        %v10421 = vpop.f32.mrf.mxu0
        %v10422 = vadd.f32 %v1968, %v10421
        %10423 = vmatprep.mubr.f32.mxu0 0.0
        %10424 = vmatmul.mubr.f32.gmra.mxu0 %v10288
        %v10425 = vpop.f32.mrf.mxu0
        %v10426 = vadd.f32 %v1964, %v10425
        %v10427 = vpop.f32.mrf.mxu0
        %v10428 = vadd.f32 %v1968, %v10427
        %10429 = vmatprep.mubr.f32.mxu0 0.0
        %10430 = vmatmul.mubr.f32.gmra.mxu0 %v10289
        %v10431 = vpop.f32.mrf.mxu0
        %v10432 = vadd.f32 %v1964, %v10431
        %v10433 = vpop.f32.mrf.mxu0
        %v10434 = vadd.f32 %v1968, %v10433
        %10435 = vmatprep.mubr.f32.mxu0 0.0
        %10436 = vmatmul.mubr.f32.gmra.mxu0 %v10290
        %v10437 = vpop.f32.mrf.mxu0
        %v10438 = vadd.f32 %v1964, %v10437
        %v10439 = vpop.f32.mrf.mxu0
        %v10440 = vadd.f32 %v1968, %v10439
        %10441 = vmatprep.mubr.f32.mxu0 0.0
        %10442 = vmatmul.mubr.f32.gmra.mxu0 %v10291
        %v10443 = vpop.f32.mrf.mxu0
        %v10444 = vadd.f32 %v1964, %v10443
        %v10445 = vpop.f32.mrf.mxu0
        %v10446 = vadd.f32 %v1968, %v10445
        %10447 = vmatprep.mubr.f32.mxu0 0.0
        %10448 = vmatmul.mubr.f32.gmra.mxu0 %v10292
        %v10449 = vpop.f32.mrf.mxu0
        %v10450 = vadd.f32 %v1964, %v10449
        %v10451 = vpop.f32.mrf.mxu0
        %v10452 = vadd.f32 %v1968, %v10451
        %10453 = vdwg.mxu0
        %v10454 = vxor.u32 %v10360, 2147483648
        %v10455 = vxor.u32 %v10366, 2147483648
        %v10456 = vxor.u32 %v10372, 2147483648
        %v10457 = vxor.u32 %v10378, 2147483648
        %v10458 = vxor.u32 %v10384, 2147483648
        %v10459 = vxor.u32 %v10390, 2147483648
        %v10460 = vxor.u32 %v10396, 2147483648
        %v10461 = vxor.u32 %v10402, 2147483648
        %v10462 = vxor.u32 %v10408, 2147483648
        %v10463 = vxor.u32 %v10414, 2147483648
        %v10464 = vxor.u32 %v10420, 2147483648
        %v10465 = vxor.u32 %v10426, 2147483648
        %v10466 = vxor.u32 %v10432, 2147483648
        %v10467 = vxor.u32 %v10438, 2147483648
        %v10468 = vxor.u32 %v10444, 2147483648
        %v10469 = vxor.u32 %v10450, 2147483648
        %v10470 = vmul.f32 %v10454, 1.442695
        %v10471 = vpow.pop %v10470
        %v10472 = vmul.f32 %v10455, 1.442695
        %v10473 = vpow.pop %v10472
        %v10474 = vmul.f32 %v10456, 1.442695
        %v10475 = vpow.pop %v10474
        %v10476 = vmul.f32 %v10457, 1.442695
        %v10477 = vpow.pop %v10476
        %v10478 = vmul.f32 %v10458, 1.442695
        %v10479 = vpow.pop %v10478
        %v10480 = vmul.f32 %v10459, 1.442695
        %v10481 = vpow.pop %v10480
        %v10482 = vmul.f32 %v10460, 1.442695
        %v10483 = vpow.pop %v10482
        %v10484 = vmul.f32 %v10461, 1.442695
        %v10485 = vpow.pop %v10484
        %v10486 = vmul.f32 %v10462, 1.442695
        %v10487 = vpow.pop %v10486
        %v10488 = vmul.f32 %v10463, 1.442695
        %v10489 = vpow.pop %v10488
        %v10490 = vmul.f32 %v10464, 1.442695
        %v10491 = vpow.pop %v10490
        %v10492 = vmul.f32 %v10465, 1.442695
        %v10493 = vpow.pop %v10492
        %v10494 = vmul.f32 %v10466, 1.442695
        %v10495 = vpow.pop %v10494
        %v10496 = vmul.f32 %v10467, 1.442695
        %v10497 = vpow.pop %v10496
        %v10498 = vmul.f32 %v10468, 1.442695
        %v10499 = vpow.pop %v10498
        %v10500 = vmul.f32 %v10469, 1.442695
        %v10501 = vpow.pop %v10500
        %v10502 = vadd.f32 %v10471, 1.0
        %v10503 = vadd.f32 %v10473, 1.0
        %v10504 = vadd.f32 %v10475, 1.0
        %v10505 = vadd.f32 %v10477, 1.0
        %v10506 = vadd.f32 %v10479, 1.0
        %v10507 = vadd.f32 %v10481, 1.0
        %v10508 = vadd.f32 %v10483, 1.0
        %v10509 = vadd.f32 %v10485, 1.0
        %v10510 = vadd.f32 %v10487, 1.0
        %v10511 = vadd.f32 %v10489, 1.0
        %v10512 = vadd.f32 %v10491, 1.0
        %v10513 = vadd.f32 %v10493, 1.0
        %v10514 = vadd.f32 %v10495, 1.0
        %v10515 = vadd.f32 %v10497, 1.0
        %v10516 = vadd.f32 %v10499, 1.0
        %v10517 = vadd.f32 %v10501, 1.0
        %v10518 = vrcp.pop %v10502
        %v10519 = vmul.f32 1.0, %v10518
        %v10520 = vrcp.pop %v10503
        %v10521 = vmul.f32 1.0, %v10520
        %v10522 = vrcp.pop %v10504
        %v10523 = vmul.f32 1.0, %v10522
        %v10524 = vrcp.pop %v10505
        %v10525 = vmul.f32 1.0, %v10524
        %v10526 = vrcp.pop %v10506
        %v10527 = vmul.f32 1.0, %v10526
        %v10528 = vrcp.pop %v10507
        %v10529 = vmul.f32 1.0, %v10528
        %v10530 = vrcp.pop %v10508
        %v10531 = vmul.f32 1.0, %v10530
        %v10532 = vrcp.pop %v10509
        %v10533 = vmul.f32 1.0, %v10532
        %v10534 = vrcp.pop %v10510
        %v10535 = vmul.f32 1.0, %v10534
        %v10536 = vrcp.pop %v10511
        %v10537 = vmul.f32 1.0, %v10536
        %v10538 = vrcp.pop %v10512
        %v10539 = vmul.f32 1.0, %v10538
        %v10540 = vrcp.pop %v10513
        %v10541 = vmul.f32 1.0, %v10540
        %v10542 = vrcp.pop %v10514
        %v10543 = vmul.f32 1.0, %v10542
        %v10544 = vrcp.pop %v10515
        %v10545 = vmul.f32 1.0, %v10544
        %v10546 = vrcp.pop %v10516
        %v10547 = vmul.f32 1.0, %v10546
        %v10548 = vrcp.pop %v10517
        %v10549 = vmul.f32 1.0, %v10548
        %10566 = vrot.lane.b32.xlu0 %v10362, 64
        %v10567 = vpop.permute.xlu0 %10566
        %10568 = vrot.lane.b32.xlu0 %v10368, 64
        %v10569 = vpop.permute.xlu0 %10568
        %10570 = vrot.lane.b32.xlu0 %v10374, 64
        %v10571 = vpop.permute.xlu0 %10570
        %10572 = vrot.lane.b32.xlu0 %v10380, 64
        %v10573 = vpop.permute.xlu0 %10572
        %10574 = vrot.lane.b32.xlu0 %v10386, 64
        %v10575 = vpop.permute.xlu0 %10574
        %10576 = vrot.lane.b32.xlu0 %v10392, 64
        %v10577 = vpop.permute.xlu0 %10576
        %10578 = vrot.lane.b32.xlu0 %v10398, 64
        %v10579 = vpop.permute.xlu0 %10578
        %10580 = vrot.lane.b32.xlu0 %v10404, 64
        %v10581 = vpop.permute.xlu0 %10580
        %10582 = vrot.lane.b32.xlu0 %v10410, 64
        %v10583 = vpop.permute.xlu0 %10582
        %10584 = vrot.lane.b32.xlu0 %v10416, 64
        %v10585 = vpop.permute.xlu0 %10584
        %10586 = vrot.lane.b32.xlu0 %v10422, 64
        %v10587 = vpop.permute.xlu0 %10586
        %10588 = vrot.lane.b32.xlu0 %v10428, 64
        %v10589 = vpop.permute.xlu0 %10588
        %10590 = vrot.lane.b32.xlu0 %v10434, 64
        %v10591 = vpop.permute.xlu0 %10590
        %10592 = vrot.lane.b32.xlu0 %v10440, 64
        %v10593 = vpop.permute.xlu0 %10592
        %10594 = vrot.lane.b32.xlu0 %v10446, 64
        %v10595 = vpop.permute.xlu0 %10594
        %10596 = vrot.lane.b32.xlu0 %v10452, 64
        %v10597 = vpop.permute.xlu0 %10596
        %v10614 = vmul.f32 %v10519, %v10567
        %v10615 = vmul.f32 %v10521, %v10569
        %v10616 = vmul.f32 %v10523, %v10571
        %v10617 = vmul.f32 %v10525, %v10573
        %v10618 = vmul.f32 %v10527, %v10575
        %v10619 = vmul.f32 %v10529, %v10577
        %v10620 = vmul.f32 %v10531, %v10579
        %v10621 = vmul.f32 %v10533, %v10581
        %v10622 = vmul.f32 %v10535, %v10583
        %v10623 = vmul.f32 %v10537, %v10585
        %v10624 = vmul.f32 %v10539, %v10587
        %v10625 = vmul.f32 %v10541, %v10589
        %v10626 = vmul.f32 %v10543, %v10591
        %v10627 = vmul.f32 %v10545, %v10593
        %v10628 = vmul.f32 %v10547, %v10595
        %v10629 = vmul.f32 %v10549, %v10597
        %v10630 = vadd.f32 %v10362, %v10614
        %v10631 = vadd.f32 %v10368, %v10615
        %v10632 = vadd.f32 %v10374, %v10616
        %v10633 = vadd.f32 %v10380, %v10617
        %v10634 = vadd.f32 %v10386, %v10618
        %v10635 = vadd.f32 %v10392, %v10619
        %v10636 = vadd.f32 %v10398, %v10620
        %v10637 = vadd.f32 %v10404, %v10621
        %v10638 = vadd.f32 %v10410, %v10622
        %v10639 = vadd.f32 %v10416, %v10623
        %v10640 = vadd.f32 %v10422, %v10624
        %v10641 = vadd.f32 %v10428, %v10625
        %v10642 = vadd.f32 %v10434, %v10626
        %v10643 = vadd.f32 %v10440, %v10627
        %v10644 = vadd.f32 %v10446, %v10628
        %v10645 = vadd.f32 %v10452, %v10629
        %v10646 = vtanh.pop %v10630
        %v10647 = vtanh.pop %v10631
        %v10648 = vtanh.pop %v10632
        %v10649 = vtanh.pop %v10633
        %v10650 = vtanh.pop %v10634
        %v10651 = vtanh.pop %v10635
        %v10652 = vtanh.pop %v10636
        %v10653 = vtanh.pop %v10637
        %v10654 = vtanh.pop %v10638
        %v10655 = vtanh.pop %v10639
        %v10656 = vtanh.pop %v10640
        %v10657 = vtanh.pop %v10641
        %v10658 = vtanh.pop %v10642
        %v10659 = vtanh.pop %v10643
        %v10660 = vtanh.pop %v10644
        %v10661 = vtanh.pop %v10645
        %v10662 = vsub.f32 1.0, %v10519
        %v10663 = vsub.f32 1.0, %v10521
        %v10664 = vsub.f32 1.0, %v10523
        %v10665 = vsub.f32 1.0, %v10525
        %v10666 = vsub.f32 1.0, %v10527
        %v10667 = vsub.f32 1.0, %v10529
        %v10668 = vsub.f32 1.0, %v10531
        %v10669 = vsub.f32 1.0, %v10533
        %v10670 = vsub.f32 1.0, %v10535
        %v10671 = vsub.f32 1.0, %v10537
        %v10672 = vsub.f32 1.0, %v10539
        %v10673 = vsub.f32 1.0, %v10541
        %v10674 = vsub.f32 1.0, %v10543
        %v10675 = vsub.f32 1.0, %v10545
        %v10676 = vsub.f32 1.0, %v10547
        %v10677 = vsub.f32 1.0, %v10549
        %10694 = vrot.lane.b32.xlu0 %v10646, 64
        %v10695 = vpop.permute.xlu0 %10694
        %10696 = vrot.lane.b32.xlu0 %v10647, 64
        %v10697 = vpop.permute.xlu0 %10696
        %10698 = vrot.lane.b32.xlu0 %v10648, 64
        %v10699 = vpop.permute.xlu0 %10698
        %10700 = vrot.lane.b32.xlu0 %v10649, 64
        %v10701 = vpop.permute.xlu0 %10700
        %10702 = vrot.lane.b32.xlu0 %v10650, 64
        %v10703 = vpop.permute.xlu0 %10702
        %10704 = vrot.lane.b32.xlu0 %v10651, 64
        %v10705 = vpop.permute.xlu0 %10704
        %10706 = vrot.lane.b32.xlu0 %v10652, 64
        %v10707 = vpop.permute.xlu0 %10706
        %10708 = vrot.lane.b32.xlu0 %v10653, 64
        %v10709 = vpop.permute.xlu0 %10708
        %10710 = vrot.lane.b32.xlu0 %v10654, 64
        %v10711 = vpop.permute.xlu0 %10710
        %10712 = vrot.lane.b32.xlu0 %v10655, 64
        %v10713 = vpop.permute.xlu0 %10712
        %10714 = vrot.lane.b32.xlu0 %v10656, 64
        %v10715 = vpop.permute.xlu0 %10714
        %10716 = vrot.lane.b32.xlu0 %v10657, 64
        %v10717 = vpop.permute.xlu0 %10716
        %10718 = vrot.lane.b32.xlu0 %v10658, 64
        %v10719 = vpop.permute.xlu0 %10718
        %10720 = vrot.lane.b32.xlu0 %v10659, 64
        %v10721 = vpop.permute.xlu0 %10720
        %10722 = vrot.lane.b32.xlu0 %v10660, 64
        %v10723 = vpop.permute.xlu0 %10722
        %10724 = vrot.lane.b32.xlu0 %v10661, 64
        %v10725 = vpop.permute.xlu0 %10724
        %v10742 = vmul.f32 %v10662, %v10695
        %v10743 = vmul.f32 %v10663, %v10697
        %v10744 = vmul.f32 %v10664, %v10699
        %v10745 = vmul.f32 %v10665, %v10701
        %v10746 = vmul.f32 %v10666, %v10703
        %v10747 = vmul.f32 %v10667, %v10705
        %v10748 = vmul.f32 %v10668, %v10707
        %v10749 = vmul.f32 %v10669, %v10709
        %v10750 = vmul.f32 %v10670, %v10711
        %v10751 = vmul.f32 %v10671, %v10713
        %v10752 = vmul.f32 %v10672, %v10715
        %v10753 = vmul.f32 %v10673, %v10717
        %v10754 = vmul.f32 %v10674, %v10719
        %v10755 = vmul.f32 %v10675, %v10721
        %v10756 = vmul.f32 %v10676, %v10723
        %v10757 = vmul.f32 %v10677, %v10725
        %v10758 = vmul.f32 %v10519, %v9668
        %v10759 = vmul.f32 %v10521, %v9669
        %v10760 = vmul.f32 %v10523, %v9670
        %v10761 = vmul.f32 %v10525, %v9671
        %v10762 = vmul.f32 %v10527, %v9672
        %v10763 = vmul.f32 %v10529, %v9673
        %v10764 = vmul.f32 %v10531, %v9674
        %v10765 = vmul.f32 %v10533, %v9675
        %v10766 = vmul.f32 %v10535, %v9676
        %v10767 = vmul.f32 %v10537, %v9677
        %v10768 = vmul.f32 %v10539, %v9678
        %v10769 = vmul.f32 %v10541, %v9679
        %v10770 = vmul.f32 %v10543, %v9680
        %v10771 = vmul.f32 %v10545, %v9681
        %v10772 = vmul.f32 %v10547, %v9682
        %v10773 = vmul.f32 %v10549, %v9683
        %v10774 = vadd.f32 %v10742, %v10758
        %v10775 = vadd.f32 %v10743, %v10759
        %v10776 = vadd.f32 %v10744, %v10760
        %v10777 = vadd.f32 %v10745, %v10761
        %v10778 = vadd.f32 %v10746, %v10762
        %v10779 = vadd.f32 %v10747, %v10763
        %v10780 = vadd.f32 %v10748, %v10764
        %v10781 = vadd.f32 %v10749, %v10765
        %v10782 = vadd.f32 %v10750, %v10766
        %v10783 = vadd.f32 %v10751, %v10767
        %v10784 = vadd.f32 %v10752, %v10768
        %v10785 = vadd.f32 %v10753, %v10769
        %v10786 = vadd.f32 %v10754, %v10770
        %v10787 = vadd.f32 %v10755, %v10771
        %v10788 = vadd.f32 %v10756, %v10772
        %v10789 = vadd.f32 %v10757, %v10773
        %10806 = vrot.lane.b32.xlu0 %v10774, 64
        %v10807 = vpop.permute.xlu0 %10806
        %10808 = vrot.lane.b32.xlu0 %v10775, 64
        %v10809 = vpop.permute.xlu0 %10808
        %10810 = vrot.lane.b32.xlu0 %v10776, 64
        %v10811 = vpop.permute.xlu0 %10810
        %10812 = vrot.lane.b32.xlu0 %v10777, 64
        %v10813 = vpop.permute.xlu0 %10812
        %10814 = vrot.lane.b32.xlu0 %v10778, 64
        %v10815 = vpop.permute.xlu0 %10814
        %10816 = vrot.lane.b32.xlu0 %v10779, 64
        %v10817 = vpop.permute.xlu0 %10816
        %10818 = vrot.lane.b32.xlu0 %v10780, 64
        %v10819 = vpop.permute.xlu0 %10818
        %10820 = vrot.lane.b32.xlu0 %v10781, 64
        %v10821 = vpop.permute.xlu0 %10820
        %10822 = vrot.lane.b32.xlu0 %v10782, 64
        %v10823 = vpop.permute.xlu0 %10822
        %10824 = vrot.lane.b32.xlu0 %v10783, 64
        %v10825 = vpop.permute.xlu0 %10824
        %10826 = vrot.lane.b32.xlu0 %v10784, 64
        %v10827 = vpop.permute.xlu0 %10826
        %10828 = vrot.lane.b32.xlu0 %v10785, 64
        %v10829 = vpop.permute.xlu0 %10828
        %10830 = vrot.lane.b32.xlu0 %v10786, 64
        %v10831 = vpop.permute.xlu0 %10830
        %10832 = vrot.lane.b32.xlu0 %v10787, 64
        %v10833 = vpop.permute.xlu0 %10832
        %10834 = vrot.lane.b32.xlu0 %v10788, 64
        %v10835 = vpop.permute.xlu0 %10834
        %10836 = vrot.lane.b32.xlu0 %v10789, 64
        %v10837 = vpop.permute.xlu0 %10836
        %v10854 = vsel %vm1648, %v10807, 0.0
        %v10855 = vsel %vm1648, %v10809, 0.0
        %v10856 = vsel %vm1648, %v10811, 0.0
        %v10857 = vsel %vm1648, %v10813, 0.0
        %v10858 = vsel %vm1648, %v10815, 0.0
        %v10859 = vsel %vm1648, %v10817, 0.0
        %v10860 = vsel %vm1648, %v10819, 0.0
        %v10861 = vsel %vm1648, %v10821, 0.0
        %v10862 = vsel %vm1648, %v10823, 0.0
        %v10863 = vsel %vm1648, %v10825, 0.0
        %v10864 = vsel %vm1648, %v10827, 0.0
        %v10865 = vsel %vm1648, %v10829, 0.0
        %v10866 = vsel %vm1648, %v10831, 0.0
        %v10867 = vsel %vm1648, %v10833, 0.0
        %v10868 = vsel %vm1648, %v10835, 0.0
        %v10869 = vsel %vm1648, %v10837, 0.0
        %10870 = vst [vmem:[%s272] sm:$0xff] %v10854
        %10871 = vst [vmem:[%s272 + $0x8] sm:$0xff] %v10855
        %10872 = vst [vmem:[%s272 + $0x10] sm:$0xff] %v10856
        %10873 = vst [vmem:[%s272 + $0x18] sm:$0xff] %v10857
        %10874 = vst [vmem:[%s272 + $0x20] sm:$0xff] %v10858
        %10875 = vst [vmem:[%s272 + $0x28] sm:$0xff] %v10859
        %10876 = vst [vmem:[%s272 + $0x30] sm:$0xff] %v10860
        %10877 = vst [vmem:[%s272 + $0x38] sm:$0xff] %v10861
        %10878 = vst [vmem:[%s272 + $0x40] sm:$0xff] %v10862
        %10879 = vst [vmem:[%s272 + $0x48] sm:$0xff] %v10863
        %10880 = vst [vmem:[%s272 + $0x50] sm:$0xff] %v10864
        %10881 = vst [vmem:[%s272 + $0x58] sm:$0xff] %v10865
        %10882 = vst [vmem:[%s272 + $0x60] sm:$0xff] %v10866
        %10883 = vst [vmem:[%s272 + $0x68] sm:$0xff] %v10867
        %10884 = vst [vmem:[%s272 + $0x70] sm:$0xff] %v10868
        %10885 = vst [vmem:[%s272 + $0x78] sm:$0xff] %v10869
        %s10886 = sand.u32 %s181, 1
        %s10887 = scalar_lea.sflag [#allocation4], %s10886
        %s10888 = sand.u32 %s181, 1
        %s10889 = smul.addr %s10888, 128
        %s10890 = scalar_lea.vmem [#allocation3], %s10889
        // Predicated region
        $region49: #{tpu_custom_call.1} parent=47 // pred_check
          %p10891 = pneg %p191
        $region50: #{tpu_custom_call.1} parent=47 // pred_check_branch
          %10893 = sbr.rel (%p10891) target = $region52
        $region51: #{tpu_custom_call.1} parent=47 // pred_region
          %s10894 = smul.u32 16, %s21
          %s10896 = ssub.s32 2048, 2048
          %10897 = vsyncadd %s10887, %s10896
          %s10898 = smul.addr %s10894, 128
          %s10899 = scalar_lea.hbm %s7, %s10898
          %s10900 = sshll.u32 %s10890, 4
          %s10901 = int_to_ptr.vmem [resolvable:$true] %s10900
          %10906 = dma.vmem_to_hbm [thread:$0]  %s10901, 2048, %s10899, %s10887, 128, 128, 8
        $region52: #{tpu_custom_call.1} parent=47 // pred_fallthru
          _
      $region48: #{tpu_custom_call.1} parent=5 // pred_fallthru
        _
      %p10907 = scmp.le.s32.totalorder 2, %s16
      // Predicated region
      $region53: #{tpu_custom_call.1} parent=5 // pred_check
        %p10908 = pneg %p10907
      $region54: #{tpu_custom_call.1} parent=5 // pred_check_branch
        %10910 = sbr.rel (%p10908) target = $region56
      $region55: #{tpu_custom_call.1} parent=5 // pred_region
        %s10911 = ssub.s32 %s16, 2
        // Predicated region
        $region57: #{tpu_custom_call.1} parent=55 // pred_check
          %p10912 = pneg %p197
        $region58: #{tpu_custom_call.1} parent=55 // pred_check_branch
          %10914 = sbr.rel (%p10912) target = $region60
        $region59: #{tpu_custom_call.1} parent=55 // pred_region
          %s10915 = sand.u32 %s182, 1
          %s10916 = scalar_lea.sflag [#allocation4], %s10915
          %s10917 = sand.u32 %s182, 1
          %s10918 = smul.addr %s10917, 128
          %s10919 = scalar_lea.vmem [#allocation3], %s10918
          %10920 = dma.done %s10916, 2048
        $region60: #{tpu_custom_call.1} parent=55 // pred_fallthru
          _
      $region56: #{tpu_custom_call.1} parent=5 // pred_fallthru
        _
    $region6: #{tpu_custom_call.1} parent=1 // loop_footer
      %s20 = sadd.s32 1, %s16
    $region7: #{tpu_custom_call.1} parent=1 // loop_footer_branch
      %15 = sbr.rel target = $region3
    $region8: #{tpu_custom_call.1} parent=1 // loop_exit
      _
    %10921 = vsyncpa [#allocation4], 1
    %s10922 = scalar_lea.sflag [#allocation4], 1
    %10923 = vsyncpa %s10922, 1

</llo_original>
